<compile_context>
chip_gen: v7x
topology: tpu7x:2x2x1
jax: 0.10.0
libtpu: 0.0.40
codegen_flags: <defaults>
</compile_context>

<pallas_src>
import functools
import math

import jax
import jax.numpy as jnp
import numpy as np
from jax import lax
from jax.experimental import pallas as pl
from jax.experimental.pallas import tpu as pltpu


def _round_up(x, m):
    return (x + m - 1) // m * m


def _gelu_exact(x):
    # PyTorch nn.GELU() default (erf-based, exact)
    return 0.5 * x * (1.0 + lax.erf(x * (1.0 / math.sqrt(2.0))))


def _masked_layernorm(x, gamma, beta, eps, d_true, mask):
    # LayerNorm over a zero-padded feature dim: statistics use only the first d_true
    # columns (padded columns of x are zero by construction; padded gamma/beta are 0
    # so padded outputs stay exactly zero).
    inv_d = 1.0 / d_true
    mu = jnp.sum(x, axis=-1, keepdims=True) * inv_d
    diff = x - mu
    diff_m = diff if mask is None else diff * mask
    var = jnp.sum(diff_m * diff_m, axis=-1, keepdims=True) * inv_d
    return diff * lax.rsqrt(var + eps) * gamma + beta


def attention_res_kernel(
    eeg_ref, vid_ref,
    we_ref, be_ref, wvp_ref, bvp_ref,                 # eeg_proj, video_proj
    wq_ref, bq_ref, wk_ref, bk_ref, wv_ref, bv_ref,   # q/k/v proj
    wo_ref, bo_ref,                                   # out_proj
    g1_ref, bt1_ref,                                  # norm1
    w1_ref, b1_ref, w2_ref, b2_ref,                   # ffn
    g2_ref, bt2_ref,                                  # norm2
    o_ref,
    k_cache, v_cache, ctx_ref,                        # VMEM scratch
    *, num_heads, inv_scale, eps, ffn_chunk, d_true):
    bf16 = jnp.bfloat16
    f32 = jnp.float32

    # ---- K/V cache: video projection + K/V computed once per batch ------------
    @pl.when(pl.program_id(1) == 0)
    def _():
        yv16 = vid_ref[0].astype(bf16)                                    # (S, Dp)
        vid_h = jnp.dot(yv16, wvp_ref[...], preferred_element_type=f32) + bvp_ref[...]
        vh16 = vid_h.astype(bf16)                                         # (S, H)
        k_all = jnp.dot(vh16, wk_ref[...], preferred_element_type=f32) + bk_ref[...]
        v_all = jnp.dot(vh16, wv_ref[...], preferred_element_type=f32) + bv_ref[...]
        k_cache[...] = k_all.astype(bf16)
        v_cache[...] = v_all.astype(bf16)

    x = eeg_ref[0].astype(f32)                                            # (TQ, Dp)
    TQ, Dp = x.shape
    H = wq_ref.shape[1]
    hd = H // num_heads

    mask = None
    if Dp != d_true:
        col = lax.broadcasted_iota(jnp.int32, (1, Dp), 1)
        mask = (col < d_true).astype(f32)

    # ---- full-width Q projection; score scaling folded into Q -----------------
    eeg_h = jnp.dot(x.astype(bf16), we_ref[...], preferred_element_type=f32) + be_ref[...]
    q_all = jnp.dot(eeg_h.astype(bf16), wq_ref[...], preferred_element_type=f32) + bq_ref[...]
    q16 = (q_all * inv_scale).astype(bf16)                                # (TQ, H)

    k16 = k_cache[...]                                                    # (S, H) bf16
    v16 = v_cache[...]                                                    # (S, H) bf16

    # ---- per-head attention; contexts land in a (TQ, H) bf16 scratch ----------
    for h in range(num_heads):                # static loop, num_heads is small
        cs = slice(h * hd, (h + 1) * hd)
        s = lax.dot_general(q16[:, cs], k16[:, cs],
                            dimension_numbers=(((1,), (1,)), ((), ())),
                            preferred_element_type=f32)                  # (TQ, S)
        s = s - jnp.max(s, axis=-1, keepdims=True)
        p = jnp.exp(s)
        p = p / jnp.sum(p, axis=-1, keepdims=True)
        ctx = jnp.dot(p.astype(bf16), v16[:, cs], preferred_element_type=f32)
        ctx_ref[:, cs] = ctx.astype(bf16)

    # ---- single full-width out-projection + residual + norm1 ------------------
    attn_out = jnp.dot(ctx_ref[...], wo_ref[...], preferred_element_type=f32) + bo_ref[...]
    out = _masked_layernorm(x + attn_out, g1_ref[...], bt1_ref[...], eps, d_true, mask)

    # ---- FFN chunked along the (padded) hidden dim + residual + norm2 ---------
    identity = out
    out16 = out.astype(bf16)
    ffn_hidden = w1_ref.shape[1]
    ffn_acc = jnp.zeros((TQ, Dp), f32)
    for c in range(ffn_hidden // ffn_chunk):
        cs = slice(c * ffn_chunk, (c + 1) * ffn_chunk)
        h1 = jnp.dot(out16, w1_ref[:, cs], preferred_element_type=f32) + b1_ref[:, cs]
        h1 = _gelu_exact(h1)
        ffn_acc = ffn_acc + jnp.dot(h1.astype(bf16), w2_ref[cs, :],
                                    preferred_element_type=f32)
    out = _masked_layernorm(identity + ffn_acc + b2_ref[...],
                            g2_ref[...], bt2_ref[...], eps, d_true, mask)

    o_ref[0] = out.astype(o_ref.dtype)


def attention_res_pallas(eeg, video, params, *, num_heads, max_q_tile=256):
    B, S, Din = eeg.shape
    H = params["wq"].shape[0]
    assert H % num_heads == 0, "hidden_dim must be divisible by num_heads"
    hd = H // num_heads
    inv_scale = float(1.0 / (hd ** 0.5))
    eps = 1e-5
    bf16, f32 = jnp.bfloat16, jnp.float32

    # ---- pad feature dim to 128-multiple, FFN hidden dim to 512-multiple ------
    Dp = _round_up(Din, 128)
    F_true = params["w1"].shape[1]
    Fp = max(_round_up(F_true, 512), 512)

    def pad2(a, rows, cols):
        return jnp.pad(a, ((0, rows - a.shape[0]), (0, cols - a.shape[1])))

    p = params
    weights = [
        pad2(p["we"], Dp, H).astype(bf16),   p["be"].astype(f32),
        pad2(p["wvid"], Dp, H).astype(bf16), p["bvid"].astype(f32),
        p["wq"].astype(bf16), p["bq"].astype(f32),
        p["wk"].astype(bf16), p["bk"].astype(f32),
        p["wv"].astype(bf16), p["bv"].astype(f32),
        pad2(p["wo"], H, Dp).astype(bf16),   pad2(p["bo"], 1, Dp).astype(f32),
        pad2(p["g1"], 1, Dp).astype(f32),    pad2(p["bt1"], 1, Dp).astype(f32),
        pad2(p["w1"], Dp, Fp).astype(bf16),  pad2(p["b1"], 1, Fp).astype(f32),
        pad2(p["w2"], Fp, Dp).astype(bf16),  pad2(p["b2"], 1, Dp).astype(f32),
        pad2(p["g2"], 1, Dp).astype(f32),    pad2(p["bt2"], 1, Dp).astype(f32),
    ]
    eeg_p = jnp.pad(eeg, ((0, 0), (0, 0), (0, Dp - Din))).astype(f32)
    vid_p = jnp.pad(video, ((0, 0), (0, 0), (0, Dp - Din))).astype(f32)

    # ---- query tile: as large as possible (full S when small), multiple of 8 ---
    if S <= max_q_tile:
        q_tile = S
    else:
        q_tile = None
        for t in range(max_q_tile - max_q_tile % 8, 7, -8):
            if S % t == 0:
                q_tile = t
                break
        if q_tile is None:
            q_tile = S
    n_q = S // q_tile

    # ---- FFN chunk: lane-dense (512-multiple), as deep as possible ------------
    if Fp <= 2048:
        ffn_chunk = Fp
    else:
        ffn_chunk = 512
        for c in (2048, 1024, 512):
            if Fp % c == 0:
                ffn_chunk = c
                break

    # ---- generation-aware VMEM budget ------------------------------------------
    weight_bytes = sum(int(np.prod(w.shape)) * w.dtype.itemsize for w in weights)
    act_bytes = 4 * (2 * q_tile * Dp + S * Dp)          # f32 eeg/out blocks + video block
    scratch_bytes = 2 * (2 * S * H + q_tile * H)        # bf16 K/V cache + ctx scratch
    request = 2 * weight_bytes + 2 * act_bytes + scratch_bytes + (16 << 20)
    try:
        vmem_cap = int(pltpu.get_tpu_info().vmem_capacity_bytes)
    except Exception:
        vmem_cap = 64 << 20
    vmem_limit = int(max(32 << 20, min(request, int(vmem_cap * 0.7))))

    kernel = functools.partial(
        attention_res_kernel, num_heads=num_heads, inv_scale=inv_scale,
        eps=eps, ffn_chunk=ffn_chunk, d_true=Din)

    def call(weight_mode):
        def wspec(w):
            if weight_mode is None:
                return pl.BlockSpec(w.shape, lambda b, s: (0, 0))
            return pl.BlockSpec(w.shape, lambda b, s: (0, 0), pipeline_mode=weight_mode)

        in_specs = [
            pl.BlockSpec((1, q_tile, Dp), lambda b, s: (b, s, 0)),   # eeg query tile
            pl.BlockSpec((1, S, Dp), lambda b, s: (b, 0, 0)),        # full video sequence
        ] + [wspec(w) for w in weights]

        return pl.pallas_call(
            kernel,
            out_shape=jax.ShapeDtypeStruct((B, S, Dp), jnp.float32),
            grid_spec=pltpu.PrefetchScalarGridSpec(
                num_scalar_prefetch=0,
                grid=(B, n_q),
                in_specs=in_specs,
                out_specs=pl.BlockSpec((1, q_tile, Dp), lambda b, s: (b, s, 0)),
                scratch_shapes=[
                    pltpu.VMEM((S, H), jnp.bfloat16),        # K cache (per batch)
                    pltpu.VMEM((S, H), jnp.bfloat16),        # V cache (per batch)
                    pltpu.VMEM((q_tile, H), jnp.bfloat16),   # per-head contexts
                ],
            ),
            compiler_params=pltpu.CompilerParams(
                dimension_semantics=("parallel", "arbitrary"),
                vmem_limit_bytes=vmem_limit),
        )(eeg_p, vid_p, *weights)

    try:
        out = call(pl.Buffered(1))     # single-buffer resident weights
    except Exception:
        out = call(None)               # fallback if pipeline_mode is unsupported

    return out[:, :, :Din]


def attention_res_reference(eeg, video, params, *, num_heads):
    """Pure-JAX reference mirroring the PyTorch forward (matmul operands quantized to
    bf16 with f32 accumulation, identical scaling order to the kernel)."""
    B, S, Din = eeg.shape
    H = params["wq"].shape[0]
    hd = H // num_heads
    inv_scale = 1.0 / (hd ** 0.5)
    eps = 1e-5
    bf16, f32 = jnp.bfloat16, jnp.float32

    def mm(x, w):
        return jnp.dot(x.astype(bf16), w.astype(bf16), preferred_element_type=f32)

    def ln(x, g, b):
        mu = jnp.mean(x, axis=-1, keepdims=True)
        var = jnp.mean((x - mu) ** 2, axis=-1, keepdims=True)
        return (x - mu) * lax.rsqrt(var + eps) * g + b

    eeg_h = mm(eeg, params["we"]) + params["be"]
    vid_h = mm(video, params["wvid"]) + params["bvid"]
    q = (mm(eeg_h, params["wq"]) + params["bq"]) * inv_scale
    k = mm(vid_h, params["wk"]) + params["bk"]
    v = mm(vid_h, params["wv"]) + params["bv"]
    q = q.reshape(B, S, num_heads, hd).transpose(0, 2, 1, 3)
    k = k.reshape(B, S, num_heads, hd).transpose(0, 2, 1, 3)
    v = v.reshape(B, S, num_heads, hd).transpose(0, 2, 1, 3)
    attn = jnp.einsum("bhqd,bhkd->bhqk", q.astype(bf16), k.astype(bf16),
                      preferred_element_type=f32)
    attn = jax.nn.softmax(attn, axis=-1)
    ctx = jnp.einsum("bhqk,bhkd->bhqd", attn.astype(bf16), v.astype(bf16),
                     preferred_element_type=f32)
    ctx = ctx.transpose(0, 2, 1, 3).reshape(B, S, H)
    out = mm(ctx, params["wo"]) + params["bo"]
    out = ln(eeg + out, params["g1"], params["bt1"])
    identity = out
    h1 = _gelu_exact(mm(out, params["w1"]) + params["b1"])
    out = identity + mm(h1, params["w2"]) + params["b2"]
    return ln(out, params["g2"], params["bt2"])


def init_params(key, input_dim, hidden_dim):
    keys = jax.random.split(key, 8)
    s = 0.05

    def lin(k, fan_in, fan_out):
        kw, kb = jax.random.split(k)
        w = jax.random.normal(kw, (fan_in, fan_out), jnp.float32) * s
        b = jax.random.normal(kb, (1, fan_out), jnp.float32) * s
        return w, b

    p = {}
    p["we"], p["be"] = lin(keys[0], input_dim, hidden_dim)      # eeg_proj
    p["wvid"], p["bvid"] = lin(keys[1], input_dim, hidden_dim)  # video_proj
    p["wq"], p["bq"] = lin(keys[2], hidden_dim, hidden_dim)
    p["wk"], p["bk"] = lin(keys[3], hidden_dim, hidden_dim)
    p["wv"], p["bv"] = lin(keys[4], hidden_dim, hidden_dim)
    p["wo"], p["bo"] = lin(keys[5], hidden_dim, input_dim)      # out_proj
    p["g1"] = jnp.ones((1, input_dim), jnp.float32)             # norm1
    p["bt1"] = jnp.zeros((1, input_dim), jnp.float32)
    p["w1"], p["b1"] = lin(keys[6], input_dim, input_dim * 4)   # ffn[0]
    p["w2"], p["b2"] = lin(keys[7], input_dim * 4, input_dim)   # ffn[2]
    p["g2"] = jnp.ones((1, input_dim), jnp.float32)             # norm2
    p["bt2"] = jnp.zeros((1, input_dim), jnp.float32)
    return p


if __name__ == "__main__":
    # Small shapes consistent with the module (defaults 930/256/8).  INPUT_DIM is
    # deliberately not a multiple of 128 to exercise the padding + masked-LayerNorm
    # path; HIDDEN_DIM keeps the module default 256.
    B, S = 2, 16
    INPUT_DIM, HIDDEN_DIM, NUM_HEADS = 200, 256, 2

    key = jax.random.PRNGKey(0)
    k_eeg, k_vid, k_par = jax.random.split(key, 3)
    eeg = jax.random.normal(k_eeg, (B, S, INPUT_DIM), jnp.float32)
    video = jax.random.normal(k_vid, (B, S, INPUT_DIM), jnp.float32)
    params = init_params(k_par, INPUT_DIM, HIDDEN_DIM)

    out = attention_res_pallas(eeg, video, params, num_heads=NUM_HEADS)
    out = jax.block_until_ready(out)

    ref = attention_res_reference(eeg, video, params, num_heads=NUM_HEADS)
    np.testing.assert_allclose(np.asarray(out), np.asarray(ref), rtol=1e-2, atol=1e-2)

    print("KERNEL_OK")
</pallas_src>

<mosaic_0001>
module attributes {stable_mosaic.version = 11 : i64} {
  func.func @attention_res_kernel(%arg0: i32, %arg1: i32, %arg2: memref<1x16x256xf32, #tpu.memory_space<vmem>>, %arg3: memref<1x16x256xf32, #tpu.memory_space<vmem>>, %arg4: memref<256x256xbf16, #tpu.memory_space<vmem>>, %arg5: memref<1x256xf32, #tpu.memory_space<vmem>>, %arg6: memref<256x256xbf16, #tpu.memory_space<vmem>>, %arg7: memref<1x256xf32, #tpu.memory_space<vmem>>, %arg8: memref<256x256xbf16, #tpu.memory_space<vmem>>, %arg9: memref<1x256xf32, #tpu.memory_space<vmem>>, %arg10: memref<256x256xbf16, #tpu.memory_space<vmem>>, %arg11: memref<1x256xf32, #tpu.memory_space<vmem>>, %arg12: memref<256x256xbf16, #tpu.memory_space<vmem>>, %arg13: memref<1x256xf32, #tpu.memory_space<vmem>>, %arg14: memref<256x256xbf16, #tpu.memory_space<vmem>>, %arg15: memref<1x256xf32, #tpu.memory_space<vmem>>, %arg16: memref<1x256xf32, #tpu.memory_space<vmem>>, %arg17: memref<1x256xf32, #tpu.memory_space<vmem>>, %arg18: memref<256x1024xbf16, #tpu.memory_space<vmem>>, %arg19: memref<1x1024xf32, #tpu.memory_space<vmem>>, %arg20: memref<1024x256xbf16, #tpu.memory_space<vmem>>, %arg21: memref<1x256xf32, #tpu.memory_space<vmem>>, %arg22: memref<1x256xf32, #tpu.memory_space<vmem>>, %arg23: memref<1x256xf32, #tpu.memory_space<vmem>>, %arg24: memref<1x16x256xf32, #tpu.memory_space<vmem>>, %arg25: memref<16x256xbf16, #tpu.memory_space<vmem>>, %arg26: memref<16x256xbf16, #tpu.memory_space<vmem>>, %arg27: memref<16x256xbf16, #tpu.memory_space<vmem>>) attributes {dimension_semantics = [#tpu.dimension_semantics<parallel>, #tpu.dimension_semantics<arbitrary>], iteration_bounds = array<i64: 2, 1>, scalar_prefetch = 0 : i64, scratch_operands = 3 : i64, tpu.core_type = #tpu.core_type<tc>, window_params = [{transform_indices = @transform_0, window_bounds = array<i64: 1, 16, 256>}, {transform_indices = @transform_1, window_bounds = array<i64: 1, 16, 256>}, {pipeline_mode = #tpu.pipeline_mode<synchronous>, transform_indices = @transform_2, window_bounds = array<i64: 256, 256>}, {pipeline_mode = #tpu.pipeline_mode<synchronous>, transform_indices = @transform_3, window_bounds = array<i64: 1, 256>}, {pipeline_mode = #tpu.pipeline_mode<synchronous>, transform_indices = @transform_4, window_bounds = array<i64: 256, 256>}, {pipeline_mode = #tpu.pipeline_mode<synchronous>, transform_indices = @transform_5, window_bounds = array<i64: 1, 256>}, {pipeline_mode = #tpu.pipeline_mode<synchronous>, transform_indices = @transform_6, window_bounds = array<i64: 256, 256>}, {pipeline_mode = #tpu.pipeline_mode<synchronous>, transform_indices = @transform_7, window_bounds = array<i64: 1, 256>}, {pipeline_mode = #tpu.pipeline_mode<synchronous>, transform_indices = @transform_8, window_bounds = array<i64: 256, 256>}, {pipeline_mode = #tpu.pipeline_mode<synchronous>, transform_indices = @transform_9, window_bounds = array<i64: 1, 256>}, {pipeline_mode = #tpu.pipeline_mode<synchronous>, transform_indices = @transform_10, window_bounds = array<i64: 256, 256>}, {pipeline_mode = #tpu.pipeline_mode<synchronous>, transform_indices = @transform_11, window_bounds = array<i64: 1, 256>}, {pipeline_mode = #tpu.pipeline_mode<synchronous>, transform_indices = @transform_12, window_bounds = array<i64: 256, 256>}, {pipeline_mode = #tpu.pipeline_mode<synchronous>, transform_indices = @transform_13, window_bounds = array<i64: 1, 256>}, {pipeline_mode = #tpu.pipeline_mode<synchronous>, transform_indices = @transform_14, window_bounds = array<i64: 1, 256>}, {pipeline_mode = #tpu.pipeline_mode<synchronous>, transform_indices = @transform_15, window_bounds = array<i64: 1, 256>}, {pipeline_mode = #tpu.pipeline_mode<synchronous>, transform_indices = @transform_16, window_bounds = array<i64: 256, 1024>}, {pipeline_mode = #tpu.pipeline_mode<synchronous>, transform_indices = @transform_17, window_bounds = array<i64: 1, 1024>}, {pipeline_mode = #tpu.pipeline_mode<synchronous>, transform_indices = @transform_18, window_bounds = array<i64: 1024, 256>}, {pipeline_mode = #tpu.pipeline_mode<synchronous>, transform_indices = @transform_19, window_bounds = array<i64: 1, 256>}, {pipeline_mode = #tpu.pipeline_mode<synchronous>, transform_indices = @transform_20, window_bounds = array<i64: 1, 256>}, {pipeline_mode = #tpu.pipeline_mode<synchronous>, transform_indices = @transform_21, window_bounds = array<i64: 1, 256>}, {transform_indices = @transform_22, window_bounds = array<i64: 1, 16, 256>}]} {
    %c0_i32 = arith.constant 0 : i32
    %0 = arith.cmpi eq, %arg1, %c0_i32 : i32
    %1 = arith.extui %0 : i1 to i32
    %c0_i32_0 = arith.constant 0 : i32
    %2 = arith.cmpi ne, %1, %c0_i32_0 : i32
    scf.if %2 {
      %c0_70 = arith.constant 0 : index
      %c0_71 = arith.constant 0 : index
      %c0_72 = arith.constant 0 : index
      %142 = vector.load %arg3[%c0_70, %c0_71, %c0_72] : memref<1x16x256xf32, #tpu.memory_space<vmem>>, vector<1x16x256xf32>
      %143 = vector.shape_cast %142 : vector<1x16x256xf32> to vector<16x256xf32>
      %144 = arith.truncf %143 : vector<16x256xf32> to vector<16x256xbf16>
      %c0_73 = arith.constant 0 : index
      %c0_74 = arith.constant 0 : index
      %145 = vector.load %arg6[%c0_73, %c0_74] : memref<256x256xbf16, #tpu.memory_space<vmem>>, vector<256x256xbf16>
      %cst_75 = arith.constant dense<0.000000e+00> : vector<16x256xf32>
      %146 = tpu.matmul %144, %145, %cst_75 {dimension_numbers = #tpu.dot_dimension_numbers<[1], [0], [0], [1], [0, 0, 1, 1], [], []>} : vector<16x256xbf16>, vector<256x256xbf16>, vector<16x256xf32> -> vector<16x256xf32>
      %c0_76 = arith.constant 0 : index
      %c0_77 = arith.constant 0 : index
      %147 = vector.load %arg7[%c0_76, %c0_77] : memref<1x256xf32, #tpu.memory_space<vmem>>, vector<1x256xf32>
      %148 = vector.broadcast %147 : vector<1x256xf32> to vector<16x256xf32>
      %149 = arith.addf %146, %148 : vector<16x256xf32>
      %150 = arith.truncf %149 : vector<16x256xf32> to vector<16x256xbf16>
      %c0_78 = arith.constant 0 : index
      %c0_79 = arith.constant 0 : index
      %151 = vector.load %arg10[%c0_78, %c0_79] : memref<256x256xbf16, #tpu.memory_space<vmem>>, vector<256x256xbf16>
      %cst_80 = arith.constant dense<0.000000e+00> : vector<16x256xf32>
      %152 = tpu.matmul %150, %151, %cst_80 {dimension_numbers = #tpu.dot_dimension_numbers<[1], [0], [0], [1], [0, 0, 1, 1], [], []>} : vector<16x256xbf16>, vector<256x256xbf16>, vector<16x256xf32> -> vector<16x256xf32>
      %c0_81 = arith.constant 0 : index
      %c0_82 = arith.constant 0 : index
      %153 = vector.load %arg11[%c0_81, %c0_82] : memref<1x256xf32, #tpu.memory_space<vmem>>, vector<1x256xf32>
      %154 = vector.broadcast %153 : vector<1x256xf32> to vector<16x256xf32>
      %155 = arith.addf %152, %154 : vector<16x256xf32>
      %c0_83 = arith.constant 0 : index
      %c0_84 = arith.constant 0 : index
      %156 = vector.load %arg12[%c0_83, %c0_84] : memref<256x256xbf16, #tpu.memory_space<vmem>>, vector<256x256xbf16>
      %cst_85 = arith.constant dense<0.000000e+00> : vector<16x256xf32>
      %157 = tpu.matmul %150, %156, %cst_85 {dimension_numbers = #tpu.dot_dimension_numbers<[1], [0], [0], [1], [0, 0, 1, 1], [], []>} : vector<16x256xbf16>, vector<256x256xbf16>, vector<16x256xf32> -> vector<16x256xf32>
      %c0_86 = arith.constant 0 : index
      %c0_87 = arith.constant 0 : index
      %158 = vector.load %arg13[%c0_86, %c0_87] : memref<1x256xf32, #tpu.memory_space<vmem>>, vector<1x256xf32>
      %159 = vector.broadcast %158 : vector<1x256xf32> to vector<16x256xf32>
      %160 = arith.addf %157, %159 : vector<16x256xf32>
      %161 = arith.truncf %155 : vector<16x256xf32> to vector<16x256xbf16>
      %c0_88 = arith.constant 0 : index
      %c0_89 = arith.constant 0 : index
      %162 = vector.load %arg25[%c0_88, %c0_89] : memref<16x256xbf16, #tpu.memory_space<vmem>>, vector<16x256xbf16>
      tpu.vector_store %arg25[%c0_88, %c0_89], %161 {strides = array<i32>} : memref<16x256xbf16, #tpu.memory_space<vmem>>, vector<16x256xbf16>,
      %163 = arith.truncf %160 : vector<16x256xf32> to vector<16x256xbf16>
      %c0_90 = arith.constant 0 : index
      %c0_91 = arith.constant 0 : index
      %164 = vector.load %arg26[%c0_90, %c0_91] : memref<16x256xbf16, #tpu.memory_space<vmem>>, vector<16x256xbf16>
      tpu.vector_store %arg26[%c0_90, %c0_91], %163 {strides = array<i32>} : memref<16x256xbf16, #tpu.memory_space<vmem>>, vector<16x256xbf16>,
    } else {
    }
    %c0 = arith.constant 0 : index
    %c0_1 = arith.constant 0 : index
    %c0_2 = arith.constant 0 : index
    %3 = vector.load %arg2[%c0, %c0_1, %c0_2] : memref<1x16x256xf32, #tpu.memory_space<vmem>>, vector<1x16x256xf32>
    %4 = vector.shape_cast %3 : vector<1x16x256xf32> to vector<16x256xf32>
    %5 = tpu.iota {dimensions = array<i32: 1>} : vector<1x256xi32>
    %c200_i32 = arith.constant 200 : i32
    %6 = vector.broadcast %c200_i32 : i32 to vector<1x256xi32>
    %7 = arith.cmpi slt, %5, %6 : vector<1x256xi32>
    %8 = arith.extui %7 : vector<1x256xi1> to vector<1x256xi32>
    %9 = arith.sitofp %8 : vector<1x256xi32> to vector<1x256xf32>
    %10 = arith.truncf %4 : vector<16x256xf32> to vector<16x256xbf16>
    %c0_3 = arith.constant 0 : index
    %c0_4 = arith.constant 0 : index
    %11 = vector.load %arg4[%c0_3, %c0_4] : memref<256x256xbf16, #tpu.memory_space<vmem>>, vector<256x256xbf16>
    %cst = arith.constant dense<0.000000e+00> : vector<16x256xf32>
    %12 = tpu.matmul %10, %11, %cst {dimension_numbers = #tpu.dot_dimension_numbers<[1], [0], [0], [1], [0, 0, 1, 1], [], []>} : vector<16x256xbf16>, vector<256x256xbf16>, vector<16x256xf32> -> vector<16x256xf32>
    %c0_5 = arith.constant 0 : index
    %c0_6 = arith.constant 0 : index
    %13 = vector.load %arg5[%c0_5, %c0_6] : memref<1x256xf32, #tpu.memory_space<vmem>>, vector<1x256xf32>
    %14 = vector.broadcast %13 : vector<1x256xf32> to vector<16x256xf32>
    %15 = arith.addf %12, %14 : vector<16x256xf32>
    %16 = arith.truncf %15 : vector<16x256xf32> to vector<16x256xbf16>
    %c0_7 = arith.constant 0 : index
    %c0_8 = arith.constant 0 : index
    %17 = vector.load %arg8[%c0_7, %c0_8] : memref<256x256xbf16, #tpu.memory_space<vmem>>, vector<256x256xbf16>
    %cst_9 = arith.constant dense<0.000000e+00> : vector<16x256xf32>
    %18 = tpu.matmul %16, %17, %cst_9 {dimension_numbers = #tpu.dot_dimension_numbers<[1], [0], [0], [1], [0, 0, 1, 1], [], []>} : vector<16x256xbf16>, vector<256x256xbf16>, vector<16x256xf32> -> vector<16x256xf32>
    %c0_10 = arith.constant 0 : index
    %c0_11 = arith.constant 0 : index
    %19 = vector.load %arg9[%c0_10, %c0_11] : memref<1x256xf32, #tpu.memory_space<vmem>>, vector<1x256xf32>
    %20 = vector.broadcast %19 : vector<1x256xf32> to vector<16x256xf32>
    %21 = arith.addf %18, %20 : vector<16x256xf32>
    %cst_12 = arith.constant 0.0883883461 : f32
    %22 = vector.broadcast %cst_12 : f32 to vector<16x256xf32>
    %23 = arith.mulf %21, %22 : vector<16x256xf32>
    %24 = arith.truncf %23 : vector<16x256xf32> to vector<16x256xbf16>
    %c0_13 = arith.constant 0 : index
    %c0_14 = arith.constant 0 : index
    %25 = vector.load %arg25[%c0_13, %c0_14] : memref<16x256xbf16, #tpu.memory_space<vmem>>, vector<16x256xbf16>
    %c0_15 = arith.constant 0 : index
    %c0_16 = arith.constant 0 : index
    %26 = vector.load %arg26[%c0_15, %c0_16] : memref<16x256xbf16, #tpu.memory_space<vmem>>, vector<16x256xbf16>
    %27 = vector.extract_strided_slice %24 {offsets = [0, 0], sizes = [16, 128], strides = [1, 1]} : vector<16x256xbf16> to vector<16x128xbf16>
    %28 = vector.extract_strided_slice %25 {offsets = [0, 0], sizes = [16, 128], strides = [1, 1]} : vector<16x256xbf16> to vector<16x128xbf16>
    %cst_17 = arith.constant dense<0.000000e+00> : vector<16x16xf32>
    %29 = tpu.matmul %27, %28, %cst_17 {dimension_numbers = #tpu.dot_dimension_numbers<[1], [1], [0], [0], [0, 0, 1, 0], [], []>} : vector<16x128xbf16>, vector<16x128xbf16>, vector<16x16xf32> -> vector<16x16xf32>
    %cst_18 = arith.constant dense<0xFF800000> : vector<16xf32>
    %30 = vector.multi_reduction <maximumf>, %29, %cst_18 [1] : vector<16x16xf32> to vector<16xf32>
    %31 = vector.shape_cast %30 : vector<16xf32> to vector<16x1xf32>
    %32 = vector.broadcast %31 : vector<16x1xf32> to vector<16x16xf32>
    %33 = arith.subf %29, %32 : vector<16x16xf32>
    %34 = math.exp %33 : vector<16x16xf32>
    %cst_19 = arith.constant dense<0.000000e+00> : vector<16xf32>
    %35 = vector.multi_reduction <add>, %34, %cst_19 [1] : vector<16x16xf32> to vector<16xf32>
    %36 = vector.shape_cast %35 : vector<16xf32> to vector<16x1xf32>
    %37 = vector.broadcast %36 : vector<16x1xf32> to vector<16x16xf32>
    %38 = arith.divf %34, %37 : vector<16x16xf32>
    %39 = arith.truncf %38 : vector<16x16xf32> to vector<16x16xbf16>
    %40 = vector.extract_strided_slice %26 {offsets = [0, 0], sizes = [16, 128], strides = [1, 1]} : vector<16x256xbf16> to vector<16x128xbf16>
    %cst_20 = arith.constant dense<0.000000e+00> : vector<16x128xf32>
    %41 = tpu.matmul %39, %40, %cst_20 {dimension_numbers = #tpu.dot_dimension_numbers<[1], [0], [0], [1], [0, 0, 1, 1], [], []>} : vector<16x16xbf16>, vector<16x128xbf16>, vector<16x128xf32> -> vector<16x128xf32>
    %42 = arith.truncf %41 : vector<16x128xf32> to vector<16x128xbf16>
    %c0_21 = arith.constant 0 : index
    %c0_22 = arith.constant 0 : index
    %43 = vector.load %arg27[%c0_21, %c0_22] : memref<16x256xbf16, #tpu.memory_space<vmem>>, vector<16x128xbf16>
    tpu.vector_store %arg27[%c0_21, %c0_22], %42 {strides = array<i32>} : memref<16x256xbf16, #tpu.memory_space<vmem>>, vector<16x128xbf16>,
    %44 = vector.extract_strided_slice %24 {offsets = [0, 128], sizes = [16, 128], strides = [1, 1]} : vector<16x256xbf16> to vector<16x128xbf16>
    %45 = vector.extract_strided_slice %25 {offsets = [0, 128], sizes = [16, 128], strides = [1, 1]} : vector<16x256xbf16> to vector<16x128xbf16>
    %cst_23 = arith.constant dense<0.000000e+00> : vector<16x16xf32>
    %46 = tpu.matmul %44, %45, %cst_23 {dimension_numbers = #tpu.dot_dimension_numbers<[1], [1], [0], [0], [0, 0, 1, 0], [], []>} : vector<16x128xbf16>, vector<16x128xbf16>, vector<16x16xf32> -> vector<16x16xf32>
    %cst_24 = arith.constant dense<0xFF800000> : vector<16xf32>
    %47 = vector.multi_reduction <maximumf>, %46, %cst_24 [1] : vector<16x16xf32> to vector<16xf32>
    %48 = vector.shape_cast %47 : vector<16xf32> to vector<16x1xf32>
    %49 = vector.broadcast %48 : vector<16x1xf32> to vector<16x16xf32>
    %50 = arith.subf %46, %49 : vector<16x16xf32>
    %51 = math.exp %50 : vector<16x16xf32>
    %cst_25 = arith.constant dense<0.000000e+00> : vector<16xf32>
    %52 = vector.multi_reduction <add>, %51, %cst_25 [1] : vector<16x16xf32> to vector<16xf32>
    %53 = vector.shape_cast %52 : vector<16xf32> to vector<16x1xf32>
    %54 = vector.broadcast %53 : vector<16x1xf32> to vector<16x16xf32>
    %55 = arith.divf %51, %54 : vector<16x16xf32>
    %56 = arith.truncf %55 : vector<16x16xf32> to vector<16x16xbf16>
    %57 = vector.extract_strided_slice %26 {offsets = [0, 128], sizes = [16, 128], strides = [1, 1]} : vector<16x256xbf16> to vector<16x128xbf16>
    %cst_26 = arith.constant dense<0.000000e+00> : vector<16x128xf32>
    %58 = tpu.matmul %56, %57, %cst_26 {dimension_numbers = #tpu.dot_dimension_numbers<[1], [0], [0], [1], [0, 0, 1, 1], [], []>} : vector<16x16xbf16>, vector<16x128xbf16>, vector<16x128xf32> -> vector<16x128xf32>
    %59 = arith.truncf %58 : vector<16x128xf32> to vector<16x128xbf16>
    %c0_27 = arith.constant 0 : index
    %c128 = arith.constant 128 : index
    %60 = vector.load %arg27[%c0_27, %c128] : memref<16x256xbf16, #tpu.memory_space<vmem>>, vector<16x128xbf16>
    tpu.vector_store %arg27[%c0_27, %c128], %59 {strides = array<i32>} : memref<16x256xbf16, #tpu.memory_space<vmem>>, vector<16x128xbf16>,
    %c0_28 = arith.constant 0 : index
    %c0_29 = arith.constant 0 : index
    %61 = vector.load %arg27[%c0_28, %c0_29] : memref<16x256xbf16, #tpu.memory_space<vmem>>, vector<16x256xbf16>
    %c0_30 = arith.constant 0 : index
    %c0_31 = arith.constant 0 : index
    %62 = vector.load %arg14[%c0_30, %c0_31] : memref<256x256xbf16, #tpu.memory_space<vmem>>, vector<256x256xbf16>
    %cst_32 = arith.constant dense<0.000000e+00> : vector<16x256xf32>
    %63 = tpu.matmul %61, %62, %cst_32 {dimension_numbers = #tpu.dot_dimension_numbers<[1], [0], [0], [1], [0, 0, 1, 1], [], []>} : vector<16x256xbf16>, vector<256x256xbf16>, vector<16x256xf32> -> vector<16x256xf32>
    %c0_33 = arith.constant 0 : index
    %c0_34 = arith.constant 0 : index
    %64 = vector.load %arg15[%c0_33, %c0_34] : memref<1x256xf32, #tpu.memory_space<vmem>>, vector<1x256xf32>
    %65 = vector.broadcast %64 : vector<1x256xf32> to vector<16x256xf32>
    %66 = arith.addf %63, %65 : vector<16x256xf32>
    %67 = arith.addf %4, %66 : vector<16x256xf32>
    %c0_35 = arith.constant 0 : index
    %c0_36 = arith.constant 0 : index
    %68 = vector.load %arg16[%c0_35, %c0_36] : memref<1x256xf32, #tpu.memory_space<vmem>>, vector<1x256xf32>
    %c0_37 = arith.constant 0 : index
    %c0_38 = arith.constant 0 : index
    %69 = vector.load %arg17[%c0_37, %c0_38] : memref<1x256xf32, #tpu.memory_space<vmem>>, vector<1x256xf32>
    %cst_39 = arith.constant dense<0.000000e+00> : vector<16xf32>
    %70 = vector.multi_reduction <add>, %67, %cst_39 [1] : vector<16x256xf32> to vector<16xf32>
    %71 = vector.shape_cast %70 : vector<16xf32> to vector<16x1xf32>
    %cst_40 = arith.constant 5.000000e-03 : f32
    %72 = vector.broadcast %cst_40 : f32 to vector<16x1xf32>
    %73 = arith.mulf %71, %72 : vector<16x1xf32>
    %74 = vector.broadcast %73 : vector<16x1xf32> to vector<16x256xf32>
    %75 = arith.subf %67, %74 : vector<16x256xf32>
    %76 = vector.broadcast %9 : vector<1x256xf32> to vector<16x256xf32>
    %77 = arith.mulf %75, %76 : vector<16x256xf32>
    %78 = arith.mulf %77, %77 : vector<16x256xf32>
    %cst_41 = arith.constant dense<0.000000e+00> : vector<16xf32>
    %79 = vector.multi_reduction <add>, %78, %cst_41 [1] : vector<16x256xf32> to vector<16xf32>
    %80 = vector.shape_cast %79 : vector<16xf32> to vector<16x1xf32>
    %cst_42 = arith.constant 5.000000e-03 : f32
    %81 = vector.broadcast %cst_42 : f32 to vector<16x1xf32>
    %82 = arith.mulf %80, %81 : vector<16x1xf32>
    %cst_43 = arith.constant 9.99999974E-6 : f32
    %83 = vector.broadcast %cst_43 : f32 to vector<16x1xf32>
    %84 = arith.addf %82, %83 : vector<16x1xf32>
    %85 = math.rsqrt %84 : vector<16x1xf32>
    %86 = vector.broadcast %85 : vector<16x1xf32> to vector<16x256xf32>
    %87 = arith.mulf %75, %86 : vector<16x256xf32>
    %88 = vector.broadcast %68 : vector<1x256xf32> to vector<16x256xf32>
    %89 = arith.mulf %87, %88 : vector<16x256xf32>
    %90 = vector.broadcast %69 : vector<1x256xf32> to vector<16x256xf32>
    %91 = arith.addf %89, %90 : vector<16x256xf32>
    %92 = arith.truncf %91 : vector<16x256xf32> to vector<16x256xbf16>
    %cst_44 = arith.constant 0.000000e+00 : f32
    %93 = vector.broadcast %cst_44 : f32 to vector<16x256xf32>
    %c0_45 = arith.constant 0 : index
    %c0_46 = arith.constant 0 : index
    %94 = vector.load %arg18[%c0_45, %c0_46] : memref<256x1024xbf16, #tpu.memory_space<vmem>>, vector<256x1024xbf16>
    %cst_47 = arith.constant dense<0.000000e+00> : vector<16x1024xf32>
    %95 = tpu.matmul %92, %94, %cst_47 {dimension_numbers = #tpu.dot_dimension_numbers<[1], [0], [0], [1], [0, 0, 1, 1], [], []>} : vector<16x256xbf16>, vector<256x1024xbf16>, vector<16x1024xf32> -> vector<16x1024xf32>
    %c0_48 = arith.constant 0 : index
    %c0_49 = arith.constant 0 : index
    %96 = vector.load %arg19[%c0_48, %c0_49] : memref<1x1024xf32, #tpu.memory_space<vmem>>, vector<1x1024xf32>
    %97 = vector.broadcast %96 : vector<1x1024xf32> to vector<16x1024xf32>
    %98 = arith.addf %95, %97 : vector<16x1024xf32>
    %cst_50 = arith.constant 5.000000e-01 : f32
    %99 = vector.broadcast %cst_50 : f32 to vector<16x1024xf32>
    %100 = arith.mulf %99, %98 : vector<16x1024xf32>
    %cst_51 = arith.constant 0.707106769 : f32
    %101 = vector.broadcast %cst_51 : f32 to vector<16x1024xf32>
    %102 = arith.mulf %98, %101 : vector<16x1024xf32>
    %103 = math.erf %102 : vector<16x1024xf32>
    %cst_52 = arith.constant 1.000000e+00 : f32
    %104 = vector.broadcast %cst_52 : f32 to vector<16x1024xf32>
    %105 = arith.addf %104, %103 : vector<16x1024xf32>
    %106 = arith.mulf %100, %105 : vector<16x1024xf32>
    %107 = arith.truncf %106 : vector<16x1024xf32> to vector<16x1024xbf16>
    %c0_53 = arith.constant 0 : index
    %c0_54 = arith.constant 0 : index
    %108 = vector.load %arg20[%c0_53, %c0_54] : memref<1024x256xbf16, #tpu.memory_space<vmem>>, vector<1024x256xbf16>
    %cst_55 = arith.constant dense<0.000000e+00> : vector<16x256xf32>
    %109 = tpu.matmul %107, %108, %cst_55 {dimension_numbers = #tpu.dot_dimension_numbers<[1], [0], [0], [1], [0, 0, 1, 1], [], []>} : vector<16x1024xbf16>, vector<1024x256xbf16>, vector<16x256xf32> -> vector<16x256xf32>
    %110 = arith.addf %93, %109 : vector<16x256xf32>
    %111 = arith.addf %91, %110 : vector<16x256xf32>
    %c0_56 = arith.constant 0 : index
    %c0_57 = arith.constant 0 : index
    %112 = vector.load %arg21[%c0_56, %c0_57] : memref<1x256xf32, #tpu.memory_space<vmem>>, vector<1x256xf32>
    %113 = vector.broadcast %112 : vector<1x256xf32> to vector<16x256xf32>
    %114 = arith.addf %111, %113 : vector<16x256xf32>
    %c0_58 = arith.constant 0 : index
    %c0_59 = arith.constant 0 : index
    %115 = vector.load %arg22[%c0_58, %c0_59] : memref<1x256xf32, #tpu.memory_space<vmem>>, vector<1x256xf32>
    %c0_60 = arith.constant 0 : index
    %c0_61 = arith.constant 0 : index
    %116 = vector.load %arg23[%c0_60, %c0_61] : memref<1x256xf32, #tpu.memory_space<vmem>>, vector<1x256xf32>
    %cst_62 = arith.constant dense<0.000000e+00> : vector<16xf32>
    %117 = vector.multi_reduction <add>, %114, %cst_62 [1] : vector<16x256xf32> to vector<16xf32>
    %118 = vector.shape_cast %117 : vector<16xf32> to vector<16x1xf32>
    %cst_63 = arith.constant 5.000000e-03 : f32
    %119 = vector.broadcast %cst_63 : f32 to vector<16x1xf32>
    %120 = arith.mulf %118, %119 : vector<16x1xf32>
    %121 = vector.broadcast %120 : vector<16x1xf32> to vector<16x256xf32>
    %122 = arith.subf %114, %121 : vector<16x256xf32>
    %123 = vector.broadcast %9 : vector<1x256xf32> to vector<16x256xf32>
    %124 = arith.mulf %122, %123 : vector<16x256xf32>
    %125 = arith.mulf %124, %124 : vector<16x256xf32>
    %cst_64 = arith.constant dense<0.000000e+00> : vector<16xf32>
    %126 = vector.multi_reduction <add>, %125, %cst_64 [1] : vector<16x256xf32> to vector<16xf32>
    %127 = vector.shape_cast %126 : vector<16xf32> to vector<16x1xf32>
    %cst_65 = arith.constant 5.000000e-03 : f32
    %128 = vector.broadcast %cst_65 : f32 to vector<16x1xf32>
    %129 = arith.mulf %127, %128 : vector<16x1xf32>
    %cst_66 = arith.constant 9.99999974E-6 : f32
    %130 = vector.broadcast %cst_66 : f32 to vector<16x1xf32>
    %131 = arith.addf %129, %130 : vector<16x1xf32>
    %132 = math.rsqrt %131 : vector<16x1xf32>
    %133 = vector.broadcast %132 : vector<16x1xf32> to vector<16x256xf32>
    %134 = arith.mulf %122, %133 : vector<16x256xf32>
    %135 = vector.broadcast %115 : vector<1x256xf32> to vector<16x256xf32>
    %136 = arith.mulf %134, %135 : vector<16x256xf32>
    %137 = vector.broadcast %116 : vector<1x256xf32> to vector<16x256xf32>
    %138 = arith.addf %136, %137 : vector<16x256xf32>
    %c0_67 = arith.constant 0 : index
    %c0_68 = arith.constant 0 : index
    %c0_69 = arith.constant 0 : index
    %139 = vector.load %arg24[%c0_67, %c0_68, %c0_69] : memref<1x16x256xf32, #tpu.memory_space<vmem>>, vector<1x16x256xf32>
    %140 = vector.shape_cast %139 : vector<1x16x256xf32> to vector<16x256xf32>
    %141 = vector.shape_cast %138 : vector<16x256xf32> to vector<1x16x256xf32>
    tpu.vector_store %arg24[%c0_67, %c0_68, %c0_69], %141 {strides = array<i32>} : memref<1x16x256xf32, #tpu.memory_space<vmem>>, vector<1x16x256xf32>,
    return
  }
  func.func @transform_0(%arg0: i32, %arg1: i32) -> (i32, i32, i32) {
    %c0_i32 = arith.constant 0 : i32
    %c0_i32_0 = arith.constant 0 : i32
    return %arg0, %arg1, %c0_i32 : i32, i32, i32
  }
  func.func @transform_1(%arg0: i32, %arg1: i32) -> (i32, i32, i32) {
    %c0_i32 = arith.constant 0 : i32
    %c0_i32_0 = arith.constant 0 : i32
    %c0_i32_1 = arith.constant 0 : i32
    return %arg0, %c0_i32, %c0_i32_0 : i32, i32, i32
  }
  func.func @transform_2(%arg0: i32, %arg1: i32) -> (i32, i32) {
    %c0_i32 = arith.constant 0 : i32
    %c0_i32_0 = arith.constant 0 : i32
    %c0_i32_1 = arith.constant 0 : i32
    return %c0_i32, %c0_i32_0 : i32, i32
  }
  func.func @transform_3(%arg0: i32, %arg1: i32) -> (i32, i32) {
    %c0_i32 = arith.constant 0 : i32
    %c0_i32_0 = arith.constant 0 : i32
    %c0_i32_1 = arith.constant 0 : i32
    return %c0_i32, %c0_i32_0 : i32, i32
  }
  func.func @transform_4(%arg0: i32, %arg1: i32) -> (i32, i32) {
    %c0_i32 = arith.constant 0 : i32
    %c0_i32_0 = arith.constant 0 : i32
    %c0_i32_1 = arith.constant 0 : i32
    return %c0_i32, %c0_i32_0 : i32, i32
  }
  func.func @transform_5(%arg0: i32, %arg1: i32) -> (i32, i32) {
    %c0_i32 = arith.constant 0 : i32
    %c0_i32_0 = arith.constant 0 : i32
    %c0_i32_1 = arith.constant 0 : i32
    return %c0_i32, %c0_i32_0 : i32, i32
  }
  func.func @transform_6(%arg0: i32, %arg1: i32) -> (i32, i32) {
    %c0_i32 = arith.constant 0 : i32
    %c0_i32_0 = arith.constant 0 : i32
    %c0_i32_1 = arith.constant 0 : i32
    return %c0_i32, %c0_i32_0 : i32, i32
  }
  func.func @transform_7(%arg0: i32, %arg1: i32) -> (i32, i32) {
    %c0_i32 = arith.constant 0 : i32
    %c0_i32_0 = arith.constant 0 : i32
    %c0_i32_1 = arith.constant 0 : i32
    return %c0_i32, %c0_i32_0 : i32, i32
  }
  func.func @transform_8(%arg0: i32, %arg1: i32) -> (i32, i32) {
    %c0_i32 = arith.constant 0 : i32
    %c0_i32_0 = arith.constant 0 : i32
    %c0_i32_1 = arith.constant 0 : i32
    return %c0_i32, %c0_i32_0 : i32, i32
  }
  func.func @transform_9(%arg0: i32, %arg1: i32) -> (i32, i32) {
    %c0_i32 = arith.constant 0 : i32
    %c0_i32_0 = arith.constant 0 : i32
    %c0_i32_1 = arith.constant 0 : i32
    return %c0_i32, %c0_i32_0 : i32, i32
  }
  func.func @transform_10(%arg0: i32, %arg1: i32) -> (i32, i32) {
    %c0_i32 = arith.constant 0 : i32
    %c0_i32_0 = arith.constant 0 : i32
    %c0_i32_1 = arith.constant 0 : i32
    return %c0_i32, %c0_i32_0 : i32, i32
  }
  func.func @transform_11(%arg0: i32, %arg1: i32) -> (i32, i32) {
    %c0_i32 = arith.constant 0 : i32
    %c0_i32_0 = arith.constant 0 : i32
    %c0_i32_1 = arith.constant 0 : i32
    return %c0_i32, %c0_i32_0 : i32, i32
  }
  func.func @transform_12(%arg0: i32, %arg1: i32) -> (i32, i32) {
    %c0_i32 = arith.constant 0 : i32
    %c0_i32_0 = arith.constant 0 : i32
    %c0_i32_1 = arith.constant 0 : i32
    return %c0_i32, %c0_i32_0 : i32, i32
  }
  func.func @transform_13(%arg0: i32, %arg1: i32) -> (i32, i32) {
    %c0_i32 = arith.constant 0 : i32
    %c0_i32_0 = arith.constant 0 : i32
    %c0_i32_1 = arith.constant 0 : i32
    return %c0_i32, %c0_i32_0 : i32, i32
  }
  func.func @transform_14(%arg0: i32, %arg1: i32) -> (i32, i32) {
    %c0_i32 = arith.constant 0 : i32
    %c0_i32_0 = arith.constant 0 : i32
    %c0_i32_1 = arith.constant 0 : i32
    return %c0_i32, %c0_i32_0 : i32, i32
  }
  func.func @transform_15(%arg0: i32, %arg1: i32) -> (i32, i32) {
    %c0_i32 = arith.constant 0 : i32
    %c0_i32_0 = arith.constant 0 : i32
    %c0_i32_1 = arith.constant 0 : i32
    return %c0_i32, %c0_i32_0 : i32, i32
  }
  func.func @transform_16(%arg0: i32, %arg1: i32) -> (i32, i32) {
    %c0_i32 = arith.constant 0 : i32
    %c0_i32_0 = arith.constant 0 : i32
    %c0_i32_1 = arith.constant 0 : i32
    return %c0_i32, %c0_i32_0 : i32, i32
  }
  func.func @transform_17(%arg0: i32, %arg1: i32) -> (i32, i32) {
    %c0_i32 = arith.constant 0 : i32
    %c0_i32_0 = arith.constant 0 : i32
    %c0_i32_1 = arith.constant 0 : i32
    return %c0_i32, %c0_i32_0 : i32, i32
  }
  func.func @transform_18(%arg0: i32, %arg1: i32) -> (i32, i32) {
    %c0_i32 = arith.constant 0 : i32
    %c0_i32_0 = arith.constant 0 : i32
    %c0_i32_1 = arith.constant 0 : i32
    return %c0_i32, %c0_i32_0 : i32, i32
  }
  func.func @transform_19(%arg0: i32, %arg1: i32) -> (i32, i32) {
    %c0_i32 = arith.constant 0 : i32
    %c0_i32_0 = arith.constant 0 : i32
    %c0_i32_1 = arith.constant 0 : i32
    return %c0_i32, %c0_i32_0 : i32, i32
  }
  func.func @transform_20(%arg0: i32, %arg1: i32) -> (i32, i32) {
    %c0_i32 = arith.constant 0 : i32
    %c0_i32_0 = arith.constant 0 : i32
    %c0_i32_1 = arith.constant 0 : i32
    return %c0_i32, %c0_i32_0 : i32, i32
  }
  func.func @transform_21(%arg0: i32, %arg1: i32) -> (i32, i32) {
    %c0_i32 = arith.constant 0 : i32
    %c0_i32_0 = arith.constant 0 : i32
    %c0_i32_1 = arith.constant 0 : i32
    return %c0_i32, %c0_i32_0 : i32, i32
  }
  func.func @transform_22(%arg0: i32, %arg1: i32) -> (i32, i32, i32) {
    %c0_i32 = arith.constant 0 : i32
    %c0_i32_0 = arith.constant 0 : i32
    return %arg0, %arg1, %c0_i32 : i32, i32, i32
  }
}

module attributes {stable_mosaic.version = 11 : i64} {
  func.func @attention_res_kernel(%arg0: i32, %arg1: i32, %arg2: memref<1x16x256xf32, #tpu.memory_space<vmem>>, %arg3: memref<1x16x256xf32, #tpu.memory_space<vmem>>, %arg4: memref<256x256xbf16, #tpu.memory_space<vmem>>, %arg5: memref<1x256xf32, #tpu.memory_space<vmem>>, %arg6: memref<256x256xbf16, #tpu.memory_space<vmem>>, %arg7: memref<1x256xf32, #tpu.memory_space<vmem>>, %arg8: memref<256x256xbf16, #tpu.memory_space<vmem>>, %arg9: memref<1x256xf32, #tpu.memory_space<vmem>>, %arg10: memref<256x256xbf16, #tpu.memory_space<vmem>>, %arg11: memref<1x256xf32, #tpu.memory_space<vmem>>, %arg12: memref<256x256xbf16, #tpu.memory_space<vmem>>, %arg13: memref<1x256xf32, #tpu.memory_space<vmem>>, %arg14: memref<256x256xbf16, #tpu.memory_space<vmem>>, %arg15: memref<1x256xf32, #tpu.memory_space<vmem>>, %arg16: memref<1x256xf32, #tpu.memory_space<vmem>>, %arg17: memref<1x256xf32, #tpu.memory_space<vmem>>, %arg18: memref<256x1024xbf16, #tpu.memory_space<vmem>>, %arg19: memref<1x1024xf32, #tpu.memory_space<vmem>>, %arg20: memref<1024x256xbf16, #tpu.memory_space<vmem>>, %arg21: memref<1x256xf32, #tpu.memory_space<vmem>>, %arg22: memref<1x256xf32, #tpu.memory_space<vmem>>, %arg23: memref<1x256xf32, #tpu.memory_space<vmem>>, %arg24: memref<1x16x256xf32, #tpu.memory_space<vmem>>, %arg25: memref<16x256xbf16, #tpu.memory_space<vmem>>, %arg26: memref<16x256xbf16, #tpu.memory_space<vmem>>, %arg27: memref<16x256xbf16, #tpu.memory_space<vmem>>) attributes {dimension_semantics = [#tpu.dimension_semantics<parallel>, #tpu.dimension_semantics<arbitrary>], iteration_bounds = array<i64: 2, 1>, scalar_prefetch = 0 : i64, scratch_operands = 3 : i64, tpu.core_type = #tpu.core_type<tc>, window_params = [{transform_indices = @transform_0, window_bounds = array<i64: 1, 16, 256>}, {transform_indices = @transform_1, window_bounds = array<i64: 1, 16, 256>}, {pipeline_mode = #tpu.pipeline_mode<synchronous>, transform_indices = @transform_2, window_bounds = array<i64: 256, 256>}, {pipeline_mode = #tpu.pipeline_mode<synchronous>, transform_indices = @transform_3, window_bounds = array<i64: 1, 256>}, {pipeline_mode = #tpu.pipeline_mode<synchronous>, transform_indices = @transform_4, window_bounds = array<i64: 256, 256>}, {pipeline_mode = #tpu.pipeline_mode<synchronous>, transform_indices = @transform_5, window_bounds = array<i64: 1, 256>}, {pipeline_mode = #tpu.pipeline_mode<synchronous>, transform_indices = @transform_6, window_bounds = array<i64: 256, 256>}, {pipeline_mode = #tpu.pipeline_mode<synchronous>, transform_indices = @transform_7, window_bounds = array<i64: 1, 256>}, {pipeline_mode = #tpu.pipeline_mode<synchronous>, transform_indices = @transform_8, window_bounds = array<i64: 256, 256>}, {pipeline_mode = #tpu.pipeline_mode<synchronous>, transform_indices = @transform_9, window_bounds = array<i64: 1, 256>}, {pipeline_mode = #tpu.pipeline_mode<synchronous>, transform_indices = @transform_10, window_bounds = array<i64: 256, 256>}, {pipeline_mode = #tpu.pipeline_mode<synchronous>, transform_indices = @transform_11, window_bounds = array<i64: 1, 256>}, {pipeline_mode = #tpu.pipeline_mode<synchronous>, transform_indices = @transform_12, window_bounds = array<i64: 256, 256>}, {pipeline_mode = #tpu.pipeline_mode<synchronous>, transform_indices = @transform_13, window_bounds = array<i64: 1, 256>}, {pipeline_mode = #tpu.pipeline_mode<synchronous>, transform_indices = @transform_14, window_bounds = array<i64: 1, 256>}, {pipeline_mode = #tpu.pipeline_mode<synchronous>, transform_indices = @transform_15, window_bounds = array<i64: 1, 256>}, {pipeline_mode = #tpu.pipeline_mode<synchronous>, transform_indices = @transform_16, window_bounds = array<i64: 256, 1024>}, {pipeline_mode = #tpu.pipeline_mode<synchronous>, transform_indices = @transform_17, window_bounds = array<i64: 1, 1024>}, {pipeline_mode = #tpu.pipeline_mode<synchronous>, transform_indices = @transform_18, window_bounds = array<i64: 1024, 256>}, {pipeline_mode = #tpu.pipeline_mode<synchronous>, transform_indices = @transform_19, window_bounds = array<i64: 1, 256>}, {pipeline_mode = #tpu.pipeline_mode<synchronous>, transform_indices = @transform_20, window_bounds = array<i64: 1, 256>}, {pipeline_mode = #tpu.pipeline_mode<synchronous>, transform_indices = @transform_21, window_bounds = array<i64: 1, 256>}, {transform_indices = @transform_22, window_bounds = array<i64: 1, 16, 256>}]} {
    %c0_i32 = arith.constant 0 : i32
    %0 = arith.cmpi eq, %arg1, %c0_i32 : i32
    %1 = arith.extui %0 : i1 to i32
    %c0_i32_0 = arith.constant 0 : i32
    %2 = arith.cmpi ne, %1, %c0_i32_0 : i32
    scf.if %2 {
      %c0_70 = arith.constant 0 : index
      %c0_71 = arith.constant 0 : index
      %c0_72 = arith.constant 0 : index
      %142 = vector.load %arg3[%c0_70, %c0_71, %c0_72] : memref<1x16x256xf32, #tpu.memory_space<vmem>>, vector<1x16x256xf32>
      %143 = vector.shape_cast %142 : vector<1x16x256xf32> to vector<16x256xf32>
      %144 = arith.truncf %143 : vector<16x256xf32> to vector<16x256xbf16>
      %c0_73 = arith.constant 0 : index
      %c0_74 = arith.constant 0 : index
      %145 = vector.load %arg6[%c0_73, %c0_74] : memref<256x256xbf16, #tpu.memory_space<vmem>>, vector<256x256xbf16>
      %cst_75 = arith.constant dense<0.000000e+00> : vector<16x256xf32>
      %146 = tpu.matmul %144, %145, %cst_75 {dimension_numbers = #tpu.dot_dimension_numbers<[1], [0], [0], [1], [0, 0, 1, 1], [], []>} : vector<16x256xbf16>, vector<256x256xbf16>, vector<16x256xf32> -> vector<16x256xf32>
      %c0_76 = arith.constant 0 : index
      %c0_77 = arith.constant 0 : index
      %147 = vector.load %arg7[%c0_76, %c0_77] : memref<1x256xf32, #tpu.memory_space<vmem>>, vector<1x256xf32>
      %148 = vector.broadcast %147 : vector<1x256xf32> to vector<16x256xf32>
      %149 = arith.addf %146, %148 : vector<16x256xf32>
      %150 = arith.truncf %149 : vector<16x256xf32> to vector<16x256xbf16>
      %c0_78 = arith.constant 0 : index
      %c0_79 = arith.constant 0 : index
      %151 = vector.load %arg10[%c0_78, %c0_79] : memref<256x256xbf16, #tpu.memory_space<vmem>>, vector<256x256xbf16>
      %cst_80 = arith.constant dense<0.000000e+00> : vector<16x256xf32>
      %152 = tpu.matmul %150, %151, %cst_80 {dimension_numbers = #tpu.dot_dimension_numbers<[1], [0], [0], [1], [0, 0, 1, 1], [], []>} : vector<16x256xbf16>, vector<256x256xbf16>, vector<16x256xf32> -> vector<16x256xf32>
      %c0_81 = arith.constant 0 : index
      %c0_82 = arith.constant 0 : index
      %153 = vector.load %arg11[%c0_81, %c0_82] : memref<1x256xf32, #tpu.memory_space<vmem>>, vector<1x256xf32>
      %154 = vector.broadcast %153 : vector<1x256xf32> to vector<16x256xf32>
      %155 = arith.addf %152, %154 : vector<16x256xf32>
      %c0_83 = arith.constant 0 : index
      %c0_84 = arith.constant 0 : index
      %156 = vector.load %arg12[%c0_83, %c0_84] : memref<256x256xbf16, #tpu.memory_space<vmem>>, vector<256x256xbf16>
      %cst_85 = arith.constant dense<0.000000e+00> : vector<16x256xf32>
      %157 = tpu.matmul %150, %156, %cst_85 {dimension_numbers = #tpu.dot_dimension_numbers<[1], [0], [0], [1], [0, 0, 1, 1], [], []>} : vector<16x256xbf16>, vector<256x256xbf16>, vector<16x256xf32> -> vector<16x256xf32>
      %c0_86 = arith.constant 0 : index
      %c0_87 = arith.constant 0 : index
      %158 = vector.load %arg13[%c0_86, %c0_87] : memref<1x256xf32, #tpu.memory_space<vmem>>, vector<1x256xf32>
      %159 = vector.broadcast %158 : vector<1x256xf32> to vector<16x256xf32>
      %160 = arith.addf %157, %159 : vector<16x256xf32>
      %161 = arith.truncf %155 : vector<16x256xf32> to vector<16x256xbf16>
      %c0_88 = arith.constant 0 : index
      %c0_89 = arith.constant 0 : index
      %162 = vector.load %arg25[%c0_88, %c0_89] : memref<16x256xbf16, #tpu.memory_space<vmem>>, vector<16x256xbf16>
      tpu.vector_store %arg25[%c0_88, %c0_89], %161 {strides = array<i32>} : memref<16x256xbf16, #tpu.memory_space<vmem>>, vector<16x256xbf16>,
      %163 = arith.truncf %160 : vector<16x256xf32> to vector<16x256xbf16>
      %c0_90 = arith.constant 0 : index
      %c0_91 = arith.constant 0 : index
      %164 = vector.load %arg26[%c0_90, %c0_91] : memref<16x256xbf16, #tpu.memory_space<vmem>>, vector<16x256xbf16>
      tpu.vector_store %arg26[%c0_90, %c0_91], %163 {strides = array<i32>} : memref<16x256xbf16, #tpu.memory_space<vmem>>, vector<16x256xbf16>,
    } else {
    }
    %c0 = arith.constant 0 : index
    %c0_1 = arith.constant 0 : index
    %c0_2 = arith.constant 0 : index
    %3 = vector.load %arg2[%c0, %c0_1, %c0_2] : memref<1x16x256xf32, #tpu.memory_space<vmem>>, vector<1x16x256xf32>
    %4 = vector.shape_cast %3 : vector<1x16x256xf32> to vector<16x256xf32>
    %5 = tpu.iota {dimensions = array<i32: 1>} : vector<1x256xi32>
    %c200_i32 = arith.constant 200 : i32
    %6 = vector.broadcast %c200_i32 : i32 to vector<1x256xi32>
    %7 = arith.cmpi slt, %5, %6 : vector<1x256xi32>
    %8 = arith.extui %7 : vector<1x256xi1> to vector<1x256xi32>
    %9 = arith.sitofp %8 : vector<1x256xi32> to vector<1x256xf32>
    %10 = arith.truncf %4 : vector<16x256xf32> to vector<16x256xbf16>
    %c0_3 = arith.constant 0 : index
    %c0_4 = arith.constant 0 : index
    %11 = vector.load %arg4[%c0_3, %c0_4] : memref<256x256xbf16, #tpu.memory_space<vmem>>, vector<256x256xbf16>
    %cst = arith.constant dense<0.000000e+00> : vector<16x256xf32>
    %12 = tpu.matmul %10, %11, %cst {dimension_numbers = #tpu.dot_dimension_numbers<[1], [0], [0], [1], [0, 0, 1, 1], [], []>} : vector<16x256xbf16>, vector<256x256xbf16>, vector<16x256xf32> -> vector<16x256xf32>
    %c0_5 = arith.constant 0 : index
    %c0_6 = arith.constant 0 : index
    %13 = vector.load %arg5[%c0_5, %c0_6] : memref<1x256xf32, #tpu.memory_space<vmem>>, vector<1x256xf32>
    %14 = vector.broadcast %13 : vector<1x256xf32> to vector<16x256xf32>
    %15 = arith.addf %12, %14 : vector<16x256xf32>
    %16 = arith.truncf %15 : vector<16x256xf32> to vector<16x256xbf16>
    %c0_7 = arith.constant 0 : index
    %c0_8 = arith.constant 0 : index
    %17 = vector.load %arg8[%c0_7, %c0_8] : memref<256x256xbf16, #tpu.memory_space<vmem>>, vector<256x256xbf16>
    %cst_9 = arith.constant dense<0.000000e+00> : vector<16x256xf32>
    %18 = tpu.matmul %16, %17, %cst_9 {dimension_numbers = #tpu.dot_dimension_numbers<[1], [0], [0], [1], [0, 0, 1, 1], [], []>} : vector<16x256xbf16>, vector<256x256xbf16>, vector<16x256xf32> -> vector<16x256xf32>
    %c0_10 = arith.constant 0 : index
    %c0_11 = arith.constant 0 : index
    %19 = vector.load %arg9[%c0_10, %c0_11] : memref<1x256xf32, #tpu.memory_space<vmem>>, vector<1x256xf32>
    %20 = vector.broadcast %19 : vector<1x256xf32> to vector<16x256xf32>
    %21 = arith.addf %18, %20 : vector<16x256xf32>
    %cst_12 = arith.constant 0.0883883461 : f32
    %22 = vector.broadcast %cst_12 : f32 to vector<16x256xf32>
    %23 = arith.mulf %21, %22 : vector<16x256xf32>
    %24 = arith.truncf %23 : vector<16x256xf32> to vector<16x256xbf16>
    %c0_13 = arith.constant 0 : index
    %c0_14 = arith.constant 0 : index
    %25 = vector.load %arg25[%c0_13, %c0_14] : memref<16x256xbf16, #tpu.memory_space<vmem>>, vector<16x256xbf16>
    %c0_15 = arith.constant 0 : index
    %c0_16 = arith.constant 0 : index
    %26 = vector.load %arg26[%c0_15, %c0_16] : memref<16x256xbf16, #tpu.memory_space<vmem>>, vector<16x256xbf16>
    %27 = vector.extract_strided_slice %24 {offsets = [0, 0], sizes = [16, 128], strides = [1, 1]} : vector<16x256xbf16> to vector<16x128xbf16>
    %28 = vector.extract_strided_slice %25 {offsets = [0, 0], sizes = [16, 128], strides = [1, 1]} : vector<16x256xbf16> to vector<16x128xbf16>
    %cst_17 = arith.constant dense<0.000000e+00> : vector<16x16xf32>
    %29 = tpu.matmul %27, %28, %cst_17 {dimension_numbers = #tpu.dot_dimension_numbers<[1], [1], [0], [0], [0, 0, 1, 0], [], []>} : vector<16x128xbf16>, vector<16x128xbf16>, vector<16x16xf32> -> vector<16x16xf32>
    %cst_18 = arith.constant dense<0xFF800000> : vector<16xf32>
    %30 = vector.multi_reduction <maximumf>, %29, %cst_18 [1] : vector<16x16xf32> to vector<16xf32>
    %31 = vector.shape_cast %30 : vector<16xf32> to vector<16x1xf32>
    %32 = vector.broadcast %31 : vector<16x1xf32> to vector<16x16xf32>
    %33 = arith.subf %29, %32 : vector<16x16xf32>
    %34 = math.exp %33 : vector<16x16xf32>
    %cst_19 = arith.constant dense<0.000000e+00> : vector<16xf32>
    %35 = vector.multi_reduction <add>, %34, %cst_19 [1] : vector<16x16xf32> to vector<16xf32>
    %36 = vector.shape_cast %35 : vector<16xf32> to vector<16x1xf32>
    %37 = vector.broadcast %36 : vector<16x1xf32> to vector<16x16xf32>
    %38 = arith.divf %34, %37 : vector<16x16xf32>
    %39 = arith.truncf %38 : vector<16x16xf32> to vector<16x16xbf16>
    %40 = vector.extract_strided_slice %26 {offsets = [0, 0], sizes = [16, 128], strides = [1, 1]} : vector<16x256xbf16> to vector<16x128xbf16>
    %cst_20 = arith.constant dense<0.000000e+00> : vector<16x128xf32>
    %41 = tpu.matmul %39, %40, %cst_20 {dimension_numbers = #tpu.dot_dimension_numbers<[1], [0], [0], [1], [0, 0, 1, 1], [], []>} : vector<16x16xbf16>, vector<16x128xbf16>, vector<16x128xf32> -> vector<16x128xf32>
    %42 = arith.truncf %41 : vector<16x128xf32> to vector<16x128xbf16>
    %c0_21 = arith.constant 0 : index
    %c0_22 = arith.constant 0 : index
    %43 = vector.load %arg27[%c0_21, %c0_22] : memref<16x256xbf16, #tpu.memory_space<vmem>>, vector<16x128xbf16>
    tpu.vector_store %arg27[%c0_21, %c0_22], %42 {strides = array<i32>} : memref<16x256xbf16, #tpu.memory_space<vmem>>, vector<16x128xbf16>,
    %44 = vector.extract_strided_slice %24 {offsets = [0, 128], sizes = [16, 128], strides = [1, 1]} : vector<16x256xbf16> to vector<16x128xbf16>
    %45 = vector.extract_strided_slice %25 {offsets = [0, 128], sizes = [16, 128], strides = [1, 1]} : vector<16x256xbf16> to vector<16x128xbf16>
    %cst_23 = arith.constant dense<0.000000e+00> : vector<16x16xf32>
    %46 = tpu.matmul %44, %45, %cst_23 {dimension_numbers = #tpu.dot_dimension_numbers<[1], [1], [0], [0], [0, 0, 1, 0], [], []>} : vector<16x128xbf16>, vector<16x128xbf16>, vector<16x16xf32> -> vector<16x16xf32>
    %cst_24 = arith.constant dense<0xFF800000> : vector<16xf32>
    %47 = vector.multi_reduction <maximumf>, %46, %cst_24 [1] : vector<16x16xf32> to vector<16xf32>
    %48 = vector.shape_cast %47 : vector<16xf32> to vector<16x1xf32>
    %49 = vector.broadcast %48 : vector<16x1xf32> to vector<16x16xf32>
    %50 = arith.subf %46, %49 : vector<16x16xf32>
    %51 = math.exp %50 : vector<16x16xf32>
    %cst_25 = arith.constant dense<0.000000e+00> : vector<16xf32>
    %52 = vector.multi_reduction <add>, %51, %cst_25 [1] : vector<16x16xf32> to vector<16xf32>
    %53 = vector.shape_cast %52 : vector<16xf32> to vector<16x1xf32>
    %54 = vector.broadcast %53 : vector<16x1xf32> to vector<16x16xf32>
    %55 = arith.divf %51, %54 : vector<16x16xf32>
    %56 = arith.truncf %55 : vector<16x16xf32> to vector<16x16xbf16>
    %57 = vector.extract_strided_slice %26 {offsets = [0, 128], sizes = [16, 128], strides = [1, 1]} : vector<16x256xbf16> to vector<16x128xbf16>
    %cst_26 = arith.constant dense<0.000000e+00> : vector<16x128xf32>
    %58 = tpu.matmul %56, %57, %cst_26 {dimension_numbers = #tpu.dot_dimension_numbers<[1], [0], [0], [1], [0, 0, 1, 1], [], []>} : vector<16x16xbf16>, vector<16x128xbf16>, vector<16x128xf32> -> vector<16x128xf32>
    %59 = arith.truncf %58 : vector<16x128xf32> to vector<16x128xbf16>
    %c0_27 = arith.constant 0 : index
    %c128 = arith.constant 128 : index
    %60 = vector.load %arg27[%c0_27, %c128] : memref<16x256xbf16, #tpu.memory_space<vmem>>, vector<16x128xbf16>
    tpu.vector_store %arg27[%c0_27, %c128], %59 {strides = array<i32>} : memref<16x256xbf16, #tpu.memory_space<vmem>>, vector<16x128xbf16>,
    %c0_28 = arith.constant 0 : index
    %c0_29 = arith.constant 0 : index
    %61 = vector.load %arg27[%c0_28, %c0_29] : memref<16x256xbf16, #tpu.memory_space<vmem>>, vector<16x256xbf16>
    %c0_30 = arith.constant 0 : index
    %c0_31 = arith.constant 0 : index
    %62 = vector.load %arg14[%c0_30, %c0_31] : memref<256x256xbf16, #tpu.memory_space<vmem>>, vector<256x256xbf16>
    %cst_32 = arith.constant dense<0.000000e+00> : vector<16x256xf32>
    %63 = tpu.matmul %61, %62, %cst_32 {dimension_numbers = #tpu.dot_dimension_numbers<[1], [0], [0], [1], [0, 0, 1, 1], [], []>} : vector<16x256xbf16>, vector<256x256xbf16>, vector<16x256xf32> -> vector<16x256xf32>
    %c0_33 = arith.constant 0 : index
    %c0_34 = arith.constant 0 : index
    %64 = vector.load %arg15[%c0_33, %c0_34] : memref<1x256xf32, #tpu.memory_space<vmem>>, vector<1x256xf32>
    %65 = vector.broadcast %64 : vector<1x256xf32> to vector<16x256xf32>
    %66 = arith.addf %63, %65 : vector<16x256xf32>
    %67 = arith.addf %4, %66 : vector<16x256xf32>
    %c0_35 = arith.constant 0 : index
    %c0_36 = arith.constant 0 : index
    %68 = vector.load %arg16[%c0_35, %c0_36] : memref<1x256xf32, #tpu.memory_space<vmem>>, vector<1x256xf32>
    %c0_37 = arith.constant 0 : index
    %c0_38 = arith.constant 0 : index
    %69 = vector.load %arg17[%c0_37, %c0_38] : memref<1x256xf32, #tpu.memory_space<vmem>>, vector<1x256xf32>
    %cst_39 = arith.constant dense<0.000000e+00> : vector<16xf32>
    %70 = vector.multi_reduction <add>, %67, %cst_39 [1] : vector<16x256xf32> to vector<16xf32>
    %71 = vector.shape_cast %70 : vector<16xf32> to vector<16x1xf32>
    %cst_40 = arith.constant 5.000000e-03 : f32
    %72 = vector.broadcast %cst_40 : f32 to vector<16x1xf32>
    %73 = arith.mulf %71, %72 : vector<16x1xf32>
    %74 = vector.broadcast %73 : vector<16x1xf32> to vector<16x256xf32>
    %75 = arith.subf %67, %74 : vector<16x256xf32>
    %76 = vector.broadcast %9 : vector<1x256xf32> to vector<16x256xf32>
    %77 = arith.mulf %75, %76 : vector<16x256xf32>
    %78 = arith.mulf %77, %77 : vector<16x256xf32>
    %cst_41 = arith.constant dense<0.000000e+00> : vector<16xf32>
    %79 = vector.multi_reduction <add>, %78, %cst_41 [1] : vector<16x256xf32> to vector<16xf32>
    %80 = vector.shape_cast %79 : vector<16xf32> to vector<16x1xf32>
    %cst_42 = arith.constant 5.000000e-03 : f32
    %81 = vector.broadcast %cst_42 : f32 to vector<16x1xf32>
    %82 = arith.mulf %80, %81 : vector<16x1xf32>
    %cst_43 = arith.constant 9.99999974E-6 : f32
    %83 = vector.broadcast %cst_43 : f32 to vector<16x1xf32>
    %84 = arith.addf %82, %83 : vector<16x1xf32>
    %85 = math.rsqrt %84 : vector<16x1xf32>
    %86 = vector.broadcast %85 : vector<16x1xf32> to vector<16x256xf32>
    %87 = arith.mulf %75, %86 : vector<16x256xf32>
    %88 = vector.broadcast %68 : vector<1x256xf32> to vector<16x256xf32>
    %89 = arith.mulf %87, %88 : vector<16x256xf32>
    %90 = vector.broadcast %69 : vector<1x256xf32> to vector<16x256xf32>
    %91 = arith.addf %89, %90 : vector<16x256xf32>
    %92 = arith.truncf %91 : vector<16x256xf32> to vector<16x256xbf16>
    %cst_44 = arith.constant 0.000000e+00 : f32
    %93 = vector.broadcast %cst_44 : f32 to vector<16x256xf32>
    %c0_45 = arith.constant 0 : index
    %c0_46 = arith.constant 0 : index
    %94 = vector.load %arg18[%c0_45, %c0_46] : memref<256x1024xbf16, #tpu.memory_space<vmem>>, vector<256x1024xbf16>
    %cst_47 = arith.constant dense<0.000000e+00> : vector<16x1024xf32>
    %95 = tpu.matmul %92, %94, %cst_47 {dimension_numbers = #tpu.dot_dimension_numbers<[1], [0], [0], [1], [0, 0, 1, 1], [], []>} : vector<16x256xbf16>, vector<256x1024xbf16>, vector<16x1024xf32> -> vector<16x1024xf32>
    %c0_48 = arith.constant 0 : index
    %c0_49 = arith.constant 0 : index
    %96 = vector.load %arg19[%c0_48, %c0_49] : memref<1x1024xf32, #tpu.memory_space<vmem>>, vector<1x1024xf32>
    %97 = vector.broadcast %96 : vector<1x1024xf32> to vector<16x1024xf32>
    %98 = arith.addf %95, %97 : vector<16x1024xf32>
    %cst_50 = arith.constant 5.000000e-01 : f32
    %99 = vector.broadcast %cst_50 : f32 to vector<16x1024xf32>
    %100 = arith.mulf %99, %98 : vector<16x1024xf32>
    %cst_51 = arith.constant 0.707106769 : f32
    %101 = vector.broadcast %cst_51 : f32 to vector<16x1024xf32>
    %102 = arith.mulf %98, %101 : vector<16x1024xf32>
    %103 = math.erf %102 : vector<16x1024xf32>
    %cst_52 = arith.constant 1.000000e+00 : f32
    %104 = vector.broadcast %cst_52 : f32 to vector<16x1024xf32>
    %105 = arith.addf %104, %103 : vector<16x1024xf32>
    %106 = arith.mulf %100, %105 : vector<16x1024xf32>
    %107 = arith.truncf %106 : vector<16x1024xf32> to vector<16x1024xbf16>
    %c0_53 = arith.constant 0 : index
    %c0_54 = arith.constant 0 : index
    %108 = vector.load %arg20[%c0_53, %c0_54] : memref<1024x256xbf16, #tpu.memory_space<vmem>>, vector<1024x256xbf16>
    %cst_55 = arith.constant dense<0.000000e+00> : vector<16x256xf32>
    %109 = tpu.matmul %107, %108, %cst_55 {dimension_numbers = #tpu.dot_dimension_numbers<[1], [0], [0], [1], [0, 0, 1, 1], [], []>} : vector<16x1024xbf16>, vector<1024x256xbf16>, vector<16x256xf32> -> vector<16x256xf32>
    %110 = arith.addf %93, %109 : vector<16x256xf32>
    %111 = arith.addf %91, %110 : vector<16x256xf32>
    %c0_56 = arith.constant 0 : index
    %c0_57 = arith.constant 0 : index
    %112 = vector.load %arg21[%c0_56, %c0_57] : memref<1x256xf32, #tpu.memory_space<vmem>>, vector<1x256xf32>
    %113 = vector.broadcast %112 : vector<1x256xf32> to vector<16x256xf32>
    %114 = arith.addf %111, %113 : vector<16x256xf32>
    %c0_58 = arith.constant 0 : index
    %c0_59 = arith.constant 0 : index
    %115 = vector.load %arg22[%c0_58, %c0_59] : memref<1x256xf32, #tpu.memory_space<vmem>>, vector<1x256xf32>
    %c0_60 = arith.constant 0 : index
    %c0_61 = arith.constant 0 : index
    %116 = vector.load %arg23[%c0_60, %c0_61] : memref<1x256xf32, #tpu.memory_space<vmem>>, vector<1x256xf32>
    %cst_62 = arith.constant dense<0.000000e+00> : vector<16xf32>
    %117 = vector.multi_reduction <add>, %114, %cst_62 [1] : vector<16x256xf32> to vector<16xf32>
    %118 = vector.shape_cast %117 : vector<16xf32> to vector<16x1xf32>
    %cst_63 = arith.constant 5.000000e-03 : f32
    %119 = vector.broadcast %cst_63 : f32 to vector<16x1xf32>
    %120 = arith.mulf %118, %119 : vector<16x1xf32>
    %121 = vector.broadcast %120 : vector<16x1xf32> to vector<16x256xf32>
    %122 = arith.subf %114, %121 : vector<16x256xf32>
    %123 = vector.broadcast %9 : vector<1x256xf32> to vector<16x256xf32>
    %124 = arith.mulf %122, %123 : vector<16x256xf32>
    %125 = arith.mulf %124, %124 : vector<16x256xf32>
    %cst_64 = arith.constant dense<0.000000e+00> : vector<16xf32>
    %126 = vector.multi_reduction <add>, %125, %cst_64 [1] : vector<16x256xf32> to vector<16xf32>
    %127 = vector.shape_cast %126 : vector<16xf32> to vector<16x1xf32>
    %cst_65 = arith.constant 5.000000e-03 : f32
    %128 = vector.broadcast %cst_65 : f32 to vector<16x1xf32>
    %129 = arith.mulf %127, %128 : vector<16x1xf32>
    %cst_66 = arith.constant 9.99999974E-6 : f32
    %130 = vector.broadcast %cst_66 : f32 to vector<16x1xf32>
    %131 = arith.addf %129, %130 : vector<16x1xf32>
    %132 = math.rsqrt %131 : vector<16x1xf32>
    %133 = vector.broadcast %132 : vector<16x1xf32> to vector<16x256xf32>
    %134 = arith.mulf %122, %133 : vector<16x256xf32>
    %135 = vector.broadcast %115 : vector<1x256xf32> to vector<16x256xf32>
    %136 = arith.mulf %134, %135 : vector<16x256xf32>
    %137 = vector.broadcast %116 : vector<1x256xf32> to vector<16x256xf32>
    %138 = arith.addf %136, %137 : vector<16x256xf32>
    %c0_67 = arith.constant 0 : index
    %c0_68 = arith.constant 0 : index
    %c0_69 = arith.constant 0 : index
    %139 = vector.load %arg24[%c0_67, %c0_68, %c0_69] : memref<1x16x256xf32, #tpu.memory_space<vmem>>, vector<1x16x256xf32>
    %140 = vector.shape_cast %139 : vector<1x16x256xf32> to vector<16x256xf32>
    %141 = vector.shape_cast %138 : vector<16x256xf32> to vector<1x16x256xf32>
    tpu.vector_store %arg24[%c0_67, %c0_68, %c0_69], %141 {strides = array<i32>} : memref<1x16x256xf32, #tpu.memory_space<vmem>>, vector<1x16x256xf32>,
    return
  }
  func.func @transform_0(%arg0: i32, %arg1: i32) -> (i32, i32, i32) {
    %c0_i32 = arith.constant 0 : i32
    %c0_i32_0 = arith.constant 0 : i32
    return %arg0, %arg1, %c0_i32 : i32, i32, i32
  }
  func.func @transform_1(%arg0: i32, %arg1: i32) -> (i32, i32, i32) {
    %c0_i32 = arith.constant 0 : i32
    %c0_i32_0 = arith.constant 0 : i32
    %c0_i32_1 = arith.constant 0 : i32
    return %arg0, %c0_i32, %c0_i32_0 : i32, i32, i32
  }
  func.func @transform_2(%arg0: i32, %arg1: i32) -> (i32, i32) {
    %c0_i32 = arith.constant 0 : i32
    %c0_i32_0 = arith.constant 0 : i32
    %c0_i32_1 = arith.constant 0 : i32
    return %c0_i32, %c0_i32_0 : i32, i32
  }
  func.func @transform_3(%arg0: i32, %arg1: i32) -> (i32, i32) {
    %c0_i32 = arith.constant 0 : i32
    %c0_i32_0 = arith.constant 0 : i32
    %c0_i32_1 = arith.constant 0 : i32
    return %c0_i32, %c0_i32_0 : i32, i32
  }
  func.func @transform_4(%arg0: i32, %arg1: i32) -> (i32, i32) {
    %c0_i32 = arith.constant 0 : i32
    %c0_i32_0 = arith.constant 0 : i32
    %c0_i32_1 = arith.constant 0 : i32
    return %c0_i32, %c0_i32_0 : i32, i32
  }
  func.func @transform_5(%arg0: i32, %arg1: i32) -> (i32, i32) {
    %c0_i32 = arith.constant 0 : i32
    %c0_i32_0 = arith.constant 0 : i32
    %c0_i32_1 = arith.constant 0 : i32
    return %c0_i32, %c0_i32_0 : i32, i32
  }
  func.func @transform_6(%arg0: i32, %arg1: i32) -> (i32, i32) {
    %c0_i32 = arith.constant 0 : i32
    %c0_i32_0 = arith.constant 0 : i32
    %c0_i32_1 = arith.constant 0 : i32
    return %c0_i32, %c0_i32_0 : i32, i32
  }
  func.func @transform_7(%arg0: i32, %arg1: i32) -> (i32, i32) {
    %c0_i32 = arith.constant 0 : i32
    %c0_i32_0 = arith.constant 0 : i32
    %c0_i32_1 = arith.constant 0 : i32
    return %c0_i32, %c0_i32_0 : i32, i32
  }
  func.func @transform_8(%arg0: i32, %arg1: i32) -> (i32, i32) {
    %c0_i32 = arith.constant 0 : i32
    %c0_i32_0 = arith.constant 0 : i32
    %c0_i32_1 = arith.constant 0 : i32
    return %c0_i32, %c0_i32_0 : i32, i32
  }
  func.func @transform_9(%arg0: i32, %arg1: i32) -> (i32, i32) {
    %c0_i32 = arith.constant 0 : i32
    %c0_i32_0 = arith.constant 0 : i32
    %c0_i32_1 = arith.constant 0 : i32
    return %c0_i32, %c0_i32_0 : i32, i32
  }
  func.func @transform_10(%arg0: i32, %arg1: i32) -> (i32, i32) {
    %c0_i32 = arith.constant 0 : i32
    %c0_i32_0 = arith.constant 0 : i32
    %c0_i32_1 = arith.constant 0 : i32
    return %c0_i32, %c0_i32_0 : i32, i32
  }
  func.func @transform_11(%arg0: i32, %arg1: i32) -> (i32, i32) {
    %c0_i32 = arith.constant 0 : i32
    %c0_i32_0 = arith.constant 0 : i32
    %c0_i32_1 = arith.constant 0 : i32
    return %c0_i32, %c0_i32_0 : i32, i32
  }
  func.func @transform_12(%arg0: i32, %arg1: i32) -> (i32, i32) {
    %c0_i32 = arith.constant 0 : i32
    %c0_i32_0 = arith.constant 0 : i32
    %c0_i32_1 = arith.constant 0 : i32
    return %c0_i32, %c0_i32_0 : i32, i32
  }
  func.func @transform_13(%arg0: i32, %arg1: i32) -> (i32, i32) {
    %c0_i32 = arith.constant 0 : i32
    %c0_i32_0 = arith.constant 0 : i32
    %c0_i32_1 = arith.constant 0 : i32
    return %c0_i32, %c0_i32_0 : i32, i32
  }
  func.func @transform_14(%arg0: i32, %arg1: i32) -> (i32, i32) {
    %c0_i32 = arith.constant 0 : i32
    %c0_i32_0 = arith.constant 0 : i32
    %c0_i32_1 = arith.constant 0 : i32
    return %c0_i32, %c0_i32_0 : i32, i32
  }
  func.func @transform_15(%arg0: i32, %arg1: i32) -> (i32, i32) {
    %c0_i32 = arith.constant 0 : i32
    %c0_i32_0 = arith.constant 0 : i32
    %c0_i32_1 = arith.constant 0 : i32
    return %c0_i32, %c0_i32_0 : i32, i32
  }
  func.func @transform_16(%arg0: i32, %arg1: i32) -> (i32, i32) {
    %c0_i32 = arith.constant 0 : i32
    %c0_i32_0 = arith.constant 0 : i32
    %c0_i32_1 = arith.constant 0 : i32
    return %c0_i32, %c0_i32_0 : i32, i32
  }
  func.func @transform_17(%arg0: i32, %arg1: i32) -> (i32, i32) {
    %c0_i32 = arith.constant 0 : i32
    %c0_i32_0 = arith.constant 0 : i32
    %c0_i32_1 = arith.constant 0 : i32
    return %c0_i32, %c0_i32_0 : i32, i32
  }
  func.func @transform_18(%arg0: i32, %arg1: i32) -> (i32, i32) {
    %c0_i32 = arith.constant 0 : i32
    %c0_i32_0 = arith.constant 0 : i32
    %c0_i32_1 = arith.constant 0 : i32
    return %c0_i32, %c0_i32_0 : i32, i32
  }
  func.func @transform_19(%arg0: i32, %arg1: i32) -> (i32, i32) {
    %c0_i32 = arith.constant 0 : i32
    %c0_i32_0 = arith.constant 0 : i32
    %c0_i32_1 = arith.constant 0 : i32
    return %c0_i32, %c0_i32_0 : i32, i32
  }
  func.func @transform_20(%arg0: i32, %arg1: i32) -> (i32, i32) {
    %c0_i32 = arith.constant 0 : i32
    %c0_i32_0 = arith.constant 0 : i32
    %c0_i32_1 = arith.constant 0 : i32
    return %c0_i32, %c0_i32_0 : i32, i32
  }
  func.func @transform_21(%arg0: i32, %arg1: i32) -> (i32, i32) {
    %c0_i32 = arith.constant 0 : i32
    %c0_i32_0 = arith.constant 0 : i32
    %c0_i32_1 = arith.constant 0 : i32
    return %c0_i32, %c0_i32_0 : i32, i32
  }
  func.func @transform_22(%arg0: i32, %arg1: i32) -> (i32, i32, i32) {
    %c0_i32 = arith.constant 0 : i32
    %c0_i32_0 = arith.constant 0 : i32
    return %arg0, %arg1, %c0_i32 : i32, i32, i32
  }
}

</mosaic_0001>

<llo_original>
// kernel: tpu_custom_call.1
$region0: #{tpu_custom_call.1}
  #allocation0 [shape = 'u32[]', space=smem, size = 0x4, offset = 0x4, fixed_abs, tag = 'smem constant byte address 0x4 - core index']
  #allocation1 [shape = 'u32[144,128]{1,0:T(1,128)}', space=vmem, size = 0x12000, scoped, tag = 'internal scratch']
  #allocation2 [shape = 'bf16[16,256]{1,0:T(16,128)(2,1)}', space=vmem, size = 0x2000, scoped, tag = 'scratch operand']
  #allocation3 [shape = 'bf16[16,256]{1,0:T(16,128)(2,1)}', space=vmem, size = 0x2000, scoped, tag = 'scratch operand']
  #allocation4 [shape = 'bf16[16,256]{1,0:T(16,128)(2,1)}', space=vmem, size = 0x2000, scoped, tag = 'scratch operand']
  %s0 = inlined_call_operand.hbm [shape: f32[2,16,256], index: 0, kind: input, shape index: {}]
  %s1 = inlined_call_operand.hbm [shape: f32[2,16,256], index: 1, kind: input, shape index: {}]
  %s2 = inlined_call_operand.hbm [shape: bf16[256,256], index: 2, kind: input, shape index: {}]
  %s3 = inlined_call_operand.vmem [shape: f32[1,256], index: 3, kind: input, shape index: {}]
  %s4 = inlined_call_operand.hbm [shape: bf16[256,256], index: 4, kind: input, shape index: {}]
  %s5 = inlined_call_operand.vmem [shape: f32[1,256], index: 5, kind: input, shape index: {}]
  %s6 = inlined_call_operand.hbm [shape: bf16[256,256], index: 6, kind: input, shape index: {}]
  %s7 = inlined_call_operand.vmem [shape: f32[1,256], index: 7, kind: input, shape index: {}]
  %s8 = inlined_call_operand.hbm [shape: bf16[256,256], index: 8, kind: input, shape index: {}]
  %s9 = inlined_call_operand.vmem [shape: f32[1,256], index: 9, kind: input, shape index: {}]
  %s10 = inlined_call_operand.hbm [shape: bf16[256,256], index: 10, kind: input, shape index: {}]
  %s11 = inlined_call_operand.vmem [shape: f32[1,256], index: 11, kind: input, shape index: {}]
  %s12 = inlined_call_operand.hbm [shape: bf16[256,256], index: 12, kind: input, shape index: {}]
  %s13 = inlined_call_operand.vmem [shape: f32[1,256], index: 13, kind: input, shape index: {}]
  %s14 = inlined_call_operand.vmem [shape: f32[1,256], index: 14, kind: input, shape index: {}]
  %s15 = inlined_call_operand.vmem [shape: f32[1,256], index: 15, kind: input, shape index: {}]
  %s16 = inlined_call_operand.hbm [shape: bf16[256,1024], index: 16, kind: input, shape index: {}]
  %s17 = inlined_call_operand.vmem [shape: f32[1,1024], index: 17, kind: input, shape index: {}]
  %s18 = inlined_call_operand.hbm [shape: bf16[1024,256], index: 18, kind: input, shape index: {}]
  %s19 = inlined_call_operand.vmem [shape: f32[1,256], index: 19, kind: input, shape index: {}]
  %s20 = inlined_call_operand.vmem [shape: f32[1,256], index: 20, kind: input, shape index: {}]
  %s21 = inlined_call_operand.vmem [shape: f32[1,256], index: 21, kind: input, shape index: {}]
  %s22 = inlined_call_operand.hbm [shape: f32[2,16,256], index: 22, kind: output, shape index: {}]
  %s23 = sld [smem:[#allocation0]]
  $region165: #{tpu_custom_call.1} parent=0
    _
  %s25 = ssub.s32 1, %s23
  %s26 = scalar_select 0, %s25, %s23
  $region1: #{tpu_custom_call.1} parent=0
    #allocation5 [shape = 'u8[32768]{0}', space=vmem, size = 0x8000, scoped, tag = 'input window, operand 0']
    #allocation6 [shape = 's32[2]{0}', space=sflag, size = 0x8, scoped, tag = 'scoped memory for tpu_custom_call.1']
    #allocation7 [shape = 's32[2]{0}', space=sflag, size = 0x8, scoped, tag = 'scoped memory for tpu_custom_call.1']
    #allocation8 [shape = 'u8[32768]{0}', space=vmem, size = 0x8000, scoped, tag = 'input window, operand 1']
    #allocation9 [shape = 's32[2]{0}', space=sflag, size = 0x8, scoped, tag = 'scoped memory for tpu_custom_call.1']
    #allocation10 [shape = 'u8[131072]{0}', space=vmem, size = 0x20000, scoped, tag = 'input window, operand 2, single buffered']
    #allocation11 [shape = 'u8[131072]{0}', space=vmem, size = 0x20000, scoped, tag = 'input window, operand 4, single buffered']
    #allocation12 [shape = 's32[1]{0}', space=sflag, size = 0x4, scoped, tag = 'scoped memory for tpu_custom_call.1']
    #allocation13 [shape = 'u8[131072]{0}', space=vmem, size = 0x20000, scoped, tag = 'input window, operand 6, single buffered']
    #allocation14 [shape = 'u8[131072]{0}', space=vmem, size = 0x20000, scoped, tag = 'input window, operand 8, single buffered']
    #allocation15 [shape = 's32[1]{0}', space=sflag, size = 0x4, scoped, tag = 'scoped memory for tpu_custom_call.1']
    #allocation16 [shape = 'u8[131072]{0}', space=vmem, size = 0x20000, scoped, tag = 'input window, operand 10, single buffered']
    #allocation17 [shape = 'u8[131072]{0}', space=vmem, size = 0x20000, scoped, tag = 'input window, operand 12, single buffered']
    #allocation18 [shape = 's32[1]{0}', space=sflag, size = 0x4, scoped, tag = 'scoped memory for tpu_custom_call.1']
    #allocation19 [shape = 'u8[524288]{0}', space=vmem, size = 0x80000, scoped, tag = 'input window, operand 16, single buffered']
    #allocation20 [shape = 'u8[524288]{0}', space=vmem, size = 0x80000, scoped, tag = 'input window, operand 18, single buffered']
    #allocation21 [shape = 's32[1]{0}', space=sflag, size = 0x4, scoped, tag = 'scoped memory for tpu_custom_call.1']
    #allocation22 [shape = 'u8[32768]{0}', space=vmem, size = 0x8000, scoped, tag = 'output window, operand 0']
    %27 = vsyncpa [#allocation6], 0
    %s28 = scalar_lea.sflag [#allocation6], 1
    %29 = vsyncpa %s28, 0
    %30 = vsyncpa [#allocation9], 0
    %s31 = scalar_lea.sflag [#allocation9], 1
    %32 = vsyncpa %s31, 0
    %33 = vsyncpa [#allocation12], 0
    %34 = vsyncpa [#allocation15], 0
    %35 = vsyncpa [#allocation18], 0
    %36 = vsyncpa [#allocation21], 0
    %37 = vsyncpa [#allocation7], 0
    %s38 = scalar_lea.sflag [#allocation7], 1
    %39 = vsyncpa %s38, 0
    loop: start=0, step=1, limit=4
    $region2: #{tpu_custom_call.1} parent=1 // loop_pre_header
      _
    $region3: #{tpu_custom_call.1} parent=1 // loop_header
      %s41 = sphi 0, %s45
      %p42 = scmp.ge.s32.totalorder %s41, 4
      %s48 = sphi 0, %s60
      %s49 = sphi 0, %s56
      %s50 = sphi 0, %s48
      %s51 = sphi 0, %s49
      %s52 = sphi 0, %s50
      %s53 = sphi 0, %s51
      %s65 = sphi 0, %s67
      %s68 = sphi 0, %s65
      %s69 = sphi 0, %s68
      %s85 = sphi 0, %s69
      %s91 = sphi 0, %s93
      %s94 = sphi 0, %s91
      %s95 = sphi 0, %s94
      %s111 = sphi 0, %s95
      %s115 = sphi 0, %s115
      %s117 = sphi 0, %s115
      %s118 = sphi 0, %s117
      %s132 = sphi 0, %s118
      %s136 = sphi 0, %s136
      %s138 = sphi 0, %s136
      %s139 = sphi 0, %s138
      %s153 = sphi 0, %s139
      %s157 = sphi 0, %s157
      %s159 = sphi 0, %s157
      %s160 = sphi 0, %s159
      %s174 = sphi 0, %s160
      %s178 = sphi 0, %s178
      %s180 = sphi 0, %s178
      %s181 = sphi 0, %s180
      %s195 = sphi 0, %s181
      %s199 = sphi 0, %s199
      %s201 = sphi 0, %s199
      %s202 = sphi 0, %s201
      %s216 = sphi 0, %s202
      %s220 = sphi 0, %s220
      %s222 = sphi 0, %s220
      %s223 = sphi 0, %s222
      %s237 = sphi 0, %s223
      %s241 = sphi 0, %s241
      %s243 = sphi 0, %s241
      %s244 = sphi 0, %s243
      %s258 = sphi 0, %s244
      %s262 = sphi 0, %s262
      %s264 = sphi 0, %s262
      %s265 = sphi 0, %s264
      %s279 = sphi 0, %s265
      %s283 = sphi 0, %s283
      %s285 = sphi 0, %s283
      %s286 = sphi 0, %s285
      %s300 = sphi 0, %s286
      %s304 = sphi 0, %s304
      %s306 = sphi 0, %s304
      %s307 = sphi 0, %s306
      %s321 = sphi 0, %s307
      %s325 = sphi 0, %s325
      %s327 = sphi 0, %s325
      %s328 = sphi 0, %s327
      %s342 = sphi 0, %s328
      %s346 = sphi 0, %s346
      %s348 = sphi 0, %s346
      %s349 = sphi 0, %s348
      %s363 = sphi 0, %s349
      %s367 = sphi 0, %s367
      %s369 = sphi 0, %s367
      %s370 = sphi 0, %s369
      %s384 = sphi 0, %s370
      %s388 = sphi 0, %s388
      %s390 = sphi 0, %s388
      %s391 = sphi 0, %s390
      %s405 = sphi 0, %s391
      %s409 = sphi 0, %s409
      %s411 = sphi 0, %s409
      %s412 = sphi 0, %s411
      %s426 = sphi 0, %s412
      %s430 = sphi 0, %s430
      %s432 = sphi 0, %s430
      %s433 = sphi 0, %s432
      %s447 = sphi 0, %s433
      %s451 = sphi 0, %s451
      %s453 = sphi 0, %s451
      %s454 = sphi 0, %s453
      %s468 = sphi 0, %s454
      %s472 = sphi 0, %s472
      %s474 = sphi 0, %s472
      %s475 = sphi 0, %s474
      %s489 = sphi 0, %s475
      %s493 = sphi 0, %s493
      %s495 = sphi 0, %s493
      %s496 = sphi 0, %s495
      %s510 = sphi 0, %s496
      %s514 = sphi 0, %s514
      %s516 = sphi 0, %s514
      %s517 = sphi 0, %s516
      %s531 = sphi 0, %s517
      %s539 = sphi 0, %s541
      %s542 = sphi 0, %s539
      %s543 = sphi 0, %s542
      %s559 = sphi 0, %s543
    $region4: #{tpu_custom_call.1} parent=1 // loop_header_branch
      %44 = sbr.rel (%p42) target = $region8
    $region5: #{tpu_custom_call.1} parent=1 // loop_body
      %s46 = ssub.s32 %s41, 1
      %s47 = ssub.s32 %s41, 2
      %s54 = sadd.s32 1, %s49
      %p55 = scmp.ge.s32.totalorder %s54, 1
      %s56 = scalar_select %p55, 0, %s54
      %s57 = sadd.s32 1, %s48
      %s58 = scalar_select %p55, %s57, %s48
      %p59 = scmp.ge.s32.totalorder %s58, 2
      %s60 = scalar_select %p59, 0, %s58
      %s61 = ssub.s32 %s48, %s60
      %s62 = ssub.s32 %s49, %s56
      %s63 = sor.u32 %s61, %s62
      %p64 = scmp.eq.s32.totalorder %s63, 0
      %s66 = sadd.s32 %s65, 1
      %s67 = scalar_select %p64, %s65, %s66
      %p70 = pneg %p64
      %p71 = scmp.eq.s32.totalorder %s41, 1
      %p72 = por %p70, %p71
      %p73 = scmp.ne.s32.totalorder %s65, %s68
      %p74 = scmp.eq.s32.totalorder %s41, 0
      %p75 = por %p73, %p74
      %p76 = scmp.ne.s32.totalorder %s65, %s68
      %p77 = scmp.eq.s32.totalorder %s46, 1
      %p78 = por %p76, %p77
      %p79 = scmp.ne.s32.totalorder %s68, %s69
      %p80 = scmp.eq.s32.totalorder %s46, 0
      %p81 = por %p79, %p80
      %p82 = scmp.ne.s32.totalorder %s68, %s69
      %p83 = scmp.eq.s32.totalorder %s47, 1
      %p84 = por %p82, %p83
      %p86 = scmp.ne.s32.totalorder %s69, %s85
      %p87 = scmp.eq.s32.totalorder %s47, 0
      %p88 = por %p86, %p87
      %s89 = ssub.s32 %s48, %s60
      %p90 = scmp.eq.s32.totalorder %s89, 0
      %s92 = sadd.s32 %s91, 1
      %s93 = scalar_select %p90, %s91, %s92
      %p96 = pneg %p90
      %p97 = scmp.eq.s32.totalorder %s41, 1
      %p98 = por %p96, %p97
      %p99 = scmp.ne.s32.totalorder %s91, %s94
      %p100 = scmp.eq.s32.totalorder %s41, 0
      %p101 = por %p99, %p100
      %p102 = scmp.ne.s32.totalorder %s91, %s94
      %p103 = scmp.eq.s32.totalorder %s46, 1
      %p104 = por %p102, %p103
      %p105 = scmp.ne.s32.totalorder %s94, %s95
      %p106 = scmp.eq.s32.totalorder %s46, 0
      %p107 = por %p105, %p106
      %p108 = scmp.ne.s32.totalorder %s94, %s95
      %p109 = scmp.eq.s32.totalorder %s47, 1
      %p110 = por %p108, %p109
      %p112 = scmp.ne.s32.totalorder %s95, %s111
      %p113 = scmp.eq.s32.totalorder %s47, 0
      %p114 = por %p112, %p113
      %s116 = sadd.s32 %s115, 1
      %p119 = scmp.eq.s32.totalorder %s41, 1
      %p120 = scmp.ne.s32.totalorder %s115, %s117
      %p121 = scmp.eq.s32.totalorder %s41, 0
      %p122 = por %p120, %p121
      %p123 = scmp.ne.s32.totalorder %s115, %s117
      %p124 = scmp.eq.s32.totalorder %s46, 1
      %p125 = por %p123, %p124
      %p126 = scmp.ne.s32.totalorder %s117, %s118
      %p127 = scmp.eq.s32.totalorder %s46, 0
      %p128 = por %p126, %p127
      %p129 = scmp.ne.s32.totalorder %s117, %s118
      %p130 = scmp.eq.s32.totalorder %s47, 1
      %p131 = por %p129, %p130
      %p133 = scmp.ne.s32.totalorder %s118, %s132
      %p134 = scmp.eq.s32.totalorder %s47, 0
      %p135 = por %p133, %p134
      %s137 = sadd.s32 %s136, 1
      %p140 = scmp.eq.s32.totalorder %s41, 1
      %p141 = scmp.ne.s32.totalorder %s136, %s138
      %p142 = scmp.eq.s32.totalorder %s41, 0
      %p143 = por %p141, %p142
      %p144 = scmp.ne.s32.totalorder %s136, %s138
      %p145 = scmp.eq.s32.totalorder %s46, 1
      %p146 = por %p144, %p145
      %p147 = scmp.ne.s32.totalorder %s138, %s139
      %p148 = scmp.eq.s32.totalorder %s46, 0
      %p149 = por %p147, %p148
      %p150 = scmp.ne.s32.totalorder %s138, %s139
      %p151 = scmp.eq.s32.totalorder %s47, 1
      %p152 = por %p150, %p151
      %p154 = scmp.ne.s32.totalorder %s139, %s153
      %p155 = scmp.eq.s32.totalorder %s47, 0
      %p156 = por %p154, %p155
      %s158 = sadd.s32 %s157, 1
      %p161 = scmp.eq.s32.totalorder %s41, 1
      %p162 = scmp.ne.s32.totalorder %s157, %s159
      %p163 = scmp.eq.s32.totalorder %s41, 0
      %p164 = por %p162, %p163
      %p165 = scmp.ne.s32.totalorder %s157, %s159
      %p166 = scmp.eq.s32.totalorder %s46, 1
      %p167 = por %p165, %p166
      %p168 = scmp.ne.s32.totalorder %s159, %s160
      %p169 = scmp.eq.s32.totalorder %s46, 0
      %p170 = por %p168, %p169
      %p171 = scmp.ne.s32.totalorder %s159, %s160
      %p172 = scmp.eq.s32.totalorder %s47, 1
      %p173 = por %p171, %p172
      %p175 = scmp.ne.s32.totalorder %s160, %s174
      %p176 = scmp.eq.s32.totalorder %s47, 0
      %p177 = por %p175, %p176
      %s179 = sadd.s32 %s178, 1
      %p182 = scmp.eq.s32.totalorder %s41, 1
      %p183 = scmp.ne.s32.totalorder %s178, %s180
      %p184 = scmp.eq.s32.totalorder %s41, 0
      %p185 = por %p183, %p184
      %p186 = scmp.ne.s32.totalorder %s178, %s180
      %p187 = scmp.eq.s32.totalorder %s46, 1
      %p188 = por %p186, %p187
      %p189 = scmp.ne.s32.totalorder %s180, %s181
      %p190 = scmp.eq.s32.totalorder %s46, 0
      %p191 = por %p189, %p190
      %p192 = scmp.ne.s32.totalorder %s180, %s181
      %p193 = scmp.eq.s32.totalorder %s47, 1
      %p194 = por %p192, %p193
      %p196 = scmp.ne.s32.totalorder %s181, %s195
      %p197 = scmp.eq.s32.totalorder %s47, 0
      %p198 = por %p196, %p197
      %s200 = sadd.s32 %s199, 1
      %p203 = scmp.eq.s32.totalorder %s41, 1
      %p204 = scmp.ne.s32.totalorder %s199, %s201
      %p205 = scmp.eq.s32.totalorder %s41, 0
      %p206 = por %p204, %p205
      %p207 = scmp.ne.s32.totalorder %s199, %s201
      %p208 = scmp.eq.s32.totalorder %s46, 1
      %p209 = por %p207, %p208
      %p210 = scmp.ne.s32.totalorder %s201, %s202
      %p211 = scmp.eq.s32.totalorder %s46, 0
      %p212 = por %p210, %p211
      %p213 = scmp.ne.s32.totalorder %s201, %s202
      %p214 = scmp.eq.s32.totalorder %s47, 1
      %p215 = por %p213, %p214
      %p217 = scmp.ne.s32.totalorder %s202, %s216
      %p218 = scmp.eq.s32.totalorder %s47, 0
      %p219 = por %p217, %p218
      %s221 = sadd.s32 %s220, 1
      %p224 = scmp.eq.s32.totalorder %s41, 1
      %p225 = scmp.ne.s32.totalorder %s220, %s222
      %p226 = scmp.eq.s32.totalorder %s41, 0
      %p227 = por %p225, %p226
      %p228 = scmp.ne.s32.totalorder %s220, %s222
      %p229 = scmp.eq.s32.totalorder %s46, 1
      %p230 = por %p228, %p229
      %p231 = scmp.ne.s32.totalorder %s222, %s223
      %p232 = scmp.eq.s32.totalorder %s46, 0
      %p233 = por %p231, %p232
      %p234 = scmp.ne.s32.totalorder %s222, %s223
      %p235 = scmp.eq.s32.totalorder %s47, 1
      %p236 = por %p234, %p235
      %p238 = scmp.ne.s32.totalorder %s223, %s237
      %p239 = scmp.eq.s32.totalorder %s47, 0
      %p240 = por %p238, %p239
      %s242 = sadd.s32 %s241, 1
      %p245 = scmp.eq.s32.totalorder %s41, 1
      %p246 = scmp.ne.s32.totalorder %s241, %s243
      %p247 = scmp.eq.s32.totalorder %s41, 0
      %p248 = por %p246, %p247
      %p249 = scmp.ne.s32.totalorder %s241, %s243
      %p250 = scmp.eq.s32.totalorder %s46, 1
      %p251 = por %p249, %p250
      %p252 = scmp.ne.s32.totalorder %s243, %s244
      %p253 = scmp.eq.s32.totalorder %s46, 0
      %p254 = por %p252, %p253
      %p255 = scmp.ne.s32.totalorder %s243, %s244
      %p256 = scmp.eq.s32.totalorder %s47, 1
      %p257 = por %p255, %p256
      %p259 = scmp.ne.s32.totalorder %s244, %s258
      %p260 = scmp.eq.s32.totalorder %s47, 0
      %p261 = por %p259, %p260
      %s263 = sadd.s32 %s262, 1
      %p266 = scmp.eq.s32.totalorder %s41, 1
      %p267 = scmp.ne.s32.totalorder %s262, %s264
      %p268 = scmp.eq.s32.totalorder %s41, 0
      %p269 = por %p267, %p268
      %p270 = scmp.ne.s32.totalorder %s262, %s264
      %p271 = scmp.eq.s32.totalorder %s46, 1
      %p272 = por %p270, %p271
      %p273 = scmp.ne.s32.totalorder %s264, %s265
      %p274 = scmp.eq.s32.totalorder %s46, 0
      %p275 = por %p273, %p274
      %p276 = scmp.ne.s32.totalorder %s264, %s265
      %p277 = scmp.eq.s32.totalorder %s47, 1
      %p278 = por %p276, %p277
      %p280 = scmp.ne.s32.totalorder %s265, %s279
      %p281 = scmp.eq.s32.totalorder %s47, 0
      %p282 = por %p280, %p281
      %s284 = sadd.s32 %s283, 1
      %p287 = scmp.eq.s32.totalorder %s41, 1
      %p288 = scmp.ne.s32.totalorder %s283, %s285
      %p289 = scmp.eq.s32.totalorder %s41, 0
      %p290 = por %p288, %p289
      %p291 = scmp.ne.s32.totalorder %s283, %s285
      %p292 = scmp.eq.s32.totalorder %s46, 1
      %p293 = por %p291, %p292
      %p294 = scmp.ne.s32.totalorder %s285, %s286
      %p295 = scmp.eq.s32.totalorder %s46, 0
      %p296 = por %p294, %p295
      %p297 = scmp.ne.s32.totalorder %s285, %s286
      %p298 = scmp.eq.s32.totalorder %s47, 1
      %p299 = por %p297, %p298
      %p301 = scmp.ne.s32.totalorder %s286, %s300
      %p302 = scmp.eq.s32.totalorder %s47, 0
      %p303 = por %p301, %p302
      %s305 = sadd.s32 %s304, 1
      %p308 = scmp.eq.s32.totalorder %s41, 1
      %p309 = scmp.ne.s32.totalorder %s304, %s306
      %p310 = scmp.eq.s32.totalorder %s41, 0
      %p311 = por %p309, %p310
      %p312 = scmp.ne.s32.totalorder %s304, %s306
      %p313 = scmp.eq.s32.totalorder %s46, 1
      %p314 = por %p312, %p313
      %p315 = scmp.ne.s32.totalorder %s306, %s307
      %p316 = scmp.eq.s32.totalorder %s46, 0
      %p317 = por %p315, %p316
      %p318 = scmp.ne.s32.totalorder %s306, %s307
      %p319 = scmp.eq.s32.totalorder %s47, 1
      %p320 = por %p318, %p319
      %p322 = scmp.ne.s32.totalorder %s307, %s321
      %p323 = scmp.eq.s32.totalorder %s47, 0
      %p324 = por %p322, %p323
      %s326 = sadd.s32 %s325, 1
      %p329 = scmp.eq.s32.totalorder %s41, 1
      %p330 = scmp.ne.s32.totalorder %s325, %s327
      %p331 = scmp.eq.s32.totalorder %s41, 0
      %p332 = por %p330, %p331
      %p333 = scmp.ne.s32.totalorder %s325, %s327
      %p334 = scmp.eq.s32.totalorder %s46, 1
      %p335 = por %p333, %p334
      %p336 = scmp.ne.s32.totalorder %s327, %s328
      %p337 = scmp.eq.s32.totalorder %s46, 0
      %p338 = por %p336, %p337
      %p339 = scmp.ne.s32.totalorder %s327, %s328
      %p340 = scmp.eq.s32.totalorder %s47, 1
      %p341 = por %p339, %p340
      %p343 = scmp.ne.s32.totalorder %s328, %s342
      %p344 = scmp.eq.s32.totalorder %s47, 0
      %p345 = por %p343, %p344
      %s347 = sadd.s32 %s346, 1
      %p350 = scmp.eq.s32.totalorder %s41, 1
      %p351 = scmp.ne.s32.totalorder %s346, %s348
      %p352 = scmp.eq.s32.totalorder %s41, 0
      %p353 = por %p351, %p352
      %p354 = scmp.ne.s32.totalorder %s346, %s348
      %p355 = scmp.eq.s32.totalorder %s46, 1
      %p356 = por %p354, %p355
      %p357 = scmp.ne.s32.totalorder %s348, %s349
      %p358 = scmp.eq.s32.totalorder %s46, 0
      %p359 = por %p357, %p358
      %p360 = scmp.ne.s32.totalorder %s348, %s349
      %p361 = scmp.eq.s32.totalorder %s47, 1
      %p362 = por %p360, %p361
      %p364 = scmp.ne.s32.totalorder %s349, %s363
      %p365 = scmp.eq.s32.totalorder %s47, 0
      %p366 = por %p364, %p365
      %s368 = sadd.s32 %s367, 1
      %p371 = scmp.eq.s32.totalorder %s41, 1
      %p372 = scmp.ne.s32.totalorder %s367, %s369
      %p373 = scmp.eq.s32.totalorder %s41, 0
      %p374 = por %p372, %p373
      %p375 = scmp.ne.s32.totalorder %s367, %s369
      %p376 = scmp.eq.s32.totalorder %s46, 1
      %p377 = por %p375, %p376
      %p378 = scmp.ne.s32.totalorder %s369, %s370
      %p379 = scmp.eq.s32.totalorder %s46, 0
      %p380 = por %p378, %p379
      %p381 = scmp.ne.s32.totalorder %s369, %s370
      %p382 = scmp.eq.s32.totalorder %s47, 1
      %p383 = por %p381, %p382
      %p385 = scmp.ne.s32.totalorder %s370, %s384
      %p386 = scmp.eq.s32.totalorder %s47, 0
      %p387 = por %p385, %p386
      %s389 = sadd.s32 %s388, 1
      %p392 = scmp.eq.s32.totalorder %s41, 1
      %p393 = scmp.ne.s32.totalorder %s388, %s390
      %p394 = scmp.eq.s32.totalorder %s41, 0
      %p395 = por %p393, %p394
      %p396 = scmp.ne.s32.totalorder %s388, %s390
      %p397 = scmp.eq.s32.totalorder %s46, 1
      %p398 = por %p396, %p397
      %p399 = scmp.ne.s32.totalorder %s390, %s391
      %p400 = scmp.eq.s32.totalorder %s46, 0
      %p401 = por %p399, %p400
      %p402 = scmp.ne.s32.totalorder %s390, %s391
      %p403 = scmp.eq.s32.totalorder %s47, 1
      %p404 = por %p402, %p403
      %p406 = scmp.ne.s32.totalorder %s391, %s405
      %p407 = scmp.eq.s32.totalorder %s47, 0
      %p408 = por %p406, %p407
      %s410 = sadd.s32 %s409, 1
      %p413 = scmp.eq.s32.totalorder %s41, 1
      %p414 = scmp.ne.s32.totalorder %s409, %s411
      %p415 = scmp.eq.s32.totalorder %s41, 0
      %p416 = por %p414, %p415
      %p417 = scmp.ne.s32.totalorder %s409, %s411
      %p418 = scmp.eq.s32.totalorder %s46, 1
      %p419 = por %p417, %p418
      %p420 = scmp.ne.s32.totalorder %s411, %s412
      %p421 = scmp.eq.s32.totalorder %s46, 0
      %p422 = por %p420, %p421
      %p423 = scmp.ne.s32.totalorder %s411, %s412
      %p424 = scmp.eq.s32.totalorder %s47, 1
      %p425 = por %p423, %p424
      %p427 = scmp.ne.s32.totalorder %s412, %s426
      %p428 = scmp.eq.s32.totalorder %s47, 0
      %p429 = por %p427, %p428
      %s431 = sadd.s32 %s430, 1
      %p434 = scmp.eq.s32.totalorder %s41, 1
      %p435 = scmp.ne.s32.totalorder %s430, %s432
      %p436 = scmp.eq.s32.totalorder %s41, 0
      %p437 = por %p435, %p436
      %p438 = scmp.ne.s32.totalorder %s430, %s432
      %p439 = scmp.eq.s32.totalorder %s46, 1
      %p440 = por %p438, %p439
      %p441 = scmp.ne.s32.totalorder %s432, %s433
      %p442 = scmp.eq.s32.totalorder %s46, 0
      %p443 = por %p441, %p442
      %p444 = scmp.ne.s32.totalorder %s432, %s433
      %p445 = scmp.eq.s32.totalorder %s47, 1
      %p446 = por %p444, %p445
      %p448 = scmp.ne.s32.totalorder %s433, %s447
      %p449 = scmp.eq.s32.totalorder %s47, 0
      %p450 = por %p448, %p449
      %s452 = sadd.s32 %s451, 1
      %p455 = scmp.eq.s32.totalorder %s41, 1
      %p456 = scmp.ne.s32.totalorder %s451, %s453
      %p457 = scmp.eq.s32.totalorder %s41, 0
      %p458 = por %p456, %p457
      %p459 = scmp.ne.s32.totalorder %s451, %s453
      %p460 = scmp.eq.s32.totalorder %s46, 1
      %p461 = por %p459, %p460
      %p462 = scmp.ne.s32.totalorder %s453, %s454
      %p463 = scmp.eq.s32.totalorder %s46, 0
      %p464 = por %p462, %p463
      %p465 = scmp.ne.s32.totalorder %s453, %s454
      %p466 = scmp.eq.s32.totalorder %s47, 1
      %p467 = por %p465, %p466
      %p469 = scmp.ne.s32.totalorder %s454, %s468
      %p470 = scmp.eq.s32.totalorder %s47, 0
      %p471 = por %p469, %p470
      %s473 = sadd.s32 %s472, 1
      %p476 = scmp.eq.s32.totalorder %s41, 1
      %p477 = scmp.ne.s32.totalorder %s472, %s474
      %p478 = scmp.eq.s32.totalorder %s41, 0
      %p479 = por %p477, %p478
      %p480 = scmp.ne.s32.totalorder %s472, %s474
      %p481 = scmp.eq.s32.totalorder %s46, 1
      %p482 = por %p480, %p481
      %p483 = scmp.ne.s32.totalorder %s474, %s475
      %p484 = scmp.eq.s32.totalorder %s46, 0
      %p485 = por %p483, %p484
      %p486 = scmp.ne.s32.totalorder %s474, %s475
      %p487 = scmp.eq.s32.totalorder %s47, 1
      %p488 = por %p486, %p487
      %p490 = scmp.ne.s32.totalorder %s475, %s489
      %p491 = scmp.eq.s32.totalorder %s47, 0
      %p492 = por %p490, %p491
      %s494 = sadd.s32 %s493, 1
      %p497 = scmp.eq.s32.totalorder %s41, 1
      %p498 = scmp.ne.s32.totalorder %s493, %s495
      %p499 = scmp.eq.s32.totalorder %s41, 0
      %p500 = por %p498, %p499
      %p501 = scmp.ne.s32.totalorder %s493, %s495
      %p502 = scmp.eq.s32.totalorder %s46, 1
      %p503 = por %p501, %p502
      %p504 = scmp.ne.s32.totalorder %s495, %s496
      %p505 = scmp.eq.s32.totalorder %s46, 0
      %p506 = por %p504, %p505
      %p507 = scmp.ne.s32.totalorder %s495, %s496
      %p508 = scmp.eq.s32.totalorder %s47, 1
      %p509 = por %p507, %p508
      %p511 = scmp.ne.s32.totalorder %s496, %s510
      %p512 = scmp.eq.s32.totalorder %s47, 0
      %p513 = por %p511, %p512
      %s515 = sadd.s32 %s514, 1
      %p518 = scmp.eq.s32.totalorder %s41, 1
      %p519 = scmp.ne.s32.totalorder %s514, %s516
      %p520 = scmp.eq.s32.totalorder %s41, 0
      %p521 = por %p519, %p520
      %p522 = scmp.ne.s32.totalorder %s514, %s516
      %p523 = scmp.eq.s32.totalorder %s46, 1
      %p524 = por %p522, %p523
      %p525 = scmp.ne.s32.totalorder %s516, %s517
      %p526 = scmp.eq.s32.totalorder %s46, 0
      %p527 = por %p525, %p526
      %p528 = scmp.ne.s32.totalorder %s516, %s517
      %p529 = scmp.eq.s32.totalorder %s47, 1
      %p530 = por %p528, %p529
      %p532 = scmp.ne.s32.totalorder %s517, %s531
      %p533 = scmp.eq.s32.totalorder %s47, 0
      %p534 = por %p532, %p533
      %s535 = ssub.s32 %s48, %s60
      %s536 = ssub.s32 %s49, %s56
      %s537 = sor.u32 %s535, %s536
      %p538 = scmp.eq.s32.totalorder %s537, 0
      %s540 = sadd.s32 %s539, 1
      %s541 = scalar_select %p538, %s539, %s540
      %p544 = pneg %p538
      %p545 = scmp.eq.s32.totalorder %s41, 1
      %p546 = por %p544, %p545
      %p547 = scmp.ne.s32.totalorder %s539, %s542
      %p548 = scmp.eq.s32.totalorder %s41, 0
      %p549 = por %p547, %p548
      %p550 = scmp.ne.s32.totalorder %s539, %s542
      %p551 = scmp.eq.s32.totalorder %s46, 1
      %p552 = por %p550, %p551
      %p553 = scmp.ne.s32.totalorder %s542, %s543
      %p554 = scmp.eq.s32.totalorder %s46, 0
      %p555 = por %p553, %p554
      %p556 = scmp.ne.s32.totalorder %s542, %s543
      %p557 = scmp.eq.s32.totalorder %s47, 1
      %p558 = por %p556, %p557
      %p560 = scmp.ne.s32.totalorder %s543, %s559
      %p561 = scmp.eq.s32.totalorder %s47, 0
      %p562 = por %p560, %p561
      %p563 = scmp.le.s32.totalorder 1, %s41
      %p564 = scmp.lt.s32.totalorder %s41, 3
      %p565 = pnand %p563, %p564
      %p566 = pneg %p565
      // Predicated region
      $region9: #{tpu_custom_call.1} parent=5 // pred_check
        _
      $region10: #{tpu_custom_call.1} parent=5 // pred_check_branch
        %568 = sbr.rel (%p565) target = $region12
      $region11: #{tpu_custom_call.1} parent=5 // pred_region
        %s569 = ssub.s32 %s41, 1
        // Predicated region
        $region13: #{tpu_custom_call.1} parent=11 // pred_check
          %p570 = pneg %p128
        $region14: #{tpu_custom_call.1} parent=11 // pred_check_branch
          %572 = sbr.rel (%p570) target = $region16
        $region15: #{tpu_custom_call.1} parent=11 // pred_region
          %s574 = ssub.s32 4096, 4096
          %575 = vsyncadd [#allocation9], %s574
          %s576 = sshll.u32 [#allocation10], 4
          %s577 = int_to_ptr.vmem [resolvable:$true] %s576
          %582 = dma.hbm_to_vmem [thread:$0]  %s2, 4096, %s577, [#allocation9], 128, 128, 8
        $region16: #{tpu_custom_call.1} parent=11 // pred_fallthru
          _
        // Predicated region
        $region17: #{tpu_custom_call.1} parent=11 // pred_check
          %p583 = pneg %p149
        $region18: #{tpu_custom_call.1} parent=11 // pred_check_branch
          %585 = sbr.rel (%p583) target = $region20
        $region19: #{tpu_custom_call.1} parent=11 // pred_region
          _
        $region20: #{tpu_custom_call.1} parent=11 // pred_fallthru
          _
        // Predicated region
        $region21: #{tpu_custom_call.1} parent=11 // pred_check
          %p586 = pneg %p170
        $region22: #{tpu_custom_call.1} parent=11 // pred_check_branch
          %588 = sbr.rel (%p586) target = $region24
        $region23: #{tpu_custom_call.1} parent=11 // pred_region
          %s590 = ssub.s32 4096, 4096
          %591 = vsyncadd [#allocation12], %s590
          %s592 = sshll.u32 [#allocation11], 4
          %s593 = int_to_ptr.vmem [resolvable:$true] %s592
          %598 = dma.hbm_to_vmem [thread:$0]  %s4, 4096, %s593, [#allocation12], 128, 128, 8
        $region24: #{tpu_custom_call.1} parent=11 // pred_fallthru
          _
        // Predicated region
        $region25: #{tpu_custom_call.1} parent=11 // pred_check
          %p599 = pneg %p191
        $region26: #{tpu_custom_call.1} parent=11 // pred_check_branch
          %601 = sbr.rel (%p599) target = $region28
        $region27: #{tpu_custom_call.1} parent=11 // pred_region
          _
        $region28: #{tpu_custom_call.1} parent=11 // pred_fallthru
          _
        // Predicated region
        $region29: #{tpu_custom_call.1} parent=11 // pred_check
          %p602 = pneg %p212
        $region30: #{tpu_custom_call.1} parent=11 // pred_check_branch
          %604 = sbr.rel (%p602) target = $region32
        $region31: #{tpu_custom_call.1} parent=11 // pred_region
          %s606 = ssub.s32 4096, 4096
          %607 = vsyncadd [#allocation12], %s606
          %s608 = sshll.u32 [#allocation13], 4
          %s609 = int_to_ptr.vmem [resolvable:$true] %s608
          %614 = dma.hbm_to_vmem [thread:$0]  %s6, 4096, %s609, [#allocation12], 128, 128, 8
        $region32: #{tpu_custom_call.1} parent=11 // pred_fallthru
          _
        // Predicated region
        $region33: #{tpu_custom_call.1} parent=11 // pred_check
          %p615 = pneg %p233
        $region34: #{tpu_custom_call.1} parent=11 // pred_check_branch
          %617 = sbr.rel (%p615) target = $region36
        $region35: #{tpu_custom_call.1} parent=11 // pred_region
          _
        $region36: #{tpu_custom_call.1} parent=11 // pred_fallthru
          _
        // Predicated region
        $region37: #{tpu_custom_call.1} parent=11 // pred_check
          %p618 = pneg %p254
        $region38: #{tpu_custom_call.1} parent=11 // pred_check_branch
          %620 = sbr.rel (%p618) target = $region40
        $region39: #{tpu_custom_call.1} parent=11 // pred_region
          %s622 = ssub.s32 4096, 4096
          %623 = vsyncadd [#allocation15], %s622
          %s624 = sshll.u32 [#allocation14], 4
          %s625 = int_to_ptr.vmem [resolvable:$true] %s624
          %630 = dma.hbm_to_vmem [thread:$0]  %s8, 4096, %s625, [#allocation15], 128, 128, 8
        $region40: #{tpu_custom_call.1} parent=11 // pred_fallthru
          _
        // Predicated region
        $region41: #{tpu_custom_call.1} parent=11 // pred_check
          %p631 = pneg %p275
        $region42: #{tpu_custom_call.1} parent=11 // pred_check_branch
          %633 = sbr.rel (%p631) target = $region44
        $region43: #{tpu_custom_call.1} parent=11 // pred_region
          _
        $region44: #{tpu_custom_call.1} parent=11 // pred_fallthru
          _
        // Predicated region
        $region45: #{tpu_custom_call.1} parent=11 // pred_check
          %p634 = pneg %p296
        $region46: #{tpu_custom_call.1} parent=11 // pred_check_branch
          %636 = sbr.rel (%p634) target = $region48
        $region47: #{tpu_custom_call.1} parent=11 // pred_region
          %s638 = ssub.s32 4096, 4096
          %639 = vsyncadd [#allocation15], %s638
          %s640 = sshll.u32 [#allocation16], 4
          %s641 = int_to_ptr.vmem [resolvable:$true] %s640
          %646 = dma.hbm_to_vmem [thread:$0]  %s10, 4096, %s641, [#allocation15], 128, 128, 8
        $region48: #{tpu_custom_call.1} parent=11 // pred_fallthru
          _
        // Predicated region
        $region49: #{tpu_custom_call.1} parent=11 // pred_check
          %p647 = pneg %p317
        $region50: #{tpu_custom_call.1} parent=11 // pred_check_branch
          %649 = sbr.rel (%p647) target = $region52
        $region51: #{tpu_custom_call.1} parent=11 // pred_region
          _
        $region52: #{tpu_custom_call.1} parent=11 // pred_fallthru
          _
        // Predicated region
        $region53: #{tpu_custom_call.1} parent=11 // pred_check
          %p650 = pneg %p338
        $region54: #{tpu_custom_call.1} parent=11 // pred_check_branch
          %652 = sbr.rel (%p650) target = $region56
        $region55: #{tpu_custom_call.1} parent=11 // pred_region
          %s654 = ssub.s32 4096, 4096
          %655 = vsyncadd [#allocation18], %s654
          %s656 = sshll.u32 [#allocation17], 4
          %s657 = int_to_ptr.vmem [resolvable:$true] %s656
          %662 = dma.hbm_to_vmem [thread:$0]  %s12, 4096, %s657, [#allocation18], 128, 128, 8
        $region56: #{tpu_custom_call.1} parent=11 // pred_fallthru
          _
        // Predicated region
        $region57: #{tpu_custom_call.1} parent=11 // pred_check
          %p663 = pneg %p359
        $region58: #{tpu_custom_call.1} parent=11 // pred_check_branch
          %665 = sbr.rel (%p663) target = $region60
        $region59: #{tpu_custom_call.1} parent=11 // pred_region
          _
        $region60: #{tpu_custom_call.1} parent=11 // pred_fallthru
          _
        // Predicated region
        $region61: #{tpu_custom_call.1} parent=11 // pred_check
          %p666 = pneg %p380
        $region62: #{tpu_custom_call.1} parent=11 // pred_check_branch
          %668 = sbr.rel (%p666) target = $region64
        $region63: #{tpu_custom_call.1} parent=11 // pred_region
          _
        $region64: #{tpu_custom_call.1} parent=11 // pred_fallthru
          _
        // Predicated region
        $region65: #{tpu_custom_call.1} parent=11 // pred_check
          %p669 = pneg %p401
        $region66: #{tpu_custom_call.1} parent=11 // pred_check_branch
          %671 = sbr.rel (%p669) target = $region68
        $region67: #{tpu_custom_call.1} parent=11 // pred_region
          _
        $region68: #{tpu_custom_call.1} parent=11 // pred_fallthru
          _
        // Predicated region
        $region69: #{tpu_custom_call.1} parent=11 // pred_check
          %p672 = pneg %p422
        $region70: #{tpu_custom_call.1} parent=11 // pred_check_branch
          %674 = sbr.rel (%p672) target = $region72
        $region71: #{tpu_custom_call.1} parent=11 // pred_region
          %s676 = ssub.s32 16384, 16384
          %677 = vsyncadd [#allocation18], %s676
          %s678 = sshll.u32 [#allocation19], 4
          %s679 = int_to_ptr.vmem [resolvable:$true] %s678
          %684 = dma.hbm_to_vmem [thread:$0]  %s16, 16384, %s679, [#allocation18], 512, 512, 32
        $region72: #{tpu_custom_call.1} parent=11 // pred_fallthru
          _
        // Predicated region
        $region73: #{tpu_custom_call.1} parent=11 // pred_check
          %p685 = pneg %p443
        $region74: #{tpu_custom_call.1} parent=11 // pred_check_branch
          %687 = sbr.rel (%p685) target = $region76
        $region75: #{tpu_custom_call.1} parent=11 // pred_region
          _
        $region76: #{tpu_custom_call.1} parent=11 // pred_fallthru
          _
        // Predicated region
        $region77: #{tpu_custom_call.1} parent=11 // pred_check
          %p688 = pneg %p464
        $region78: #{tpu_custom_call.1} parent=11 // pred_check_branch
          %690 = sbr.rel (%p688) target = $region80
        $region79: #{tpu_custom_call.1} parent=11 // pred_region
          %s692 = ssub.s32 16384, 16384
          %693 = vsyncadd [#allocation21], %s692
          %s694 = sshll.u32 [#allocation20], 4
          %s695 = int_to_ptr.vmem [resolvable:$true] %s694
          %700 = dma.hbm_to_vmem [thread:$0]  %s18, 16384, %s695, [#allocation21], 128, 128, 8
        $region80: #{tpu_custom_call.1} parent=11 // pred_fallthru
          _
        // Predicated region
        $region81: #{tpu_custom_call.1} parent=11 // pred_check
          %p701 = pneg %p485
        $region82: #{tpu_custom_call.1} parent=11 // pred_check_branch
          %703 = sbr.rel (%p701) target = $region84
        $region83: #{tpu_custom_call.1} parent=11 // pred_region
          _
        $region84: #{tpu_custom_call.1} parent=11 // pred_fallthru
          _
        // Predicated region
        $region85: #{tpu_custom_call.1} parent=11 // pred_check
          %p704 = pneg %p506
        $region86: #{tpu_custom_call.1} parent=11 // pred_check_branch
          %706 = sbr.rel (%p704) target = $region88
        $region87: #{tpu_custom_call.1} parent=11 // pred_region
          _
        $region88: #{tpu_custom_call.1} parent=11 // pred_fallthru
          _
        // Predicated region
        $region89: #{tpu_custom_call.1} parent=11 // pred_check
          %p707 = pneg %p527
        $region90: #{tpu_custom_call.1} parent=11 // pred_check_branch
          %709 = sbr.rel (%p707) target = $region92
        $region91: #{tpu_custom_call.1} parent=11 // pred_region
          _
        $region92: #{tpu_custom_call.1} parent=11 // pred_fallthru
          _
      $region12: #{tpu_custom_call.1} parent=5 // pred_fallthru
        _
      %p710 = scmp.lt.s32.totalorder %s41, 2
      // Predicated region
      $region93: #{tpu_custom_call.1} parent=5 // pred_check
        %p711 = pneg %p710
      $region94: #{tpu_custom_call.1} parent=5 // pred_check_branch
        %713 = sbr.rel (%p711) target = $region96
      $region95: #{tpu_custom_call.1} parent=5 // pred_region
        // Predicated region
        $region97: #{tpu_custom_call.1} parent=95 // pred_check
          %p714 = pneg %p75
        $region98: #{tpu_custom_call.1} parent=95 // pred_check_branch
          %716 = sbr.rel (%p714) target = $region100
        $region99: #{tpu_custom_call.1} parent=95 // pred_region
          %s717 = sand.u32 %s65, 1
          %s718 = scalar_lea.sflag [#allocation6], %s717
          %s719 = sand.u32 %s65, 1
          %s720 = smul.addr %s719, 32
          %s721 = scalar_lea.vmem [#allocation5], %s720
          %s722 = smul.u32 2, %s49
          %s724 = ssub.s32 512, 512
          %725 = vsyncadd %s718, %s724
          %s726 = smul.addr %s722, 2
          %s727 = smul.addr %s48, 4
          %s728 = sadd.s32 %s726, %s727
          %s729 = smul.addr %s728, 128
          %s730 = scalar_lea.hbm %s0, %s729
          %s731 = sshll.u32 %s721, 4
          %s732 = int_to_ptr.vmem [resolvable:$true] %s731
          %737 = dma.hbm_to_vmem [thread:$0]  %s730, 512, %s732, %s718, 256, 256, 16
        $region100: #{tpu_custom_call.1} parent=95 // pred_fallthru
          _
        // Predicated region
        $region101: #{tpu_custom_call.1} parent=95 // pred_check
          %p738 = pneg %p101
        $region102: #{tpu_custom_call.1} parent=95 // pred_check_branch
          %740 = sbr.rel (%p738) target = $region104
        $region103: #{tpu_custom_call.1} parent=95 // pred_region
          %s741 = sand.u32 %s41, 1
          %s742 = scalar_lea.sflag [#allocation9], %s741
          %s743 = sand.u32 %s91, 1
          %s744 = smul.addr %s743, 32
          %s745 = scalar_lea.vmem [#allocation8], %s744
          %s747 = ssub.s32 512, 512
          %748 = vsyncadd %s742, %s747
          %s749 = smul.addr %s48, 4
          %s750 = smul.addr %s749, 128
          %s751 = scalar_lea.hbm %s1, %s750
          %s752 = sshll.u32 %s745, 4
          %s753 = int_to_ptr.vmem [resolvable:$true] %s752
          %758 = dma.hbm_to_vmem [thread:$0]  %s751, 512, %s753, %s742, 256, 256, 16
        $region104: #{tpu_custom_call.1} parent=95 // pred_fallthru
          _
      $region96: #{tpu_custom_call.1} parent=5 // pred_fallthru
        _
      %p759 = scmp.le.s32.totalorder 1, %s41
      %p760 = scmp.lt.s32.totalorder %s41, 3
      %p761 = pnand %p759, %p760
      %p762 = pneg %p761
      // Predicated region
      $region105: #{tpu_custom_call.1} parent=5 // pred_check
        _
      $region106: #{tpu_custom_call.1} parent=5 // pred_check_branch
        %764 = sbr.rel (%p761) target = $region108
      $region107: #{tpu_custom_call.1} parent=5 // pred_region
        %s765 = ssub.s32 %s41, 1
        %s766 = sand.u32 %s68, 1
        %s767 = scalar_lea.sflag [#allocation6], %s766
        %s768 = sand.u32 %s68, 1
        %s769 = smul.addr %s768, 32
        %s770 = scalar_lea.vmem [#allocation5], %s769
        // Predicated region
        $region109: #{tpu_custom_call.1} parent=107 // pred_check
          %p771 = pneg %p81
        $region110: #{tpu_custom_call.1} parent=107 // pred_check_branch
          %773 = sbr.rel (%p771) target = $region112
        $region111: #{tpu_custom_call.1} parent=107 // pred_region
          %774 = dma.done %s767, 512
        $region112: #{tpu_custom_call.1} parent=107 // pred_fallthru
          _
        %s775 = sand.u32 %s46, 1
        %s776 = scalar_lea.sflag [#allocation9], %s775
        %s777 = sand.u32 %s94, 1
        %s778 = smul.addr %s777, 32
        %s779 = scalar_lea.vmem [#allocation8], %s778
        // Predicated region
        $region113: #{tpu_custom_call.1} parent=107 // pred_check
          %p780 = pneg %p107
        $region114: #{tpu_custom_call.1} parent=107 // pred_check_branch
          %782 = sbr.rel (%p780) target = $region116
        $region115: #{tpu_custom_call.1} parent=107 // pred_region
          %783 = dma.done %s776, 512
        $region116: #{tpu_custom_call.1} parent=107 // pred_fallthru
          _
        // Predicated region
        $region117: #{tpu_custom_call.1} parent=107 // pred_check
          %p784 = pneg %p128
        $region118: #{tpu_custom_call.1} parent=107 // pred_check_branch
          %786 = sbr.rel (%p784) target = $region120
        $region119: #{tpu_custom_call.1} parent=107 // pred_region
          %787 = dma.done [#allocation9], 4096
        $region120: #{tpu_custom_call.1} parent=107 // pred_fallthru
          _
        // Predicated region
        $region121: #{tpu_custom_call.1} parent=107 // pred_check
          %p788 = pneg %p170
        $region122: #{tpu_custom_call.1} parent=107 // pred_check_branch
          %790 = sbr.rel (%p788) target = $region124
        $region123: #{tpu_custom_call.1} parent=107 // pred_region
          %791 = dma.done [#allocation12], 4096
        $region124: #{tpu_custom_call.1} parent=107 // pred_fallthru
          _
        // Predicated region
        $region125: #{tpu_custom_call.1} parent=107 // pred_check
          %p792 = pneg %p212
        $region126: #{tpu_custom_call.1} parent=107 // pred_check_branch
          %794 = sbr.rel (%p792) target = $region128
        $region127: #{tpu_custom_call.1} parent=107 // pred_region
          %795 = dma.done [#allocation12], 4096
        $region128: #{tpu_custom_call.1} parent=107 // pred_fallthru
          _
        // Predicated region
        $region129: #{tpu_custom_call.1} parent=107 // pred_check
          %p796 = pneg %p254
        $region130: #{tpu_custom_call.1} parent=107 // pred_check_branch
          %798 = sbr.rel (%p796) target = $region132
        $region131: #{tpu_custom_call.1} parent=107 // pred_region
          %799 = dma.done [#allocation15], 4096
        $region132: #{tpu_custom_call.1} parent=107 // pred_fallthru
          _
        // Predicated region
        $region133: #{tpu_custom_call.1} parent=107 // pred_check
          %p800 = pneg %p296
        $region134: #{tpu_custom_call.1} parent=107 // pred_check_branch
          %802 = sbr.rel (%p800) target = $region136
        $region135: #{tpu_custom_call.1} parent=107 // pred_region
          %803 = dma.done [#allocation15], 4096
        $region136: #{tpu_custom_call.1} parent=107 // pred_fallthru
          _
        // Predicated region
        $region137: #{tpu_custom_call.1} parent=107 // pred_check
          %p804 = pneg %p338
        $region138: #{tpu_custom_call.1} parent=107 // pred_check_branch
          %806 = sbr.rel (%p804) target = $region140
        $region139: #{tpu_custom_call.1} parent=107 // pred_region
          %807 = dma.done [#allocation18], 4096
        $region140: #{tpu_custom_call.1} parent=107 // pred_fallthru
          _
        // Predicated region
        $region141: #{tpu_custom_call.1} parent=107 // pred_check
          %p808 = pneg %p422
        $region142: #{tpu_custom_call.1} parent=107 // pred_check_branch
          %810 = sbr.rel (%p808) target = $region144
        $region143: #{tpu_custom_call.1} parent=107 // pred_region
          %811 = dma.done [#allocation18], 16384
        $region144: #{tpu_custom_call.1} parent=107 // pred_fallthru
          _
        // Predicated region
        $region145: #{tpu_custom_call.1} parent=107 // pred_check
          %p812 = pneg %p464
        $region146: #{tpu_custom_call.1} parent=107 // pred_check_branch
          %814 = sbr.rel (%p812) target = $region148
        $region147: #{tpu_custom_call.1} parent=107 // pred_region
          %815 = dma.done [#allocation21], 16384
        $region148: #{tpu_custom_call.1} parent=107 // pred_fallthru
          _
        %s816 = sand.u32 %s68, 1
        %s817 = scalar_lea.sflag [#allocation6], %s816
        %s818 = sand.u32 %s68, 1
        %s819 = smul.addr %s818, 32
        %s820 = scalar_lea.vmem [#allocation5], %s819
        %p821 = pneg %p81
        %p822 = pneg %p78
        %s823 = sand.u32 %s46, 1
        %s824 = scalar_lea.sflag [#allocation9], %s823
        %s825 = sand.u32 %s94, 1
        %s826 = smul.addr %s825, 32
        %s827 = scalar_lea.vmem [#allocation8], %s826
        %p828 = pneg %p107
        %p829 = pneg %p104
        %p830 = pneg %p128
        %p831 = pneg %p125
        %p832 = pneg %p149
        %p833 = pneg %p146
        %p834 = pneg %p170
        %p835 = pneg %p167
        %p836 = pneg %p191
        %p837 = pneg %p188
        %p838 = pneg %p212
        %p839 = pneg %p209
        %p840 = pneg %p233
        %p841 = pneg %p230
        %p842 = pneg %p254
        %p843 = pneg %p251
        %p844 = pneg %p275
        %p845 = pneg %p272
        %p846 = pneg %p296
        %p847 = pneg %p293
        %p848 = pneg %p317
        %p849 = pneg %p314
        %p850 = pneg %p338
        %p851 = pneg %p335
        %p852 = pneg %p359
        %p853 = pneg %p356
        %p854 = pneg %p380
        %p855 = pneg %p377
        %p856 = pneg %p401
        %p857 = pneg %p398
        %p858 = pneg %p422
        %p859 = pneg %p419
        %p860 = pneg %p443
        %p861 = pneg %p440
        %p862 = pneg %p464
        %p863 = pneg %p461
        %p864 = pneg %p485
        %p865 = pneg %p482
        %p866 = pneg %p506
        %p867 = pneg %p503
        %p868 = pneg %p527
        %p869 = pneg %p524
        %p870 = pneg %p555
        %p871 = pneg %p552
        %s872 = sand.u32 %s542, 1
        %s873 = scalar_lea.sflag [#allocation7], %s872
        %s874 = sand.u32 %s542, 1
        %s875 = smul.addr %s874, 32
        %s876 = scalar_lea.vmem [#allocation22], %s875
        %s877 = smul.u32 2, %s51
        %s878 = smul.u32 2, %s51
        %p880 = scmp.eq.s32.totalorder %s51, 0
        // Predicated region
        $region149: #{tpu_custom_call.1} parent=107 // pred_check
          %p881 = pneg %p880
        $region150: #{tpu_custom_call.1} parent=107 // pred_check_branch
          %883 = sbr.rel (%p881) target = $region152
        $region151: #{tpu_custom_call.1} parent=107 // pred_region
          %v884 = vld [vmem:[%s779] sm:$0xff]
          %v885 = vld [vmem:[%s779 + $0x8] sm:$0xff]
          %v886 = vld [vmem:[%s779 + $0x10] sm:$0xff]
          %v887 = vld [vmem:[%s779 + $0x18] sm:$0xff]
          %v888 = vpack.c.bf16 %v886, %v884
          %v889 = vpack.c.bf16 %v887, %v885
          %v890 = vld [vmem:[#allocation11] sm:$0xff]
          %v891 = vld [vmem:[#allocation11 + $0x8] sm:$0xff]
          %v892 = vld [vmem:[#allocation11 + $0x10] sm:$0xff]
          %v893 = vld [vmem:[#allocation11 + $0x18] sm:$0xff]
          %v894 = vld [vmem:[#allocation11 + $0x20] sm:$0xff]
          %v895 = vld [vmem:[#allocation11 + $0x28] sm:$0xff]
          %v896 = vld [vmem:[#allocation11 + $0x30] sm:$0xff]
          %v897 = vld [vmem:[#allocation11 + $0x38] sm:$0xff]
          %v898 = vld [vmem:[#allocation11 + $0x40] sm:$0xff]
          %v899 = vld [vmem:[#allocation11 + $0x48] sm:$0xff]
          %v900 = vld [vmem:[#allocation11 + $0x50] sm:$0xff]
          %v901 = vld [vmem:[#allocation11 + $0x58] sm:$0xff]
          %v902 = vld [vmem:[#allocation11 + $0x60] sm:$0xff]
          %v903 = vld [vmem:[#allocation11 + $0x68] sm:$0xff]
          %v904 = vld [vmem:[#allocation11 + $0x70] sm:$0xff]
          %v905 = vld [vmem:[#allocation11 + $0x78] sm:$0xff]
          %v906 = vld [vmem:[#allocation11 + $0x80] sm:$0xff]
          %v907 = vld [vmem:[#allocation11 + $0x88] sm:$0xff]
          %v908 = vld [vmem:[#allocation11 + $0x90] sm:$0xff]
          %v909 = vld [vmem:[#allocation11 + $0x98] sm:$0xff]
          %v910 = vld [vmem:[#allocation11 + $0xa0] sm:$0xff]
          %v911 = vld [vmem:[#allocation11 + $0xa8] sm:$0xff]
          %v912 = vld [vmem:[#allocation11 + $0xb0] sm:$0xff]
          %v913 = vld [vmem:[#allocation11 + $0xb8] sm:$0xff]
          %v914 = vld [vmem:[#allocation11 + $0xc0] sm:$0xff]
          %v915 = vld [vmem:[#allocation11 + $0xc8] sm:$0xff]
          %v916 = vld [vmem:[#allocation11 + $0xd0] sm:$0xff]
          %v917 = vld [vmem:[#allocation11 + $0xd8] sm:$0xff]
          %v918 = vld [vmem:[#allocation11 + $0xe0] sm:$0xff]
          %v919 = vld [vmem:[#allocation11 + $0xe8] sm:$0xff]
          %v920 = vld [vmem:[#allocation11 + $0xf0] sm:$0xff]
          %v921 = vld [vmem:[#allocation11 + $0xf8] sm:$0xff]
          %v922 = vld [vmem:[%s5] sm:$0x3]
          %v924 = vlaneseq
          %v925 = vshrl.u32 %v924, 7
          %v926 = vsub.s32 0, %v925
          %v927 = vrot.slane %v922, %v926
          %v928 = vlaneseq
          %v929 = vshrl.u32 %v928, 7
          %v930 = vsub.s32 1, %v929
          %v931 = vrot.slane %v922, %v930
          %v966 = vunpack.c.l.b16 %v890
          %v967 = vunpack.c.h.b16 %v890
          %v968 = vunpack.c.l.b16 %v891
          %v969 = vunpack.c.h.b16 %v891
          %v970 = vunpack.c.l.b16 %v892
          %v971 = vunpack.c.h.b16 %v892
          %v972 = vunpack.c.l.b16 %v893
          %v973 = vunpack.c.h.b16 %v893
          %v974 = vunpack.c.l.b16 %v894
          %v975 = vunpack.c.h.b16 %v894
          %v976 = vunpack.c.l.b16 %v895
          %v977 = vunpack.c.h.b16 %v895
          %v978 = vunpack.c.l.b16 %v896
          %v979 = vunpack.c.h.b16 %v896
          %v980 = vunpack.c.l.b16 %v897
          %v981 = vunpack.c.h.b16 %v897
          %v982 = vunpack.c.l.b16 %v898
          %v983 = vunpack.c.h.b16 %v898
          %v984 = vunpack.c.l.b16 %v899
          %v985 = vunpack.c.h.b16 %v899
          %v986 = vunpack.c.l.b16 %v900
          %v987 = vunpack.c.h.b16 %v900
          %v988 = vunpack.c.l.b16 %v901
          %v989 = vunpack.c.h.b16 %v901
          %v990 = vunpack.c.l.b16 %v902
          %v991 = vunpack.c.h.b16 %v902
          %v992 = vunpack.c.l.b16 %v903
          %v993 = vunpack.c.h.b16 %v903
          %v994 = vunpack.c.l.b16 %v904
          %v995 = vunpack.c.h.b16 %v904
          %v996 = vunpack.c.l.b16 %v905
          %v997 = vunpack.c.h.b16 %v905
          %v998 = vunpack.c.l.b16 %v906
          %v999 = vunpack.c.h.b16 %v906
          %v1000 = vunpack.c.l.b16 %v907
          %v1001 = vunpack.c.h.b16 %v907
          %v1002 = vunpack.c.l.b16 %v908
          %v1003 = vunpack.c.h.b16 %v908
          %v1004 = vunpack.c.l.b16 %v909
          %v1005 = vunpack.c.h.b16 %v909
          %v1006 = vunpack.c.l.b16 %v910
          %v1007 = vunpack.c.h.b16 %v910
          %v1008 = vunpack.c.l.b16 %v911
          %v1009 = vunpack.c.h.b16 %v911
          %v1010 = vunpack.c.l.b16 %v912
          %v1011 = vunpack.c.h.b16 %v912
          %v1012 = vunpack.c.l.b16 %v913
          %v1013 = vunpack.c.h.b16 %v913
          %v1014 = vunpack.c.l.b16 %v914
          %v1015 = vunpack.c.h.b16 %v914
          %v1016 = vunpack.c.l.b16 %v915
          %v1017 = vunpack.c.h.b16 %v915
          %v1018 = vunpack.c.l.b16 %v916
          %v1019 = vunpack.c.h.b16 %v916
          %v1020 = vunpack.c.l.b16 %v917
          %v1021 = vunpack.c.h.b16 %v917
          %v1022 = vunpack.c.l.b16 %v918
          %v1023 = vunpack.c.h.b16 %v918
          %v1024 = vunpack.c.l.b16 %v919
          %v1025 = vunpack.c.h.b16 %v919
          %v1026 = vunpack.c.l.b16 %v920
          %v1027 = vunpack.c.h.b16 %v920
          %v1028 = vunpack.c.l.b16 %v921
          %v1029 = vunpack.c.h.b16 %v921
          %v1030 = vpack.c.b16 %v968, %v966
          %v1031 = vpack.c.b16 %v969, %v967
          %v1032 = vpack.c.b16 %v972, %v970
          %v1033 = vpack.c.b16 %v973, %v971
          %v1034 = vpack.c.b16 %v976, %v974
          %v1035 = vpack.c.b16 %v977, %v975
          %v1036 = vpack.c.b16 %v980, %v978
          %v1037 = vpack.c.b16 %v981, %v979
          %v1038 = vpack.c.b16 %v984, %v982
          %v1039 = vpack.c.b16 %v985, %v983
          %v1040 = vpack.c.b16 %v988, %v986
          %v1041 = vpack.c.b16 %v989, %v987
          %v1042 = vpack.c.b16 %v992, %v990
          %v1043 = vpack.c.b16 %v993, %v991
          %v1044 = vpack.c.b16 %v996, %v994
          %v1045 = vpack.c.b16 %v997, %v995
          %v1046 = vpack.c.b16 %v1000, %v998
          %v1047 = vpack.c.b16 %v1001, %v999
          %v1048 = vpack.c.b16 %v1004, %v1002
          %v1049 = vpack.c.b16 %v1005, %v1003
          %v1050 = vpack.c.b16 %v1008, %v1006
          %v1051 = vpack.c.b16 %v1009, %v1007
          %v1052 = vpack.c.b16 %v1012, %v1010
          %v1053 = vpack.c.b16 %v1013, %v1011
          %v1054 = vpack.c.b16 %v1016, %v1014
          %v1055 = vpack.c.b16 %v1017, %v1015
          %v1056 = vpack.c.b16 %v1020, %v1018
          %v1057 = vpack.c.b16 %v1021, %v1019
          %v1058 = vpack.c.b16 %v1024, %v1022
          %v1059 = vpack.c.b16 %v1025, %v1023
          %v1060 = vpack.c.b16 %v1028, %v1026
          %v1061 = vpack.c.b16 %v1029, %v1027
          %1094 = vmatprep.subr.bf16.mxu0 %v1031
          %1095 = vmatpush1.bf16.msra.mxu0 %v1030
          %1096 = vmatprep.subr.bf16.mxu0 %v1033
          %1097 = vmatpush1.bf16.msra.mxu0 %v1032
          %1098 = vmatprep.subr.bf16.mxu0 %v1035
          %1099 = vmatpush1.bf16.msra.mxu0 %v1034
          %1100 = vmatprep.subr.bf16.mxu0 %v1037
          %1101 = vmatpush1.bf16.msra.mxu0 %v1036
          %1102 = vmatprep.subr.bf16.mxu0 %v1039
          %1103 = vmatpush1.bf16.msra.mxu0 %v1038
          %1104 = vmatprep.subr.bf16.mxu0 %v1041
          %1105 = vmatpush1.bf16.msra.mxu0 %v1040
          %1106 = vmatprep.subr.bf16.mxu0 %v1043
          %1107 = vmatpush1.bf16.msra.mxu0 %v1042
          %1108 = vmatprep.subr.bf16.mxu0 %v1045
          %1109 = vmatpush1.bf16.msra.mxu0 %v1044
          %1110 = vmatprep.subr.bf16.mxu0 %v1047
          %1111 = vmatpush1.bf16.msra.mxu0 %v1046
          %1112 = vmatprep.subr.bf16.mxu0 %v1049
          %1113 = vmatpush1.bf16.msra.mxu0 %v1048
          %1114 = vmatprep.subr.bf16.mxu0 %v1051
          %1115 = vmatpush1.bf16.msra.mxu0 %v1050
          %1116 = vmatprep.subr.bf16.mxu0 %v1053
          %1117 = vmatpush1.bf16.msra.mxu0 %v1052
          %1118 = vmatprep.subr.bf16.mxu0 %v1055
          %1119 = vmatpush1.bf16.msra.mxu0 %v1054
          %1120 = vmatprep.subr.bf16.mxu0 %v1057
          %1121 = vmatpush1.bf16.msra.mxu0 %v1056
          %1122 = vmatprep.subr.bf16.mxu0 %v1059
          %1123 = vmatpush1.bf16.msra.mxu0 %v1058
          %1124 = vmatprep.subr.bf16.mxu0 %v1061
          %1125 = vmatpush1.bf16.msra.mxu0 %v1060
          %1126 = vmatprep.mubr.bf16.mxu0 %v889
          %1127 = vmatmul.mubr.bf16.gmra.mrb[0].mxu0 %v888
          %v1128 = vpop.f32.mrb[0].mxu0
          %v1129 = vadd.f32 %v927, %v1128
          %v1130 = vpop.f32.mrb[0].mxu0
          %v1131 = vadd.f32 %v931, %v1130
          %v1132 = vpop.f32.mrb[0].mxu0
          %v1133 = vadd.f32 %v927, %v1132
          %v1134 = vpop.f32.mrb[0].mxu0
          %v1135 = vadd.f32 %v931, %v1134
          %1136 = vdwg.mxu0
          %v1137 = vpack.c.bf16 %v1133, %v1129
          %v1138 = vpack.c.bf16 %v1135, %v1131
          %v1139 = vld [vmem:[#allocation14] sm:$0xff]
          %v1140 = vld [vmem:[#allocation14 + $0x8] sm:$0xff]
          %v1141 = vld [vmem:[#allocation14 + $0x10] sm:$0xff]
          %v1142 = vld [vmem:[#allocation14 + $0x18] sm:$0xff]
          %v1143 = vld [vmem:[#allocation14 + $0x20] sm:$0xff]
          %v1144 = vld [vmem:[#allocation14 + $0x28] sm:$0xff]
          %v1145 = vld [vmem:[#allocation14 + $0x30] sm:$0xff]
          %v1146 = vld [vmem:[#allocation14 + $0x38] sm:$0xff]
          %v1147 = vld [vmem:[#allocation14 + $0x40] sm:$0xff]
          %v1148 = vld [vmem:[#allocation14 + $0x48] sm:$0xff]
          %v1149 = vld [vmem:[#allocation14 + $0x50] sm:$0xff]
          %v1150 = vld [vmem:[#allocation14 + $0x58] sm:$0xff]
          %v1151 = vld [vmem:[#allocation14 + $0x60] sm:$0xff]
          %v1152 = vld [vmem:[#allocation14 + $0x68] sm:$0xff]
          %v1153 = vld [vmem:[#allocation14 + $0x70] sm:$0xff]
          %v1154 = vld [vmem:[#allocation14 + $0x78] sm:$0xff]
          %v1155 = vld [vmem:[#allocation14 + $0x80] sm:$0xff]
          %v1156 = vld [vmem:[#allocation14 + $0x88] sm:$0xff]
          %v1157 = vld [vmem:[#allocation14 + $0x90] sm:$0xff]
          %v1158 = vld [vmem:[#allocation14 + $0x98] sm:$0xff]
          %v1159 = vld [vmem:[#allocation14 + $0xa0] sm:$0xff]
          %v1160 = vld [vmem:[#allocation14 + $0xa8] sm:$0xff]
          %v1161 = vld [vmem:[#allocation14 + $0xb0] sm:$0xff]
          %v1162 = vld [vmem:[#allocation14 + $0xb8] sm:$0xff]
          %v1163 = vld [vmem:[#allocation14 + $0xc0] sm:$0xff]
          %v1164 = vld [vmem:[#allocation14 + $0xc8] sm:$0xff]
          %v1165 = vld [vmem:[#allocation14 + $0xd0] sm:$0xff]
          %v1166 = vld [vmem:[#allocation14 + $0xd8] sm:$0xff]
          %v1167 = vld [vmem:[#allocation14 + $0xe0] sm:$0xff]
          %v1168 = vld [vmem:[#allocation14 + $0xe8] sm:$0xff]
          %v1169 = vld [vmem:[#allocation14 + $0xf0] sm:$0xff]
          %v1170 = vld [vmem:[#allocation14 + $0xf8] sm:$0xff]
          %v1171 = vld [vmem:[%s9] sm:$0x3]
          %v1173 = vlaneseq
          %v1174 = vshrl.u32 %v1173, 7
          %v1175 = vsub.s32 0, %v1174
          %v1176 = vrot.slane %v1171, %v1175
          %v1177 = vlaneseq
          %v1178 = vshrl.u32 %v1177, 7
          %v1179 = vsub.s32 1, %v1178
          %v1180 = vrot.slane %v1171, %v1179
          %v1215 = vunpack.c.l.b16 %v1139
          %v1216 = vunpack.c.h.b16 %v1139
          %v1217 = vunpack.c.l.b16 %v1140
          %v1218 = vunpack.c.h.b16 %v1140
          %v1219 = vunpack.c.l.b16 %v1141
          %v1220 = vunpack.c.h.b16 %v1141
          %v1221 = vunpack.c.l.b16 %v1142
          %v1222 = vunpack.c.h.b16 %v1142
          %v1223 = vunpack.c.l.b16 %v1143
          %v1224 = vunpack.c.h.b16 %v1143
          %v1225 = vunpack.c.l.b16 %v1144
          %v1226 = vunpack.c.h.b16 %v1144
          %v1227 = vunpack.c.l.b16 %v1145
          %v1228 = vunpack.c.h.b16 %v1145
          %v1229 = vunpack.c.l.b16 %v1146
          %v1230 = vunpack.c.h.b16 %v1146
          %v1231 = vunpack.c.l.b16 %v1147
          %v1232 = vunpack.c.h.b16 %v1147
          %v1233 = vunpack.c.l.b16 %v1148
          %v1234 = vunpack.c.h.b16 %v1148
          %v1235 = vunpack.c.l.b16 %v1149
          %v1236 = vunpack.c.h.b16 %v1149
          %v1237 = vunpack.c.l.b16 %v1150
          %v1238 = vunpack.c.h.b16 %v1150
          %v1239 = vunpack.c.l.b16 %v1151
          %v1240 = vunpack.c.h.b16 %v1151
          %v1241 = vunpack.c.l.b16 %v1152
          %v1242 = vunpack.c.h.b16 %v1152
          %v1243 = vunpack.c.l.b16 %v1153
          %v1244 = vunpack.c.h.b16 %v1153
          %v1245 = vunpack.c.l.b16 %v1154
          %v1246 = vunpack.c.h.b16 %v1154
          %v1247 = vunpack.c.l.b16 %v1155
          %v1248 = vunpack.c.h.b16 %v1155
          %v1249 = vunpack.c.l.b16 %v1156
          %v1250 = vunpack.c.h.b16 %v1156
          %v1251 = vunpack.c.l.b16 %v1157
          %v1252 = vunpack.c.h.b16 %v1157
          %v1253 = vunpack.c.l.b16 %v1158
          %v1254 = vunpack.c.h.b16 %v1158
          %v1255 = vunpack.c.l.b16 %v1159
          %v1256 = vunpack.c.h.b16 %v1159
          %v1257 = vunpack.c.l.b16 %v1160
          %v1258 = vunpack.c.h.b16 %v1160
          %v1259 = vunpack.c.l.b16 %v1161
          %v1260 = vunpack.c.h.b16 %v1161
          %v1261 = vunpack.c.l.b16 %v1162
          %v1262 = vunpack.c.h.b16 %v1162
          %v1263 = vunpack.c.l.b16 %v1163
          %v1264 = vunpack.c.h.b16 %v1163
          %v1265 = vunpack.c.l.b16 %v1164
          %v1266 = vunpack.c.h.b16 %v1164
          %v1267 = vunpack.c.l.b16 %v1165
          %v1268 = vunpack.c.h.b16 %v1165
          %v1269 = vunpack.c.l.b16 %v1166
          %v1270 = vunpack.c.h.b16 %v1166
          %v1271 = vunpack.c.l.b16 %v1167
          %v1272 = vunpack.c.h.b16 %v1167
          %v1273 = vunpack.c.l.b16 %v1168
          %v1274 = vunpack.c.h.b16 %v1168
          %v1275 = vunpack.c.l.b16 %v1169
          %v1276 = vunpack.c.h.b16 %v1169
          %v1277 = vunpack.c.l.b16 %v1170
          %v1278 = vunpack.c.h.b16 %v1170
          %v1279 = vpack.c.b16 %v1217, %v1215
          %v1280 = vpack.c.b16 %v1218, %v1216
          %v1281 = vpack.c.b16 %v1221, %v1219
          %v1282 = vpack.c.b16 %v1222, %v1220
          %v1283 = vpack.c.b16 %v1225, %v1223
          %v1284 = vpack.c.b16 %v1226, %v1224
          %v1285 = vpack.c.b16 %v1229, %v1227
          %v1286 = vpack.c.b16 %v1230, %v1228
          %v1287 = vpack.c.b16 %v1233, %v1231
          %v1288 = vpack.c.b16 %v1234, %v1232
          %v1289 = vpack.c.b16 %v1237, %v1235
          %v1290 = vpack.c.b16 %v1238, %v1236
          %v1291 = vpack.c.b16 %v1241, %v1239
          %v1292 = vpack.c.b16 %v1242, %v1240
          %v1293 = vpack.c.b16 %v1245, %v1243
          %v1294 = vpack.c.b16 %v1246, %v1244
          %v1295 = vpack.c.b16 %v1249, %v1247
          %v1296 = vpack.c.b16 %v1250, %v1248
          %v1297 = vpack.c.b16 %v1253, %v1251
          %v1298 = vpack.c.b16 %v1254, %v1252
          %v1299 = vpack.c.b16 %v1257, %v1255
          %v1300 = vpack.c.b16 %v1258, %v1256
          %v1301 = vpack.c.b16 %v1261, %v1259
          %v1302 = vpack.c.b16 %v1262, %v1260
          %v1303 = vpack.c.b16 %v1265, %v1263
          %v1304 = vpack.c.b16 %v1266, %v1264
          %v1305 = vpack.c.b16 %v1269, %v1267
          %v1306 = vpack.c.b16 %v1270, %v1268
          %v1307 = vpack.c.b16 %v1273, %v1271
          %v1308 = vpack.c.b16 %v1274, %v1272
          %v1309 = vpack.c.b16 %v1277, %v1275
          %v1310 = vpack.c.b16 %v1278, %v1276
          %1343 = vmatprep.subr.bf16.mxu0 %v1280
          %1344 = vmatpush1.bf16.msra.mxu0 %v1279
          %1345 = vmatprep.subr.bf16.mxu0 %v1282
          %1346 = vmatpush1.bf16.msra.mxu0 %v1281
          %1347 = vmatprep.subr.bf16.mxu0 %v1284
          %1348 = vmatpush1.bf16.msra.mxu0 %v1283
          %1349 = vmatprep.subr.bf16.mxu0 %v1286
          %1350 = vmatpush1.bf16.msra.mxu0 %v1285
          %1351 = vmatprep.subr.bf16.mxu0 %v1288
          %1352 = vmatpush1.bf16.msra.mxu0 %v1287
          %1353 = vmatprep.subr.bf16.mxu0 %v1290
          %1354 = vmatpush1.bf16.msra.mxu0 %v1289
          %1355 = vmatprep.subr.bf16.mxu0 %v1292
          %1356 = vmatpush1.bf16.msra.mxu0 %v1291
          %1357 = vmatprep.subr.bf16.mxu0 %v1294
          %1358 = vmatpush1.bf16.msra.mxu0 %v1293
          %1359 = vmatprep.subr.bf16.mxu0 %v1296
          %1360 = vmatpush1.bf16.msra.mxu0 %v1295
          %1361 = vmatprep.subr.bf16.mxu0 %v1298
          %1362 = vmatpush1.bf16.msra.mxu0 %v1297
          %1363 = vmatprep.subr.bf16.mxu0 %v1300
          %1364 = vmatpush1.bf16.msra.mxu0 %v1299
          %1365 = vmatprep.subr.bf16.mxu0 %v1302
          %1366 = vmatpush1.bf16.msra.mxu0 %v1301
          %1367 = vmatprep.subr.bf16.mxu0 %v1304
          %1368 = vmatpush1.bf16.msra.mxu0 %v1303
          %1369 = vmatprep.subr.bf16.mxu0 %v1306
          %1370 = vmatpush1.bf16.msra.mxu0 %v1305
          %1371 = vmatprep.subr.bf16.mxu0 %v1308
          %1372 = vmatpush1.bf16.msra.mxu0 %v1307
          %1373 = vmatprep.subr.bf16.mxu0 %v1310
          %1374 = vmatpush1.bf16.msra.mxu0 %v1309
          %1375 = vmatprep.mubr.bf16.mxu0 %v1138
          %1376 = vmatmul.mubr.bf16.gmra.mrb[0].mxu0 %v1137
          %v1377 = vpop.f32.mrb[0].mxu0
          %v1378 = vadd.f32 %v1176, %v1377
          %v1379 = vpop.f32.mrb[0].mxu0
          %v1380 = vadd.f32 %v1180, %v1379
          %v1381 = vpop.f32.mrb[0].mxu0
          %v1382 = vadd.f32 %v1176, %v1381
          %v1383 = vpop.f32.mrb[0].mxu0
          %v1384 = vadd.f32 %v1180, %v1383
          %1385 = vdwg.mxu0
          %v1386 = vld [vmem:[#allocation16] sm:$0xff]
          %v1387 = vld [vmem:[#allocation16 + $0x8] sm:$0xff]
          %v1388 = vld [vmem:[#allocation16 + $0x10] sm:$0xff]
          %v1389 = vld [vmem:[#allocation16 + $0x18] sm:$0xff]
          %v1390 = vld [vmem:[#allocation16 + $0x20] sm:$0xff]
          %v1391 = vld [vmem:[#allocation16 + $0x28] sm:$0xff]
          %v1392 = vld [vmem:[#allocation16 + $0x30] sm:$0xff]
          %v1393 = vld [vmem:[#allocation16 + $0x38] sm:$0xff]
          %v1394 = vld [vmem:[#allocation16 + $0x40] sm:$0xff]
          %v1395 = vld [vmem:[#allocation16 + $0x48] sm:$0xff]
          %v1396 = vld [vmem:[#allocation16 + $0x50] sm:$0xff]
          %v1397 = vld [vmem:[#allocation16 + $0x58] sm:$0xff]
          %v1398 = vld [vmem:[#allocation16 + $0x60] sm:$0xff]
          %v1399 = vld [vmem:[#allocation16 + $0x68] sm:$0xff]
          %v1400 = vld [vmem:[#allocation16 + $0x70] sm:$0xff]
          %v1401 = vld [vmem:[#allocation16 + $0x78] sm:$0xff]
          %v1402 = vld [vmem:[#allocation16 + $0x80] sm:$0xff]
          %v1403 = vld [vmem:[#allocation16 + $0x88] sm:$0xff]
          %v1404 = vld [vmem:[#allocation16 + $0x90] sm:$0xff]
          %v1405 = vld [vmem:[#allocation16 + $0x98] sm:$0xff]
          %v1406 = vld [vmem:[#allocation16 + $0xa0] sm:$0xff]
          %v1407 = vld [vmem:[#allocation16 + $0xa8] sm:$0xff]
          %v1408 = vld [vmem:[#allocation16 + $0xb0] sm:$0xff]
          %v1409 = vld [vmem:[#allocation16 + $0xb8] sm:$0xff]
          %v1410 = vld [vmem:[#allocation16 + $0xc0] sm:$0xff]
          %v1411 = vld [vmem:[#allocation16 + $0xc8] sm:$0xff]
          %v1412 = vld [vmem:[#allocation16 + $0xd0] sm:$0xff]
          %v1413 = vld [vmem:[#allocation16 + $0xd8] sm:$0xff]
          %v1414 = vld [vmem:[#allocation16 + $0xe0] sm:$0xff]
          %v1415 = vld [vmem:[#allocation16 + $0xe8] sm:$0xff]
          %v1416 = vld [vmem:[#allocation16 + $0xf0] sm:$0xff]
          %v1417 = vld [vmem:[#allocation16 + $0xf8] sm:$0xff]
          %v1418 = vld [vmem:[%s11] sm:$0x3]
          %v1420 = vlaneseq
          %v1421 = vshrl.u32 %v1420, 7
          %v1422 = vsub.s32 0, %v1421
          %v1423 = vrot.slane %v1418, %v1422
          %v1424 = vlaneseq
          %v1425 = vshrl.u32 %v1424, 7
          %v1426 = vsub.s32 1, %v1425
          %v1427 = vrot.slane %v1418, %v1426
          %v1462 = vunpack.c.l.b16 %v1386
          %v1463 = vunpack.c.h.b16 %v1386
          %v1464 = vunpack.c.l.b16 %v1387
          %v1465 = vunpack.c.h.b16 %v1387
          %v1466 = vunpack.c.l.b16 %v1388
          %v1467 = vunpack.c.h.b16 %v1388
          %v1468 = vunpack.c.l.b16 %v1389
          %v1469 = vunpack.c.h.b16 %v1389
          %v1470 = vunpack.c.l.b16 %v1390
          %v1471 = vunpack.c.h.b16 %v1390
          %v1472 = vunpack.c.l.b16 %v1391
          %v1473 = vunpack.c.h.b16 %v1391
          %v1474 = vunpack.c.l.b16 %v1392
          %v1475 = vunpack.c.h.b16 %v1392
          %v1476 = vunpack.c.l.b16 %v1393
          %v1477 = vunpack.c.h.b16 %v1393
          %v1478 = vunpack.c.l.b16 %v1394
          %v1479 = vunpack.c.h.b16 %v1394
          %v1480 = vunpack.c.l.b16 %v1395
          %v1481 = vunpack.c.h.b16 %v1395
          %v1482 = vunpack.c.l.b16 %v1396
          %v1483 = vunpack.c.h.b16 %v1396
          %v1484 = vunpack.c.l.b16 %v1397
          %v1485 = vunpack.c.h.b16 %v1397
          %v1486 = vunpack.c.l.b16 %v1398
          %v1487 = vunpack.c.h.b16 %v1398
          %v1488 = vunpack.c.l.b16 %v1399
          %v1489 = vunpack.c.h.b16 %v1399
          %v1490 = vunpack.c.l.b16 %v1400
          %v1491 = vunpack.c.h.b16 %v1400
          %v1492 = vunpack.c.l.b16 %v1401
          %v1493 = vunpack.c.h.b16 %v1401
          %v1494 = vunpack.c.l.b16 %v1402
          %v1495 = vunpack.c.h.b16 %v1402
          %v1496 = vunpack.c.l.b16 %v1403
          %v1497 = vunpack.c.h.b16 %v1403
          %v1498 = vunpack.c.l.b16 %v1404
          %v1499 = vunpack.c.h.b16 %v1404
          %v1500 = vunpack.c.l.b16 %v1405
          %v1501 = vunpack.c.h.b16 %v1405
          %v1502 = vunpack.c.l.b16 %v1406
          %v1503 = vunpack.c.h.b16 %v1406
          %v1504 = vunpack.c.l.b16 %v1407
          %v1505 = vunpack.c.h.b16 %v1407
          %v1506 = vunpack.c.l.b16 %v1408
          %v1507 = vunpack.c.h.b16 %v1408
          %v1508 = vunpack.c.l.b16 %v1409
          %v1509 = vunpack.c.h.b16 %v1409
          %v1510 = vunpack.c.l.b16 %v1410
          %v1511 = vunpack.c.h.b16 %v1410
          %v1512 = vunpack.c.l.b16 %v1411
          %v1513 = vunpack.c.h.b16 %v1411
          %v1514 = vunpack.c.l.b16 %v1412
          %v1515 = vunpack.c.h.b16 %v1412
          %v1516 = vunpack.c.l.b16 %v1413
          %v1517 = vunpack.c.h.b16 %v1413
          %v1518 = vunpack.c.l.b16 %v1414
          %v1519 = vunpack.c.h.b16 %v1414
          %v1520 = vunpack.c.l.b16 %v1415
          %v1521 = vunpack.c.h.b16 %v1415
          %v1522 = vunpack.c.l.b16 %v1416
          %v1523 = vunpack.c.h.b16 %v1416
          %v1524 = vunpack.c.l.b16 %v1417
          %v1525 = vunpack.c.h.b16 %v1417
          %v1526 = vpack.c.b16 %v1464, %v1462
          %v1527 = vpack.c.b16 %v1465, %v1463
          %v1528 = vpack.c.b16 %v1468, %v1466
          %v1529 = vpack.c.b16 %v1469, %v1467
          %v1530 = vpack.c.b16 %v1472, %v1470
          %v1531 = vpack.c.b16 %v1473, %v1471
          %v1532 = vpack.c.b16 %v1476, %v1474
          %v1533 = vpack.c.b16 %v1477, %v1475
          %v1534 = vpack.c.b16 %v1480, %v1478
          %v1535 = vpack.c.b16 %v1481, %v1479
          %v1536 = vpack.c.b16 %v1484, %v1482
          %v1537 = vpack.c.b16 %v1485, %v1483
          %v1538 = vpack.c.b16 %v1488, %v1486
          %v1539 = vpack.c.b16 %v1489, %v1487
          %v1540 = vpack.c.b16 %v1492, %v1490
          %v1541 = vpack.c.b16 %v1493, %v1491
          %v1542 = vpack.c.b16 %v1496, %v1494
          %v1543 = vpack.c.b16 %v1497, %v1495
          %v1544 = vpack.c.b16 %v1500, %v1498
          %v1545 = vpack.c.b16 %v1501, %v1499
          %v1546 = vpack.c.b16 %v1504, %v1502
          %v1547 = vpack.c.b16 %v1505, %v1503
          %v1548 = vpack.c.b16 %v1508, %v1506
          %v1549 = vpack.c.b16 %v1509, %v1507
          %v1550 = vpack.c.b16 %v1512, %v1510
          %v1551 = vpack.c.b16 %v1513, %v1511
          %v1552 = vpack.c.b16 %v1516, %v1514
          %v1553 = vpack.c.b16 %v1517, %v1515
          %v1554 = vpack.c.b16 %v1520, %v1518
          %v1555 = vpack.c.b16 %v1521, %v1519
          %v1556 = vpack.c.b16 %v1524, %v1522
          %v1557 = vpack.c.b16 %v1525, %v1523
          %1590 = vmatprep.subr.bf16.mxu0 %v1527
          %1591 = vmatpush1.bf16.msra.mxu0 %v1526
          %1592 = vmatprep.subr.bf16.mxu0 %v1529
          %1593 = vmatpush1.bf16.msra.mxu0 %v1528
          %1594 = vmatprep.subr.bf16.mxu0 %v1531
          %1595 = vmatpush1.bf16.msra.mxu0 %v1530
          %1596 = vmatprep.subr.bf16.mxu0 %v1533
          %1597 = vmatpush1.bf16.msra.mxu0 %v1532
          %1598 = vmatprep.subr.bf16.mxu0 %v1535
          %1599 = vmatpush1.bf16.msra.mxu0 %v1534
          %1600 = vmatprep.subr.bf16.mxu0 %v1537
          %1601 = vmatpush1.bf16.msra.mxu0 %v1536
          %1602 = vmatprep.subr.bf16.mxu0 %v1539
          %1603 = vmatpush1.bf16.msra.mxu0 %v1538
          %1604 = vmatprep.subr.bf16.mxu0 %v1541
          %1605 = vmatpush1.bf16.msra.mxu0 %v1540
          %1606 = vmatprep.subr.bf16.mxu0 %v1543
          %1607 = vmatpush1.bf16.msra.mxu0 %v1542
          %1608 = vmatprep.subr.bf16.mxu0 %v1545
          %1609 = vmatpush1.bf16.msra.mxu0 %v1544
          %1610 = vmatprep.subr.bf16.mxu0 %v1547
          %1611 = vmatpush1.bf16.msra.mxu0 %v1546
          %1612 = vmatprep.subr.bf16.mxu0 %v1549
          %1613 = vmatpush1.bf16.msra.mxu0 %v1548
          %1614 = vmatprep.subr.bf16.mxu0 %v1551
          %1615 = vmatpush1.bf16.msra.mxu0 %v1550
          %1616 = vmatprep.subr.bf16.mxu0 %v1553
          %1617 = vmatpush1.bf16.msra.mxu0 %v1552
          %1618 = vmatprep.subr.bf16.mxu0 %v1555
          %1619 = vmatpush1.bf16.msra.mxu0 %v1554
          %1620 = vmatprep.subr.bf16.mxu0 %v1557
          %1621 = vmatpush1.bf16.msra.mxu0 %v1556
          %1622 = vmatprep.mubr.bf16.mxu0 %v1138
          %1623 = vmatmul.mubr.bf16.gmra.mrb[0].mxu0 %v1137
          %v1624 = vpop.f32.mrb[0].mxu0
          %v1625 = vadd.f32 %v1423, %v1624
          %v1626 = vpop.f32.mrb[0].mxu0
          %v1627 = vadd.f32 %v1427, %v1626
          %v1628 = vpop.f32.mrb[0].mxu0
          %v1629 = vadd.f32 %v1423, %v1628
          %v1630 = vpop.f32.mrb[0].mxu0
          %v1631 = vadd.f32 %v1427, %v1630
          %1632 = vdwg.mxu0
          %v1633 = vpack.c.bf16 %v1382, %v1378
          %v1634 = vpack.c.bf16 %v1384, %v1380
          %1635 = vst [vmem:[#allocation2] sm:$0xff] %v1633
          %1636 = vst [vmem:[#allocation2 + $0x8] sm:$0xff] %v1634
          %v1637 = vpack.c.bf16 %v1629, %v1625
          %v1638 = vpack.c.bf16 %v1631, %v1627
          %1639 = vst [vmem:[#allocation3] sm:$0xff] %v1637
          %1640 = vst [vmem:[#allocation3 + $0x8] sm:$0xff] %v1638
        $region152: #{tpu_custom_call.1} parent=107 // pred_fallthru
          _
        %v1641 = vld [vmem:[%s770] sm:$0xff]
        %v1642 = vld [vmem:[%s770 + $0x8] sm:$0xff]
        %v1643 = vld [vmem:[%s770 + $0x10] sm:$0xff]
        %v1644 = vld [vmem:[%s770 + $0x18] sm:$0xff]
        %v1645 = vlaneseq
        %v1646 = vand.u32 %v1645, 127
        %v1647 = vadd.s32 %v1646, 128
        %vm1648 = vcmp.lt.s32.totalorder %v1646, 200
        %vm1649 = vcmp.lt.s32.totalorder %v1647, 200
        %v1650 = vsel %vm1648, 1, 0
        %v1651 = vsel %vm1649, 1, 0
        %v1652 = vcvt.s32.f32 %v1650
        %v1653 = vcvt.s32.f32 %v1651
        %v1654 = vpack.c.bf16 %v1643, %v1641
        %v1655 = vpack.c.bf16 %v1644, %v1642
        %v1656 = vld [vmem:[#allocation10] sm:$0xff]
        %v1657 = vld [vmem:[#allocation10 + $0x8] sm:$0xff]
        %v1658 = vld [vmem:[#allocation10 + $0x10] sm:$0xff]
        %v1659 = vld [vmem:[#allocation10 + $0x18] sm:$0xff]
        %v1660 = vld [vmem:[#allocation10 + $0x20] sm:$0xff]
        %v1661 = vld [vmem:[#allocation10 + $0x28] sm:$0xff]
        %v1662 = vld [vmem:[#allocation10 + $0x30] sm:$0xff]
        %v1663 = vld [vmem:[#allocation10 + $0x38] sm:$0xff]
        %v1664 = vld [vmem:[#allocation10 + $0x40] sm:$0xff]
        %v1665 = vld [vmem:[#allocation10 + $0x48] sm:$0xff]
        %v1666 = vld [vmem:[#allocation10 + $0x50] sm:$0xff]
        %v1667 = vld [vmem:[#allocation10 + $0x58] sm:$0xff]
        %v1668 = vld [vmem:[#allocation10 + $0x60] sm:$0xff]
        %v1669 = vld [vmem:[#allocation10 + $0x68] sm:$0xff]
        %v1670 = vld [vmem:[#allocation10 + $0x70] sm:$0xff]
        %v1671 = vld [vmem:[#allocation10 + $0x78] sm:$0xff]
        %v1672 = vld [vmem:[#allocation10 + $0x80] sm:$0xff]
        %v1673 = vld [vmem:[#allocation10 + $0x88] sm:$0xff]
        %v1674 = vld [vmem:[#allocation10 + $0x90] sm:$0xff]
        %v1675 = vld [vmem:[#allocation10 + $0x98] sm:$0xff]
        %v1676 = vld [vmem:[#allocation10 + $0xa0] sm:$0xff]
        %v1677 = vld [vmem:[#allocation10 + $0xa8] sm:$0xff]
        %v1678 = vld [vmem:[#allocation10 + $0xb0] sm:$0xff]
        %v1679 = vld [vmem:[#allocation10 + $0xb8] sm:$0xff]
        %v1680 = vld [vmem:[#allocation10 + $0xc0] sm:$0xff]
        %v1681 = vld [vmem:[#allocation10 + $0xc8] sm:$0xff]
        %v1682 = vld [vmem:[#allocation10 + $0xd0] sm:$0xff]
        %v1683 = vld [vmem:[#allocation10 + $0xd8] sm:$0xff]
        %v1684 = vld [vmem:[#allocation10 + $0xe0] sm:$0xff]
        %v1685 = vld [vmem:[#allocation10 + $0xe8] sm:$0xff]
        %v1686 = vld [vmem:[#allocation10 + $0xf0] sm:$0xff]
        %v1687 = vld [vmem:[#allocation10 + $0xf8] sm:$0xff]
        %v1688 = vld [vmem:[%s3] sm:$0x3]
        %v1690 = vlaneseq
        %v1691 = vshrl.u32 %v1690, 7
        %v1692 = vsub.s32 0, %v1691
        %v1693 = vrot.slane %v1688, %v1692
        %v1694 = vlaneseq
        %v1695 = vshrl.u32 %v1694, 7
        %v1696 = vsub.s32 1, %v1695
        %v1697 = vrot.slane %v1688, %v1696
        %v1732 = vunpack.c.l.b16 %v1656
        %v1733 = vunpack.c.h.b16 %v1656
        %v1734 = vunpack.c.l.b16 %v1657
        %v1735 = vunpack.c.h.b16 %v1657
        %v1736 = vunpack.c.l.b16 %v1658
        %v1737 = vunpack.c.h.b16 %v1658
        %v1738 = vunpack.c.l.b16 %v1659
        %v1739 = vunpack.c.h.b16 %v1659
        %v1740 = vunpack.c.l.b16 %v1660
        %v1741 = vunpack.c.h.b16 %v1660
        %v1742 = vunpack.c.l.b16 %v1661
        %v1743 = vunpack.c.h.b16 %v1661
        %v1744 = vunpack.c.l.b16 %v1662
        %v1745 = vunpack.c.h.b16 %v1662
        %v1746 = vunpack.c.l.b16 %v1663
        %v1747 = vunpack.c.h.b16 %v1663
        %v1748 = vunpack.c.l.b16 %v1664
        %v1749 = vunpack.c.h.b16 %v1664
        %v1750 = vunpack.c.l.b16 %v1665
        %v1751 = vunpack.c.h.b16 %v1665
        %v1752 = vunpack.c.l.b16 %v1666
        %v1753 = vunpack.c.h.b16 %v1666
        %v1754 = vunpack.c.l.b16 %v1667
        %v1755 = vunpack.c.h.b16 %v1667
        %v1756 = vunpack.c.l.b16 %v1668
        %v1757 = vunpack.c.h.b16 %v1668
        %v1758 = vunpack.c.l.b16 %v1669
        %v1759 = vunpack.c.h.b16 %v1669
        %v1760 = vunpack.c.l.b16 %v1670
        %v1761 = vunpack.c.h.b16 %v1670
        %v1762 = vunpack.c.l.b16 %v1671
        %v1763 = vunpack.c.h.b16 %v1671
        %v1764 = vunpack.c.l.b16 %v1672
        %v1765 = vunpack.c.h.b16 %v1672
        %v1766 = vunpack.c.l.b16 %v1673
        %v1767 = vunpack.c.h.b16 %v1673
        %v1768 = vunpack.c.l.b16 %v1674
        %v1769 = vunpack.c.h.b16 %v1674
        %v1770 = vunpack.c.l.b16 %v1675
        %v1771 = vunpack.c.h.b16 %v1675
        %v1772 = vunpack.c.l.b16 %v1676
        %v1773 = vunpack.c.h.b16 %v1676
        %v1774 = vunpack.c.l.b16 %v1677
        %v1775 = vunpack.c.h.b16 %v1677
        %v1776 = vunpack.c.l.b16 %v1678
        %v1777 = vunpack.c.h.b16 %v1678
        %v1778 = vunpack.c.l.b16 %v1679
        %v1779 = vunpack.c.h.b16 %v1679
        %v1780 = vunpack.c.l.b16 %v1680
        %v1781 = vunpack.c.h.b16 %v1680
        %v1782 = vunpack.c.l.b16 %v1681
        %v1783 = vunpack.c.h.b16 %v1681
        %v1784 = vunpack.c.l.b16 %v1682
        %v1785 = vunpack.c.h.b16 %v1682
        %v1786 = vunpack.c.l.b16 %v1683
        %v1787 = vunpack.c.h.b16 %v1683
        %v1788 = vunpack.c.l.b16 %v1684
        %v1789 = vunpack.c.h.b16 %v1684
        %v1790 = vunpack.c.l.b16 %v1685
        %v1791 = vunpack.c.h.b16 %v1685
        %v1792 = vunpack.c.l.b16 %v1686
        %v1793 = vunpack.c.h.b16 %v1686
        %v1794 = vunpack.c.l.b16 %v1687
        %v1795 = vunpack.c.h.b16 %v1687
        %v1796 = vpack.c.b16 %v1734, %v1732
        %v1797 = vpack.c.b16 %v1735, %v1733
        %v1798 = vpack.c.b16 %v1738, %v1736
        %v1799 = vpack.c.b16 %v1739, %v1737
        %v1800 = vpack.c.b16 %v1742, %v1740
        %v1801 = vpack.c.b16 %v1743, %v1741
        %v1802 = vpack.c.b16 %v1746, %v1744
        %v1803 = vpack.c.b16 %v1747, %v1745
        %v1804 = vpack.c.b16 %v1750, %v1748
        %v1805 = vpack.c.b16 %v1751, %v1749
        %v1806 = vpack.c.b16 %v1754, %v1752
        %v1807 = vpack.c.b16 %v1755, %v1753
        %v1808 = vpack.c.b16 %v1758, %v1756
        %v1809 = vpack.c.b16 %v1759, %v1757
        %v1810 = vpack.c.b16 %v1762, %v1760
        %v1811 = vpack.c.b16 %v1763, %v1761
        %v1812 = vpack.c.b16 %v1766, %v1764
        %v1813 = vpack.c.b16 %v1767, %v1765
        %v1814 = vpack.c.b16 %v1770, %v1768
        %v1815 = vpack.c.b16 %v1771, %v1769
        %v1816 = vpack.c.b16 %v1774, %v1772
        %v1817 = vpack.c.b16 %v1775, %v1773
        %v1818 = vpack.c.b16 %v1778, %v1776
        %v1819 = vpack.c.b16 %v1779, %v1777
        %v1820 = vpack.c.b16 %v1782, %v1780
        %v1821 = vpack.c.b16 %v1783, %v1781
        %v1822 = vpack.c.b16 %v1786, %v1784
        %v1823 = vpack.c.b16 %v1787, %v1785
        %v1824 = vpack.c.b16 %v1790, %v1788
        %v1825 = vpack.c.b16 %v1791, %v1789
        %v1826 = vpack.c.b16 %v1794, %v1792
        %v1827 = vpack.c.b16 %v1795, %v1793
        %1860 = vmatprep.subr.bf16.mxu0 %v1797
        %1861 = vmatpush1.bf16.msra.mxu0 %v1796
        %1862 = vmatprep.subr.bf16.mxu0 %v1799
        %1863 = vmatpush1.bf16.msra.mxu0 %v1798
        %1864 = vmatprep.subr.bf16.mxu0 %v1801
        %1865 = vmatpush1.bf16.msra.mxu0 %v1800
        %1866 = vmatprep.subr.bf16.mxu0 %v1803
        %1867 = vmatpush1.bf16.msra.mxu0 %v1802
        %1868 = vmatprep.subr.bf16.mxu0 %v1805
        %1869 = vmatpush1.bf16.msra.mxu0 %v1804
        %1870 = vmatprep.subr.bf16.mxu0 %v1807
        %1871 = vmatpush1.bf16.msra.mxu0 %v1806
        %1872 = vmatprep.subr.bf16.mxu0 %v1809
        %1873 = vmatpush1.bf16.msra.mxu0 %v1808
        %1874 = vmatprep.subr.bf16.mxu0 %v1811
        %1875 = vmatpush1.bf16.msra.mxu0 %v1810
        %1876 = vmatprep.subr.bf16.mxu0 %v1813
        %1877 = vmatpush1.bf16.msra.mxu0 %v1812
        %1878 = vmatprep.subr.bf16.mxu0 %v1815
        %1879 = vmatpush1.bf16.msra.mxu0 %v1814
        %1880 = vmatprep.subr.bf16.mxu0 %v1817
        %1881 = vmatpush1.bf16.msra.mxu0 %v1816
        %1882 = vmatprep.subr.bf16.mxu0 %v1819
        %1883 = vmatpush1.bf16.msra.mxu0 %v1818
        %1884 = vmatprep.subr.bf16.mxu0 %v1821
        %1885 = vmatpush1.bf16.msra.mxu0 %v1820
        %1886 = vmatprep.subr.bf16.mxu0 %v1823
        %1887 = vmatpush1.bf16.msra.mxu0 %v1822
        %1888 = vmatprep.subr.bf16.mxu0 %v1825
        %1889 = vmatpush1.bf16.msra.mxu0 %v1824
        %1890 = vmatprep.subr.bf16.mxu0 %v1827
        %1891 = vmatpush1.bf16.msra.mxu0 %v1826
        %1892 = vmatprep.mubr.bf16.mxu0 %v1655
        %1893 = vmatmul.mubr.bf16.gmra.mrb[0].mxu0 %v1654
        %v1894 = vpop.f32.mrb[0].mxu0
        %v1895 = vadd.f32 %v1693, %v1894
        %v1896 = vpop.f32.mrb[0].mxu0
        %v1897 = vadd.f32 %v1697, %v1896
        %v1898 = vpop.f32.mrb[0].mxu0
        %v1899 = vadd.f32 %v1693, %v1898
        %v1900 = vpop.f32.mrb[0].mxu0
        %v1901 = vadd.f32 %v1697, %v1900
        %1902 = vdwg.mxu0
        %v1903 = vpack.c.bf16 %v1899, %v1895
        %v1904 = vpack.c.bf16 %v1901, %v1897
        %v1905 = vld [vmem:[#allocation13] sm:$0xff]
        %v1906 = vld [vmem:[#allocation13 + $0x8] sm:$0xff]
        %v1907 = vld [vmem:[#allocation13 + $0x10] sm:$0xff]
        %v1908 = vld [vmem:[#allocation13 + $0x18] sm:$0xff]
        %v1909 = vld [vmem:[#allocation13 + $0x20] sm:$0xff]
        %v1910 = vld [vmem:[#allocation13 + $0x28] sm:$0xff]
        %v1911 = vld [vmem:[#allocation13 + $0x30] sm:$0xff]
        %v1912 = vld [vmem:[#allocation13 + $0x38] sm:$0xff]
        %v1913 = vld [vmem:[#allocation13 + $0x40] sm:$0xff]
        %v1914 = vld [vmem:[#allocation13 + $0x48] sm:$0xff]
        %v1915 = vld [vmem:[#allocation13 + $0x50] sm:$0xff]
        %v1916 = vld [vmem:[#allocation13 + $0x58] sm:$0xff]
        %v1917 = vld [vmem:[#allocation13 + $0x60] sm:$0xff]
        %v1918 = vld [vmem:[#allocation13 + $0x68] sm:$0xff]
        %v1919 = vld [vmem:[#allocation13 + $0x70] sm:$0xff]
        %v1920 = vld [vmem:[#allocation13 + $0x78] sm:$0xff]
        %v1921 = vld [vmem:[#allocation13 + $0x80] sm:$0xff]
        %v1922 = vld [vmem:[#allocation13 + $0x88] sm:$0xff]
        %v1923 = vld [vmem:[#allocation13 + $0x90] sm:$0xff]
        %v1924 = vld [vmem:[#allocation13 + $0x98] sm:$0xff]
        %v1925 = vld [vmem:[#allocation13 + $0xa0] sm:$0xff]
        %v1926 = vld [vmem:[#allocation13 + $0xa8] sm:$0xff]
        %v1927 = vld [vmem:[#allocation13 + $0xb0] sm:$0xff]
        %v1928 = vld [vmem:[#allocation13 + $0xb8] sm:$0xff]
        %v1929 = vld [vmem:[#allocation13 + $0xc0] sm:$0xff]
        %v1930 = vld [vmem:[#allocation13 + $0xc8] sm:$0xff]
        %v1931 = vld [vmem:[#allocation13 + $0xd0] sm:$0xff]
        %v1932 = vld [vmem:[#allocation13 + $0xd8] sm:$0xff]
        %v1933 = vld [vmem:[#allocation13 + $0xe0] sm:$0xff]
        %v1934 = vld [vmem:[#allocation13 + $0xe8] sm:$0xff]
        %v1935 = vld [vmem:[#allocation13 + $0xf0] sm:$0xff]
        %v1936 = vld [vmem:[#allocation13 + $0xf8] sm:$0xff]
        %v1937 = vld [vmem:[%s7] sm:$0x3]
        %v1939 = vlaneseq
        %v1940 = vshrl.u32 %v1939, 7
        %v1941 = vsub.s32 0, %v1940
        %v1942 = vrot.slane %v1937, %v1941
        %v1943 = vlaneseq
        %v1944 = vshrl.u32 %v1943, 7
        %v1945 = vsub.s32 1, %v1944
        %v1946 = vrot.slane %v1937, %v1945
        %v1981 = vunpack.c.l.b16 %v1905
        %v1982 = vunpack.c.h.b16 %v1905
        %v1983 = vunpack.c.l.b16 %v1906
        %v1984 = vunpack.c.h.b16 %v1906
        %v1985 = vunpack.c.l.b16 %v1907
        %v1986 = vunpack.c.h.b16 %v1907
        %v1987 = vunpack.c.l.b16 %v1908
        %v1988 = vunpack.c.h.b16 %v1908
        %v1989 = vunpack.c.l.b16 %v1909
        %v1990 = vunpack.c.h.b16 %v1909
        %v1991 = vunpack.c.l.b16 %v1910
        %v1992 = vunpack.c.h.b16 %v1910
        %v1993 = vunpack.c.l.b16 %v1911
        %v1994 = vunpack.c.h.b16 %v1911
        %v1995 = vunpack.c.l.b16 %v1912
        %v1996 = vunpack.c.h.b16 %v1912
        %v1997 = vunpack.c.l.b16 %v1913
        %v1998 = vunpack.c.h.b16 %v1913
        %v1999 = vunpack.c.l.b16 %v1914
        %v2000 = vunpack.c.h.b16 %v1914
        %v2001 = vunpack.c.l.b16 %v1915
        %v2002 = vunpack.c.h.b16 %v1915
        %v2003 = vunpack.c.l.b16 %v1916
        %v2004 = vunpack.c.h.b16 %v1916
        %v2005 = vunpack.c.l.b16 %v1917
        %v2006 = vunpack.c.h.b16 %v1917
        %v2007 = vunpack.c.l.b16 %v1918
        %v2008 = vunpack.c.h.b16 %v1918
        %v2009 = vunpack.c.l.b16 %v1919
        %v2010 = vunpack.c.h.b16 %v1919
        %v2011 = vunpack.c.l.b16 %v1920
        %v2012 = vunpack.c.h.b16 %v1920
        %v2013 = vunpack.c.l.b16 %v1921
        %v2014 = vunpack.c.h.b16 %v1921
        %v2015 = vunpack.c.l.b16 %v1922
        %v2016 = vunpack.c.h.b16 %v1922
        %v2017 = vunpack.c.l.b16 %v1923
        %v2018 = vunpack.c.h.b16 %v1923
        %v2019 = vunpack.c.l.b16 %v1924
        %v2020 = vunpack.c.h.b16 %v1924
        %v2021 = vunpack.c.l.b16 %v1925
        %v2022 = vunpack.c.h.b16 %v1925
        %v2023 = vunpack.c.l.b16 %v1926
        %v2024 = vunpack.c.h.b16 %v1926
        %v2025 = vunpack.c.l.b16 %v1927
        %v2026 = vunpack.c.h.b16 %v1927
        %v2027 = vunpack.c.l.b16 %v1928
        %v2028 = vunpack.c.h.b16 %v1928
        %v2029 = vunpack.c.l.b16 %v1929
        %v2030 = vunpack.c.h.b16 %v1929
        %v2031 = vunpack.c.l.b16 %v1930
        %v2032 = vunpack.c.h.b16 %v1930
        %v2033 = vunpack.c.l.b16 %v1931
        %v2034 = vunpack.c.h.b16 %v1931
        %v2035 = vunpack.c.l.b16 %v1932
        %v2036 = vunpack.c.h.b16 %v1932
        %v2037 = vunpack.c.l.b16 %v1933
        %v2038 = vunpack.c.h.b16 %v1933
        %v2039 = vunpack.c.l.b16 %v1934
        %v2040 = vunpack.c.h.b16 %v1934
        %v2041 = vunpack.c.l.b16 %v1935
        %v2042 = vunpack.c.h.b16 %v1935
        %v2043 = vunpack.c.l.b16 %v1936
        %v2044 = vunpack.c.h.b16 %v1936
        %v2045 = vpack.c.b16 %v1983, %v1981
        %v2046 = vpack.c.b16 %v1984, %v1982
        %v2047 = vpack.c.b16 %v1987, %v1985
        %v2048 = vpack.c.b16 %v1988, %v1986
        %v2049 = vpack.c.b16 %v1991, %v1989
        %v2050 = vpack.c.b16 %v1992, %v1990
        %v2051 = vpack.c.b16 %v1995, %v1993
        %v2052 = vpack.c.b16 %v1996, %v1994
        %v2053 = vpack.c.b16 %v1999, %v1997
        %v2054 = vpack.c.b16 %v2000, %v1998
        %v2055 = vpack.c.b16 %v2003, %v2001
        %v2056 = vpack.c.b16 %v2004, %v2002
        %v2057 = vpack.c.b16 %v2007, %v2005
        %v2058 = vpack.c.b16 %v2008, %v2006
        %v2059 = vpack.c.b16 %v2011, %v2009
        %v2060 = vpack.c.b16 %v2012, %v2010
        %v2061 = vpack.c.b16 %v2015, %v2013
        %v2062 = vpack.c.b16 %v2016, %v2014
        %v2063 = vpack.c.b16 %v2019, %v2017
        %v2064 = vpack.c.b16 %v2020, %v2018
        %v2065 = vpack.c.b16 %v2023, %v2021
        %v2066 = vpack.c.b16 %v2024, %v2022
        %v2067 = vpack.c.b16 %v2027, %v2025
        %v2068 = vpack.c.b16 %v2028, %v2026
        %v2069 = vpack.c.b16 %v2031, %v2029
        %v2070 = vpack.c.b16 %v2032, %v2030
        %v2071 = vpack.c.b16 %v2035, %v2033
        %v2072 = vpack.c.b16 %v2036, %v2034
        %v2073 = vpack.c.b16 %v2039, %v2037
        %v2074 = vpack.c.b16 %v2040, %v2038
        %v2075 = vpack.c.b16 %v2043, %v2041
        %v2076 = vpack.c.b16 %v2044, %v2042
        %2109 = vmatprep.subr.bf16.mxu0 %v2046
        %2110 = vmatpush1.bf16.msra.mxu0 %v2045
        %2111 = vmatprep.subr.bf16.mxu0 %v2048
        %2112 = vmatpush1.bf16.msra.mxu0 %v2047
        %2113 = vmatprep.subr.bf16.mxu0 %v2050
        %2114 = vmatpush1.bf16.msra.mxu0 %v2049
        %2115 = vmatprep.subr.bf16.mxu0 %v2052
        %2116 = vmatpush1.bf16.msra.mxu0 %v2051
        %2117 = vmatprep.subr.bf16.mxu0 %v2054
        %2118 = vmatpush1.bf16.msra.mxu0 %v2053
        %2119 = vmatprep.subr.bf16.mxu0 %v2056
        %2120 = vmatpush1.bf16.msra.mxu0 %v2055
        %2121 = vmatprep.subr.bf16.mxu0 %v2058
        %2122 = vmatpush1.bf16.msra.mxu0 %v2057
        %2123 = vmatprep.subr.bf16.mxu0 %v2060
        %2124 = vmatpush1.bf16.msra.mxu0 %v2059
        %2125 = vmatprep.subr.bf16.mxu0 %v2062
        %2126 = vmatpush1.bf16.msra.mxu0 %v2061
        %2127 = vmatprep.subr.bf16.mxu0 %v2064
        %2128 = vmatpush1.bf16.msra.mxu0 %v2063
        %2129 = vmatprep.subr.bf16.mxu0 %v2066
        %2130 = vmatpush1.bf16.msra.mxu0 %v2065
        %2131 = vmatprep.subr.bf16.mxu0 %v2068
        %2132 = vmatpush1.bf16.msra.mxu0 %v2067
        %2133 = vmatprep.subr.bf16.mxu0 %v2070
        %2134 = vmatpush1.bf16.msra.mxu0 %v2069
        %2135 = vmatprep.subr.bf16.mxu0 %v2072
        %2136 = vmatpush1.bf16.msra.mxu0 %v2071
        %2137 = vmatprep.subr.bf16.mxu0 %v2074
        %2138 = vmatpush1.bf16.msra.mxu0 %v2073
        %2139 = vmatprep.subr.bf16.mxu0 %v2076
        %2140 = vmatpush1.bf16.msra.mxu0 %v2075
        %2141 = vmatprep.mubr.bf16.mxu0 %v1904
        %2142 = vmatmul.mubr.bf16.gmra.mrb[0].mxu0 %v1903
        %v2143 = vpop.f32.mrb[0].mxu0
        %v2144 = vadd.f32 %v1942, %v2143
        %v2145 = vpop.f32.mrb[0].mxu0
        %v2146 = vadd.f32 %v1946, %v2145
        %v2147 = vpop.f32.mrb[0].mxu0
        %v2148 = vadd.f32 %v1942, %v2147
        %v2149 = vpop.f32.mrb[0].mxu0
        %v2150 = vadd.f32 %v1946, %v2149
        %2151 = vdwg.mxu0
        %v2152 = vmul.f32 %v2144, 0.088388346
        %v2153 = vmul.f32 %v2146, 0.088388346
        %v2154 = vmul.f32 %v2148, 0.088388346
        %v2155 = vmul.f32 %v2150, 0.088388346
        %v2156 = vpack.c.bf16 %v2154, %v2152
        %v2157 = vpack.c.bf16 %v2155, %v2153
        %v2158 = vld [vmem:[#allocation2] sm:$0xff]
        %v2159 = vld [vmem:[#allocation2 + $0x8] sm:$0xff]
        %v2160 = vld [vmem:[#allocation3] sm:$0xff]
        %v2161 = vld [vmem:[#allocation3 + $0x8] sm:$0xff]
        %2162 = vmatprep.subr.bf16.mxu0 0
        %2163 = vmatpush1.bf16.xpose.msra.mxu0 %v2158
        %2164 = vmatprep.subr.bf16.mxu0 0
        %2165 = vmatpush1.bf16.xpose.msra.mxu0 0
        %2166 = vmatprep.subr.bf16.mxu0 0
        %2167 = vmatpush1.bf16.xpose.msra.mxu0 0
        %2168 = vmatprep.subr.bf16.mxu0 0
        %2169 = vmatpush1.bf16.xpose.msra.mxu0 0
        %2170 = vmatprep.subr.bf16.mxu0 0
        %2171 = vmatpush1.bf16.xpose.msra.mxu0 0
        %2172 = vmatprep.subr.bf16.mxu0 0
        %2173 = vmatpush1.bf16.xpose.msra.mxu0 0
        %2174 = vmatprep.subr.bf16.mxu0 0
        %2175 = vmatpush1.bf16.xpose.msra.mxu0 0
        %2176 = vmatprep.subr.bf16.mxu0 0
        %2177 = vmatpush1.bf16.xpose.msra.mxu0 0
        %2178 = vmatprep.subr.bf16.mxu0 0
        %2179 = vmatpush1.bf16.xpose.msra.mxu0 0
        %2180 = vmatprep.subr.bf16.mxu0 0
        %2181 = vmatpush1.bf16.xpose.msra.mxu0 0
        %2182 = vmatprep.subr.bf16.mxu0 0
        %2183 = vmatpush1.bf16.xpose.msra.mxu0 0
        %2184 = vmatprep.subr.bf16.mxu0 0
        %2185 = vmatpush1.bf16.xpose.msra.mxu0 0
        %2186 = vmatprep.subr.bf16.mxu0 0
        %2187 = vmatpush1.bf16.xpose.msra.mxu0 0
        %2188 = vmatprep.subr.bf16.mxu0 0
        %2189 = vmatpush1.bf16.xpose.msra.mxu0 0
        %2190 = vmatprep.subr.bf16.mxu0 0
        %2191 = vmatpush1.bf16.xpose.msra.mxu0 0
        %2192 = vmatprep.subr.bf16.mxu0 0
        %2193 = vmatpush1.bf16.xpose.msra.mxu0 0
        %2194 = vmatprep.mubr.bf16.mxu0 0
        %2195 = vmatmul.mubr.bf16.gmra.mrb[0].mxu0 %v2156
        %v2196 = vpop.f32.mrb[0].mxu0
        %v2197 = vadd.f32 0.0, %v2196
        %v2198 = vpop.f32.mrb[0].mxu0
        %v2199 = vpop.f32.mrb[0].mxu0
        %v2200 = vadd.f32 0.0, %v2199
        %v2201 = vpop.f32.mrb[0].mxu0
        %2202 = vdwg.mxu0
        %vm2203 = vcmask 130048
        %v2204 = vsel %vm2203, %v2197, -inf
        %2205 = vmax.xlane.f32.xlu0 %v2204
        %v2206 = vpop.xlane.xlu0 %2205
        %v2207 = vsel %vm2203, %v2200, -inf
        %2208 = vmax.xlane.f32.xlu0 %v2207
        %v2209 = vpop.xlane.xlu0 %2208
        %v2210 = vsub.f32 %v2197, %v2206
        %v2211 = vsub.f32 %v2200, %v2209
        %v2212 = vmul.f32 %v2210, 1.442695
        %v2213 = vpow.pop %v2212
        %v2214 = vmul.f32 %v2211, 1.442695
        %v2215 = vpow.pop %v2214
        %v2216 = vsel %vm2203, %v2213, 0.0
        %2217 = vadd.xlane.f32.xlu0 %v2216
        %v2218 = vpop.xlane.xlu0 %2217
        %v2219 = vsel %vm2203, %v2215, 0.0
        %2220 = vadd.xlane.f32.xlu0 %v2219
        %v2221 = vpop.xlane.xlu0 %2220
        %v2222 = vrcp.pop %v2218
        %v2223 = vmul.f32 %v2213, %v2222
        %v2224 = vrcp.pop %v2221
        %v2225 = vmul.f32 %v2215, %v2224
        %v2226 = vpack.c.bf16 %v2225, %v2223
        %v2228 = vsel %vm2203, %v2226, 0
        %2230 = vmatprep.subr.bf16.mxu0 0
        %2231 = vmatpush1.bf16.msra.mxu0 %v2160
        %2232 = vmatprep.subr.bf16.mxu0 0
        %2233 = vmatpush1.bf16.msra.mxu0 0
        %2234 = vmatprep.subr.bf16.mxu0 0
        %2235 = vmatpush1.bf16.msra.mxu0 0
        %2236 = vmatprep.subr.bf16.mxu0 0
        %2237 = vmatpush1.bf16.msra.mxu0 0
        %2238 = vmatprep.subr.bf16.mxu0 0
        %2239 = vmatpush1.bf16.msra.mxu0 0
        %2240 = vmatprep.subr.bf16.mxu0 0
        %2241 = vmatpush1.bf16.msra.mxu0 0
        %2242 = vmatprep.subr.bf16.mxu0 0
        %2243 = vmatpush1.bf16.msra.mxu0 0
        %2244 = vmatprep.subr.bf16.mxu0 0
        %2245 = vmatpush1.bf16.msra.mxu0 0
        %2246 = vmatprep.subr.bf16.mxu0 0
        %2247 = vmatpush1.bf16.msra.mxu0 0
        %2248 = vmatprep.subr.bf16.mxu0 0
        %2249 = vmatpush1.bf16.msra.mxu0 0
        %2250 = vmatprep.subr.bf16.mxu0 0
        %2251 = vmatpush1.bf16.msra.mxu0 0
        %2252 = vmatprep.subr.bf16.mxu0 0
        %2253 = vmatpush1.bf16.msra.mxu0 0
        %2254 = vmatprep.subr.bf16.mxu0 0
        %2255 = vmatpush1.bf16.msra.mxu0 0
        %2256 = vmatprep.subr.bf16.mxu0 0
        %2257 = vmatpush1.bf16.msra.mxu0 0
        %2258 = vmatprep.subr.bf16.mxu0 0
        %2259 = vmatpush1.bf16.msra.mxu0 0
        %2260 = vmatprep.subr.bf16.mxu0 0
        %2261 = vmatpush1.bf16.msra.mxu0 0
        %2262 = vmatprep.mubr.bf16.mxu0 0
        %2263 = vmatmul.mubr.bf16.gmra.mrb[0].mxu0 %v2228
        %v2264 = vpop.f32.mrb[0].mxu0
        %v2265 = vadd.f32 0.0, %v2264
        %v2266 = vpop.f32.mrb[0].mxu0
        %v2267 = vpop.f32.mrb[0].mxu0
        %v2268 = vadd.f32 0.0, %v2267
        %v2269 = vpop.f32.mrb[0].mxu0
        %2270 = vdwg.mxu0
        %v2271 = vpack.c.bf16 %v2268, %v2265
        %2272 = vst [vmem:[#allocation4] sm:$0xff] %v2271
        %2273 = vmatprep.subr.bf16.mxu0 0
        %2274 = vmatpush1.bf16.xpose.msra.mxu0 %v2159
        %2275 = vmatprep.subr.bf16.mxu0 0
        %2276 = vmatpush1.bf16.xpose.msra.mxu0 0
        %2277 = vmatprep.subr.bf16.mxu0 0
        %2278 = vmatpush1.bf16.xpose.msra.mxu0 0
        %2279 = vmatprep.subr.bf16.mxu0 0
        %2280 = vmatpush1.bf16.xpose.msra.mxu0 0
        %2281 = vmatprep.subr.bf16.mxu0 0
        %2282 = vmatpush1.bf16.xpose.msra.mxu0 0
        %2283 = vmatprep.subr.bf16.mxu0 0
        %2284 = vmatpush1.bf16.xpose.msra.mxu0 0
        %2285 = vmatprep.subr.bf16.mxu0 0
        %2286 = vmatpush1.bf16.xpose.msra.mxu0 0
        %2287 = vmatprep.subr.bf16.mxu0 0
        %2288 = vmatpush1.bf16.xpose.msra.mxu0 0
        %2289 = vmatprep.subr.bf16.mxu0 0
        %2290 = vmatpush1.bf16.xpose.msra.mxu0 0
        %2291 = vmatprep.subr.bf16.mxu0 0
        %2292 = vmatpush1.bf16.xpose.msra.mxu0 0
        %2293 = vmatprep.subr.bf16.mxu0 0
        %2294 = vmatpush1.bf16.xpose.msra.mxu0 0
        %2295 = vmatprep.subr.bf16.mxu0 0
        %2296 = vmatpush1.bf16.xpose.msra.mxu0 0
        %2297 = vmatprep.subr.bf16.mxu0 0
        %2298 = vmatpush1.bf16.xpose.msra.mxu0 0
        %2299 = vmatprep.subr.bf16.mxu0 0
        %2300 = vmatpush1.bf16.xpose.msra.mxu0 0
        %2301 = vmatprep.subr.bf16.mxu0 0
        %2302 = vmatpush1.bf16.xpose.msra.mxu0 0
        %2303 = vmatprep.subr.bf16.mxu0 0
        %2304 = vmatpush1.bf16.xpose.msra.mxu0 0
        %2305 = vmatprep.mubr.bf16.mxu0 0
        %2306 = vmatmul.mubr.bf16.gmra.mrb[0].mxu0 %v2157
        %v2307 = vpop.f32.mrb[0].mxu0
        %v2308 = vadd.f32 0.0, %v2307
        %v2309 = vpop.f32.mrb[0].mxu0
        %v2310 = vpop.f32.mrb[0].mxu0
        %v2311 = vadd.f32 0.0, %v2310
        %v2312 = vpop.f32.mrb[0].mxu0
        %2313 = vdwg.mxu0
        %v2314 = vsel %vm2203, %v2308, -inf
        %2315 = vmax.xlane.f32.xlu0 %v2314
        %v2316 = vpop.xlane.xlu0 %2315
        %v2317 = vsel %vm2203, %v2311, -inf
        %2318 = vmax.xlane.f32.xlu0 %v2317
        %v2319 = vpop.xlane.xlu0 %2318
        %v2320 = vsub.f32 %v2308, %v2316
        %v2321 = vsub.f32 %v2311, %v2319
        %v2322 = vmul.f32 %v2320, 1.442695
        %v2323 = vpow.pop %v2322
        %v2324 = vmul.f32 %v2321, 1.442695
        %v2325 = vpow.pop %v2324
        %v2326 = vsel %vm2203, %v2323, 0.0
        %2327 = vadd.xlane.f32.xlu0 %v2326
        %v2328 = vpop.xlane.xlu0 %2327
        %v2329 = vsel %vm2203, %v2325, 0.0
        %2330 = vadd.xlane.f32.xlu0 %v2329
        %v2331 = vpop.xlane.xlu0 %2330
        %v2332 = vrcp.pop %v2328
        %v2333 = vmul.f32 %v2323, %v2332
        %v2334 = vrcp.pop %v2331
        %v2335 = vmul.f32 %v2325, %v2334
        %v2336 = vpack.c.bf16 %v2335, %v2333
        %v2338 = vsel %vm2203, %v2336, 0
        %2340 = vmatprep.subr.bf16.mxu0 0
        %2341 = vmatpush1.bf16.msra.mxu0 %v2161
        %2342 = vmatprep.subr.bf16.mxu0 0
        %2343 = vmatpush1.bf16.msra.mxu0 0
        %2344 = vmatprep.subr.bf16.mxu0 0
        %2345 = vmatpush1.bf16.msra.mxu0 0
        %2346 = vmatprep.subr.bf16.mxu0 0
        %2347 = vmatpush1.bf16.msra.mxu0 0
        %2348 = vmatprep.subr.bf16.mxu0 0
        %2349 = vmatpush1.bf16.msra.mxu0 0
        %2350 = vmatprep.subr.bf16.mxu0 0
        %2351 = vmatpush1.bf16.msra.mxu0 0
        %2352 = vmatprep.subr.bf16.mxu0 0
        %2353 = vmatpush1.bf16.msra.mxu0 0
        %2354 = vmatprep.subr.bf16.mxu0 0
        %2355 = vmatpush1.bf16.msra.mxu0 0
        %2356 = vmatprep.subr.bf16.mxu0 0
        %2357 = vmatpush1.bf16.msra.mxu0 0
        %2358 = vmatprep.subr.bf16.mxu0 0
        %2359 = vmatpush1.bf16.msra.mxu0 0
        %2360 = vmatprep.subr.bf16.mxu0 0
        %2361 = vmatpush1.bf16.msra.mxu0 0
        %2362 = vmatprep.subr.bf16.mxu0 0
        %2363 = vmatpush1.bf16.msra.mxu0 0
        %2364 = vmatprep.subr.bf16.mxu0 0
        %2365 = vmatpush1.bf16.msra.mxu0 0
        %2366 = vmatprep.subr.bf16.mxu0 0
        %2367 = vmatpush1.bf16.msra.mxu0 0
        %2368 = vmatprep.subr.bf16.mxu0 0
        %2369 = vmatpush1.bf16.msra.mxu0 0
        %2370 = vmatprep.subr.bf16.mxu0 0
        %2371 = vmatpush1.bf16.msra.mxu0 0
        %2372 = vmatprep.mubr.bf16.mxu0 0
        %2373 = vmatmul.mubr.bf16.gmra.mrb[0].mxu0 %v2338
        %v2374 = vpop.f32.mrb[0].mxu0
        %v2375 = vadd.f32 0.0, %v2374
        %v2376 = vpop.f32.mrb[0].mxu0
        %v2377 = vpop.f32.mrb[0].mxu0
        %v2378 = vadd.f32 0.0, %v2377
        %v2379 = vpop.f32.mrb[0].mxu0
        %2380 = vdwg.mxu0
        %v2381 = vpack.c.bf16 %v2378, %v2375
        %2382 = vst [vmem:[#allocation4 + $0x8] sm:$0xff] %v2381
        %v2383 = vld [vmem:[#allocation4] sm:$0xff]
        %v2384 = vld [vmem:[#allocation4 + $0x8] sm:$0xff]
        %v2385 = vld [vmem:[#allocation17] sm:$0xff]
        %v2386 = vld [vmem:[#allocation17 + $0x8] sm:$0xff]
        %v2387 = vld [vmem:[#allocation17 + $0x10] sm:$0xff]
        %v2388 = vld [vmem:[#allocation17 + $0x18] sm:$0xff]
        %v2389 = vld [vmem:[#allocation17 + $0x20] sm:$0xff]
        %v2390 = vld [vmem:[#allocation17 + $0x28] sm:$0xff]
        %v2391 = vld [vmem:[#allocation17 + $0x30] sm:$0xff]
        %v2392 = vld [vmem:[#allocation17 + $0x38] sm:$0xff]
        %v2393 = vld [vmem:[#allocation17 + $0x40] sm:$0xff]
        %v2394 = vld [vmem:[#allocation17 + $0x48] sm:$0xff]
        %v2395 = vld [vmem:[#allocation17 + $0x50] sm:$0xff]
        %v2396 = vld [vmem:[#allocation17 + $0x58] sm:$0xff]
        %v2397 = vld [vmem:[#allocation17 + $0x60] sm:$0xff]
        %v2398 = vld [vmem:[#allocation17 + $0x68] sm:$0xff]
        %v2399 = vld [vmem:[#allocation17 + $0x70] sm:$0xff]
        %v2400 = vld [vmem:[#allocation17 + $0x78] sm:$0xff]
        %v2401 = vld [vmem:[#allocation17 + $0x80] sm:$0xff]
        %v2402 = vld [vmem:[#allocation17 + $0x88] sm:$0xff]
        %v2403 = vld [vmem:[#allocation17 + $0x90] sm:$0xff]
        %v2404 = vld [vmem:[#allocation17 + $0x98] sm:$0xff]
        %v2405 = vld [vmem:[#allocation17 + $0xa0] sm:$0xff]
        %v2406 = vld [vmem:[#allocation17 + $0xa8] sm:$0xff]
        %v2407 = vld [vmem:[#allocation17 + $0xb0] sm:$0xff]
        %v2408 = vld [vmem:[#allocation17 + $0xb8] sm:$0xff]
        %v2409 = vld [vmem:[#allocation17 + $0xc0] sm:$0xff]
        %v2410 = vld [vmem:[#allocation17 + $0xc8] sm:$0xff]
        %v2411 = vld [vmem:[#allocation17 + $0xd0] sm:$0xff]
        %v2412 = vld [vmem:[#allocation17 + $0xd8] sm:$0xff]
        %v2413 = vld [vmem:[#allocation17 + $0xe0] sm:$0xff]
        %v2414 = vld [vmem:[#allocation17 + $0xe8] sm:$0xff]
        %v2415 = vld [vmem:[#allocation17 + $0xf0] sm:$0xff]
        %v2416 = vld [vmem:[#allocation17 + $0xf8] sm:$0xff]
        %v2417 = vld [vmem:[%s13] sm:$0x3]
        %v2419 = vlaneseq
        %v2420 = vshrl.u32 %v2419, 7
        %v2421 = vsub.s32 0, %v2420
        %v2422 = vrot.slane %v2417, %v2421
        %v2423 = vlaneseq
        %v2424 = vshrl.u32 %v2423, 7
        %v2425 = vsub.s32 1, %v2424
        %v2426 = vrot.slane %v2417, %v2425
        %v2461 = vunpack.c.l.b16 %v2385
        %v2462 = vunpack.c.h.b16 %v2385
        %v2463 = vunpack.c.l.b16 %v2386
        %v2464 = vunpack.c.h.b16 %v2386
        %v2465 = vunpack.c.l.b16 %v2387
        %v2466 = vunpack.c.h.b16 %v2387
        %v2467 = vunpack.c.l.b16 %v2388
        %v2468 = vunpack.c.h.b16 %v2388
        %v2469 = vunpack.c.l.b16 %v2389
        %v2470 = vunpack.c.h.b16 %v2389
        %v2471 = vunpack.c.l.b16 %v2390
        %v2472 = vunpack.c.h.b16 %v2390
        %v2473 = vunpack.c.l.b16 %v2391
        %v2474 = vunpack.c.h.b16 %v2391
        %v2475 = vunpack.c.l.b16 %v2392
        %v2476 = vunpack.c.h.b16 %v2392
        %v2477 = vunpack.c.l.b16 %v2393
        %v2478 = vunpack.c.h.b16 %v2393
        %v2479 = vunpack.c.l.b16 %v2394
        %v2480 = vunpack.c.h.b16 %v2394
        %v2481 = vunpack.c.l.b16 %v2395
        %v2482 = vunpack.c.h.b16 %v2395
        %v2483 = vunpack.c.l.b16 %v2396
        %v2484 = vunpack.c.h.b16 %v2396
        %v2485 = vunpack.c.l.b16 %v2397
        %v2486 = vunpack.c.h.b16 %v2397
        %v2487 = vunpack.c.l.b16 %v2398
        %v2488 = vunpack.c.h.b16 %v2398
        %v2489 = vunpack.c.l.b16 %v2399
        %v2490 = vunpack.c.h.b16 %v2399
        %v2491 = vunpack.c.l.b16 %v2400
        %v2492 = vunpack.c.h.b16 %v2400
        %v2493 = vunpack.c.l.b16 %v2401
        %v2494 = vunpack.c.h.b16 %v2401
        %v2495 = vunpack.c.l.b16 %v2402
        %v2496 = vunpack.c.h.b16 %v2402
        %v2497 = vunpack.c.l.b16 %v2403
        %v2498 = vunpack.c.h.b16 %v2403
        %v2499 = vunpack.c.l.b16 %v2404
        %v2500 = vunpack.c.h.b16 %v2404
        %v2501 = vunpack.c.l.b16 %v2405
        %v2502 = vunpack.c.h.b16 %v2405
        %v2503 = vunpack.c.l.b16 %v2406
        %v2504 = vunpack.c.h.b16 %v2406
        %v2505 = vunpack.c.l.b16 %v2407
        %v2506 = vunpack.c.h.b16 %v2407
        %v2507 = vunpack.c.l.b16 %v2408
        %v2508 = vunpack.c.h.b16 %v2408
        %v2509 = vunpack.c.l.b16 %v2409
        %v2510 = vunpack.c.h.b16 %v2409
        %v2511 = vunpack.c.l.b16 %v2410
        %v2512 = vunpack.c.h.b16 %v2410
        %v2513 = vunpack.c.l.b16 %v2411
        %v2514 = vunpack.c.h.b16 %v2411
        %v2515 = vunpack.c.l.b16 %v2412
        %v2516 = vunpack.c.h.b16 %v2412
        %v2517 = vunpack.c.l.b16 %v2413
        %v2518 = vunpack.c.h.b16 %v2413
        %v2519 = vunpack.c.l.b16 %v2414
        %v2520 = vunpack.c.h.b16 %v2414
        %v2521 = vunpack.c.l.b16 %v2415
        %v2522 = vunpack.c.h.b16 %v2415
        %v2523 = vunpack.c.l.b16 %v2416
        %v2524 = vunpack.c.h.b16 %v2416
        %v2525 = vpack.c.b16 %v2463, %v2461
        %v2526 = vpack.c.b16 %v2464, %v2462
        %v2527 = vpack.c.b16 %v2467, %v2465
        %v2528 = vpack.c.b16 %v2468, %v2466
        %v2529 = vpack.c.b16 %v2471, %v2469
        %v2530 = vpack.c.b16 %v2472, %v2470
        %v2531 = vpack.c.b16 %v2475, %v2473
        %v2532 = vpack.c.b16 %v2476, %v2474
        %v2533 = vpack.c.b16 %v2479, %v2477
        %v2534 = vpack.c.b16 %v2480, %v2478
        %v2535 = vpack.c.b16 %v2483, %v2481
        %v2536 = vpack.c.b16 %v2484, %v2482
        %v2537 = vpack.c.b16 %v2487, %v2485
        %v2538 = vpack.c.b16 %v2488, %v2486
        %v2539 = vpack.c.b16 %v2491, %v2489
        %v2540 = vpack.c.b16 %v2492, %v2490
        %v2541 = vpack.c.b16 %v2495, %v2493
        %v2542 = vpack.c.b16 %v2496, %v2494
        %v2543 = vpack.c.b16 %v2499, %v2497
        %v2544 = vpack.c.b16 %v2500, %v2498
        %v2545 = vpack.c.b16 %v2503, %v2501
        %v2546 = vpack.c.b16 %v2504, %v2502
        %v2547 = vpack.c.b16 %v2507, %v2505
        %v2548 = vpack.c.b16 %v2508, %v2506
        %v2549 = vpack.c.b16 %v2511, %v2509
        %v2550 = vpack.c.b16 %v2512, %v2510
        %v2551 = vpack.c.b16 %v2515, %v2513
        %v2552 = vpack.c.b16 %v2516, %v2514
        %v2553 = vpack.c.b16 %v2519, %v2517
        %v2554 = vpack.c.b16 %v2520, %v2518
        %v2555 = vpack.c.b16 %v2523, %v2521
        %v2556 = vpack.c.b16 %v2524, %v2522
        %2589 = vmatprep.subr.bf16.mxu0 %v2526
        %2590 = vmatpush1.bf16.msra.mxu0 %v2525
        %2591 = vmatprep.subr.bf16.mxu0 %v2528
        %2592 = vmatpush1.bf16.msra.mxu0 %v2527
        %2593 = vmatprep.subr.bf16.mxu0 %v2530
        %2594 = vmatpush1.bf16.msra.mxu0 %v2529
        %2595 = vmatprep.subr.bf16.mxu0 %v2532
        %2596 = vmatpush1.bf16.msra.mxu0 %v2531
        %2597 = vmatprep.subr.bf16.mxu0 %v2534
        %2598 = vmatpush1.bf16.msra.mxu0 %v2533
        %2599 = vmatprep.subr.bf16.mxu0 %v2536
        %2600 = vmatpush1.bf16.msra.mxu0 %v2535
        %2601 = vmatprep.subr.bf16.mxu0 %v2538
        %2602 = vmatpush1.bf16.msra.mxu0 %v2537
        %2603 = vmatprep.subr.bf16.mxu0 %v2540
        %2604 = vmatpush1.bf16.msra.mxu0 %v2539
        %2605 = vmatprep.subr.bf16.mxu0 %v2542
        %2606 = vmatpush1.bf16.msra.mxu0 %v2541
        %2607 = vmatprep.subr.bf16.mxu0 %v2544
        %2608 = vmatpush1.bf16.msra.mxu0 %v2543
        %2609 = vmatprep.subr.bf16.mxu0 %v2546
        %2610 = vmatpush1.bf16.msra.mxu0 %v2545
        %2611 = vmatprep.subr.bf16.mxu0 %v2548
        %2612 = vmatpush1.bf16.msra.mxu0 %v2547
        %2613 = vmatprep.subr.bf16.mxu0 %v2550
        %2614 = vmatpush1.bf16.msra.mxu0 %v2549
        %2615 = vmatprep.subr.bf16.mxu0 %v2552
        %2616 = vmatpush1.bf16.msra.mxu0 %v2551
        %2617 = vmatprep.subr.bf16.mxu0 %v2554
        %2618 = vmatpush1.bf16.msra.mxu0 %v2553
        %2619 = vmatprep.subr.bf16.mxu0 %v2556
        %2620 = vmatpush1.bf16.msra.mxu0 %v2555
        %2621 = vmatprep.mubr.bf16.mxu0 %v2384
        %2622 = vmatmul.mubr.bf16.gmra.mrb[0].mxu0 %v2383
        %v2623 = vpop.f32.mrb[0].mxu0
        %v2624 = vadd.f32 %v2422, %v2623
        %v2625 = vpop.f32.mrb[0].mxu0
        %v2626 = vadd.f32 %v2426, %v2625
        %v2627 = vpop.f32.mrb[0].mxu0
        %v2628 = vadd.f32 %v2422, %v2627
        %v2629 = vpop.f32.mrb[0].mxu0
        %v2630 = vadd.f32 %v2426, %v2629
        %2631 = vdwg.mxu0
        %v2632 = vadd.f32 %v1641, %v2624
        %v2633 = vadd.f32 %v1642, %v2626
        %v2634 = vadd.f32 %v1643, %v2628
        %v2635 = vadd.f32 %v1644, %v2630
        %v2636 = vld [vmem:[%s14] sm:$0x3]
        %v2637 = vld [vmem:[%s15] sm:$0x3]
        %v2638 = vadd.f32 %v2632, %v2633
        %2639 = vadd.xlane.f32.xlu0 %v2638
        %v2640 = vpop.xlane.xlu0 %2639
        %v2641 = vadd.f32 %v2634, %v2635
        %2642 = vadd.xlane.f32.xlu0 %v2641
        %v2643 = vpop.xlane.xlu0 %2642
        %v2644 = vmul.f32 %v2640, 0.005
        %v2645 = vmul.f32 %v2643, 0.005
        %v2646 = vsub.f32 %v2632, %v2644
        %v2647 = vsub.f32 %v2633, %v2644
        %v2648 = vsub.f32 %v2634, %v2645
        %v2649 = vsub.f32 %v2635, %v2645
        %v2650 = vmul.f32 %v2646, %v1652
        %v2651 = vmul.f32 %v2647, %v1653
        %v2652 = vmul.f32 %v2648, %v1652
        %v2653 = vmul.f32 %v2649, %v1653
        %v2654 = vmul.f32 %v2650, %v2650
        %v2655 = vmul.f32 %v2651, %v2651
        %v2656 = vmul.f32 %v2652, %v2652
        %v2657 = vmul.f32 %v2653, %v2653
        %v2658 = vadd.f32 %v2654, %v2655
        %2659 = vadd.xlane.f32.xlu0 %v2658
        %v2660 = vpop.xlane.xlu0 %2659
        %v2661 = vadd.f32 %v2656, %v2657
        %2662 = vadd.xlane.f32.xlu0 %v2661
        %v2663 = vpop.xlane.xlu0 %2662
        %v2664 = vmul.f32 %v2660, 0.005
        %v2665 = vmul.f32 %v2663, 0.005
        %v2666 = vadd.f32 %v2664, 1e-05
        %v2667 = vadd.f32 %v2665, 1e-05
        %v2668 = vrsqrt.pop %v2666
        %v2669 = vrsqrt.pop %v2667
        %v2670 = vmul.f32 %v2646, %v2668
        %v2671 = vmul.f32 %v2647, %v2668
        %v2672 = vmul.f32 %v2648, %v2669
        %v2673 = vmul.f32 %v2649, %v2669
        %v2675 = vlaneseq
        %v2676 = vshrl.u32 %v2675, 7
        %v2677 = vsub.s32 0, %v2676
        %v2678 = vrot.slane %v2636, %v2677
        %v2679 = vlaneseq
        %v2680 = vshrl.u32 %v2679, 7
        %v2681 = vsub.s32 1, %v2680
        %v2682 = vrot.slane %v2636, %v2681
        %v2685 = vmul.f32 %v2670, %v2678
        %v2686 = vmul.f32 %v2671, %v2682
        %v2687 = vmul.f32 %v2672, %v2678
        %v2688 = vmul.f32 %v2673, %v2682
        %v2690 = vlaneseq
        %v2691 = vshrl.u32 %v2690, 7
        %v2692 = vsub.s32 0, %v2691
        %v2693 = vrot.slane %v2637, %v2692
        %v2694 = vlaneseq
        %v2695 = vshrl.u32 %v2694, 7
        %v2696 = vsub.s32 1, %v2695
        %v2697 = vrot.slane %v2637, %v2696
        %v2700 = vadd.f32 %v2685, %v2693
        %v2701 = vadd.f32 %v2686, %v2697
        %v2702 = vadd.f32 %v2687, %v2693
        %v2703 = vadd.f32 %v2688, %v2697
        %v2704 = vpack.c.bf16 %v2702, %v2700
        %v2705 = vpack.c.bf16 %v2703, %v2701
        %v2706 = vld [vmem:[#allocation19] sm:$0xff]
        %v2707 = vld [vmem:[#allocation19 + $0x8] sm:$0xff]
        %v2708 = vld [vmem:[#allocation19 + $0x10] sm:$0xff]
        %v2709 = vld [vmem:[#allocation19 + $0x18] sm:$0xff]
        %v2710 = vld [vmem:[#allocation19 + $0x20] sm:$0xff]
        %v2711 = vld [vmem:[#allocation19 + $0x28] sm:$0xff]
        %v2712 = vld [vmem:[#allocation19 + $0x30] sm:$0xff]
        %v2713 = vld [vmem:[#allocation19 + $0x38] sm:$0xff]
        %v2714 = vld [vmem:[#allocation19 + $0x40] sm:$0xff]
        %v2715 = vld [vmem:[#allocation19 + $0x48] sm:$0xff]
        %v2716 = vld [vmem:[#allocation19 + $0x50] sm:$0xff]
        %v2717 = vld [vmem:[#allocation19 + $0x58] sm:$0xff]
        %v2718 = vld [vmem:[#allocation19 + $0x60] sm:$0xff]
        %v2719 = vld [vmem:[#allocation19 + $0x68] sm:$0xff]
        %v2720 = vld [vmem:[#allocation19 + $0x70] sm:$0xff]
        %v2721 = vld [vmem:[#allocation19 + $0x78] sm:$0xff]
        %v2722 = vld [vmem:[#allocation19 + $0x80] sm:$0xff]
        %v2723 = vld [vmem:[#allocation19 + $0x88] sm:$0xff]
        %v2724 = vld [vmem:[#allocation19 + $0x90] sm:$0xff]
        %v2725 = vld [vmem:[#allocation19 + $0x98] sm:$0xff]
        %v2726 = vld [vmem:[#allocation19 + $0xa0] sm:$0xff]
        %v2727 = vld [vmem:[#allocation19 + $0xa8] sm:$0xff]
        %v2728 = vld [vmem:[#allocation19 + $0xb0] sm:$0xff]
        %v2729 = vld [vmem:[#allocation19 + $0xb8] sm:$0xff]
        %v2730 = vld [vmem:[#allocation19 + $0xc0] sm:$0xff]
        %v2731 = vld [vmem:[#allocation19 + $0xc8] sm:$0xff]
        %v2732 = vld [vmem:[#allocation19 + $0xd0] sm:$0xff]
        %v2733 = vld [vmem:[#allocation19 + $0xd8] sm:$0xff]
        %v2734 = vld [vmem:[#allocation19 + $0xe0] sm:$0xff]
        %v2735 = vld [vmem:[#allocation19 + $0xe8] sm:$0xff]
        %v2736 = vld [vmem:[#allocation19 + $0xf0] sm:$0xff]
        %v2737 = vld [vmem:[#allocation19 + $0xf8] sm:$0xff]
        %v2738 = vld [vmem:[#allocation19 + $0x100] sm:$0xff]
        %v2739 = vld [vmem:[#allocation19 + $0x108] sm:$0xff]
        %v2740 = vld [vmem:[#allocation19 + $0x110] sm:$0xff]
        %v2741 = vld [vmem:[#allocation19 + $0x118] sm:$0xff]
        %v2742 = vld [vmem:[#allocation19 + $0x120] sm:$0xff]
        %v2743 = vld [vmem:[#allocation19 + $0x128] sm:$0xff]
        %v2744 = vld [vmem:[#allocation19 + $0x130] sm:$0xff]
        %v2745 = vld [vmem:[#allocation19 + $0x138] sm:$0xff]
        %v2746 = vld [vmem:[#allocation19 + $0x140] sm:$0xff]
        %v2747 = vld [vmem:[#allocation19 + $0x148] sm:$0xff]
        %v2748 = vld [vmem:[#allocation19 + $0x150] sm:$0xff]
        %v2749 = vld [vmem:[#allocation19 + $0x158] sm:$0xff]
        %v2750 = vld [vmem:[#allocation19 + $0x160] sm:$0xff]
        %v2751 = vld [vmem:[#allocation19 + $0x168] sm:$0xff]
        %v2752 = vld [vmem:[#allocation19 + $0x170] sm:$0xff]
        %v2753 = vld [vmem:[#allocation19 + $0x178] sm:$0xff]
        %v2754 = vld [vmem:[#allocation19 + $0x180] sm:$0xff]
        %v2755 = vld [vmem:[#allocation19 + $0x188] sm:$0xff]
        %v2756 = vld [vmem:[#allocation19 + $0x190] sm:$0xff]
        %v2757 = vld [vmem:[#allocation19 + $0x198] sm:$0xff]
        %v2758 = vld [vmem:[#allocation19 + $0x1a0] sm:$0xff]
        %v2759 = vld [vmem:[#allocation19 + $0x1a8] sm:$0xff]
        %v2760 = vld [vmem:[#allocation19 + $0x1b0] sm:$0xff]
        %v2761 = vld [vmem:[#allocation19 + $0x1b8] sm:$0xff]
        %v2762 = vld [vmem:[#allocation19 + $0x1c0] sm:$0xff]
        %v2763 = vld [vmem:[#allocation19 + $0x1c8] sm:$0xff]
        %v2764 = vld [vmem:[#allocation19 + $0x1d0] sm:$0xff]
        %v2765 = vld [vmem:[#allocation19 + $0x1d8] sm:$0xff]
        %v2766 = vld [vmem:[#allocation19 + $0x1e0] sm:$0xff]
        %v2767 = vld [vmem:[#allocation19 + $0x1e8] sm:$0xff]
        %v2768 = vld [vmem:[#allocation19 + $0x1f0] sm:$0xff]
        %v2769 = vld [vmem:[#allocation19 + $0x1f8] sm:$0xff]
        %v2770 = vld [vmem:[#allocation19 + $0x200] sm:$0xff]
        %v2771 = vld [vmem:[#allocation19 + $0x208] sm:$0xff]
        %v2772 = vld [vmem:[#allocation19 + $0x210] sm:$0xff]
        %v2773 = vld [vmem:[#allocation19 + $0x218] sm:$0xff]
        %v2774 = vld [vmem:[#allocation19 + $0x220] sm:$0xff]
        %v2775 = vld [vmem:[#allocation19 + $0x228] sm:$0xff]
        %v2776 = vld [vmem:[#allocation19 + $0x230] sm:$0xff]
        %v2777 = vld [vmem:[#allocation19 + $0x238] sm:$0xff]
        %v2778 = vld [vmem:[#allocation19 + $0x240] sm:$0xff]
        %v2779 = vld [vmem:[#allocation19 + $0x248] sm:$0xff]
        %v2780 = vld [vmem:[#allocation19 + $0x250] sm:$0xff]
        %v2781 = vld [vmem:[#allocation19 + $0x258] sm:$0xff]
        %v2782 = vld [vmem:[#allocation19 + $0x260] sm:$0xff]
        %v2783 = vld [vmem:[#allocation19 + $0x268] sm:$0xff]
        %v2784 = vld [vmem:[#allocation19 + $0x270] sm:$0xff]
        %v2785 = vld [vmem:[#allocation19 + $0x278] sm:$0xff]
        %v2786 = vld [vmem:[#allocation19 + $0x280] sm:$0xff]
        %v2787 = vld [vmem:[#allocation19 + $0x288] sm:$0xff]
        %v2788 = vld [vmem:[#allocation19 + $0x290] sm:$0xff]
        %v2789 = vld [vmem:[#allocation19 + $0x298] sm:$0xff]
        %v2790 = vld [vmem:[#allocation19 + $0x2a0] sm:$0xff]
        %v2791 = vld [vmem:[#allocation19 + $0x2a8] sm:$0xff]
        %v2792 = vld [vmem:[#allocation19 + $0x2b0] sm:$0xff]
        %v2793 = vld [vmem:[#allocation19 + $0x2b8] sm:$0xff]
        %v2794 = vld [vmem:[#allocation19 + $0x2c0] sm:$0xff]
        %v2795 = vld [vmem:[#allocation19 + $0x2c8] sm:$0xff]
        %v2796 = vld [vmem:[#allocation19 + $0x2d0] sm:$0xff]
        %v2797 = vld [vmem:[#allocation19 + $0x2d8] sm:$0xff]
        %v2798 = vld [vmem:[#allocation19 + $0x2e0] sm:$0xff]
        %v2799 = vld [vmem:[#allocation19 + $0x2e8] sm:$0xff]
        %v2800 = vld [vmem:[#allocation19 + $0x2f0] sm:$0xff]
        %v2801 = vld [vmem:[#allocation19 + $0x2f8] sm:$0xff]
        %v2802 = vld [vmem:[#allocation19 + $0x300] sm:$0xff]
        %v2803 = vld [vmem:[#allocation19 + $0x308] sm:$0xff]
        %v2804 = vld [vmem:[#allocation19 + $0x310] sm:$0xff]
        %v2805 = vld [vmem:[#allocation19 + $0x318] sm:$0xff]
        %v2806 = vld [vmem:[#allocation19 + $0x320] sm:$0xff]
        %v2807 = vld [vmem:[#allocation19 + $0x328] sm:$0xff]
        %v2808 = vld [vmem:[#allocation19 + $0x330] sm:$0xff]
        %v2809 = vld [vmem:[#allocation19 + $0x338] sm:$0xff]
        %v2810 = vld [vmem:[#allocation19 + $0x340] sm:$0xff]
        %v2811 = vld [vmem:[#allocation19 + $0x348] sm:$0xff]
        %v2812 = vld [vmem:[#allocation19 + $0x350] sm:$0xff]
        %v2813 = vld [vmem:[#allocation19 + $0x358] sm:$0xff]
        %v2814 = vld [vmem:[#allocation19 + $0x360] sm:$0xff]
        %v2815 = vld [vmem:[#allocation19 + $0x368] sm:$0xff]
        %v2816 = vld [vmem:[#allocation19 + $0x370] sm:$0xff]
        %v2817 = vld [vmem:[#allocation19 + $0x378] sm:$0xff]
        %v2818 = vld [vmem:[#allocation19 + $0x380] sm:$0xff]
        %v2819 = vld [vmem:[#allocation19 + $0x388] sm:$0xff]
        %v2820 = vld [vmem:[#allocation19 + $0x390] sm:$0xff]
        %v2821 = vld [vmem:[#allocation19 + $0x398] sm:$0xff]
        %v2822 = vld [vmem:[#allocation19 + $0x3a0] sm:$0xff]
        %v2823 = vld [vmem:[#allocation19 + $0x3a8] sm:$0xff]
        %v2824 = vld [vmem:[#allocation19 + $0x3b0] sm:$0xff]
        %v2825 = vld [vmem:[#allocation19 + $0x3b8] sm:$0xff]
        %v2826 = vld [vmem:[#allocation19 + $0x3c0] sm:$0xff]
        %v2827 = vld [vmem:[#allocation19 + $0x3c8] sm:$0xff]
        %v2828 = vld [vmem:[#allocation19 + $0x3d0] sm:$0xff]
        %v2829 = vld [vmem:[#allocation19 + $0x3d8] sm:$0xff]
        %v2830 = vld [vmem:[#allocation19 + $0x3e0] sm:$0xff]
        %v2831 = vld [vmem:[#allocation19 + $0x3e8] sm:$0xff]
        %v2832 = vld [vmem:[#allocation19 + $0x3f0] sm:$0xff]
        %v2833 = vld [vmem:[#allocation19 + $0x3f8] sm:$0xff]
        %v2834 = vld [vmem:[%s17] sm:$0xff]
        %v2836 = vlaneseq
        %v2837 = vshrl.u32 %v2836, 7
        %v2838 = vsub.s32 0, %v2837
        %v2839 = vrot.slane %v2834, %v2838
        %v2840 = vlaneseq
        %v2841 = vshrl.u32 %v2840, 7
        %v2842 = vsub.s32 1, %v2841
        %v2843 = vrot.slane %v2834, %v2842
        %v2844 = vlaneseq
        %v2845 = vshrl.u32 %v2844, 7
        %v2846 = vsub.s32 2, %v2845
        %v2847 = vrot.slane %v2834, %v2846
        %v2848 = vlaneseq
        %v2849 = vshrl.u32 %v2848, 7
        %v2850 = vsub.s32 3, %v2849
        %v2851 = vrot.slane %v2834, %v2850
        %v2852 = vlaneseq
        %v2853 = vshrl.u32 %v2852, 7
        %v2854 = vsub.s32 4, %v2853
        %v2855 = vrot.slane %v2834, %v2854
        %v2856 = vlaneseq
        %v2857 = vshrl.u32 %v2856, 7
        %v2858 = vsub.s32 5, %v2857
        %v2859 = vrot.slane %v2834, %v2858
        %v2860 = vlaneseq
        %v2861 = vshrl.u32 %v2860, 7
        %v2862 = vsub.s32 6, %v2861
        %v2863 = vrot.slane %v2834, %v2862
        %v2864 = vlaneseq
        %v2865 = vshrl.u32 %v2864, 7
        %v2866 = vsub.s32 7, %v2865
        %v2867 = vrot.slane %v2834, %v2866
        %v3004 = vunpack.c.l.b16 %v2706
        %v3005 = vunpack.c.h.b16 %v2706
        %v3006 = vunpack.c.l.b16 %v2707
        %v3007 = vunpack.c.h.b16 %v2707
        %v3008 = vunpack.c.l.b16 %v2708
        %v3009 = vunpack.c.h.b16 %v2708
        %v3010 = vunpack.c.l.b16 %v2709
        %v3011 = vunpack.c.h.b16 %v2709
        %v3012 = vunpack.c.l.b16 %v2710
        %v3013 = vunpack.c.h.b16 %v2710
        %v3014 = vunpack.c.l.b16 %v2711
        %v3015 = vunpack.c.h.b16 %v2711
        %v3016 = vunpack.c.l.b16 %v2712
        %v3017 = vunpack.c.h.b16 %v2712
        %v3018 = vunpack.c.l.b16 %v2713
        %v3019 = vunpack.c.h.b16 %v2713
        %v3020 = vunpack.c.l.b16 %v2714
        %v3021 = vunpack.c.h.b16 %v2714
        %v3022 = vunpack.c.l.b16 %v2715
        %v3023 = vunpack.c.h.b16 %v2715
        %v3024 = vunpack.c.l.b16 %v2716
        %v3025 = vunpack.c.h.b16 %v2716
        %v3026 = vunpack.c.l.b16 %v2717
        %v3027 = vunpack.c.h.b16 %v2717
        %v3028 = vunpack.c.l.b16 %v2718
        %v3029 = vunpack.c.h.b16 %v2718
        %v3030 = vunpack.c.l.b16 %v2719
        %v3031 = vunpack.c.h.b16 %v2719
        %v3032 = vunpack.c.l.b16 %v2720
        %v3033 = vunpack.c.h.b16 %v2720
        %v3034 = vunpack.c.l.b16 %v2721
        %v3035 = vunpack.c.h.b16 %v2721
        %v3036 = vunpack.c.l.b16 %v2722
        %v3037 = vunpack.c.h.b16 %v2722
        %v3038 = vunpack.c.l.b16 %v2723
        %v3039 = vunpack.c.h.b16 %v2723
        %v3040 = vunpack.c.l.b16 %v2724
        %v3041 = vunpack.c.h.b16 %v2724
        %v3042 = vunpack.c.l.b16 %v2725
        %v3043 = vunpack.c.h.b16 %v2725
        %v3044 = vunpack.c.l.b16 %v2726
        %v3045 = vunpack.c.h.b16 %v2726
        %v3046 = vunpack.c.l.b16 %v2727
        %v3047 = vunpack.c.h.b16 %v2727
        %v3048 = vunpack.c.l.b16 %v2728
        %v3049 = vunpack.c.h.b16 %v2728
        %v3050 = vunpack.c.l.b16 %v2729
        %v3051 = vunpack.c.h.b16 %v2729
        %v3052 = vunpack.c.l.b16 %v2730
        %v3053 = vunpack.c.h.b16 %v2730
        %v3054 = vunpack.c.l.b16 %v2731
        %v3055 = vunpack.c.h.b16 %v2731
        %v3056 = vunpack.c.l.b16 %v2732
        %v3057 = vunpack.c.h.b16 %v2732
        %v3058 = vunpack.c.l.b16 %v2733
        %v3059 = vunpack.c.h.b16 %v2733
        %v3060 = vunpack.c.l.b16 %v2734
        %v3061 = vunpack.c.h.b16 %v2734
        %v3062 = vunpack.c.l.b16 %v2735
        %v3063 = vunpack.c.h.b16 %v2735
        %v3064 = vunpack.c.l.b16 %v2736
        %v3065 = vunpack.c.h.b16 %v2736
        %v3066 = vunpack.c.l.b16 %v2737
        %v3067 = vunpack.c.h.b16 %v2737
        %v3068 = vunpack.c.l.b16 %v2738
        %v3069 = vunpack.c.h.b16 %v2738
        %v3070 = vunpack.c.l.b16 %v2739
        %v3071 = vunpack.c.h.b16 %v2739
        %v3072 = vunpack.c.l.b16 %v2740
        %v3073 = vunpack.c.h.b16 %v2740
        %v3074 = vunpack.c.l.b16 %v2741
        %v3075 = vunpack.c.h.b16 %v2741
        %v3076 = vunpack.c.l.b16 %v2742
        %v3077 = vunpack.c.h.b16 %v2742
        %v3078 = vunpack.c.l.b16 %v2743
        %v3079 = vunpack.c.h.b16 %v2743
        %v3080 = vunpack.c.l.b16 %v2744
        %v3081 = vunpack.c.h.b16 %v2744
        %v3082 = vunpack.c.l.b16 %v2745
        %v3083 = vunpack.c.h.b16 %v2745
        %v3084 = vunpack.c.l.b16 %v2746
        %v3085 = vunpack.c.h.b16 %v2746
        %v3086 = vunpack.c.l.b16 %v2747
        %v3087 = vunpack.c.h.b16 %v2747
        %v3088 = vunpack.c.l.b16 %v2748
        %v3089 = vunpack.c.h.b16 %v2748
        %v3090 = vunpack.c.l.b16 %v2749
        %v3091 = vunpack.c.h.b16 %v2749
        %v3092 = vunpack.c.l.b16 %v2750
        %v3093 = vunpack.c.h.b16 %v2750
        %v3094 = vunpack.c.l.b16 %v2751
        %v3095 = vunpack.c.h.b16 %v2751
        %v3096 = vunpack.c.l.b16 %v2752
        %v3097 = vunpack.c.h.b16 %v2752
        %v3098 = vunpack.c.l.b16 %v2753
        %v3099 = vunpack.c.h.b16 %v2753
        %v3100 = vunpack.c.l.b16 %v2754
        %v3101 = vunpack.c.h.b16 %v2754
        %v3102 = vunpack.c.l.b16 %v2755
        %v3103 = vunpack.c.h.b16 %v2755
        %v3104 = vunpack.c.l.b16 %v2756
        %v3105 = vunpack.c.h.b16 %v2756
        %v3106 = vunpack.c.l.b16 %v2757
        %v3107 = vunpack.c.h.b16 %v2757
        %v3108 = vunpack.c.l.b16 %v2758
        %v3109 = vunpack.c.h.b16 %v2758
        %v3110 = vunpack.c.l.b16 %v2759
        %v3111 = vunpack.c.h.b16 %v2759
        %v3112 = vunpack.c.l.b16 %v2760
        %v3113 = vunpack.c.h.b16 %v2760
        %v3114 = vunpack.c.l.b16 %v2761
        %v3115 = vunpack.c.h.b16 %v2761
        %v3116 = vunpack.c.l.b16 %v2762
        %v3117 = vunpack.c.h.b16 %v2762
        %v3118 = vunpack.c.l.b16 %v2763
        %v3119 = vunpack.c.h.b16 %v2763
        %v3120 = vunpack.c.l.b16 %v2764
        %v3121 = vunpack.c.h.b16 %v2764
        %v3122 = vunpack.c.l.b16 %v2765
        %v3123 = vunpack.c.h.b16 %v2765
        %v3124 = vunpack.c.l.b16 %v2766
        %v3125 = vunpack.c.h.b16 %v2766
        %v3126 = vunpack.c.l.b16 %v2767
        %v3127 = vunpack.c.h.b16 %v2767
        %v3128 = vunpack.c.l.b16 %v2768
        %v3129 = vunpack.c.h.b16 %v2768
        %v3130 = vunpack.c.l.b16 %v2769
        %v3131 = vunpack.c.h.b16 %v2769
        %v3132 = vunpack.c.l.b16 %v2770
        %v3133 = vunpack.c.h.b16 %v2770
        %v3134 = vunpack.c.l.b16 %v2771
        %v3135 = vunpack.c.h.b16 %v2771
        %v3136 = vunpack.c.l.b16 %v2772
        %v3137 = vunpack.c.h.b16 %v2772
        %v3138 = vunpack.c.l.b16 %v2773
        %v3139 = vunpack.c.h.b16 %v2773
        %v3140 = vunpack.c.l.b16 %v2774
        %v3141 = vunpack.c.h.b16 %v2774
        %v3142 = vunpack.c.l.b16 %v2775
        %v3143 = vunpack.c.h.b16 %v2775
        %v3144 = vunpack.c.l.b16 %v2776
        %v3145 = vunpack.c.h.b16 %v2776
        %v3146 = vunpack.c.l.b16 %v2777
        %v3147 = vunpack.c.h.b16 %v2777
        %v3148 = vunpack.c.l.b16 %v2778
        %v3149 = vunpack.c.h.b16 %v2778
        %v3150 = vunpack.c.l.b16 %v2779
        %v3151 = vunpack.c.h.b16 %v2779
        %v3152 = vunpack.c.l.b16 %v2780
        %v3153 = vunpack.c.h.b16 %v2780
        %v3154 = vunpack.c.l.b16 %v2781
        %v3155 = vunpack.c.h.b16 %v2781
        %v3156 = vunpack.c.l.b16 %v2782
        %v3157 = vunpack.c.h.b16 %v2782
        %v3158 = vunpack.c.l.b16 %v2783
        %v3159 = vunpack.c.h.b16 %v2783
        %v3160 = vunpack.c.l.b16 %v2784
        %v3161 = vunpack.c.h.b16 %v2784
        %v3162 = vunpack.c.l.b16 %v2785
        %v3163 = vunpack.c.h.b16 %v2785
        %v3164 = vunpack.c.l.b16 %v2786
        %v3165 = vunpack.c.h.b16 %v2786
        %v3166 = vunpack.c.l.b16 %v2787
        %v3167 = vunpack.c.h.b16 %v2787
        %v3168 = vunpack.c.l.b16 %v2788
        %v3169 = vunpack.c.h.b16 %v2788
        %v3170 = vunpack.c.l.b16 %v2789
        %v3171 = vunpack.c.h.b16 %v2789
        %v3172 = vunpack.c.l.b16 %v2790
        %v3173 = vunpack.c.h.b16 %v2790
        %v3174 = vunpack.c.l.b16 %v2791
        %v3175 = vunpack.c.h.b16 %v2791
        %v3176 = vunpack.c.l.b16 %v2792
        %v3177 = vunpack.c.h.b16 %v2792
        %v3178 = vunpack.c.l.b16 %v2793
        %v3179 = vunpack.c.h.b16 %v2793
        %v3180 = vunpack.c.l.b16 %v2794
        %v3181 = vunpack.c.h.b16 %v2794
        %v3182 = vunpack.c.l.b16 %v2795
        %v3183 = vunpack.c.h.b16 %v2795
        %v3184 = vunpack.c.l.b16 %v2796
        %v3185 = vunpack.c.h.b16 %v2796
        %v3186 = vunpack.c.l.b16 %v2797
        %v3187 = vunpack.c.h.b16 %v2797
        %v3188 = vunpack.c.l.b16 %v2798
        %v3189 = vunpack.c.h.b16 %v2798
        %v3190 = vunpack.c.l.b16 %v2799
        %v3191 = vunpack.c.h.b16 %v2799
        %v3192 = vunpack.c.l.b16 %v2800
        %v3193 = vunpack.c.h.b16 %v2800
        %v3194 = vunpack.c.l.b16 %v2801
        %v3195 = vunpack.c.h.b16 %v2801
        %v3196 = vunpack.c.l.b16 %v2802
        %v3197 = vunpack.c.h.b16 %v2802
        %v3198 = vunpack.c.l.b16 %v2803
        %v3199 = vunpack.c.h.b16 %v2803
        %v3200 = vunpack.c.l.b16 %v2804
        %v3201 = vunpack.c.h.b16 %v2804
        %v3202 = vunpack.c.l.b16 %v2805
        %v3203 = vunpack.c.h.b16 %v2805
        %v3204 = vunpack.c.l.b16 %v2806
        %v3205 = vunpack.c.h.b16 %v2806
        %v3206 = vunpack.c.l.b16 %v2807
        %v3207 = vunpack.c.h.b16 %v2807
        %v3208 = vunpack.c.l.b16 %v2808
        %v3209 = vunpack.c.h.b16 %v2808
        %v3210 = vunpack.c.l.b16 %v2809
        %v3211 = vunpack.c.h.b16 %v2809
        %v3212 = vunpack.c.l.b16 %v2810
        %v3213 = vunpack.c.h.b16 %v2810
        %v3214 = vunpack.c.l.b16 %v2811
        %v3215 = vunpack.c.h.b16 %v2811
        %v3216 = vunpack.c.l.b16 %v2812
        %v3217 = vunpack.c.h.b16 %v2812
        %v3218 = vunpack.c.l.b16 %v2813
        %v3219 = vunpack.c.h.b16 %v2813
        %v3220 = vunpack.c.l.b16 %v2814
        %v3221 = vunpack.c.h.b16 %v2814
        %v3222 = vunpack.c.l.b16 %v2815
        %v3223 = vunpack.c.h.b16 %v2815
        %v3224 = vunpack.c.l.b16 %v2816
        %v3225 = vunpack.c.h.b16 %v2816
        %v3226 = vunpack.c.l.b16 %v2817
        %v3227 = vunpack.c.h.b16 %v2817
        %v3228 = vunpack.c.l.b16 %v2818
        %v3229 = vunpack.c.h.b16 %v2818
        %v3230 = vunpack.c.l.b16 %v2819
        %v3231 = vunpack.c.h.b16 %v2819
        %v3232 = vunpack.c.l.b16 %v2820
        %v3233 = vunpack.c.h.b16 %v2820
        %v3234 = vunpack.c.l.b16 %v2821
        %v3235 = vunpack.c.h.b16 %v2821
        %v3236 = vunpack.c.l.b16 %v2822
        %v3237 = vunpack.c.h.b16 %v2822
        %v3238 = vunpack.c.l.b16 %v2823
        %v3239 = vunpack.c.h.b16 %v2823
        %v3240 = vunpack.c.l.b16 %v2824
        %v3241 = vunpack.c.h.b16 %v2824
        %v3242 = vunpack.c.l.b16 %v2825
        %v3243 = vunpack.c.h.b16 %v2825
        %v3244 = vunpack.c.l.b16 %v2826
        %v3245 = vunpack.c.h.b16 %v2826
        %v3246 = vunpack.c.l.b16 %v2827
        %v3247 = vunpack.c.h.b16 %v2827
        %v3248 = vunpack.c.l.b16 %v2828
        %v3249 = vunpack.c.h.b16 %v2828
        %v3250 = vunpack.c.l.b16 %v2829
        %v3251 = vunpack.c.h.b16 %v2829
        %v3252 = vunpack.c.l.b16 %v2830
        %v3253 = vunpack.c.h.b16 %v2830
        %v3254 = vunpack.c.l.b16 %v2831
        %v3255 = vunpack.c.h.b16 %v2831
        %v3256 = vunpack.c.l.b16 %v2832
        %v3257 = vunpack.c.h.b16 %v2832
        %v3258 = vunpack.c.l.b16 %v2833
        %v3259 = vunpack.c.h.b16 %v2833
        %v3260 = vpack.c.b16 %v3012, %v3004
        %v3261 = vpack.c.b16 %v3013, %v3005
        %v3262 = vpack.c.b16 %v3014, %v3006
        %v3263 = vpack.c.b16 %v3015, %v3007
        %v3264 = vpack.c.b16 %v3016, %v3008
        %v3265 = vpack.c.b16 %v3017, %v3009
        %v3266 = vpack.c.b16 %v3018, %v3010
        %v3267 = vpack.c.b16 %v3019, %v3011
        %v3268 = vpack.c.b16 %v3028, %v3020
        %v3269 = vpack.c.b16 %v3029, %v3021
        %v3270 = vpack.c.b16 %v3030, %v3022
        %v3271 = vpack.c.b16 %v3031, %v3023
        %v3272 = vpack.c.b16 %v3032, %v3024
        %v3273 = vpack.c.b16 %v3033, %v3025
        %v3274 = vpack.c.b16 %v3034, %v3026
        %v3275 = vpack.c.b16 %v3035, %v3027
        %v3276 = vpack.c.b16 %v3044, %v3036
        %v3277 = vpack.c.b16 %v3045, %v3037
        %v3278 = vpack.c.b16 %v3046, %v3038
        %v3279 = vpack.c.b16 %v3047, %v3039
        %v3280 = vpack.c.b16 %v3048, %v3040
        %v3281 = vpack.c.b16 %v3049, %v3041
        %v3282 = vpack.c.b16 %v3050, %v3042
        %v3283 = vpack.c.b16 %v3051, %v3043
        %v3284 = vpack.c.b16 %v3060, %v3052
        %v3285 = vpack.c.b16 %v3061, %v3053
        %v3286 = vpack.c.b16 %v3062, %v3054
        %v3287 = vpack.c.b16 %v3063, %v3055
        %v3288 = vpack.c.b16 %v3064, %v3056
        %v3289 = vpack.c.b16 %v3065, %v3057
        %v3290 = vpack.c.b16 %v3066, %v3058
        %v3291 = vpack.c.b16 %v3067, %v3059
        %v3292 = vpack.c.b16 %v3076, %v3068
        %v3293 = vpack.c.b16 %v3077, %v3069
        %v3294 = vpack.c.b16 %v3078, %v3070
        %v3295 = vpack.c.b16 %v3079, %v3071
        %v3296 = vpack.c.b16 %v3080, %v3072
        %v3297 = vpack.c.b16 %v3081, %v3073
        %v3298 = vpack.c.b16 %v3082, %v3074
        %v3299 = vpack.c.b16 %v3083, %v3075
        %v3300 = vpack.c.b16 %v3092, %v3084
        %v3301 = vpack.c.b16 %v3093, %v3085
        %v3302 = vpack.c.b16 %v3094, %v3086
        %v3303 = vpack.c.b16 %v3095, %v3087
        %v3304 = vpack.c.b16 %v3096, %v3088
        %v3305 = vpack.c.b16 %v3097, %v3089
        %v3306 = vpack.c.b16 %v3098, %v3090
        %v3307 = vpack.c.b16 %v3099, %v3091
        %v3308 = vpack.c.b16 %v3108, %v3100
        %v3309 = vpack.c.b16 %v3109, %v3101
        %v3310 = vpack.c.b16 %v3110, %v3102
        %v3311 = vpack.c.b16 %v3111, %v3103
        %v3312 = vpack.c.b16 %v3112, %v3104
        %v3313 = vpack.c.b16 %v3113, %v3105
        %v3314 = vpack.c.b16 %v3114, %v3106
        %v3315 = vpack.c.b16 %v3115, %v3107
        %v3316 = vpack.c.b16 %v3124, %v3116
        %v3317 = vpack.c.b16 %v3125, %v3117
        %v3318 = vpack.c.b16 %v3126, %v3118
        %v3319 = vpack.c.b16 %v3127, %v3119
        %v3320 = vpack.c.b16 %v3128, %v3120
        %v3321 = vpack.c.b16 %v3129, %v3121
        %v3322 = vpack.c.b16 %v3130, %v3122
        %v3323 = vpack.c.b16 %v3131, %v3123
        %v3324 = vpack.c.b16 %v3140, %v3132
        %v3325 = vpack.c.b16 %v3141, %v3133
        %v3326 = vpack.c.b16 %v3142, %v3134
        %v3327 = vpack.c.b16 %v3143, %v3135
        %v3328 = vpack.c.b16 %v3144, %v3136
        %v3329 = vpack.c.b16 %v3145, %v3137
        %v3330 = vpack.c.b16 %v3146, %v3138
        %v3331 = vpack.c.b16 %v3147, %v3139
        %v3332 = vpack.c.b16 %v3156, %v3148
        %v3333 = vpack.c.b16 %v3157, %v3149
        %v3334 = vpack.c.b16 %v3158, %v3150
        %v3335 = vpack.c.b16 %v3159, %v3151
        %v3336 = vpack.c.b16 %v3160, %v3152
        %v3337 = vpack.c.b16 %v3161, %v3153
        %v3338 = vpack.c.b16 %v3162, %v3154
        %v3339 = vpack.c.b16 %v3163, %v3155
        %v3340 = vpack.c.b16 %v3172, %v3164
        %v3341 = vpack.c.b16 %v3173, %v3165
        %v3342 = vpack.c.b16 %v3174, %v3166
        %v3343 = vpack.c.b16 %v3175, %v3167
        %v3344 = vpack.c.b16 %v3176, %v3168
        %v3345 = vpack.c.b16 %v3177, %v3169
        %v3346 = vpack.c.b16 %v3178, %v3170
        %v3347 = vpack.c.b16 %v3179, %v3171
        %v3348 = vpack.c.b16 %v3188, %v3180
        %v3349 = vpack.c.b16 %v3189, %v3181
        %v3350 = vpack.c.b16 %v3190, %v3182
        %v3351 = vpack.c.b16 %v3191, %v3183
        %v3352 = vpack.c.b16 %v3192, %v3184
        %v3353 = vpack.c.b16 %v3193, %v3185
        %v3354 = vpack.c.b16 %v3194, %v3186
        %v3355 = vpack.c.b16 %v3195, %v3187
        %v3356 = vpack.c.b16 %v3204, %v3196
        %v3357 = vpack.c.b16 %v3205, %v3197
        %v3358 = vpack.c.b16 %v3206, %v3198
        %v3359 = vpack.c.b16 %v3207, %v3199
        %v3360 = vpack.c.b16 %v3208, %v3200
        %v3361 = vpack.c.b16 %v3209, %v3201
        %v3362 = vpack.c.b16 %v3210, %v3202
        %v3363 = vpack.c.b16 %v3211, %v3203
        %v3364 = vpack.c.b16 %v3220, %v3212
        %v3365 = vpack.c.b16 %v3221, %v3213
        %v3366 = vpack.c.b16 %v3222, %v3214
        %v3367 = vpack.c.b16 %v3223, %v3215
        %v3368 = vpack.c.b16 %v3224, %v3216
        %v3369 = vpack.c.b16 %v3225, %v3217
        %v3370 = vpack.c.b16 %v3226, %v3218
        %v3371 = vpack.c.b16 %v3227, %v3219
        %v3372 = vpack.c.b16 %v3236, %v3228
        %v3373 = vpack.c.b16 %v3237, %v3229
        %v3374 = vpack.c.b16 %v3238, %v3230
        %v3375 = vpack.c.b16 %v3239, %v3231
        %v3376 = vpack.c.b16 %v3240, %v3232
        %v3377 = vpack.c.b16 %v3241, %v3233
        %v3378 = vpack.c.b16 %v3242, %v3234
        %v3379 = vpack.c.b16 %v3243, %v3235
        %v3380 = vpack.c.b16 %v3252, %v3244
        %v3381 = vpack.c.b16 %v3253, %v3245
        %v3382 = vpack.c.b16 %v3254, %v3246
        %v3383 = vpack.c.b16 %v3255, %v3247
        %v3384 = vpack.c.b16 %v3256, %v3248
        %v3385 = vpack.c.b16 %v3257, %v3249
        %v3386 = vpack.c.b16 %v3258, %v3250
        %v3387 = vpack.c.b16 %v3259, %v3251
        %3516 = vmatprep.subr.bf16.mxu0 %v3261
        %3517 = vmatpush1.bf16.msra.mxu0 %v3260
        %3518 = vmatprep.subr.bf16.mxu0 %v3269
        %3519 = vmatpush1.bf16.msra.mxu0 %v3268
        %3520 = vmatprep.subr.bf16.mxu0 %v3277
        %3521 = vmatpush1.bf16.msra.mxu0 %v3276
        %3522 = vmatprep.subr.bf16.mxu0 %v3285
        %3523 = vmatpush1.bf16.msra.mxu0 %v3284
        %3524 = vmatprep.subr.bf16.mxu0 %v3293
        %3525 = vmatpush1.bf16.msra.mxu0 %v3292
        %3526 = vmatprep.subr.bf16.mxu0 %v3301
        %3527 = vmatpush1.bf16.msra.mxu0 %v3300
        %3528 = vmatprep.subr.bf16.mxu0 %v3309
        %3529 = vmatpush1.bf16.msra.mxu0 %v3308
        %3530 = vmatprep.subr.bf16.mxu0 %v3317
        %3531 = vmatpush1.bf16.msra.mxu0 %v3316
        %3532 = vmatprep.subr.bf16.mxu0 %v3325
        %3533 = vmatpush1.bf16.msra.mxu0 %v3324
        %3534 = vmatprep.subr.bf16.mxu0 %v3333
        %3535 = vmatpush1.bf16.msra.mxu0 %v3332
        %3536 = vmatprep.subr.bf16.mxu0 %v3341
        %3537 = vmatpush1.bf16.msra.mxu0 %v3340
        %3538 = vmatprep.subr.bf16.mxu0 %v3349
        %3539 = vmatpush1.bf16.msra.mxu0 %v3348
        %3540 = vmatprep.subr.bf16.mxu0 %v3357
        %3541 = vmatpush1.bf16.msra.mxu0 %v3356
        %3542 = vmatprep.subr.bf16.mxu0 %v3365
        %3543 = vmatpush1.bf16.msra.mxu0 %v3364
        %3544 = vmatprep.subr.bf16.mxu0 %v3373
        %3545 = vmatpush1.bf16.msra.mxu0 %v3372
        %3546 = vmatprep.subr.bf16.mxu0 %v3381
        %3547 = vmatpush1.bf16.msra.mxu0 %v3380
        %3548 = vmatprep.mubr.bf16.mxu0 %v2705
        %3549 = vmatmul.mubr.bf16.gmra.mrb[0].mxu0 %v2704
        %v3550 = vpop.f32.mrb[0].mxu0
        %v3551 = vadd.f32 %v2839, %v3550
        %v3552 = vpop.f32.mrb[0].mxu0
        %v3553 = vadd.f32 %v2843, %v3552
        %v3554 = vpop.f32.mrb[0].mxu0
        %v3555 = vadd.f32 %v2839, %v3554
        %v3556 = vpop.f32.mrb[0].mxu0
        %v3557 = vadd.f32 %v2843, %v3556
        %3558 = vdwg.mxu0
        %3559 = vmatprep.subr.bf16.mxu0 %v3263
        %3560 = vmatpush1.bf16.msra.mxu0 %v3262
        %3561 = vmatprep.subr.bf16.mxu0 %v3271
        %3562 = vmatpush1.bf16.msra.mxu0 %v3270
        %3563 = vmatprep.subr.bf16.mxu0 %v3279
        %3564 = vmatpush1.bf16.msra.mxu0 %v3278
        %3565 = vmatprep.subr.bf16.mxu0 %v3287
        %3566 = vmatpush1.bf16.msra.mxu0 %v3286
        %3567 = vmatprep.subr.bf16.mxu0 %v3295
        %3568 = vmatpush1.bf16.msra.mxu0 %v3294
        %3569 = vmatprep.subr.bf16.mxu0 %v3303
        %3570 = vmatpush1.bf16.msra.mxu0 %v3302
        %3571 = vmatprep.subr.bf16.mxu0 %v3311
        %3572 = vmatpush1.bf16.msra.mxu0 %v3310
        %3573 = vmatprep.subr.bf16.mxu0 %v3319
        %3574 = vmatpush1.bf16.msra.mxu0 %v3318
        %3575 = vmatprep.subr.bf16.mxu0 %v3327
        %3576 = vmatpush1.bf16.msra.mxu0 %v3326
        %3577 = vmatprep.subr.bf16.mxu0 %v3335
        %3578 = vmatpush1.bf16.msra.mxu0 %v3334
        %3579 = vmatprep.subr.bf16.mxu0 %v3343
        %3580 = vmatpush1.bf16.msra.mxu0 %v3342
        %3581 = vmatprep.subr.bf16.mxu0 %v3351
        %3582 = vmatpush1.bf16.msra.mxu0 %v3350
        %3583 = vmatprep.subr.bf16.mxu0 %v3359
        %3584 = vmatpush1.bf16.msra.mxu0 %v3358
        %3585 = vmatprep.subr.bf16.mxu0 %v3367
        %3586 = vmatpush1.bf16.msra.mxu0 %v3366
        %3587 = vmatprep.subr.bf16.mxu0 %v3375
        %3588 = vmatpush1.bf16.msra.mxu0 %v3374
        %3589 = vmatprep.subr.bf16.mxu0 %v3383
        %3590 = vmatpush1.bf16.msra.mxu0 %v3382
        %3591 = vmatprep.mubr.bf16.mxu0 %v2705
        %3592 = vmatmul.mubr.bf16.gmra.mrb[0].mxu0 %v2704
        %v3593 = vpop.f32.mrb[0].mxu0
        %v3594 = vadd.f32 %v2847, %v3593
        %v3595 = vpop.f32.mrb[0].mxu0
        %v3596 = vadd.f32 %v2851, %v3595
        %v3597 = vpop.f32.mrb[0].mxu0
        %v3598 = vadd.f32 %v2847, %v3597
        %v3599 = vpop.f32.mrb[0].mxu0
        %v3600 = vadd.f32 %v2851, %v3599
        %3601 = vdwg.mxu0
        %3602 = vmatprep.subr.bf16.mxu0 %v3265
        %3603 = vmatpush1.bf16.msra.mxu0 %v3264
        %3604 = vmatprep.subr.bf16.mxu0 %v3273
        %3605 = vmatpush1.bf16.msra.mxu0 %v3272
        %3606 = vmatprep.subr.bf16.mxu0 %v3281
        %3607 = vmatpush1.bf16.msra.mxu0 %v3280
        %3608 = vmatprep.subr.bf16.mxu0 %v3289
        %3609 = vmatpush1.bf16.msra.mxu0 %v3288
        %3610 = vmatprep.subr.bf16.mxu0 %v3297
        %3611 = vmatpush1.bf16.msra.mxu0 %v3296
        %3612 = vmatprep.subr.bf16.mxu0 %v3305
        %3613 = vmatpush1.bf16.msra.mxu0 %v3304
        %3614 = vmatprep.subr.bf16.mxu0 %v3313
        %3615 = vmatpush1.bf16.msra.mxu0 %v3312
        %3616 = vmatprep.subr.bf16.mxu0 %v3321
        %3617 = vmatpush1.bf16.msra.mxu0 %v3320
        %3618 = vmatprep.subr.bf16.mxu0 %v3329
        %3619 = vmatpush1.bf16.msra.mxu0 %v3328
        %3620 = vmatprep.subr.bf16.mxu0 %v3337
        %3621 = vmatpush1.bf16.msra.mxu0 %v3336
        %3622 = vmatprep.subr.bf16.mxu0 %v3345
        %3623 = vmatpush1.bf16.msra.mxu0 %v3344
        %3624 = vmatprep.subr.bf16.mxu0 %v3353
        %3625 = vmatpush1.bf16.msra.mxu0 %v3352
        %3626 = vmatprep.subr.bf16.mxu0 %v3361
        %3627 = vmatpush1.bf16.msra.mxu0 %v3360
        %3628 = vmatprep.subr.bf16.mxu0 %v3369
        %3629 = vmatpush1.bf16.msra.mxu0 %v3368
        %3630 = vmatprep.subr.bf16.mxu0 %v3377
        %3631 = vmatpush1.bf16.msra.mxu0 %v3376
        %3632 = vmatprep.subr.bf16.mxu0 %v3385
        %3633 = vmatpush1.bf16.msra.mxu0 %v3384
        %3634 = vmatprep.mubr.bf16.mxu0 %v2705
        %3635 = vmatmul.mubr.bf16.gmra.mrb[0].mxu0 %v2704
        %v3636 = vpop.f32.mrb[0].mxu0
        %v3637 = vadd.f32 %v2855, %v3636
        %v3638 = vpop.f32.mrb[0].mxu0
        %v3639 = vadd.f32 %v2859, %v3638
        %v3640 = vpop.f32.mrb[0].mxu0
        %v3641 = vadd.f32 %v2855, %v3640
        %v3642 = vpop.f32.mrb[0].mxu0
        %v3643 = vadd.f32 %v2859, %v3642
        %3644 = vdwg.mxu0
        %3645 = vmatprep.subr.bf16.mxu0 %v3267
        %3646 = vmatpush1.bf16.msra.mxu0 %v3266
        %3647 = vmatprep.subr.bf16.mxu0 %v3275
        %3648 = vmatpush1.bf16.msra.mxu0 %v3274
        %3649 = vmatprep.subr.bf16.mxu0 %v3283
        %3650 = vmatpush1.bf16.msra.mxu0 %v3282
        %3651 = vmatprep.subr.bf16.mxu0 %v3291
        %3652 = vmatpush1.bf16.msra.mxu0 %v3290
        %3653 = vmatprep.subr.bf16.mxu0 %v3299
        %3654 = vmatpush1.bf16.msra.mxu0 %v3298
        %3655 = vmatprep.subr.bf16.mxu0 %v3307
        %3656 = vmatpush1.bf16.msra.mxu0 %v3306
        %3657 = vmatprep.subr.bf16.mxu0 %v3315
        %3658 = vmatpush1.bf16.msra.mxu0 %v3314
        %3659 = vmatprep.subr.bf16.mxu0 %v3323
        %3660 = vmatpush1.bf16.msra.mxu0 %v3322
        %3661 = vmatprep.subr.bf16.mxu0 %v3331
        %3662 = vmatpush1.bf16.msra.mxu0 %v3330
        %3663 = vmatprep.subr.bf16.mxu0 %v3339
        %3664 = vmatpush1.bf16.msra.mxu0 %v3338
        %3665 = vmatprep.subr.bf16.mxu0 %v3347
        %3666 = vmatpush1.bf16.msra.mxu0 %v3346
        %3667 = vmatprep.subr.bf16.mxu0 %v3355
        %3668 = vmatpush1.bf16.msra.mxu0 %v3354
        %3669 = vmatprep.subr.bf16.mxu0 %v3363
        %3670 = vmatpush1.bf16.msra.mxu0 %v3362
        %3671 = vmatprep.subr.bf16.mxu0 %v3371
        %3672 = vmatpush1.bf16.msra.mxu0 %v3370
        %3673 = vmatprep.subr.bf16.mxu0 %v3379
        %3674 = vmatpush1.bf16.msra.mxu0 %v3378
        %3675 = vmatprep.subr.bf16.mxu0 %v3387
        %3676 = vmatpush1.bf16.msra.mxu0 %v3386
        %3677 = vmatprep.mubr.bf16.mxu0 %v2705
        %3678 = vmatmul.mubr.bf16.gmra.mrb[0].mxu0 %v2704
        %v3679 = vpop.f32.mrb[0].mxu0
        %v3680 = vadd.f32 %v2863, %v3679
        %v3681 = vpop.f32.mrb[0].mxu0
        %v3682 = vadd.f32 %v2867, %v3681
        %v3683 = vpop.f32.mrb[0].mxu0
        %v3684 = vadd.f32 %v2863, %v3683
        %v3685 = vpop.f32.mrb[0].mxu0
        %v3686 = vadd.f32 %v2867, %v3685
        %3687 = vdwg.mxu0
        %v3688 = vmul.f32 %v3551, 0.5
        %v3689 = vmul.f32 %v3553, 0.5
        %v3690 = vmul.f32 %v3594, 0.5
        %v3691 = vmul.f32 %v3596, 0.5
        %v3692 = vmul.f32 %v3637, 0.5
        %v3693 = vmul.f32 %v3639, 0.5
        %v3694 = vmul.f32 %v3680, 0.5
        %v3695 = vmul.f32 %v3682, 0.5
        %v3696 = vmul.f32 %v3555, 0.5
        %v3697 = vmul.f32 %v3557, 0.5
        %v3698 = vmul.f32 %v3598, 0.5
        %v3699 = vmul.f32 %v3600, 0.5
        %v3700 = vmul.f32 %v3641, 0.5
        %v3701 = vmul.f32 %v3643, 0.5
        %v3702 = vmul.f32 %v3684, 0.5
        %v3703 = vmul.f32 %v3686, 0.5
        %v3704 = vmul.f32 %v3551, 0.70710677
        %v3705 = vmul.f32 %v3553, 0.70710677
        %v3706 = vmul.f32 %v3594, 0.70710677
        %v3707 = vmul.f32 %v3596, 0.70710677
        %v3708 = vmul.f32 %v3637, 0.70710677
        %v3709 = vmul.f32 %v3639, 0.70710677
        %v3710 = vmul.f32 %v3680, 0.70710677
        %v3711 = vmul.f32 %v3682, 0.70710677
        %v3712 = vmul.f32 %v3555, 0.70710677
        %v3713 = vmul.f32 %v3557, 0.70710677
        %v3714 = vmul.f32 %v3598, 0.70710677
        %v3715 = vmul.f32 %v3600, 0.70710677
        %v3716 = vmul.f32 %v3641, 0.70710677
        %v3717 = vmul.f32 %v3643, 0.70710677
        %v3718 = vmul.f32 %v3684, 0.70710677
        %v3719 = vmul.f32 %v3686, 0.70710677
        %v3720 = verf.f32.pop %v3704
        %v3721 = verf.f32.pop %v3705
        %v3722 = verf.f32.pop %v3706
        %v3723 = verf.f32.pop %v3707
        %v3724 = verf.f32.pop %v3708
        %v3725 = verf.f32.pop %v3709
        %v3726 = verf.f32.pop %v3710
        %v3727 = verf.f32.pop %v3711
        %v3728 = verf.f32.pop %v3712
        %v3729 = verf.f32.pop %v3713
        %v3730 = verf.f32.pop %v3714
        %v3731 = verf.f32.pop %v3715
        %v3732 = verf.f32.pop %v3716
        %v3733 = verf.f32.pop %v3717
        %v3734 = verf.f32.pop %v3718
        %v3735 = verf.f32.pop %v3719
        %v3736 = vadd.f32 %v3720, 1.0
        %v3737 = vadd.f32 %v3721, 1.0
        %v3738 = vadd.f32 %v3722, 1.0
        %v3739 = vadd.f32 %v3723, 1.0
        %v3740 = vadd.f32 %v3724, 1.0
        %v3741 = vadd.f32 %v3725, 1.0
        %v3742 = vadd.f32 %v3726, 1.0
        %v3743 = vadd.f32 %v3727, 1.0
        %v3744 = vadd.f32 %v3728, 1.0
        %v3745 = vadd.f32 %v3729, 1.0
        %v3746 = vadd.f32 %v3730, 1.0
        %v3747 = vadd.f32 %v3731, 1.0
        %v3748 = vadd.f32 %v3732, 1.0
        %v3749 = vadd.f32 %v3733, 1.0
        %v3750 = vadd.f32 %v3734, 1.0
        %v3751 = vadd.f32 %v3735, 1.0
        %v3752 = vmul.f32 %v3688, %v3736
        %v3753 = vmul.f32 %v3689, %v3737
        %v3754 = vmul.f32 %v3690, %v3738
        %v3755 = vmul.f32 %v3691, %v3739
        %v3756 = vmul.f32 %v3692, %v3740
        %v3757 = vmul.f32 %v3693, %v3741
        %v3758 = vmul.f32 %v3694, %v3742
        %v3759 = vmul.f32 %v3695, %v3743
        %v3760 = vmul.f32 %v3696, %v3744
        %v3761 = vmul.f32 %v3697, %v3745
        %v3762 = vmul.f32 %v3698, %v3746
        %v3763 = vmul.f32 %v3699, %v3747
        %v3764 = vmul.f32 %v3700, %v3748
        %v3765 = vmul.f32 %v3701, %v3749
        %v3766 = vmul.f32 %v3702, %v3750
        %v3767 = vmul.f32 %v3703, %v3751
        %v3768 = vpack.c.bf16 %v3760, %v3752
        %v3769 = vpack.c.bf16 %v3761, %v3753
        %v3770 = vpack.c.bf16 %v3762, %v3754
        %v3771 = vpack.c.bf16 %v3763, %v3755
        %v3772 = vpack.c.bf16 %v3764, %v3756
        %v3773 = vpack.c.bf16 %v3765, %v3757
        %v3774 = vpack.c.bf16 %v3766, %v3758
        %v3775 = vpack.c.bf16 %v3767, %v3759
        %v3776 = vld [vmem:[#allocation20] sm:$0xff]
        %v3777 = vld [vmem:[#allocation20 + $0x8] sm:$0xff]
        %v3778 = vld [vmem:[#allocation20 + $0x10] sm:$0xff]
        %v3779 = vld [vmem:[#allocation20 + $0x18] sm:$0xff]
        %v3780 = vld [vmem:[#allocation20 + $0x20] sm:$0xff]
        %v3781 = vld [vmem:[#allocation20 + $0x28] sm:$0xff]
        %v3782 = vld [vmem:[#allocation20 + $0x30] sm:$0xff]
        %v3783 = vld [vmem:[#allocation20 + $0x38] sm:$0xff]
        %v3784 = vld [vmem:[#allocation20 + $0x40] sm:$0xff]
        %v3785 = vld [vmem:[#allocation20 + $0x48] sm:$0xff]
        %v3786 = vld [vmem:[#allocation20 + $0x50] sm:$0xff]
        %v3787 = vld [vmem:[#allocation20 + $0x58] sm:$0xff]
        %v3788 = vld [vmem:[#allocation20 + $0x60] sm:$0xff]
        %v3789 = vld [vmem:[#allocation20 + $0x68] sm:$0xff]
        %v3790 = vld [vmem:[#allocation20 + $0x70] sm:$0xff]
        %v3791 = vld [vmem:[#allocation20 + $0x78] sm:$0xff]
        %v3792 = vld [vmem:[#allocation20 + $0x80] sm:$0xff]
        %v3793 = vld [vmem:[#allocation20 + $0x88] sm:$0xff]
        %v3794 = vld [vmem:[#allocation20 + $0x90] sm:$0xff]
        %v3795 = vld [vmem:[#allocation20 + $0x98] sm:$0xff]
        %v3796 = vld [vmem:[#allocation20 + $0xa0] sm:$0xff]
        %v3797 = vld [vmem:[#allocation20 + $0xa8] sm:$0xff]
        %v3798 = vld [vmem:[#allocation20 + $0xb0] sm:$0xff]
        %v3799 = vld [vmem:[#allocation20 + $0xb8] sm:$0xff]
        %v3800 = vld [vmem:[#allocation20 + $0xc0] sm:$0xff]
        %v3801 = vld [vmem:[#allocation20 + $0xc8] sm:$0xff]
        %v3802 = vld [vmem:[#allocation20 + $0xd0] sm:$0xff]
        %v3803 = vld [vmem:[#allocation20 + $0xd8] sm:$0xff]
        %v3804 = vld [vmem:[#allocation20 + $0xe0] sm:$0xff]
        %v3805 = vld [vmem:[#allocation20 + $0xe8] sm:$0xff]
        %v3806 = vld [vmem:[#allocation20 + $0xf0] sm:$0xff]
        %v3807 = vld [vmem:[#allocation20 + $0xf8] sm:$0xff]
        %v3808 = vld [vmem:[#allocation20 + $0x100] sm:$0xff]
        %v3809 = vld [vmem:[#allocation20 + $0x108] sm:$0xff]
        %v3810 = vld [vmem:[#allocation20 + $0x110] sm:$0xff]
        %v3811 = vld [vmem:[#allocation20 + $0x118] sm:$0xff]
        %v3812 = vld [vmem:[#allocation20 + $0x120] sm:$0xff]
        %v3813 = vld [vmem:[#allocation20 + $0x128] sm:$0xff]
        %v3814 = vld [vmem:[#allocation20 + $0x130] sm:$0xff]
        %v3815 = vld [vmem:[#allocation20 + $0x138] sm:$0xff]
        %v3816 = vld [vmem:[#allocation20 + $0x140] sm:$0xff]
        %v3817 = vld [vmem:[#allocation20 + $0x148] sm:$0xff]
        %v3818 = vld [vmem:[#allocation20 + $0x150] sm:$0xff]
        %v3819 = vld [vmem:[#allocation20 + $0x158] sm:$0xff]
        %v3820 = vld [vmem:[#allocation20 + $0x160] sm:$0xff]
        %v3821 = vld [vmem:[#allocation20 + $0x168] sm:$0xff]
        %v3822 = vld [vmem:[#allocation20 + $0x170] sm:$0xff]
        %v3823 = vld [vmem:[#allocation20 + $0x178] sm:$0xff]
        %v3824 = vld [vmem:[#allocation20 + $0x180] sm:$0xff]
        %v3825 = vld [vmem:[#allocation20 + $0x188] sm:$0xff]
        %v3826 = vld [vmem:[#allocation20 + $0x190] sm:$0xff]
        %v3827 = vld [vmem:[#allocation20 + $0x198] sm:$0xff]
        %v3828 = vld [vmem:[#allocation20 + $0x1a0] sm:$0xff]
        %v3829 = vld [vmem:[#allocation20 + $0x1a8] sm:$0xff]
        %v3830 = vld [vmem:[#allocation20 + $0x1b0] sm:$0xff]
        %v3831 = vld [vmem:[#allocation20 + $0x1b8] sm:$0xff]
        %v3832 = vld [vmem:[#allocation20 + $0x1c0] sm:$0xff]
        %v3833 = vld [vmem:[#allocation20 + $0x1c8] sm:$0xff]
        %v3834 = vld [vmem:[#allocation20 + $0x1d0] sm:$0xff]
        %v3835 = vld [vmem:[#allocation20 + $0x1d8] sm:$0xff]
        %v3836 = vld [vmem:[#allocation20 + $0x1e0] sm:$0xff]
        %v3837 = vld [vmem:[#allocation20 + $0x1e8] sm:$0xff]
        %v3838 = vld [vmem:[#allocation20 + $0x1f0] sm:$0xff]
        %v3839 = vld [vmem:[#allocation20 + $0x1f8] sm:$0xff]
        %v3840 = vld [vmem:[#allocation20 + $0x200] sm:$0xff]
        %v3841 = vld [vmem:[#allocation20 + $0x208] sm:$0xff]
        %v3842 = vld [vmem:[#allocation20 + $0x210] sm:$0xff]
        %v3843 = vld [vmem:[#allocation20 + $0x218] sm:$0xff]
        %v3844 = vld [vmem:[#allocation20 + $0x220] sm:$0xff]
        %v3845 = vld [vmem:[#allocation20 + $0x228] sm:$0xff]
        %v3846 = vld [vmem:[#allocation20 + $0x230] sm:$0xff]
        %v3847 = vld [vmem:[#allocation20 + $0x238] sm:$0xff]
        %v3848 = vld [vmem:[#allocation20 + $0x240] sm:$0xff]
        %v3849 = vld [vmem:[#allocation20 + $0x248] sm:$0xff]
        %v3850 = vld [vmem:[#allocation20 + $0x250] sm:$0xff]
        %v3851 = vld [vmem:[#allocation20 + $0x258] sm:$0xff]
        %v3852 = vld [vmem:[#allocation20 + $0x260] sm:$0xff]
        %v3853 = vld [vmem:[#allocation20 + $0x268] sm:$0xff]
        %v3854 = vld [vmem:[#allocation20 + $0x270] sm:$0xff]
        %v3855 = vld [vmem:[#allocation20 + $0x278] sm:$0xff]
        %v3856 = vld [vmem:[#allocation20 + $0x280] sm:$0xff]
        %v3857 = vld [vmem:[#allocation20 + $0x288] sm:$0xff]
        %v3858 = vld [vmem:[#allocation20 + $0x290] sm:$0xff]
        %v3859 = vld [vmem:[#allocation20 + $0x298] sm:$0xff]
        %v3860 = vld [vmem:[#allocation20 + $0x2a0] sm:$0xff]
        %v3861 = vld [vmem:[#allocation20 + $0x2a8] sm:$0xff]
        %v3862 = vld [vmem:[#allocation20 + $0x2b0] sm:$0xff]
        %v3863 = vld [vmem:[#allocation20 + $0x2b8] sm:$0xff]
        %v3864 = vld [vmem:[#allocation20 + $0x2c0] sm:$0xff]
        %v3865 = vld [vmem:[#allocation20 + $0x2c8] sm:$0xff]
        %v3866 = vld [vmem:[#allocation20 + $0x2d0] sm:$0xff]
        %v3867 = vld [vmem:[#allocation20 + $0x2d8] sm:$0xff]
        %v3868 = vld [vmem:[#allocation20 + $0x2e0] sm:$0xff]
        %v3869 = vld [vmem:[#allocation20 + $0x2e8] sm:$0xff]
        %v3870 = vld [vmem:[#allocation20 + $0x2f0] sm:$0xff]
        %v3871 = vld [vmem:[#allocation20 + $0x2f8] sm:$0xff]
        %v3872 = vld [vmem:[#allocation20 + $0x300] sm:$0xff]
        %v3873 = vld [vmem:[#allocation20 + $0x308] sm:$0xff]
        %v3874 = vld [vmem:[#allocation20 + $0x310] sm:$0xff]
        %v3875 = vld [vmem:[#allocation20 + $0x318] sm:$0xff]
        %v3876 = vld [vmem:[#allocation20 + $0x320] sm:$0xff]
        %v3877 = vld [vmem:[#allocation20 + $0x328] sm:$0xff]
        %v3878 = vld [vmem:[#allocation20 + $0x330] sm:$0xff]
        %v3879 = vld [vmem:[#allocation20 + $0x338] sm:$0xff]
        %v3880 = vld [vmem:[#allocation20 + $0x340] sm:$0xff]
        %v3881 = vld [vmem:[#allocation20 + $0x348] sm:$0xff]
        %v3882 = vld [vmem:[#allocation20 + $0x350] sm:$0xff]
        %v3883 = vld [vmem:[#allocation20 + $0x358] sm:$0xff]
        %v3884 = vld [vmem:[#allocation20 + $0x360] sm:$0xff]
        %v3885 = vld [vmem:[#allocation20 + $0x368] sm:$0xff]
        %v3886 = vld [vmem:[#allocation20 + $0x370] sm:$0xff]
        %v3887 = vld [vmem:[#allocation20 + $0x378] sm:$0xff]
        %v3888 = vld [vmem:[#allocation20 + $0x380] sm:$0xff]
        %v3889 = vld [vmem:[#allocation20 + $0x388] sm:$0xff]
        %v3890 = vld [vmem:[#allocation20 + $0x390] sm:$0xff]
        %v3891 = vld [vmem:[#allocation20 + $0x398] sm:$0xff]
        %v3892 = vld [vmem:[#allocation20 + $0x3a0] sm:$0xff]
        %v3893 = vld [vmem:[#allocation20 + $0x3a8] sm:$0xff]
        %v3894 = vld [vmem:[#allocation20 + $0x3b0] sm:$0xff]
        %v3895 = vld [vmem:[#allocation20 + $0x3b8] sm:$0xff]
        %v3896 = vld [vmem:[#allocation20 + $0x3c0] sm:$0xff]
        %v3897 = vld [vmem:[#allocation20 + $0x3c8] sm:$0xff]
        %v3898 = vld [vmem:[#allocation20 + $0x3d0] sm:$0xff]
        %v3899 = vld [vmem:[#allocation20 + $0x3d8] sm:$0xff]
        %v3900 = vld [vmem:[#allocation20 + $0x3e0] sm:$0xff]
        %v3901 = vld [vmem:[#allocation20 + $0x3e8] sm:$0xff]
        %v3902 = vld [vmem:[#allocation20 + $0x3f0] sm:$0xff]
        %v3903 = vld [vmem:[#allocation20 + $0x3f8] sm:$0xff]
        %v4032 = vunpack.c.l.b16 %v3776
        %v4033 = vunpack.c.h.b16 %v3776
        %v4034 = vunpack.c.l.b16 %v3777
        %v4035 = vunpack.c.h.b16 %v3777
        %v4036 = vunpack.c.l.b16 %v3778
        %v4037 = vunpack.c.h.b16 %v3778
        %v4038 = vunpack.c.l.b16 %v3779
        %v4039 = vunpack.c.h.b16 %v3779
        %v4040 = vunpack.c.l.b16 %v3780
        %v4041 = vunpack.c.h.b16 %v3780
        %v4042 = vunpack.c.l.b16 %v3781
        %v4043 = vunpack.c.h.b16 %v3781
        %v4044 = vunpack.c.l.b16 %v3782
        %v4045 = vunpack.c.h.b16 %v3782
        %v4046 = vunpack.c.l.b16 %v3783
        %v4047 = vunpack.c.h.b16 %v3783
        %v4048 = vunpack.c.l.b16 %v3784
        %v4049 = vunpack.c.h.b16 %v3784
        %v4050 = vunpack.c.l.b16 %v3785
        %v4051 = vunpack.c.h.b16 %v3785
        %v4052 = vunpack.c.l.b16 %v3786
        %v4053 = vunpack.c.h.b16 %v3786
        %v4054 = vunpack.c.l.b16 %v3787
        %v4055 = vunpack.c.h.b16 %v3787
        %v4056 = vunpack.c.l.b16 %v3788
        %v4057 = vunpack.c.h.b16 %v3788
        %v4058 = vunpack.c.l.b16 %v3789
        %v4059 = vunpack.c.h.b16 %v3789
        %v4060 = vunpack.c.l.b16 %v3790
        %v4061 = vunpack.c.h.b16 %v3790
        %v4062 = vunpack.c.l.b16 %v3791
        %v4063 = vunpack.c.h.b16 %v3791
        %v4064 = vunpack.c.l.b16 %v3792
        %v4065 = vunpack.c.h.b16 %v3792
        %v4066 = vunpack.c.l.b16 %v3793
        %v4067 = vunpack.c.h.b16 %v3793
        %v4068 = vunpack.c.l.b16 %v3794
        %v4069 = vunpack.c.h.b16 %v3794
        %v4070 = vunpack.c.l.b16 %v3795
        %v4071 = vunpack.c.h.b16 %v3795
        %v4072 = vunpack.c.l.b16 %v3796
        %v4073 = vunpack.c.h.b16 %v3796
        %v4074 = vunpack.c.l.b16 %v3797
        %v4075 = vunpack.c.h.b16 %v3797
        %v4076 = vunpack.c.l.b16 %v3798
        %v4077 = vunpack.c.h.b16 %v3798
        %v4078 = vunpack.c.l.b16 %v3799
        %v4079 = vunpack.c.h.b16 %v3799
        %v4080 = vunpack.c.l.b16 %v3800
        %v4081 = vunpack.c.h.b16 %v3800
        %v4082 = vunpack.c.l.b16 %v3801
        %v4083 = vunpack.c.h.b16 %v3801
        %v4084 = vunpack.c.l.b16 %v3802
        %v4085 = vunpack.c.h.b16 %v3802
        %v4086 = vunpack.c.l.b16 %v3803
        %v4087 = vunpack.c.h.b16 %v3803
        %v4088 = vunpack.c.l.b16 %v3804
        %v4089 = vunpack.c.h.b16 %v3804
        %v4090 = vunpack.c.l.b16 %v3805
        %v4091 = vunpack.c.h.b16 %v3805
        %v4092 = vunpack.c.l.b16 %v3806
        %v4093 = vunpack.c.h.b16 %v3806
        %v4094 = vunpack.c.l.b16 %v3807
        %v4095 = vunpack.c.h.b16 %v3807
        %v4096 = vunpack.c.l.b16 %v3808
        %v4097 = vunpack.c.h.b16 %v3808
        %v4098 = vunpack.c.l.b16 %v3809
        %v4099 = vunpack.c.h.b16 %v3809
        %v4100 = vunpack.c.l.b16 %v3810
        %v4101 = vunpack.c.h.b16 %v3810
        %v4102 = vunpack.c.l.b16 %v3811
        %v4103 = vunpack.c.h.b16 %v3811
        %v4104 = vunpack.c.l.b16 %v3812
        %v4105 = vunpack.c.h.b16 %v3812
        %v4106 = vunpack.c.l.b16 %v3813
        %v4107 = vunpack.c.h.b16 %v3813
        %v4108 = vunpack.c.l.b16 %v3814
        %v4109 = vunpack.c.h.b16 %v3814
        %v4110 = vunpack.c.l.b16 %v3815
        %v4111 = vunpack.c.h.b16 %v3815
        %v4112 = vunpack.c.l.b16 %v3816
        %v4113 = vunpack.c.h.b16 %v3816
        %v4114 = vunpack.c.l.b16 %v3817
        %v4115 = vunpack.c.h.b16 %v3817
        %v4116 = vunpack.c.l.b16 %v3818
        %v4117 = vunpack.c.h.b16 %v3818
        %v4118 = vunpack.c.l.b16 %v3819
        %v4119 = vunpack.c.h.b16 %v3819
        %v4120 = vunpack.c.l.b16 %v3820
        %v4121 = vunpack.c.h.b16 %v3820
        %v4122 = vunpack.c.l.b16 %v3821
        %v4123 = vunpack.c.h.b16 %v3821
        %v4124 = vunpack.c.l.b16 %v3822
        %v4125 = vunpack.c.h.b16 %v3822
        %v4126 = vunpack.c.l.b16 %v3823
        %v4127 = vunpack.c.h.b16 %v3823
        %v4128 = vunpack.c.l.b16 %v3824
        %v4129 = vunpack.c.h.b16 %v3824
        %v4130 = vunpack.c.l.b16 %v3825
        %v4131 = vunpack.c.h.b16 %v3825
        %v4132 = vunpack.c.l.b16 %v3826
        %v4133 = vunpack.c.h.b16 %v3826
        %v4134 = vunpack.c.l.b16 %v3827
        %v4135 = vunpack.c.h.b16 %v3827
        %v4136 = vunpack.c.l.b16 %v3828
        %v4137 = vunpack.c.h.b16 %v3828
        %v4138 = vunpack.c.l.b16 %v3829
        %v4139 = vunpack.c.h.b16 %v3829
        %v4140 = vunpack.c.l.b16 %v3830
        %v4141 = vunpack.c.h.b16 %v3830
        %v4142 = vunpack.c.l.b16 %v3831
        %v4143 = vunpack.c.h.b16 %v3831
        %v4144 = vunpack.c.l.b16 %v3832
        %v4145 = vunpack.c.h.b16 %v3832
        %v4146 = vunpack.c.l.b16 %v3833
        %v4147 = vunpack.c.h.b16 %v3833
        %v4148 = vunpack.c.l.b16 %v3834
        %v4149 = vunpack.c.h.b16 %v3834
        %v4150 = vunpack.c.l.b16 %v3835
        %v4151 = vunpack.c.h.b16 %v3835
        %v4152 = vunpack.c.l.b16 %v3836
        %v4153 = vunpack.c.h.b16 %v3836
        %v4154 = vunpack.c.l.b16 %v3837
        %v4155 = vunpack.c.h.b16 %v3837
        %v4156 = vunpack.c.l.b16 %v3838
        %v4157 = vunpack.c.h.b16 %v3838
        %v4158 = vunpack.c.l.b16 %v3839
        %v4159 = vunpack.c.h.b16 %v3839
        %v4160 = vunpack.c.l.b16 %v3840
        %v4161 = vunpack.c.h.b16 %v3840
        %v4162 = vunpack.c.l.b16 %v3841
        %v4163 = vunpack.c.h.b16 %v3841
        %v4164 = vunpack.c.l.b16 %v3842
        %v4165 = vunpack.c.h.b16 %v3842
        %v4166 = vunpack.c.l.b16 %v3843
        %v4167 = vunpack.c.h.b16 %v3843
        %v4168 = vunpack.c.l.b16 %v3844
        %v4169 = vunpack.c.h.b16 %v3844
        %v4170 = vunpack.c.l.b16 %v3845
        %v4171 = vunpack.c.h.b16 %v3845
        %v4172 = vunpack.c.l.b16 %v3846
        %v4173 = vunpack.c.h.b16 %v3846
        %v4174 = vunpack.c.l.b16 %v3847
        %v4175 = vunpack.c.h.b16 %v3847
        %v4176 = vunpack.c.l.b16 %v3848
        %v4177 = vunpack.c.h.b16 %v3848
        %v4178 = vunpack.c.l.b16 %v3849
        %v4179 = vunpack.c.h.b16 %v3849
        %v4180 = vunpack.c.l.b16 %v3850
        %v4181 = vunpack.c.h.b16 %v3850
        %v4182 = vunpack.c.l.b16 %v3851
        %v4183 = vunpack.c.h.b16 %v3851
        %v4184 = vunpack.c.l.b16 %v3852
        %v4185 = vunpack.c.h.b16 %v3852
        %v4186 = vunpack.c.l.b16 %v3853
        %v4187 = vunpack.c.h.b16 %v3853
        %v4188 = vunpack.c.l.b16 %v3854
        %v4189 = vunpack.c.h.b16 %v3854
        %v4190 = vunpack.c.l.b16 %v3855
        %v4191 = vunpack.c.h.b16 %v3855
        %v4192 = vunpack.c.l.b16 %v3856
        %v4193 = vunpack.c.h.b16 %v3856
        %v4194 = vunpack.c.l.b16 %v3857
        %v4195 = vunpack.c.h.b16 %v3857
        %v4196 = vunpack.c.l.b16 %v3858
        %v4197 = vunpack.c.h.b16 %v3858
        %v4198 = vunpack.c.l.b16 %v3859
        %v4199 = vunpack.c.h.b16 %v3859
        %v4200 = vunpack.c.l.b16 %v3860
        %v4201 = vunpack.c.h.b16 %v3860
        %v4202 = vunpack.c.l.b16 %v3861
        %v4203 = vunpack.c.h.b16 %v3861
        %v4204 = vunpack.c.l.b16 %v3862
        %v4205 = vunpack.c.h.b16 %v3862
        %v4206 = vunpack.c.l.b16 %v3863
        %v4207 = vunpack.c.h.b16 %v3863
        %v4208 = vunpack.c.l.b16 %v3864
        %v4209 = vunpack.c.h.b16 %v3864
        %v4210 = vunpack.c.l.b16 %v3865
        %v4211 = vunpack.c.h.b16 %v3865
        %v4212 = vunpack.c.l.b16 %v3866
        %v4213 = vunpack.c.h.b16 %v3866
        %v4214 = vunpack.c.l.b16 %v3867
        %v4215 = vunpack.c.h.b16 %v3867
        %v4216 = vunpack.c.l.b16 %v3868
        %v4217 = vunpack.c.h.b16 %v3868
        %v4218 = vunpack.c.l.b16 %v3869
        %v4219 = vunpack.c.h.b16 %v3869
        %v4220 = vunpack.c.l.b16 %v3870
        %v4221 = vunpack.c.h.b16 %v3870
        %v4222 = vunpack.c.l.b16 %v3871
        %v4223 = vunpack.c.h.b16 %v3871
        %v4224 = vunpack.c.l.b16 %v3872
        %v4225 = vunpack.c.h.b16 %v3872
        %v4226 = vunpack.c.l.b16 %v3873
        %v4227 = vunpack.c.h.b16 %v3873
        %v4228 = vunpack.c.l.b16 %v3874
        %v4229 = vunpack.c.h.b16 %v3874
        %v4230 = vunpack.c.l.b16 %v3875
        %v4231 = vunpack.c.h.b16 %v3875
        %v4232 = vunpack.c.l.b16 %v3876
        %v4233 = vunpack.c.h.b16 %v3876
        %v4234 = vunpack.c.l.b16 %v3877
        %v4235 = vunpack.c.h.b16 %v3877
        %v4236 = vunpack.c.l.b16 %v3878
        %v4237 = vunpack.c.h.b16 %v3878
        %v4238 = vunpack.c.l.b16 %v3879
        %v4239 = vunpack.c.h.b16 %v3879
        %v4240 = vunpack.c.l.b16 %v3880
        %v4241 = vunpack.c.h.b16 %v3880
        %v4242 = vunpack.c.l.b16 %v3881
        %v4243 = vunpack.c.h.b16 %v3881
        %v4244 = vunpack.c.l.b16 %v3882
        %v4245 = vunpack.c.h.b16 %v3882
        %v4246 = vunpack.c.l.b16 %v3883
        %v4247 = vunpack.c.h.b16 %v3883
        %v4248 = vunpack.c.l.b16 %v3884
        %v4249 = vunpack.c.h.b16 %v3884
        %v4250 = vunpack.c.l.b16 %v3885
        %v4251 = vunpack.c.h.b16 %v3885
        %v4252 = vunpack.c.l.b16 %v3886
        %v4253 = vunpack.c.h.b16 %v3886
        %v4254 = vunpack.c.l.b16 %v3887
        %v4255 = vunpack.c.h.b16 %v3887
        %v4256 = vunpack.c.l.b16 %v3888
        %v4257 = vunpack.c.h.b16 %v3888
        %v4258 = vunpack.c.l.b16 %v3889
        %v4259 = vunpack.c.h.b16 %v3889
        %v4260 = vunpack.c.l.b16 %v3890
        %v4261 = vunpack.c.h.b16 %v3890
        %v4262 = vunpack.c.l.b16 %v3891
        %v4263 = vunpack.c.h.b16 %v3891
        %v4264 = vunpack.c.l.b16 %v3892
        %v4265 = vunpack.c.h.b16 %v3892
        %v4266 = vunpack.c.l.b16 %v3893
        %v4267 = vunpack.c.h.b16 %v3893
        %v4268 = vunpack.c.l.b16 %v3894
        %v4269 = vunpack.c.h.b16 %v3894
        %v4270 = vunpack.c.l.b16 %v3895
        %v4271 = vunpack.c.h.b16 %v3895
        %v4272 = vunpack.c.l.b16 %v3896
        %v4273 = vunpack.c.h.b16 %v3896
        %v4274 = vunpack.c.l.b16 %v3897
        %v4275 = vunpack.c.h.b16 %v3897
        %v4276 = vunpack.c.l.b16 %v3898
        %v4277 = vunpack.c.h.b16 %v3898
        %v4278 = vunpack.c.l.b16 %v3899
        %v4279 = vunpack.c.h.b16 %v3899
        %v4280 = vunpack.c.l.b16 %v3900
        %v4281 = vunpack.c.h.b16 %v3900
        %v4282 = vunpack.c.l.b16 %v3901
        %v4283 = vunpack.c.h.b16 %v3901
        %v4284 = vunpack.c.l.b16 %v3902
        %v4285 = vunpack.c.h.b16 %v3902
        %v4286 = vunpack.c.l.b16 %v3903
        %v4287 = vunpack.c.h.b16 %v3903
        %v4288 = vpack.c.b16 %v4034, %v4032
        %v4289 = vpack.c.b16 %v4035, %v4033
        %v4290 = vpack.c.b16 %v4038, %v4036
        %v4291 = vpack.c.b16 %v4039, %v4037
        %v4292 = vpack.c.b16 %v4042, %v4040
        %v4293 = vpack.c.b16 %v4043, %v4041
        %v4294 = vpack.c.b16 %v4046, %v4044
        %v4295 = vpack.c.b16 %v4047, %v4045
        %v4296 = vpack.c.b16 %v4050, %v4048
        %v4297 = vpack.c.b16 %v4051, %v4049
        %v4298 = vpack.c.b16 %v4054, %v4052
        %v4299 = vpack.c.b16 %v4055, %v4053
        %v4300 = vpack.c.b16 %v4058, %v4056
        %v4301 = vpack.c.b16 %v4059, %v4057
        %v4302 = vpack.c.b16 %v4062, %v4060
        %v4303 = vpack.c.b16 %v4063, %v4061
        %v4304 = vpack.c.b16 %v4066, %v4064
        %v4305 = vpack.c.b16 %v4067, %v4065
        %v4306 = vpack.c.b16 %v4070, %v4068
        %v4307 = vpack.c.b16 %v4071, %v4069
        %v4308 = vpack.c.b16 %v4074, %v4072
        %v4309 = vpack.c.b16 %v4075, %v4073
        %v4310 = vpack.c.b16 %v4078, %v4076
        %v4311 = vpack.c.b16 %v4079, %v4077
        %v4312 = vpack.c.b16 %v4082, %v4080
        %v4313 = vpack.c.b16 %v4083, %v4081
        %v4314 = vpack.c.b16 %v4086, %v4084
        %v4315 = vpack.c.b16 %v4087, %v4085
        %v4316 = vpack.c.b16 %v4090, %v4088
        %v4317 = vpack.c.b16 %v4091, %v4089
        %v4318 = vpack.c.b16 %v4094, %v4092
        %v4319 = vpack.c.b16 %v4095, %v4093
        %v4320 = vpack.c.b16 %v4098, %v4096
        %v4321 = vpack.c.b16 %v4099, %v4097
        %v4322 = vpack.c.b16 %v4102, %v4100
        %v4323 = vpack.c.b16 %v4103, %v4101
        %v4324 = vpack.c.b16 %v4106, %v4104
        %v4325 = vpack.c.b16 %v4107, %v4105
        %v4326 = vpack.c.b16 %v4110, %v4108
        %v4327 = vpack.c.b16 %v4111, %v4109
        %v4328 = vpack.c.b16 %v4114, %v4112
        %v4329 = vpack.c.b16 %v4115, %v4113
        %v4330 = vpack.c.b16 %v4118, %v4116
        %v4331 = vpack.c.b16 %v4119, %v4117
        %v4332 = vpack.c.b16 %v4122, %v4120
        %v4333 = vpack.c.b16 %v4123, %v4121
        %v4334 = vpack.c.b16 %v4126, %v4124
        %v4335 = vpack.c.b16 %v4127, %v4125
        %v4336 = vpack.c.b16 %v4130, %v4128
        %v4337 = vpack.c.b16 %v4131, %v4129
        %v4338 = vpack.c.b16 %v4134, %v4132
        %v4339 = vpack.c.b16 %v4135, %v4133
        %v4340 = vpack.c.b16 %v4138, %v4136
        %v4341 = vpack.c.b16 %v4139, %v4137
        %v4342 = vpack.c.b16 %v4142, %v4140
        %v4343 = vpack.c.b16 %v4143, %v4141
        %v4344 = vpack.c.b16 %v4146, %v4144
        %v4345 = vpack.c.b16 %v4147, %v4145
        %v4346 = vpack.c.b16 %v4150, %v4148
        %v4347 = vpack.c.b16 %v4151, %v4149
        %v4348 = vpack.c.b16 %v4154, %v4152
        %v4349 = vpack.c.b16 %v4155, %v4153
        %v4350 = vpack.c.b16 %v4158, %v4156
        %v4351 = vpack.c.b16 %v4159, %v4157
        %v4352 = vpack.c.b16 %v4162, %v4160
        %v4353 = vpack.c.b16 %v4163, %v4161
        %v4354 = vpack.c.b16 %v4166, %v4164
        %v4355 = vpack.c.b16 %v4167, %v4165
        %v4356 = vpack.c.b16 %v4170, %v4168
        %v4357 = vpack.c.b16 %v4171, %v4169
        %v4358 = vpack.c.b16 %v4174, %v4172
        %v4359 = vpack.c.b16 %v4175, %v4173
        %v4360 = vpack.c.b16 %v4178, %v4176
        %v4361 = vpack.c.b16 %v4179, %v4177
        %v4362 = vpack.c.b16 %v4182, %v4180
        %v4363 = vpack.c.b16 %v4183, %v4181
        %v4364 = vpack.c.b16 %v4186, %v4184
        %v4365 = vpack.c.b16 %v4187, %v4185
        %v4366 = vpack.c.b16 %v4190, %v4188
        %v4367 = vpack.c.b16 %v4191, %v4189
        %v4368 = vpack.c.b16 %v4194, %v4192
        %v4369 = vpack.c.b16 %v4195, %v4193
        %v4370 = vpack.c.b16 %v4198, %v4196
        %v4371 = vpack.c.b16 %v4199, %v4197
        %v4372 = vpack.c.b16 %v4202, %v4200
        %v4373 = vpack.c.b16 %v4203, %v4201
        %v4374 = vpack.c.b16 %v4206, %v4204
        %v4375 = vpack.c.b16 %v4207, %v4205
        %v4376 = vpack.c.b16 %v4210, %v4208
        %v4377 = vpack.c.b16 %v4211, %v4209
        %v4378 = vpack.c.b16 %v4214, %v4212
        %v4379 = vpack.c.b16 %v4215, %v4213
        %v4380 = vpack.c.b16 %v4218, %v4216
        %v4381 = vpack.c.b16 %v4219, %v4217
        %v4382 = vpack.c.b16 %v4222, %v4220
        %v4383 = vpack.c.b16 %v4223, %v4221
        %v4384 = vpack.c.b16 %v4226, %v4224
        %v4385 = vpack.c.b16 %v4227, %v4225
        %v4386 = vpack.c.b16 %v4230, %v4228
        %v4387 = vpack.c.b16 %v4231, %v4229
        %v4388 = vpack.c.b16 %v4234, %v4232
        %v4389 = vpack.c.b16 %v4235, %v4233
        %v4390 = vpack.c.b16 %v4238, %v4236
        %v4391 = vpack.c.b16 %v4239, %v4237
        %v4392 = vpack.c.b16 %v4242, %v4240
        %v4393 = vpack.c.b16 %v4243, %v4241
        %v4394 = vpack.c.b16 %v4246, %v4244
        %v4395 = vpack.c.b16 %v4247, %v4245
        %v4396 = vpack.c.b16 %v4250, %v4248
        %v4397 = vpack.c.b16 %v4251, %v4249
        %v4398 = vpack.c.b16 %v4254, %v4252
        %v4399 = vpack.c.b16 %v4255, %v4253
        %v4400 = vpack.c.b16 %v4258, %v4256
        %v4401 = vpack.c.b16 %v4259, %v4257
        %v4402 = vpack.c.b16 %v4262, %v4260
        %v4403 = vpack.c.b16 %v4263, %v4261
        %v4404 = vpack.c.b16 %v4266, %v4264
        %v4405 = vpack.c.b16 %v4267, %v4265
        %v4406 = vpack.c.b16 %v4270, %v4268
        %v4407 = vpack.c.b16 %v4271, %v4269
        %v4408 = vpack.c.b16 %v4274, %v4272
        %v4409 = vpack.c.b16 %v4275, %v4273
        %v4410 = vpack.c.b16 %v4278, %v4276
        %v4411 = vpack.c.b16 %v4279, %v4277
        %v4412 = vpack.c.b16 %v4282, %v4280
        %v4413 = vpack.c.b16 %v4283, %v4281
        %v4414 = vpack.c.b16 %v4286, %v4284
        %v4415 = vpack.c.b16 %v4287, %v4285
        %4544 = vmatprep.subr.bf16.mxu0 %v4289
        %4545 = vmatpush1.bf16.msra.mxu0 %v4288
        %4546 = vmatprep.subr.bf16.mxu0 %v4291
        %4547 = vmatpush1.bf16.msra.mxu0 %v4290
        %4548 = vmatprep.subr.bf16.mxu0 %v4293
        %4549 = vmatpush1.bf16.msra.mxu0 %v4292
        %4550 = vmatprep.subr.bf16.mxu0 %v4295
        %4551 = vmatpush1.bf16.msra.mxu0 %v4294
        %4552 = vmatprep.subr.bf16.mxu0 %v4297
        %4553 = vmatpush1.bf16.msra.mxu0 %v4296
        %4554 = vmatprep.subr.bf16.mxu0 %v4299
        %4555 = vmatpush1.bf16.msra.mxu0 %v4298
        %4556 = vmatprep.subr.bf16.mxu0 %v4301
        %4557 = vmatpush1.bf16.msra.mxu0 %v4300
        %4558 = vmatprep.subr.bf16.mxu0 %v4303
        %4559 = vmatpush1.bf16.msra.mxu0 %v4302
        %4560 = vmatprep.subr.bf16.mxu0 %v4305
        %4561 = vmatpush1.bf16.msra.mxu0 %v4304
        %4562 = vmatprep.subr.bf16.mxu0 %v4307
        %4563 = vmatpush1.bf16.msra.mxu0 %v4306
        %4564 = vmatprep.subr.bf16.mxu0 %v4309
        %4565 = vmatpush1.bf16.msra.mxu0 %v4308
        %4566 = vmatprep.subr.bf16.mxu0 %v4311
        %4567 = vmatpush1.bf16.msra.mxu0 %v4310
        %4568 = vmatprep.subr.bf16.mxu0 %v4313
        %4569 = vmatpush1.bf16.msra.mxu0 %v4312
        %4570 = vmatprep.subr.bf16.mxu0 %v4315
        %4571 = vmatpush1.bf16.msra.mxu0 %v4314
        %4572 = vmatprep.subr.bf16.mxu0 %v4317
        %4573 = vmatpush1.bf16.msra.mxu0 %v4316
        %4574 = vmatprep.subr.bf16.mxu0 %v4319
        %4575 = vmatpush1.bf16.msra.mxu0 %v4318
        %4576 = vmatprep.mubr.bf16.mxu0 %v3769
        %4577 = vmatmul.mubr.bf16.gmra.mrb[0].mxu0 %v3768
        %v4578 = vpop.f32.mrb[0].mxu0
        %v4579 = vadd.f32 0.0, %v4578
        %v4580 = vpop.f32.mrb[0].mxu0
        %v4581 = vadd.f32 0.0, %v4580
        %v4582 = vpop.f32.mrb[0].mxu0
        %v4583 = vadd.f32 0.0, %v4582
        %v4584 = vpop.f32.mrb[0].mxu0
        %v4585 = vadd.f32 0.0, %v4584
        %4586 = vdwg.mxu0
        %4587 = vmatprep.subr.bf16.mxu0 %v4321
        %4588 = vmatpush1.bf16.msra.mxu0 %v4320
        %4589 = vmatprep.subr.bf16.mxu0 %v4323
        %4590 = vmatpush1.bf16.msra.mxu0 %v4322
        %4591 = vmatprep.subr.bf16.mxu0 %v4325
        %4592 = vmatpush1.bf16.msra.mxu0 %v4324
        %4593 = vmatprep.subr.bf16.mxu0 %v4327
        %4594 = vmatpush1.bf16.msra.mxu0 %v4326
        %4595 = vmatprep.subr.bf16.mxu0 %v4329
        %4596 = vmatpush1.bf16.msra.mxu0 %v4328
        %4597 = vmatprep.subr.bf16.mxu0 %v4331
        %4598 = vmatpush1.bf16.msra.mxu0 %v4330
        %4599 = vmatprep.subr.bf16.mxu0 %v4333
        %4600 = vmatpush1.bf16.msra.mxu0 %v4332
        %4601 = vmatprep.subr.bf16.mxu0 %v4335
        %4602 = vmatpush1.bf16.msra.mxu0 %v4334
        %4603 = vmatprep.subr.bf16.mxu0 %v4337
        %4604 = vmatpush1.bf16.msra.mxu0 %v4336
        %4605 = vmatprep.subr.bf16.mxu0 %v4339
        %4606 = vmatpush1.bf16.msra.mxu0 %v4338
        %4607 = vmatprep.subr.bf16.mxu0 %v4341
        %4608 = vmatpush1.bf16.msra.mxu0 %v4340
        %4609 = vmatprep.subr.bf16.mxu0 %v4343
        %4610 = vmatpush1.bf16.msra.mxu0 %v4342
        %4611 = vmatprep.subr.bf16.mxu0 %v4345
        %4612 = vmatpush1.bf16.msra.mxu0 %v4344
        %4613 = vmatprep.subr.bf16.mxu0 %v4347
        %4614 = vmatpush1.bf16.msra.mxu0 %v4346
        %4615 = vmatprep.subr.bf16.mxu0 %v4349
        %4616 = vmatpush1.bf16.msra.mxu0 %v4348
        %4617 = vmatprep.subr.bf16.mxu0 %v4351
        %4618 = vmatpush1.bf16.msra.mxu0 %v4350
        %4619 = vmatprep.mubr.bf16.mxu0 %v3771
        %4620 = vmatmul.mubr.bf16.gmra.mrb[0].mxu0 %v3770
        %v4621 = vpop.f32.mrb[0].mxu0
        %v4622 = vadd.f32 %v4579, %v4621
        %v4623 = vpop.f32.mrb[0].mxu0
        %v4624 = vadd.f32 %v4581, %v4623
        %v4625 = vpop.f32.mrb[0].mxu0
        %v4626 = vadd.f32 %v4583, %v4625
        %v4627 = vpop.f32.mrb[0].mxu0
        %v4628 = vadd.f32 %v4585, %v4627
        %4629 = vdwg.mxu0
        %4630 = vmatprep.subr.bf16.mxu0 %v4353
        %4631 = vmatpush1.bf16.msra.mxu0 %v4352
        %4632 = vmatprep.subr.bf16.mxu0 %v4355
        %4633 = vmatpush1.bf16.msra.mxu0 %v4354
        %4634 = vmatprep.subr.bf16.mxu0 %v4357
        %4635 = vmatpush1.bf16.msra.mxu0 %v4356
        %4636 = vmatprep.subr.bf16.mxu0 %v4359
        %4637 = vmatpush1.bf16.msra.mxu0 %v4358
        %4638 = vmatprep.subr.bf16.mxu0 %v4361
        %4639 = vmatpush1.bf16.msra.mxu0 %v4360
        %4640 = vmatprep.subr.bf16.mxu0 %v4363
        %4641 = vmatpush1.bf16.msra.mxu0 %v4362
        %4642 = vmatprep.subr.bf16.mxu0 %v4365
        %4643 = vmatpush1.bf16.msra.mxu0 %v4364
        %4644 = vmatprep.subr.bf16.mxu0 %v4367
        %4645 = vmatpush1.bf16.msra.mxu0 %v4366
        %4646 = vmatprep.subr.bf16.mxu0 %v4369
        %4647 = vmatpush1.bf16.msra.mxu0 %v4368
        %4648 = vmatprep.subr.bf16.mxu0 %v4371
        %4649 = vmatpush1.bf16.msra.mxu0 %v4370
        %4650 = vmatprep.subr.bf16.mxu0 %v4373
        %4651 = vmatpush1.bf16.msra.mxu0 %v4372
        %4652 = vmatprep.subr.bf16.mxu0 %v4375
        %4653 = vmatpush1.bf16.msra.mxu0 %v4374
        %4654 = vmatprep.subr.bf16.mxu0 %v4377
        %4655 = vmatpush1.bf16.msra.mxu0 %v4376
        %4656 = vmatprep.subr.bf16.mxu0 %v4379
        %4657 = vmatpush1.bf16.msra.mxu0 %v4378
        %4658 = vmatprep.subr.bf16.mxu0 %v4381
        %4659 = vmatpush1.bf16.msra.mxu0 %v4380
        %4660 = vmatprep.subr.bf16.mxu0 %v4383
        %4661 = vmatpush1.bf16.msra.mxu0 %v4382
        %4662 = vmatprep.mubr.bf16.mxu0 %v3773
        %4663 = vmatmul.mubr.bf16.gmra.mrb[0].mxu0 %v3772
        %v4664 = vpop.f32.mrb[0].mxu0
        %v4665 = vadd.f32 %v4622, %v4664
        %v4666 = vpop.f32.mrb[0].mxu0
        %v4667 = vadd.f32 %v4624, %v4666
        %v4668 = vpop.f32.mrb[0].mxu0
        %v4669 = vadd.f32 %v4626, %v4668
        %v4670 = vpop.f32.mrb[0].mxu0
        %v4671 = vadd.f32 %v4628, %v4670
        %4672 = vdwg.mxu0
        %4673 = vmatprep.subr.bf16.mxu0 %v4385
        %4674 = vmatpush1.bf16.msra.mxu0 %v4384
        %4675 = vmatprep.subr.bf16.mxu0 %v4387
        %4676 = vmatpush1.bf16.msra.mxu0 %v4386
        %4677 = vmatprep.subr.bf16.mxu0 %v4389
        %4678 = vmatpush1.bf16.msra.mxu0 %v4388
        %4679 = vmatprep.subr.bf16.mxu0 %v4391
        %4680 = vmatpush1.bf16.msra.mxu0 %v4390
        %4681 = vmatprep.subr.bf16.mxu0 %v4393
        %4682 = vmatpush1.bf16.msra.mxu0 %v4392
        %4683 = vmatprep.subr.bf16.mxu0 %v4395
        %4684 = vmatpush1.bf16.msra.mxu0 %v4394
        %4685 = vmatprep.subr.bf16.mxu0 %v4397
        %4686 = vmatpush1.bf16.msra.mxu0 %v4396
        %4687 = vmatprep.subr.bf16.mxu0 %v4399
        %4688 = vmatpush1.bf16.msra.mxu0 %v4398
        %4689 = vmatprep.subr.bf16.mxu0 %v4401
        %4690 = vmatpush1.bf16.msra.mxu0 %v4400
        %4691 = vmatprep.subr.bf16.mxu0 %v4403
        %4692 = vmatpush1.bf16.msra.mxu0 %v4402
        %4693 = vmatprep.subr.bf16.mxu0 %v4405
        %4694 = vmatpush1.bf16.msra.mxu0 %v4404
        %4695 = vmatprep.subr.bf16.mxu0 %v4407
        %4696 = vmatpush1.bf16.msra.mxu0 %v4406
        %4697 = vmatprep.subr.bf16.mxu0 %v4409
        %4698 = vmatpush1.bf16.msra.mxu0 %v4408
        %4699 = vmatprep.subr.bf16.mxu0 %v4411
        %4700 = vmatpush1.bf16.msra.mxu0 %v4410
        %4701 = vmatprep.subr.bf16.mxu0 %v4413
        %4702 = vmatpush1.bf16.msra.mxu0 %v4412
        %4703 = vmatprep.subr.bf16.mxu0 %v4415
        %4704 = vmatpush1.bf16.msra.mxu0 %v4414
        %4705 = vmatprep.mubr.bf16.mxu0 %v3775
        %4706 = vmatmul.mubr.bf16.gmra.mrb[0].mxu0 %v3774
        %v4707 = vpop.f32.mrb[0].mxu0
        %v4708 = vadd.f32 %v4665, %v4707
        %v4709 = vpop.f32.mrb[0].mxu0
        %v4710 = vadd.f32 %v4667, %v4709
        %v4711 = vpop.f32.mrb[0].mxu0
        %v4712 = vadd.f32 %v4669, %v4711
        %v4713 = vpop.f32.mrb[0].mxu0
        %v4714 = vadd.f32 %v4671, %v4713
        %4715 = vdwg.mxu0
        %v4716 = vadd.f32 %v2700, %v4708
        %v4717 = vadd.f32 %v2701, %v4710
        %v4718 = vadd.f32 %v2702, %v4712
        %v4719 = vadd.f32 %v2703, %v4714
        %v4720 = vld [vmem:[%s19] sm:$0x3]
        %v4722 = vlaneseq
        %v4723 = vshrl.u32 %v4722, 7
        %v4724 = vsub.s32 0, %v4723
        %v4725 = vrot.slane %v4720, %v4724
        %v4726 = vlaneseq
        %v4727 = vshrl.u32 %v4726, 7
        %v4728 = vsub.s32 1, %v4727
        %v4729 = vrot.slane %v4720, %v4728
        %v4732 = vadd.f32 %v4716, %v4725
        %v4733 = vadd.f32 %v4717, %v4729
        %v4734 = vadd.f32 %v4718, %v4725
        %v4735 = vadd.f32 %v4719, %v4729
        %v4736 = vld [vmem:[%s20] sm:$0x3]
        %v4737 = vld [vmem:[%s21] sm:$0x3]
        %v4738 = vadd.f32 %v4732, %v4733
        %4739 = vadd.xlane.f32.xlu0 %v4738
        %v4740 = vpop.xlane.xlu0 %4739
        %v4741 = vadd.f32 %v4734, %v4735
        %4742 = vadd.xlane.f32.xlu0 %v4741
        %v4743 = vpop.xlane.xlu0 %4742
        %v4744 = vmul.f32 %v4740, 0.005
        %v4745 = vmul.f32 %v4743, 0.005
        %v4746 = vsub.f32 %v4732, %v4744
        %v4747 = vsub.f32 %v4733, %v4744
        %v4748 = vsub.f32 %v4734, %v4745
        %v4749 = vsub.f32 %v4735, %v4745
        %v4750 = vmul.f32 %v4746, %v1652
        %v4751 = vmul.f32 %v4747, %v1653
        %v4752 = vmul.f32 %v4748, %v1652
        %v4753 = vmul.f32 %v4749, %v1653
        %v4754 = vmul.f32 %v4750, %v4750
        %v4755 = vmul.f32 %v4751, %v4751
        %v4756 = vmul.f32 %v4752, %v4752
        %v4757 = vmul.f32 %v4753, %v4753
        %v4758 = vadd.f32 %v4754, %v4755
        %4759 = vadd.xlane.f32.xlu0 %v4758
        %v4760 = vpop.xlane.xlu0 %4759
        %v4761 = vadd.f32 %v4756, %v4757
        %4762 = vadd.xlane.f32.xlu0 %v4761
        %v4763 = vpop.xlane.xlu0 %4762
        %v4764 = vmul.f32 %v4760, 0.005
        %v4765 = vmul.f32 %v4763, 0.005
        %v4766 = vadd.f32 %v4764, 1e-05
        %v4767 = vadd.f32 %v4765, 1e-05
        %v4768 = vrsqrt.pop %v4766
        %v4769 = vrsqrt.pop %v4767
        %v4770 = vmul.f32 %v4746, %v4768
        %v4771 = vmul.f32 %v4747, %v4768
        %v4772 = vmul.f32 %v4748, %v4769
        %v4773 = vmul.f32 %v4749, %v4769
        %v4775 = vlaneseq
        %v4776 = vshrl.u32 %v4775, 7
        %v4777 = vsub.s32 0, %v4776
        %v4778 = vrot.slane %v4736, %v4777
        %v4779 = vlaneseq
        %v4780 = vshrl.u32 %v4779, 7
        %v4781 = vsub.s32 1, %v4780
        %v4782 = vrot.slane %v4736, %v4781
        %v4785 = vmul.f32 %v4770, %v4778
        %v4786 = vmul.f32 %v4771, %v4782
        %v4787 = vmul.f32 %v4772, %v4778
        %v4788 = vmul.f32 %v4773, %v4782
        %v4790 = vlaneseq
        %v4791 = vshrl.u32 %v4790, 7
        %v4792 = vsub.s32 0, %v4791
        %v4793 = vrot.slane %v4737, %v4792
        %v4794 = vlaneseq
        %v4795 = vshrl.u32 %v4794, 7
        %v4796 = vsub.s32 1, %v4795
        %v4797 = vrot.slane %v4737, %v4796
        %v4800 = vadd.f32 %v4785, %v4793
        %v4801 = vadd.f32 %v4786, %v4797
        %v4802 = vadd.f32 %v4787, %v4793
        %v4803 = vadd.f32 %v4788, %v4797
        %4804 = vst [vmem:[%s876] sm:$0xff] %v4800
        %4805 = vst [vmem:[%s876 + $0x8] sm:$0xff] %v4801
        %4806 = vst [vmem:[%s876 + $0x10] sm:$0xff] %v4802
        %4807 = vst [vmem:[%s876 + $0x18] sm:$0xff] %v4803
        %s4808 = sand.u32 %s542, 1
        %s4809 = scalar_lea.sflag [#allocation7], %s4808
        %s4810 = sand.u32 %s542, 1
        %s4811 = smul.addr %s4810, 32
        %s4812 = scalar_lea.vmem [#allocation22], %s4811
        // Predicated region
        $region153: #{tpu_custom_call.1} parent=107 // pred_check
          %p4813 = pneg %p552
        $region154: #{tpu_custom_call.1} parent=107 // pred_check_branch
          %4815 = sbr.rel (%p4813) target = $region156
        $region155: #{tpu_custom_call.1} parent=107 // pred_region
          %s4816 = smul.u32 2, %s51
          %s4818 = ssub.s32 512, 512
          %4819 = vsyncadd %s4809, %s4818
          %s4820 = smul.addr %s4816, 2
          %s4821 = smul.addr %s50, 4
          %s4822 = sadd.s32 %s4820, %s4821
          %s4823 = smul.addr %s4822, 128
          %s4824 = scalar_lea.hbm %s22, %s4823
          %s4825 = sshll.u32 %s4812, 4
          %s4826 = int_to_ptr.vmem [resolvable:$true] %s4825
          %4831 = dma.vmem_to_hbm [thread:$0]  %s4826, 512, %s4824, %s4809, 256, 256, 16
        $region156: #{tpu_custom_call.1} parent=107 // pred_fallthru
          _
      $region108: #{tpu_custom_call.1} parent=5 // pred_fallthru
        _
      %p4832 = scmp.le.s32.totalorder 2, %s41
      // Predicated region
      $region157: #{tpu_custom_call.1} parent=5 // pred_check
        %p4833 = pneg %p4832
      $region158: #{tpu_custom_call.1} parent=5 // pred_check_branch
        %4835 = sbr.rel (%p4833) target = $region160
      $region159: #{tpu_custom_call.1} parent=5 // pred_region
        %s4836 = ssub.s32 %s41, 2
        // Predicated region
        $region161: #{tpu_custom_call.1} parent=159 // pred_check
          %p4837 = pneg %p558
        $region162: #{tpu_custom_call.1} parent=159 // pred_check_branch
          %4839 = sbr.rel (%p4837) target = $region164
        $region163: #{tpu_custom_call.1} parent=159 // pred_region
          %s4840 = sand.u32 %s543, 1
          %s4841 = scalar_lea.sflag [#allocation7], %s4840
          %s4842 = sand.u32 %s543, 1
          %s4843 = smul.addr %s4842, 32
          %s4844 = scalar_lea.vmem [#allocation22], %s4843
          %4845 = dma.done %s4841, 512
        $region164: #{tpu_custom_call.1} parent=159 // pred_fallthru
          _
      $region160: #{tpu_custom_call.1} parent=5 // pred_fallthru
        _
    $region6: #{tpu_custom_call.1} parent=1 // loop_footer
      %s45 = sadd.s32 1, %s41
    $region7: #{tpu_custom_call.1} parent=1 // loop_footer_branch
      %40 = sbr.rel target = $region3
    $region8: #{tpu_custom_call.1} parent=1 // loop_exit
      _
    %4846 = vsyncpa [#allocation6], 1
    %s4847 = scalar_lea.sflag [#allocation6], 1
    %4848 = vsyncpa %s4847, 1
    %4849 = vsyncpa [#allocation9], 1
    %s4850 = scalar_lea.sflag [#allocation9], 1
    %4851 = vsyncpa %s4850, 1
    %4852 = vsyncpa [#allocation12], 1
    %4853 = vsyncpa [#allocation15], 1
    %4854 = vsyncpa [#allocation18], 1
    %4855 = vsyncpa [#allocation21], 1
    %4856 = vsyncpa [#allocation7], 1
    %s4857 = scalar_lea.sflag [#allocation7], 1
    %4858 = vsyncpa %s4857, 1

// kernel: tpu_custom_call.1
$region0: #{tpu_custom_call.1}
  #allocation0 [shape = 'u32[]', space=smem, size = 0x4, offset = 0x4, fixed_abs, tag = 'smem constant byte address 0x4 - core index']
  #allocation1 [shape = 'u32[144,128]{1,0:T(1,128)}', space=vmem, size = 0x12000, scoped, tag = 'internal scratch']
  #allocation2 [shape = 'bf16[16,256]{1,0:T(16,128)(2,1)}', space=vmem, size = 0x2000, scoped, tag = 'scratch operand']
  #allocation3 [shape = 'bf16[16,256]{1,0:T(16,128)(2,1)}', space=vmem, size = 0x2000, scoped, tag = 'scratch operand']
  #allocation4 [shape = 'bf16[16,256]{1,0:T(16,128)(2,1)}', space=vmem, size = 0x2000, scoped, tag = 'scratch operand']
  %s0 = inlined_call_operand.hbm [shape: f32[2,16,256], index: 0, kind: input, shape index: {}]
  %s1 = inlined_call_operand.hbm [shape: f32[2,16,256], index: 1, kind: input, shape index: {}]
  %s2 = inlined_call_operand.hbm [shape: bf16[256,256], index: 2, kind: input, shape index: {}]
  %s3 = inlined_call_operand.vmem [shape: f32[1,256], index: 3, kind: input, shape index: {}]
  %s4 = inlined_call_operand.hbm [shape: bf16[256,256], index: 4, kind: input, shape index: {}]
  %s5 = inlined_call_operand.vmem [shape: f32[1,256], index: 5, kind: input, shape index: {}]
  %s6 = inlined_call_operand.hbm [shape: bf16[256,256], index: 6, kind: input, shape index: {}]
  %s7 = inlined_call_operand.vmem [shape: f32[1,256], index: 7, kind: input, shape index: {}]
  %s8 = inlined_call_operand.hbm [shape: bf16[256,256], index: 8, kind: input, shape index: {}]
  %s9 = inlined_call_operand.vmem [shape: f32[1,256], index: 9, kind: input, shape index: {}]
  %s10 = inlined_call_operand.hbm [shape: bf16[256,256], index: 10, kind: input, shape index: {}]
  %s11 = inlined_call_operand.vmem [shape: f32[1,256], index: 11, kind: input, shape index: {}]
  %s12 = inlined_call_operand.hbm [shape: bf16[256,256], index: 12, kind: input, shape index: {}]
  %s13 = inlined_call_operand.vmem [shape: f32[1,256], index: 13, kind: input, shape index: {}]
  %s14 = inlined_call_operand.vmem [shape: f32[1,256], index: 14, kind: input, shape index: {}]
  %s15 = inlined_call_operand.vmem [shape: f32[1,256], index: 15, kind: input, shape index: {}]
  %s16 = inlined_call_operand.hbm [shape: bf16[256,1024], index: 16, kind: input, shape index: {}]
  %s17 = inlined_call_operand.vmem [shape: f32[1,1024], index: 17, kind: input, shape index: {}]
  %s18 = inlined_call_operand.hbm [shape: bf16[1024,256], index: 18, kind: input, shape index: {}]
  %s19 = inlined_call_operand.vmem [shape: f32[1,256], index: 19, kind: input, shape index: {}]
  %s20 = inlined_call_operand.vmem [shape: f32[1,256], index: 20, kind: input, shape index: {}]
  %s21 = inlined_call_operand.vmem [shape: f32[1,256], index: 21, kind: input, shape index: {}]
  %s22 = inlined_call_operand.hbm [shape: f32[2,16,256], index: 22, kind: output, shape index: {}]
  %s23 = sld [smem:[#allocation0]]
  $region165: #{tpu_custom_call.1} parent=0
    _
  %s25 = ssub.s32 1, %s23
  %s26 = scalar_select 0, %s25, %s23
  $region1: #{tpu_custom_call.1} parent=0
    #allocation5 [shape = 'u8[32768]{0}', space=vmem, size = 0x8000, scoped, tag = 'input window, operand 0']
    #allocation6 [shape = 's32[2]{0}', space=sflag, size = 0x8, scoped, tag = 'scoped memory for tpu_custom_call.1']
    #allocation7 [shape = 's32[2]{0}', space=sflag, size = 0x8, scoped, tag = 'scoped memory for tpu_custom_call.1']
    #allocation8 [shape = 'u8[32768]{0}', space=vmem, size = 0x8000, scoped, tag = 'input window, operand 1']
    #allocation9 [shape = 's32[2]{0}', space=sflag, size = 0x8, scoped, tag = 'scoped memory for tpu_custom_call.1']
    #allocation10 [shape = 'u8[131072]{0}', space=vmem, size = 0x20000, scoped, tag = 'input window, operand 2, single buffered']
    #allocation11 [shape = 'u8[131072]{0}', space=vmem, size = 0x20000, scoped, tag = 'input window, operand 4, single buffered']
    #allocation12 [shape = 's32[1]{0}', space=sflag, size = 0x4, scoped, tag = 'scoped memory for tpu_custom_call.1']
    #allocation13 [shape = 'u8[131072]{0}', space=vmem, size = 0x20000, scoped, tag = 'input window, operand 6, single buffered']
    #allocation14 [shape = 'u8[131072]{0}', space=vmem, size = 0x20000, scoped, tag = 'input window, operand 8, single buffered']
    #allocation15 [shape = 's32[1]{0}', space=sflag, size = 0x4, scoped, tag = 'scoped memory for tpu_custom_call.1']
    #allocation16 [shape = 'u8[131072]{0}', space=vmem, size = 0x20000, scoped, tag = 'input window, operand 10, single buffered']
    #allocation17 [shape = 'u8[131072]{0}', space=vmem, size = 0x20000, scoped, tag = 'input window, operand 12, single buffered']
    #allocation18 [shape = 's32[1]{0}', space=sflag, size = 0x4, scoped, tag = 'scoped memory for tpu_custom_call.1']
    #allocation19 [shape = 'u8[524288]{0}', space=vmem, size = 0x80000, scoped, tag = 'input window, operand 16, single buffered']
    #allocation20 [shape = 'u8[524288]{0}', space=vmem, size = 0x80000, scoped, tag = 'input window, operand 18, single buffered']
    #allocation21 [shape = 's32[1]{0}', space=sflag, size = 0x4, scoped, tag = 'scoped memory for tpu_custom_call.1']
    #allocation22 [shape = 'u8[32768]{0}', space=vmem, size = 0x8000, scoped, tag = 'output window, operand 0']
    %27 = vsyncpa [#allocation6], 0
    %s28 = scalar_lea.sflag [#allocation6], 1
    %29 = vsyncpa %s28, 0
    %30 = vsyncpa [#allocation9], 0
    %s31 = scalar_lea.sflag [#allocation9], 1
    %32 = vsyncpa %s31, 0
    %33 = vsyncpa [#allocation12], 0
    %34 = vsyncpa [#allocation15], 0
    %35 = vsyncpa [#allocation18], 0
    %36 = vsyncpa [#allocation21], 0
    %37 = vsyncpa [#allocation7], 0
    %s38 = scalar_lea.sflag [#allocation7], 1
    %39 = vsyncpa %s38, 0
    loop: start=0, step=1, limit=4
    $region2: #{tpu_custom_call.1} parent=1 // loop_pre_header
      _
    $region3: #{tpu_custom_call.1} parent=1 // loop_header
      %s41 = sphi 0, %s45
      %p42 = scmp.ge.s32.totalorder %s41, 4
      %s48 = sphi 0, %s60
      %s49 = sphi 0, %s56
      %s50 = sphi 0, %s48
      %s51 = sphi 0, %s49
      %s52 = sphi 0, %s50
      %s53 = sphi 0, %s51
      %s65 = sphi 0, %s67
      %s68 = sphi 0, %s65
      %s69 = sphi 0, %s68
      %s85 = sphi 0, %s69
      %s91 = sphi 0, %s93
      %s94 = sphi 0, %s91
      %s95 = sphi 0, %s94
      %s111 = sphi 0, %s95
      %s115 = sphi 0, %s115
      %s117 = sphi 0, %s115
      %s118 = sphi 0, %s117
      %s132 = sphi 0, %s118
      %s136 = sphi 0, %s136
      %s138 = sphi 0, %s136
      %s139 = sphi 0, %s138
      %s153 = sphi 0, %s139
      %s157 = sphi 0, %s157
      %s159 = sphi 0, %s157
      %s160 = sphi 0, %s159
      %s174 = sphi 0, %s160
      %s178 = sphi 0, %s178
      %s180 = sphi 0, %s178
      %s181 = sphi 0, %s180
      %s195 = sphi 0, %s181
      %s199 = sphi 0, %s199
      %s201 = sphi 0, %s199
      %s202 = sphi 0, %s201
      %s216 = sphi 0, %s202
      %s220 = sphi 0, %s220
      %s222 = sphi 0, %s220
      %s223 = sphi 0, %s222
      %s237 = sphi 0, %s223
      %s241 = sphi 0, %s241
      %s243 = sphi 0, %s241
      %s244 = sphi 0, %s243
      %s258 = sphi 0, %s244
      %s262 = sphi 0, %s262
      %s264 = sphi 0, %s262
      %s265 = sphi 0, %s264
      %s279 = sphi 0, %s265
      %s283 = sphi 0, %s283
      %s285 = sphi 0, %s283
      %s286 = sphi 0, %s285
      %s300 = sphi 0, %s286
      %s304 = sphi 0, %s304
      %s306 = sphi 0, %s304
      %s307 = sphi 0, %s306
      %s321 = sphi 0, %s307
      %s325 = sphi 0, %s325
      %s327 = sphi 0, %s325
      %s328 = sphi 0, %s327
      %s342 = sphi 0, %s328
      %s346 = sphi 0, %s346
      %s348 = sphi 0, %s346
      %s349 = sphi 0, %s348
      %s363 = sphi 0, %s349
      %s367 = sphi 0, %s367
      %s369 = sphi 0, %s367
      %s370 = sphi 0, %s369
      %s384 = sphi 0, %s370
      %s388 = sphi 0, %s388
      %s390 = sphi 0, %s388
      %s391 = sphi 0, %s390
      %s405 = sphi 0, %s391
      %s409 = sphi 0, %s409
      %s411 = sphi 0, %s409
      %s412 = sphi 0, %s411
      %s426 = sphi 0, %s412
      %s430 = sphi 0, %s430
      %s432 = sphi 0, %s430
      %s433 = sphi 0, %s432
      %s447 = sphi 0, %s433
      %s451 = sphi 0, %s451
      %s453 = sphi 0, %s451
      %s454 = sphi 0, %s453
      %s468 = sphi 0, %s454
      %s472 = sphi 0, %s472
      %s474 = sphi 0, %s472
      %s475 = sphi 0, %s474
      %s489 = sphi 0, %s475
      %s493 = sphi 0, %s493
      %s495 = sphi 0, %s493
      %s496 = sphi 0, %s495
      %s510 = sphi 0, %s496
      %s514 = sphi 0, %s514
      %s516 = sphi 0, %s514
      %s517 = sphi 0, %s516
      %s531 = sphi 0, %s517
      %s539 = sphi 0, %s541
      %s542 = sphi 0, %s539
      %s543 = sphi 0, %s542
      %s559 = sphi 0, %s543
    $region4: #{tpu_custom_call.1} parent=1 // loop_header_branch
      %44 = sbr.rel (%p42) target = $region8
    $region5: #{tpu_custom_call.1} parent=1 // loop_body
      %s46 = ssub.s32 %s41, 1
      %s47 = ssub.s32 %s41, 2
      %s54 = sadd.s32 1, %s49
      %p55 = scmp.ge.s32.totalorder %s54, 1
      %s56 = scalar_select %p55, 0, %s54
      %s57 = sadd.s32 1, %s48
      %s58 = scalar_select %p55, %s57, %s48
      %p59 = scmp.ge.s32.totalorder %s58, 2
      %s60 = scalar_select %p59, 0, %s58
      %s61 = ssub.s32 %s48, %s60
      %s62 = ssub.s32 %s49, %s56
      %s63 = sor.u32 %s61, %s62
      %p64 = scmp.eq.s32.totalorder %s63, 0
      %s66 = sadd.s32 %s65, 1
      %s67 = scalar_select %p64, %s65, %s66
      %p70 = pneg %p64
      %p71 = scmp.eq.s32.totalorder %s41, 1
      %p72 = por %p70, %p71
      %p73 = scmp.ne.s32.totalorder %s65, %s68
      %p74 = scmp.eq.s32.totalorder %s41, 0
      %p75 = por %p73, %p74
      %p76 = scmp.ne.s32.totalorder %s65, %s68
      %p77 = scmp.eq.s32.totalorder %s46, 1
      %p78 = por %p76, %p77
      %p79 = scmp.ne.s32.totalorder %s68, %s69
      %p80 = scmp.eq.s32.totalorder %s46, 0
      %p81 = por %p79, %p80
      %p82 = scmp.ne.s32.totalorder %s68, %s69
      %p83 = scmp.eq.s32.totalorder %s47, 1
      %p84 = por %p82, %p83
      %p86 = scmp.ne.s32.totalorder %s69, %s85
      %p87 = scmp.eq.s32.totalorder %s47, 0
      %p88 = por %p86, %p87
      %s89 = ssub.s32 %s48, %s60
      %p90 = scmp.eq.s32.totalorder %s89, 0
      %s92 = sadd.s32 %s91, 1
      %s93 = scalar_select %p90, %s91, %s92
      %p96 = pneg %p90
      %p97 = scmp.eq.s32.totalorder %s41, 1
      %p98 = por %p96, %p97
      %p99 = scmp.ne.s32.totalorder %s91, %s94
      %p100 = scmp.eq.s32.totalorder %s41, 0
      %p101 = por %p99, %p100
      %p102 = scmp.ne.s32.totalorder %s91, %s94
      %p103 = scmp.eq.s32.totalorder %s46, 1
      %p104 = por %p102, %p103
      %p105 = scmp.ne.s32.totalorder %s94, %s95
      %p106 = scmp.eq.s32.totalorder %s46, 0
      %p107 = por %p105, %p106
      %p108 = scmp.ne.s32.totalorder %s94, %s95
      %p109 = scmp.eq.s32.totalorder %s47, 1
      %p110 = por %p108, %p109
      %p112 = scmp.ne.s32.totalorder %s95, %s111
      %p113 = scmp.eq.s32.totalorder %s47, 0
      %p114 = por %p112, %p113
      %s116 = sadd.s32 %s115, 1
      %p119 = scmp.eq.s32.totalorder %s41, 1
      %p120 = scmp.ne.s32.totalorder %s115, %s117
      %p121 = scmp.eq.s32.totalorder %s41, 0
      %p122 = por %p120, %p121
      %p123 = scmp.ne.s32.totalorder %s115, %s117
      %p124 = scmp.eq.s32.totalorder %s46, 1
      %p125 = por %p123, %p124
      %p126 = scmp.ne.s32.totalorder %s117, %s118
      %p127 = scmp.eq.s32.totalorder %s46, 0
      %p128 = por %p126, %p127
      %p129 = scmp.ne.s32.totalorder %s117, %s118
      %p130 = scmp.eq.s32.totalorder %s47, 1
      %p131 = por %p129, %p130
      %p133 = scmp.ne.s32.totalorder %s118, %s132
      %p134 = scmp.eq.s32.totalorder %s47, 0
      %p135 = por %p133, %p134
      %s137 = sadd.s32 %s136, 1
      %p140 = scmp.eq.s32.totalorder %s41, 1
      %p141 = scmp.ne.s32.totalorder %s136, %s138
      %p142 = scmp.eq.s32.totalorder %s41, 0
      %p143 = por %p141, %p142
      %p144 = scmp.ne.s32.totalorder %s136, %s138
      %p145 = scmp.eq.s32.totalorder %s46, 1
      %p146 = por %p144, %p145
      %p147 = scmp.ne.s32.totalorder %s138, %s139
      %p148 = scmp.eq.s32.totalorder %s46, 0
      %p149 = por %p147, %p148
      %p150 = scmp.ne.s32.totalorder %s138, %s139
      %p151 = scmp.eq.s32.totalorder %s47, 1
      %p152 = por %p150, %p151
      %p154 = scmp.ne.s32.totalorder %s139, %s153
      %p155 = scmp.eq.s32.totalorder %s47, 0
      %p156 = por %p154, %p155
      %s158 = sadd.s32 %s157, 1
      %p161 = scmp.eq.s32.totalorder %s41, 1
      %p162 = scmp.ne.s32.totalorder %s157, %s159
      %p163 = scmp.eq.s32.totalorder %s41, 0
      %p164 = por %p162, %p163
      %p165 = scmp.ne.s32.totalorder %s157, %s159
      %p166 = scmp.eq.s32.totalorder %s46, 1
      %p167 = por %p165, %p166
      %p168 = scmp.ne.s32.totalorder %s159, %s160
      %p169 = scmp.eq.s32.totalorder %s46, 0
      %p170 = por %p168, %p169
      %p171 = scmp.ne.s32.totalorder %s159, %s160
      %p172 = scmp.eq.s32.totalorder %s47, 1
      %p173 = por %p171, %p172
      %p175 = scmp.ne.s32.totalorder %s160, %s174
      %p176 = scmp.eq.s32.totalorder %s47, 0
      %p177 = por %p175, %p176
      %s179 = sadd.s32 %s178, 1
      %p182 = scmp.eq.s32.totalorder %s41, 1
      %p183 = scmp.ne.s32.totalorder %s178, %s180
      %p184 = scmp.eq.s32.totalorder %s41, 0
      %p185 = por %p183, %p184
      %p186 = scmp.ne.s32.totalorder %s178, %s180
      %p187 = scmp.eq.s32.totalorder %s46, 1
      %p188 = por %p186, %p187
      %p189 = scmp.ne.s32.totalorder %s180, %s181
      %p190 = scmp.eq.s32.totalorder %s46, 0
      %p191 = por %p189, %p190
      %p192 = scmp.ne.s32.totalorder %s180, %s181
      %p193 = scmp.eq.s32.totalorder %s47, 1
      %p194 = por %p192, %p193
      %p196 = scmp.ne.s32.totalorder %s181, %s195
      %p197 = scmp.eq.s32.totalorder %s47, 0
      %p198 = por %p196, %p197
      %s200 = sadd.s32 %s199, 1
      %p203 = scmp.eq.s32.totalorder %s41, 1
      %p204 = scmp.ne.s32.totalorder %s199, %s201
      %p205 = scmp.eq.s32.totalorder %s41, 0
      %p206 = por %p204, %p205
      %p207 = scmp.ne.s32.totalorder %s199, %s201
      %p208 = scmp.eq.s32.totalorder %s46, 1
      %p209 = por %p207, %p208
      %p210 = scmp.ne.s32.totalorder %s201, %s202
      %p211 = scmp.eq.s32.totalorder %s46, 0
      %p212 = por %p210, %p211
      %p213 = scmp.ne.s32.totalorder %s201, %s202
      %p214 = scmp.eq.s32.totalorder %s47, 1
      %p215 = por %p213, %p214
      %p217 = scmp.ne.s32.totalorder %s202, %s216
      %p218 = scmp.eq.s32.totalorder %s47, 0
      %p219 = por %p217, %p218
      %s221 = sadd.s32 %s220, 1
      %p224 = scmp.eq.s32.totalorder %s41, 1
      %p225 = scmp.ne.s32.totalorder %s220, %s222
      %p226 = scmp.eq.s32.totalorder %s41, 0
      %p227 = por %p225, %p226
      %p228 = scmp.ne.s32.totalorder %s220, %s222
      %p229 = scmp.eq.s32.totalorder %s46, 1
      %p230 = por %p228, %p229
      %p231 = scmp.ne.s32.totalorder %s222, %s223
      %p232 = scmp.eq.s32.totalorder %s46, 0
      %p233 = por %p231, %p232
      %p234 = scmp.ne.s32.totalorder %s222, %s223
      %p235 = scmp.eq.s32.totalorder %s47, 1
      %p236 = por %p234, %p235
      %p238 = scmp.ne.s32.totalorder %s223, %s237
      %p239 = scmp.eq.s32.totalorder %s47, 0
      %p240 = por %p238, %p239
      %s242 = sadd.s32 %s241, 1
      %p245 = scmp.eq.s32.totalorder %s41, 1
      %p246 = scmp.ne.s32.totalorder %s241, %s243
      %p247 = scmp.eq.s32.totalorder %s41, 0
      %p248 = por %p246, %p247
      %p249 = scmp.ne.s32.totalorder %s241, %s243
      %p250 = scmp.eq.s32.totalorder %s46, 1
      %p251 = por %p249, %p250
      %p252 = scmp.ne.s32.totalorder %s243, %s244
      %p253 = scmp.eq.s32.totalorder %s46, 0
      %p254 = por %p252, %p253
      %p255 = scmp.ne.s32.totalorder %s243, %s244
      %p256 = scmp.eq.s32.totalorder %s47, 1
      %p257 = por %p255, %p256
      %p259 = scmp.ne.s32.totalorder %s244, %s258
      %p260 = scmp.eq.s32.totalorder %s47, 0
      %p261 = por %p259, %p260
      %s263 = sadd.s32 %s262, 1
      %p266 = scmp.eq.s32.totalorder %s41, 1
      %p267 = scmp.ne.s32.totalorder %s262, %s264
      %p268 = scmp.eq.s32.totalorder %s41, 0
      %p269 = por %p267, %p268
      %p270 = scmp.ne.s32.totalorder %s262, %s264
      %p271 = scmp.eq.s32.totalorder %s46, 1
      %p272 = por %p270, %p271
      %p273 = scmp.ne.s32.totalorder %s264, %s265
      %p274 = scmp.eq.s32.totalorder %s46, 0
      %p275 = por %p273, %p274
      %p276 = scmp.ne.s32.totalorder %s264, %s265
      %p277 = scmp.eq.s32.totalorder %s47, 1
      %p278 = por %p276, %p277
      %p280 = scmp.ne.s32.totalorder %s265, %s279
      %p281 = scmp.eq.s32.totalorder %s47, 0
      %p282 = por %p280, %p281
      %s284 = sadd.s32 %s283, 1
      %p287 = scmp.eq.s32.totalorder %s41, 1
      %p288 = scmp.ne.s32.totalorder %s283, %s285
      %p289 = scmp.eq.s32.totalorder %s41, 0
      %p290 = por %p288, %p289
      %p291 = scmp.ne.s32.totalorder %s283, %s285
      %p292 = scmp.eq.s32.totalorder %s46, 1
      %p293 = por %p291, %p292
      %p294 = scmp.ne.s32.totalorder %s285, %s286
      %p295 = scmp.eq.s32.totalorder %s46, 0
      %p296 = por %p294, %p295
      %p297 = scmp.ne.s32.totalorder %s285, %s286
      %p298 = scmp.eq.s32.totalorder %s47, 1
      %p299 = por %p297, %p298
      %p301 = scmp.ne.s32.totalorder %s286, %s300
      %p302 = scmp.eq.s32.totalorder %s47, 0
      %p303 = por %p301, %p302
      %s305 = sadd.s32 %s304, 1
      %p308 = scmp.eq.s32.totalorder %s41, 1
      %p309 = scmp.ne.s32.totalorder %s304, %s306
      %p310 = scmp.eq.s32.totalorder %s41, 0
      %p311 = por %p309, %p310
      %p312 = scmp.ne.s32.totalorder %s304, %s306
      %p313 = scmp.eq.s32.totalorder %s46, 1
      %p314 = por %p312, %p313
      %p315 = scmp.ne.s32.totalorder %s306, %s307
      %p316 = scmp.eq.s32.totalorder %s46, 0
      %p317 = por %p315, %p316
      %p318 = scmp.ne.s32.totalorder %s306, %s307
      %p319 = scmp.eq.s32.totalorder %s47, 1
      %p320 = por %p318, %p319
      %p322 = scmp.ne.s32.totalorder %s307, %s321
      %p323 = scmp.eq.s32.totalorder %s47, 0
      %p324 = por %p322, %p323
      %s326 = sadd.s32 %s325, 1
      %p329 = scmp.eq.s32.totalorder %s41, 1
      %p330 = scmp.ne.s32.totalorder %s325, %s327
      %p331 = scmp.eq.s32.totalorder %s41, 0
      %p332 = por %p330, %p331
      %p333 = scmp.ne.s32.totalorder %s325, %s327
      %p334 = scmp.eq.s32.totalorder %s46, 1
      %p335 = por %p333, %p334
      %p336 = scmp.ne.s32.totalorder %s327, %s328
      %p337 = scmp.eq.s32.totalorder %s46, 0
      %p338 = por %p336, %p337
      %p339 = scmp.ne.s32.totalorder %s327, %s328
      %p340 = scmp.eq.s32.totalorder %s47, 1
      %p341 = por %p339, %p340
      %p343 = scmp.ne.s32.totalorder %s328, %s342
      %p344 = scmp.eq.s32.totalorder %s47, 0
      %p345 = por %p343, %p344
      %s347 = sadd.s32 %s346, 1
      %p350 = scmp.eq.s32.totalorder %s41, 1
      %p351 = scmp.ne.s32.totalorder %s346, %s348
      %p352 = scmp.eq.s32.totalorder %s41, 0
      %p353 = por %p351, %p352
      %p354 = scmp.ne.s32.totalorder %s346, %s348
      %p355 = scmp.eq.s32.totalorder %s46, 1
      %p356 = por %p354, %p355
      %p357 = scmp.ne.s32.totalorder %s348, %s349
      %p358 = scmp.eq.s32.totalorder %s46, 0
      %p359 = por %p357, %p358
      %p360 = scmp.ne.s32.totalorder %s348, %s349
      %p361 = scmp.eq.s32.totalorder %s47, 1
      %p362 = por %p360, %p361
      %p364 = scmp.ne.s32.totalorder %s349, %s363
      %p365 = scmp.eq.s32.totalorder %s47, 0
      %p366 = por %p364, %p365
      %s368 = sadd.s32 %s367, 1
      %p371 = scmp.eq.s32.totalorder %s41, 1
      %p372 = scmp.ne.s32.totalorder %s367, %s369
      %p373 = scmp.eq.s32.totalorder %s41, 0
      %p374 = por %p372, %p373
      %p375 = scmp.ne.s32.totalorder %s367, %s369
      %p376 = scmp.eq.s32.totalorder %s46, 1
      %p377 = por %p375, %p376
      %p378 = scmp.ne.s32.totalorder %s369, %s370
      %p379 = scmp.eq.s32.totalorder %s46, 0
      %p380 = por %p378, %p379
      %p381 = scmp.ne.s32.totalorder %s369, %s370
      %p382 = scmp.eq.s32.totalorder %s47, 1
      %p383 = por %p381, %p382
      %p385 = scmp.ne.s32.totalorder %s370, %s384
      %p386 = scmp.eq.s32.totalorder %s47, 0
      %p387 = por %p385, %p386
      %s389 = sadd.s32 %s388, 1
      %p392 = scmp.eq.s32.totalorder %s41, 1
      %p393 = scmp.ne.s32.totalorder %s388, %s390
      %p394 = scmp.eq.s32.totalorder %s41, 0
      %p395 = por %p393, %p394
      %p396 = scmp.ne.s32.totalorder %s388, %s390
      %p397 = scmp.eq.s32.totalorder %s46, 1
      %p398 = por %p396, %p397
      %p399 = scmp.ne.s32.totalorder %s390, %s391
      %p400 = scmp.eq.s32.totalorder %s46, 0
      %p401 = por %p399, %p400
      %p402 = scmp.ne.s32.totalorder %s390, %s391
      %p403 = scmp.eq.s32.totalorder %s47, 1
      %p404 = por %p402, %p403
      %p406 = scmp.ne.s32.totalorder %s391, %s405
      %p407 = scmp.eq.s32.totalorder %s47, 0
      %p408 = por %p406, %p407
      %s410 = sadd.s32 %s409, 1
      %p413 = scmp.eq.s32.totalorder %s41, 1
      %p414 = scmp.ne.s32.totalorder %s409, %s411
      %p415 = scmp.eq.s32.totalorder %s41, 0
      %p416 = por %p414, %p415
      %p417 = scmp.ne.s32.totalorder %s409, %s411
      %p418 = scmp.eq.s32.totalorder %s46, 1
      %p419 = por %p417, %p418
      %p420 = scmp.ne.s32.totalorder %s411, %s412
      %p421 = scmp.eq.s32.totalorder %s46, 0
      %p422 = por %p420, %p421
      %p423 = scmp.ne.s32.totalorder %s411, %s412
      %p424 = scmp.eq.s32.totalorder %s47, 1
      %p425 = por %p423, %p424
      %p427 = scmp.ne.s32.totalorder %s412, %s426
      %p428 = scmp.eq.s32.totalorder %s47, 0
      %p429 = por %p427, %p428
      %s431 = sadd.s32 %s430, 1
      %p434 = scmp.eq.s32.totalorder %s41, 1
      %p435 = scmp.ne.s32.totalorder %s430, %s432
      %p436 = scmp.eq.s32.totalorder %s41, 0
      %p437 = por %p435, %p436
      %p438 = scmp.ne.s32.totalorder %s430, %s432
      %p439 = scmp.eq.s32.totalorder %s46, 1
      %p440 = por %p438, %p439
      %p441 = scmp.ne.s32.totalorder %s432, %s433
      %p442 = scmp.eq.s32.totalorder %s46, 0
      %p443 = por %p441, %p442
      %p444 = scmp.ne.s32.totalorder %s432, %s433
      %p445 = scmp.eq.s32.totalorder %s47, 1
      %p446 = por %p444, %p445
      %p448 = scmp.ne.s32.totalorder %s433, %s447
      %p449 = scmp.eq.s32.totalorder %s47, 0
      %p450 = por %p448, %p449
      %s452 = sadd.s32 %s451, 1
      %p455 = scmp.eq.s32.totalorder %s41, 1
      %p456 = scmp.ne.s32.totalorder %s451, %s453
      %p457 = scmp.eq.s32.totalorder %s41, 0
      %p458 = por %p456, %p457
      %p459 = scmp.ne.s32.totalorder %s451, %s453
      %p460 = scmp.eq.s32.totalorder %s46, 1
      %p461 = por %p459, %p460
      %p462 = scmp.ne.s32.totalorder %s453, %s454
      %p463 = scmp.eq.s32.totalorder %s46, 0
      %p464 = por %p462, %p463
      %p465 = scmp.ne.s32.totalorder %s453, %s454
      %p466 = scmp.eq.s32.totalorder %s47, 1
      %p467 = por %p465, %p466
      %p469 = scmp.ne.s32.totalorder %s454, %s468
      %p470 = scmp.eq.s32.totalorder %s47, 0
      %p471 = por %p469, %p470
      %s473 = sadd.s32 %s472, 1
      %p476 = scmp.eq.s32.totalorder %s41, 1
      %p477 = scmp.ne.s32.totalorder %s472, %s474
      %p478 = scmp.eq.s32.totalorder %s41, 0
      %p479 = por %p477, %p478
      %p480 = scmp.ne.s32.totalorder %s472, %s474
      %p481 = scmp.eq.s32.totalorder %s46, 1
      %p482 = por %p480, %p481
      %p483 = scmp.ne.s32.totalorder %s474, %s475
      %p484 = scmp.eq.s32.totalorder %s46, 0
      %p485 = por %p483, %p484
      %p486 = scmp.ne.s32.totalorder %s474, %s475
      %p487 = scmp.eq.s32.totalorder %s47, 1
      %p488 = por %p486, %p487
      %p490 = scmp.ne.s32.totalorder %s475, %s489
      %p491 = scmp.eq.s32.totalorder %s47, 0
      %p492 = por %p490, %p491
      %s494 = sadd.s32 %s493, 1
      %p497 = scmp.eq.s32.totalorder %s41, 1
      %p498 = scmp.ne.s32.totalorder %s493, %s495
      %p499 = scmp.eq.s32.totalorder %s41, 0
      %p500 = por %p498, %p499
      %p501 = scmp.ne.s32.totalorder %s493, %s495
      %p502 = scmp.eq.s32.totalorder %s46, 1
      %p503 = por %p501, %p502
      %p504 = scmp.ne.s32.totalorder %s495, %s496
      %p505 = scmp.eq.s32.totalorder %s46, 0
      %p506 = por %p504, %p505
      %p507 = scmp.ne.s32.totalorder %s495, %s496
      %p508 = scmp.eq.s32.totalorder %s47, 1
      %p509 = por %p507, %p508
      %p511 = scmp.ne.s32.totalorder %s496, %s510
      %p512 = scmp.eq.s32.totalorder %s47, 0
      %p513 = por %p511, %p512
      %s515 = sadd.s32 %s514, 1
      %p518 = scmp.eq.s32.totalorder %s41, 1
      %p519 = scmp.ne.s32.totalorder %s514, %s516
      %p520 = scmp.eq.s32.totalorder %s41, 0
      %p521 = por %p519, %p520
      %p522 = scmp.ne.s32.totalorder %s514, %s516
      %p523 = scmp.eq.s32.totalorder %s46, 1
      %p524 = por %p522, %p523
      %p525 = scmp.ne.s32.totalorder %s516, %s517
      %p526 = scmp.eq.s32.totalorder %s46, 0
      %p527 = por %p525, %p526
      %p528 = scmp.ne.s32.totalorder %s516, %s517
      %p529 = scmp.eq.s32.totalorder %s47, 1
      %p530 = por %p528, %p529
      %p532 = scmp.ne.s32.totalorder %s517, %s531
      %p533 = scmp.eq.s32.totalorder %s47, 0
      %p534 = por %p532, %p533
      %s535 = ssub.s32 %s48, %s60
      %s536 = ssub.s32 %s49, %s56
      %s537 = sor.u32 %s535, %s536
      %p538 = scmp.eq.s32.totalorder %s537, 0
      %s540 = sadd.s32 %s539, 1
      %s541 = scalar_select %p538, %s539, %s540
      %p544 = pneg %p538
      %p545 = scmp.eq.s32.totalorder %s41, 1
      %p546 = por %p544, %p545
      %p547 = scmp.ne.s32.totalorder %s539, %s542
      %p548 = scmp.eq.s32.totalorder %s41, 0
      %p549 = por %p547, %p548
      %p550 = scmp.ne.s32.totalorder %s539, %s542
      %p551 = scmp.eq.s32.totalorder %s46, 1
      %p552 = por %p550, %p551
      %p553 = scmp.ne.s32.totalorder %s542, %s543
      %p554 = scmp.eq.s32.totalorder %s46, 0
      %p555 = por %p553, %p554
      %p556 = scmp.ne.s32.totalorder %s542, %s543
      %p557 = scmp.eq.s32.totalorder %s47, 1
      %p558 = por %p556, %p557
      %p560 = scmp.ne.s32.totalorder %s543, %s559
      %p561 = scmp.eq.s32.totalorder %s47, 0
      %p562 = por %p560, %p561
      %p563 = scmp.le.s32.totalorder 1, %s41
      %p564 = scmp.lt.s32.totalorder %s41, 3
      %p565 = pnand %p563, %p564
      %p566 = pneg %p565
      // Predicated region
      $region9: #{tpu_custom_call.1} parent=5 // pred_check
        _
      $region10: #{tpu_custom_call.1} parent=5 // pred_check_branch
        %568 = sbr.rel (%p565) target = $region12
      $region11: #{tpu_custom_call.1} parent=5 // pred_region
        %s569 = ssub.s32 %s41, 1
        // Predicated region
        $region13: #{tpu_custom_call.1} parent=11 // pred_check
          %p570 = pneg %p128
        $region14: #{tpu_custom_call.1} parent=11 // pred_check_branch
          %572 = sbr.rel (%p570) target = $region16
        $region15: #{tpu_custom_call.1} parent=11 // pred_region
          %s574 = ssub.s32 4096, 4096
          %575 = vsyncadd [#allocation9], %s574
          %s576 = sshll.u32 [#allocation10], 4
          %s577 = int_to_ptr.vmem [resolvable:$true] %s576
          %582 = dma.hbm_to_vmem [thread:$0]  %s2, 4096, %s577, [#allocation9], 128, 128, 8
        $region16: #{tpu_custom_call.1} parent=11 // pred_fallthru
          _
        // Predicated region
        $region17: #{tpu_custom_call.1} parent=11 // pred_check
          %p583 = pneg %p149
        $region18: #{tpu_custom_call.1} parent=11 // pred_check_branch
          %585 = sbr.rel (%p583) target = $region20
        $region19: #{tpu_custom_call.1} parent=11 // pred_region
          _
        $region20: #{tpu_custom_call.1} parent=11 // pred_fallthru
          _
        // Predicated region
        $region21: #{tpu_custom_call.1} parent=11 // pred_check
          %p586 = pneg %p170
        $region22: #{tpu_custom_call.1} parent=11 // pred_check_branch
          %588 = sbr.rel (%p586) target = $region24
        $region23: #{tpu_custom_call.1} parent=11 // pred_region
          %s590 = ssub.s32 4096, 4096
          %591 = vsyncadd [#allocation12], %s590
          %s592 = sshll.u32 [#allocation11], 4
          %s593 = int_to_ptr.vmem [resolvable:$true] %s592
          %598 = dma.hbm_to_vmem [thread:$0]  %s4, 4096, %s593, [#allocation12], 128, 128, 8
        $region24: #{tpu_custom_call.1} parent=11 // pred_fallthru
          _
        // Predicated region
        $region25: #{tpu_custom_call.1} parent=11 // pred_check
          %p599 = pneg %p191
        $region26: #{tpu_custom_call.1} parent=11 // pred_check_branch
          %601 = sbr.rel (%p599) target = $region28
        $region27: #{tpu_custom_call.1} parent=11 // pred_region
          _
        $region28: #{tpu_custom_call.1} parent=11 // pred_fallthru
          _
        // Predicated region
        $region29: #{tpu_custom_call.1} parent=11 // pred_check
          %p602 = pneg %p212
        $region30: #{tpu_custom_call.1} parent=11 // pred_check_branch
          %604 = sbr.rel (%p602) target = $region32
        $region31: #{tpu_custom_call.1} parent=11 // pred_region
          %s606 = ssub.s32 4096, 4096
          %607 = vsyncadd [#allocation12], %s606
          %s608 = sshll.u32 [#allocation13], 4
          %s609 = int_to_ptr.vmem [resolvable:$true] %s608
          %614 = dma.hbm_to_vmem [thread:$0]  %s6, 4096, %s609, [#allocation12], 128, 128, 8
        $region32: #{tpu_custom_call.1} parent=11 // pred_fallthru
          _
        // Predicated region
        $region33: #{tpu_custom_call.1} parent=11 // pred_check
          %p615 = pneg %p233
        $region34: #{tpu_custom_call.1} parent=11 // pred_check_branch
          %617 = sbr.rel (%p615) target = $region36
        $region35: #{tpu_custom_call.1} parent=11 // pred_region
          _
        $region36: #{tpu_custom_call.1} parent=11 // pred_fallthru
          _
        // Predicated region
        $region37: #{tpu_custom_call.1} parent=11 // pred_check
          %p618 = pneg %p254
        $region38: #{tpu_custom_call.1} parent=11 // pred_check_branch
          %620 = sbr.rel (%p618) target = $region40
        $region39: #{tpu_custom_call.1} parent=11 // pred_region
          %s622 = ssub.s32 4096, 4096
          %623 = vsyncadd [#allocation15], %s622
          %s624 = sshll.u32 [#allocation14], 4
          %s625 = int_to_ptr.vmem [resolvable:$true] %s624
          %630 = dma.hbm_to_vmem [thread:$0]  %s8, 4096, %s625, [#allocation15], 128, 128, 8
        $region40: #{tpu_custom_call.1} parent=11 // pred_fallthru
          _
        // Predicated region
        $region41: #{tpu_custom_call.1} parent=11 // pred_check
          %p631 = pneg %p275
        $region42: #{tpu_custom_call.1} parent=11 // pred_check_branch
          %633 = sbr.rel (%p631) target = $region44
        $region43: #{tpu_custom_call.1} parent=11 // pred_region
          _
        $region44: #{tpu_custom_call.1} parent=11 // pred_fallthru
          _
        // Predicated region
        $region45: #{tpu_custom_call.1} parent=11 // pred_check
          %p634 = pneg %p296
        $region46: #{tpu_custom_call.1} parent=11 // pred_check_branch
          %636 = sbr.rel (%p634) target = $region48
        $region47: #{tpu_custom_call.1} parent=11 // pred_region
          %s638 = ssub.s32 4096, 4096
          %639 = vsyncadd [#allocation15], %s638
          %s640 = sshll.u32 [#allocation16], 4
          %s641 = int_to_ptr.vmem [resolvable:$true] %s640
          %646 = dma.hbm_to_vmem [thread:$0]  %s10, 4096, %s641, [#allocation15], 128, 128, 8
        $region48: #{tpu_custom_call.1} parent=11 // pred_fallthru
          _
        // Predicated region
        $region49: #{tpu_custom_call.1} parent=11 // pred_check
          %p647 = pneg %p317
        $region50: #{tpu_custom_call.1} parent=11 // pred_check_branch
          %649 = sbr.rel (%p647) target = $region52
        $region51: #{tpu_custom_call.1} parent=11 // pred_region
          _
        $region52: #{tpu_custom_call.1} parent=11 // pred_fallthru
          _
        // Predicated region
        $region53: #{tpu_custom_call.1} parent=11 // pred_check
          %p650 = pneg %p338
        $region54: #{tpu_custom_call.1} parent=11 // pred_check_branch
          %652 = sbr.rel (%p650) target = $region56
        $region55: #{tpu_custom_call.1} parent=11 // pred_region
          %s654 = ssub.s32 4096, 4096
          %655 = vsyncadd [#allocation18], %s654
          %s656 = sshll.u32 [#allocation17], 4
          %s657 = int_to_ptr.vmem [resolvable:$true] %s656
          %662 = dma.hbm_to_vmem [thread:$0]  %s12, 4096, %s657, [#allocation18], 128, 128, 8
        $region56: #{tpu_custom_call.1} parent=11 // pred_fallthru
          _
        // Predicated region
        $region57: #{tpu_custom_call.1} parent=11 // pred_check
          %p663 = pneg %p359
        $region58: #{tpu_custom_call.1} parent=11 // pred_check_branch
          %665 = sbr.rel (%p663) target = $region60
        $region59: #{tpu_custom_call.1} parent=11 // pred_region
          _
        $region60: #{tpu_custom_call.1} parent=11 // pred_fallthru
          _
        // Predicated region
        $region61: #{tpu_custom_call.1} parent=11 // pred_check
          %p666 = pneg %p380
        $region62: #{tpu_custom_call.1} parent=11 // pred_check_branch
          %668 = sbr.rel (%p666) target = $region64
        $region63: #{tpu_custom_call.1} parent=11 // pred_region
          _
        $region64: #{tpu_custom_call.1} parent=11 // pred_fallthru
          _
        // Predicated region
        $region65: #{tpu_custom_call.1} parent=11 // pred_check
          %p669 = pneg %p401
        $region66: #{tpu_custom_call.1} parent=11 // pred_check_branch
          %671 = sbr.rel (%p669) target = $region68
        $region67: #{tpu_custom_call.1} parent=11 // pred_region
          _
        $region68: #{tpu_custom_call.1} parent=11 // pred_fallthru
          _
        // Predicated region
        $region69: #{tpu_custom_call.1} parent=11 // pred_check
          %p672 = pneg %p422
        $region70: #{tpu_custom_call.1} parent=11 // pred_check_branch
          %674 = sbr.rel (%p672) target = $region72
        $region71: #{tpu_custom_call.1} parent=11 // pred_region
          %s676 = ssub.s32 16384, 16384
          %677 = vsyncadd [#allocation18], %s676
          %s678 = sshll.u32 [#allocation19], 4
          %s679 = int_to_ptr.vmem [resolvable:$true] %s678
          %684 = dma.hbm_to_vmem [thread:$0]  %s16, 16384, %s679, [#allocation18], 512, 512, 32
        $region72: #{tpu_custom_call.1} parent=11 // pred_fallthru
          _
        // Predicated region
        $region73: #{tpu_custom_call.1} parent=11 // pred_check
          %p685 = pneg %p443
        $region74: #{tpu_custom_call.1} parent=11 // pred_check_branch
          %687 = sbr.rel (%p685) target = $region76
        $region75: #{tpu_custom_call.1} parent=11 // pred_region
          _
        $region76: #{tpu_custom_call.1} parent=11 // pred_fallthru
          _
        // Predicated region
        $region77: #{tpu_custom_call.1} parent=11 // pred_check
          %p688 = pneg %p464
        $region78: #{tpu_custom_call.1} parent=11 // pred_check_branch
          %690 = sbr.rel (%p688) target = $region80
        $region79: #{tpu_custom_call.1} parent=11 // pred_region
          %s692 = ssub.s32 16384, 16384
          %693 = vsyncadd [#allocation21], %s692
          %s694 = sshll.u32 [#allocation20], 4
          %s695 = int_to_ptr.vmem [resolvable:$true] %s694
          %700 = dma.hbm_to_vmem [thread:$0]  %s18, 16384, %s695, [#allocation21], 128, 128, 8
        $region80: #{tpu_custom_call.1} parent=11 // pred_fallthru
          _
        // Predicated region
        $region81: #{tpu_custom_call.1} parent=11 // pred_check
          %p701 = pneg %p485
        $region82: #{tpu_custom_call.1} parent=11 // pred_check_branch
          %703 = sbr.rel (%p701) target = $region84
        $region83: #{tpu_custom_call.1} parent=11 // pred_region
          _
        $region84: #{tpu_custom_call.1} parent=11 // pred_fallthru
          _
        // Predicated region
        $region85: #{tpu_custom_call.1} parent=11 // pred_check
          %p704 = pneg %p506
        $region86: #{tpu_custom_call.1} parent=11 // pred_check_branch
          %706 = sbr.rel (%p704) target = $region88
        $region87: #{tpu_custom_call.1} parent=11 // pred_region
          _
        $region88: #{tpu_custom_call.1} parent=11 // pred_fallthru
          _
        // Predicated region
        $region89: #{tpu_custom_call.1} parent=11 // pred_check
          %p707 = pneg %p527
        $region90: #{tpu_custom_call.1} parent=11 // pred_check_branch
          %709 = sbr.rel (%p707) target = $region92
        $region91: #{tpu_custom_call.1} parent=11 // pred_region
          _
        $region92: #{tpu_custom_call.1} parent=11 // pred_fallthru
          _
      $region12: #{tpu_custom_call.1} parent=5 // pred_fallthru
        _
      %p710 = scmp.lt.s32.totalorder %s41, 2
      // Predicated region
      $region93: #{tpu_custom_call.1} parent=5 // pred_check
        %p711 = pneg %p710
      $region94: #{tpu_custom_call.1} parent=5 // pred_check_branch
        %713 = sbr.rel (%p711) target = $region96
      $region95: #{tpu_custom_call.1} parent=5 // pred_region
        // Predicated region
        $region97: #{tpu_custom_call.1} parent=95 // pred_check
          %p714 = pneg %p75
        $region98: #{tpu_custom_call.1} parent=95 // pred_check_branch
          %716 = sbr.rel (%p714) target = $region100
        $region99: #{tpu_custom_call.1} parent=95 // pred_region
          %s717 = sand.u32 %s65, 1
          %s718 = scalar_lea.sflag [#allocation6], %s717
          %s719 = sand.u32 %s65, 1
          %s720 = smul.addr %s719, 32
          %s721 = scalar_lea.vmem [#allocation5], %s720
          %s722 = smul.u32 2, %s49
          %s724 = ssub.s32 512, 512
          %725 = vsyncadd %s718, %s724
          %s726 = smul.addr %s722, 2
          %s727 = smul.addr %s48, 4
          %s728 = sadd.s32 %s726, %s727
          %s729 = smul.addr %s728, 128
          %s730 = scalar_lea.hbm %s0, %s729
          %s731 = sshll.u32 %s721, 4
          %s732 = int_to_ptr.vmem [resolvable:$true] %s731
          %737 = dma.hbm_to_vmem [thread:$0]  %s730, 512, %s732, %s718, 256, 256, 16
        $region100: #{tpu_custom_call.1} parent=95 // pred_fallthru
          _
        // Predicated region
        $region101: #{tpu_custom_call.1} parent=95 // pred_check
          %p738 = pneg %p101
        $region102: #{tpu_custom_call.1} parent=95 // pred_check_branch
          %740 = sbr.rel (%p738) target = $region104
        $region103: #{tpu_custom_call.1} parent=95 // pred_region
          %s741 = sand.u32 %s41, 1
          %s742 = scalar_lea.sflag [#allocation9], %s741
          %s743 = sand.u32 %s91, 1
          %s744 = smul.addr %s743, 32
          %s745 = scalar_lea.vmem [#allocation8], %s744
          %s747 = ssub.s32 512, 512
          %748 = vsyncadd %s742, %s747
          %s749 = smul.addr %s48, 4
          %s750 = smul.addr %s749, 128
          %s751 = scalar_lea.hbm %s1, %s750
          %s752 = sshll.u32 %s745, 4
          %s753 = int_to_ptr.vmem [resolvable:$true] %s752
          %758 = dma.hbm_to_vmem [thread:$0]  %s751, 512, %s753, %s742, 256, 256, 16
        $region104: #{tpu_custom_call.1} parent=95 // pred_fallthru
          _
      $region96: #{tpu_custom_call.1} parent=5 // pred_fallthru
        _
      %p759 = scmp.le.s32.totalorder 1, %s41
      %p760 = scmp.lt.s32.totalorder %s41, 3
      %p761 = pnand %p759, %p760
      %p762 = pneg %p761
      // Predicated region
      $region105: #{tpu_custom_call.1} parent=5 // pred_check
        _
      $region106: #{tpu_custom_call.1} parent=5 // pred_check_branch
        %764 = sbr.rel (%p761) target = $region108
      $region107: #{tpu_custom_call.1} parent=5 // pred_region
        %s765 = ssub.s32 %s41, 1
        %s766 = sand.u32 %s68, 1
        %s767 = scalar_lea.sflag [#allocation6], %s766
        %s768 = sand.u32 %s68, 1
        %s769 = smul.addr %s768, 32
        %s770 = scalar_lea.vmem [#allocation5], %s769
        // Predicated region
        $region109: #{tpu_custom_call.1} parent=107 // pred_check
          %p771 = pneg %p81
        $region110: #{tpu_custom_call.1} parent=107 // pred_check_branch
          %773 = sbr.rel (%p771) target = $region112
        $region111: #{tpu_custom_call.1} parent=107 // pred_region
          %774 = dma.done %s767, 512
        $region112: #{tpu_custom_call.1} parent=107 // pred_fallthru
          _
        %s775 = sand.u32 %s46, 1
        %s776 = scalar_lea.sflag [#allocation9], %s775
        %s777 = sand.u32 %s94, 1
        %s778 = smul.addr %s777, 32
        %s779 = scalar_lea.vmem [#allocation8], %s778
        // Predicated region
        $region113: #{tpu_custom_call.1} parent=107 // pred_check
          %p780 = pneg %p107
        $region114: #{tpu_custom_call.1} parent=107 // pred_check_branch
          %782 = sbr.rel (%p780) target = $region116
        $region115: #{tpu_custom_call.1} parent=107 // pred_region
          %783 = dma.done %s776, 512
        $region116: #{tpu_custom_call.1} parent=107 // pred_fallthru
          _
        // Predicated region
        $region117: #{tpu_custom_call.1} parent=107 // pred_check
          %p784 = pneg %p128
        $region118: #{tpu_custom_call.1} parent=107 // pred_check_branch
          %786 = sbr.rel (%p784) target = $region120
        $region119: #{tpu_custom_call.1} parent=107 // pred_region
          %787 = dma.done [#allocation9], 4096
        $region120: #{tpu_custom_call.1} parent=107 // pred_fallthru
          _
        // Predicated region
        $region121: #{tpu_custom_call.1} parent=107 // pred_check
          %p788 = pneg %p170
        $region122: #{tpu_custom_call.1} parent=107 // pred_check_branch
          %790 = sbr.rel (%p788) target = $region124
        $region123: #{tpu_custom_call.1} parent=107 // pred_region
          %791 = dma.done [#allocation12], 4096
        $region124: #{tpu_custom_call.1} parent=107 // pred_fallthru
          _
        // Predicated region
        $region125: #{tpu_custom_call.1} parent=107 // pred_check
          %p792 = pneg %p212
        $region126: #{tpu_custom_call.1} parent=107 // pred_check_branch
          %794 = sbr.rel (%p792) target = $region128
        $region127: #{tpu_custom_call.1} parent=107 // pred_region
          %795 = dma.done [#allocation12], 4096
        $region128: #{tpu_custom_call.1} parent=107 // pred_fallthru
          _
        // Predicated region
        $region129: #{tpu_custom_call.1} parent=107 // pred_check
          %p796 = pneg %p254
        $region130: #{tpu_custom_call.1} parent=107 // pred_check_branch
          %798 = sbr.rel (%p796) target = $region132
        $region131: #{tpu_custom_call.1} parent=107 // pred_region
          %799 = dma.done [#allocation15], 4096
        $region132: #{tpu_custom_call.1} parent=107 // pred_fallthru
          _
        // Predicated region
        $region133: #{tpu_custom_call.1} parent=107 // pred_check
          %p800 = pneg %p296
        $region134: #{tpu_custom_call.1} parent=107 // pred_check_branch
          %802 = sbr.rel (%p800) target = $region136
        $region135: #{tpu_custom_call.1} parent=107 // pred_region
          %803 = dma.done [#allocation15], 4096
        $region136: #{tpu_custom_call.1} parent=107 // pred_fallthru
          _
        // Predicated region
        $region137: #{tpu_custom_call.1} parent=107 // pred_check
          %p804 = pneg %p338
        $region138: #{tpu_custom_call.1} parent=107 // pred_check_branch
          %806 = sbr.rel (%p804) target = $region140
        $region139: #{tpu_custom_call.1} parent=107 // pred_region
          %807 = dma.done [#allocation18], 4096
        $region140: #{tpu_custom_call.1} parent=107 // pred_fallthru
          _
        // Predicated region
        $region141: #{tpu_custom_call.1} parent=107 // pred_check
          %p808 = pneg %p422
        $region142: #{tpu_custom_call.1} parent=107 // pred_check_branch
          %810 = sbr.rel (%p808) target = $region144
        $region143: #{tpu_custom_call.1} parent=107 // pred_region
          %811 = dma.done [#allocation18], 16384
        $region144: #{tpu_custom_call.1} parent=107 // pred_fallthru
          _
        // Predicated region
        $region145: #{tpu_custom_call.1} parent=107 // pred_check
          %p812 = pneg %p464
        $region146: #{tpu_custom_call.1} parent=107 // pred_check_branch
          %814 = sbr.rel (%p812) target = $region148
        $region147: #{tpu_custom_call.1} parent=107 // pred_region
          %815 = dma.done [#allocation21], 16384
        $region148: #{tpu_custom_call.1} parent=107 // pred_fallthru
          _
        %s816 = sand.u32 %s68, 1
        %s817 = scalar_lea.sflag [#allocation6], %s816
        %s818 = sand.u32 %s68, 1
        %s819 = smul.addr %s818, 32
        %s820 = scalar_lea.vmem [#allocation5], %s819
        %p821 = pneg %p81
        %p822 = pneg %p78
        %s823 = sand.u32 %s46, 1
        %s824 = scalar_lea.sflag [#allocation9], %s823
        %s825 = sand.u32 %s94, 1
        %s826 = smul.addr %s825, 32
        %s827 = scalar_lea.vmem [#allocation8], %s826
        %p828 = pneg %p107
        %p829 = pneg %p104
        %p830 = pneg %p128
        %p831 = pneg %p125
        %p832 = pneg %p149
        %p833 = pneg %p146
        %p834 = pneg %p170
        %p835 = pneg %p167
        %p836 = pneg %p191
        %p837 = pneg %p188
        %p838 = pneg %p212
        %p839 = pneg %p209
        %p840 = pneg %p233
        %p841 = pneg %p230
        %p842 = pneg %p254
        %p843 = pneg %p251
        %p844 = pneg %p275
        %p845 = pneg %p272
        %p846 = pneg %p296
        %p847 = pneg %p293
        %p848 = pneg %p317
        %p849 = pneg %p314
        %p850 = pneg %p338
        %p851 = pneg %p335
        %p852 = pneg %p359
        %p853 = pneg %p356
        %p854 = pneg %p380
        %p855 = pneg %p377
        %p856 = pneg %p401
        %p857 = pneg %p398
        %p858 = pneg %p422
        %p859 = pneg %p419
        %p860 = pneg %p443
        %p861 = pneg %p440
        %p862 = pneg %p464
        %p863 = pneg %p461
        %p864 = pneg %p485
        %p865 = pneg %p482
        %p866 = pneg %p506
        %p867 = pneg %p503
        %p868 = pneg %p527
        %p869 = pneg %p524
        %p870 = pneg %p555
        %p871 = pneg %p552
        %s872 = sand.u32 %s542, 1
        %s873 = scalar_lea.sflag [#allocation7], %s872
        %s874 = sand.u32 %s542, 1
        %s875 = smul.addr %s874, 32
        %s876 = scalar_lea.vmem [#allocation22], %s875
        %s877 = smul.u32 2, %s51
        %s878 = smul.u32 2, %s51
        %p880 = scmp.eq.s32.totalorder %s51, 0
        // Predicated region
        $region149: #{tpu_custom_call.1} parent=107 // pred_check
          %p881 = pneg %p880
        $region150: #{tpu_custom_call.1} parent=107 // pred_check_branch
          %883 = sbr.rel (%p881) target = $region152
        $region151: #{tpu_custom_call.1} parent=107 // pred_region
          %v884 = vld [vmem:[%s779] sm:$0xff]
          %v885 = vld [vmem:[%s779 + $0x8] sm:$0xff]
          %v886 = vld [vmem:[%s779 + $0x10] sm:$0xff]
          %v887 = vld [vmem:[%s779 + $0x18] sm:$0xff]
          %v888 = vpack.c.bf16 %v886, %v884
          %v889 = vpack.c.bf16 %v887, %v885
          %v890 = vld [vmem:[#allocation11] sm:$0xff]
          %v891 = vld [vmem:[#allocation11 + $0x8] sm:$0xff]
          %v892 = vld [vmem:[#allocation11 + $0x10] sm:$0xff]
          %v893 = vld [vmem:[#allocation11 + $0x18] sm:$0xff]
          %v894 = vld [vmem:[#allocation11 + $0x20] sm:$0xff]
          %v895 = vld [vmem:[#allocation11 + $0x28] sm:$0xff]
          %v896 = vld [vmem:[#allocation11 + $0x30] sm:$0xff]
          %v897 = vld [vmem:[#allocation11 + $0x38] sm:$0xff]
          %v898 = vld [vmem:[#allocation11 + $0x40] sm:$0xff]
          %v899 = vld [vmem:[#allocation11 + $0x48] sm:$0xff]
          %v900 = vld [vmem:[#allocation11 + $0x50] sm:$0xff]
          %v901 = vld [vmem:[#allocation11 + $0x58] sm:$0xff]
          %v902 = vld [vmem:[#allocation11 + $0x60] sm:$0xff]
          %v903 = vld [vmem:[#allocation11 + $0x68] sm:$0xff]
          %v904 = vld [vmem:[#allocation11 + $0x70] sm:$0xff]
          %v905 = vld [vmem:[#allocation11 + $0x78] sm:$0xff]
          %v906 = vld [vmem:[#allocation11 + $0x80] sm:$0xff]
          %v907 = vld [vmem:[#allocation11 + $0x88] sm:$0xff]
          %v908 = vld [vmem:[#allocation11 + $0x90] sm:$0xff]
          %v909 = vld [vmem:[#allocation11 + $0x98] sm:$0xff]
          %v910 = vld [vmem:[#allocation11 + $0xa0] sm:$0xff]
          %v911 = vld [vmem:[#allocation11 + $0xa8] sm:$0xff]
          %v912 = vld [vmem:[#allocation11 + $0xb0] sm:$0xff]
          %v913 = vld [vmem:[#allocation11 + $0xb8] sm:$0xff]
          %v914 = vld [vmem:[#allocation11 + $0xc0] sm:$0xff]
          %v915 = vld [vmem:[#allocation11 + $0xc8] sm:$0xff]
          %v916 = vld [vmem:[#allocation11 + $0xd0] sm:$0xff]
          %v917 = vld [vmem:[#allocation11 + $0xd8] sm:$0xff]
          %v918 = vld [vmem:[#allocation11 + $0xe0] sm:$0xff]
          %v919 = vld [vmem:[#allocation11 + $0xe8] sm:$0xff]
          %v920 = vld [vmem:[#allocation11 + $0xf0] sm:$0xff]
          %v921 = vld [vmem:[#allocation11 + $0xf8] sm:$0xff]
          %v922 = vld [vmem:[%s5] sm:$0x3]
          %v924 = vlaneseq
          %v925 = vshrl.u32 %v924, 7
          %v926 = vsub.s32 0, %v925
          %v927 = vrot.slane %v922, %v926
          %v928 = vlaneseq
          %v929 = vshrl.u32 %v928, 7
          %v930 = vsub.s32 1, %v929
          %v931 = vrot.slane %v922, %v930
          %v966 = vunpack.c.l.b16 %v890
          %v967 = vunpack.c.h.b16 %v890
          %v968 = vunpack.c.l.b16 %v891
          %v969 = vunpack.c.h.b16 %v891
          %v970 = vunpack.c.l.b16 %v892
          %v971 = vunpack.c.h.b16 %v892
          %v972 = vunpack.c.l.b16 %v893
          %v973 = vunpack.c.h.b16 %v893
          %v974 = vunpack.c.l.b16 %v894
          %v975 = vunpack.c.h.b16 %v894
          %v976 = vunpack.c.l.b16 %v895
          %v977 = vunpack.c.h.b16 %v895
          %v978 = vunpack.c.l.b16 %v896
          %v979 = vunpack.c.h.b16 %v896
          %v980 = vunpack.c.l.b16 %v897
          %v981 = vunpack.c.h.b16 %v897
          %v982 = vunpack.c.l.b16 %v898
          %v983 = vunpack.c.h.b16 %v898
          %v984 = vunpack.c.l.b16 %v899
          %v985 = vunpack.c.h.b16 %v899
          %v986 = vunpack.c.l.b16 %v900
          %v987 = vunpack.c.h.b16 %v900
          %v988 = vunpack.c.l.b16 %v901
          %v989 = vunpack.c.h.b16 %v901
          %v990 = vunpack.c.l.b16 %v902
          %v991 = vunpack.c.h.b16 %v902
          %v992 = vunpack.c.l.b16 %v903
          %v993 = vunpack.c.h.b16 %v903
          %v994 = vunpack.c.l.b16 %v904
          %v995 = vunpack.c.h.b16 %v904
          %v996 = vunpack.c.l.b16 %v905
          %v997 = vunpack.c.h.b16 %v905
          %v998 = vunpack.c.l.b16 %v906
          %v999 = vunpack.c.h.b16 %v906
          %v1000 = vunpack.c.l.b16 %v907
          %v1001 = vunpack.c.h.b16 %v907
          %v1002 = vunpack.c.l.b16 %v908
          %v1003 = vunpack.c.h.b16 %v908
          %v1004 = vunpack.c.l.b16 %v909
          %v1005 = vunpack.c.h.b16 %v909
          %v1006 = vunpack.c.l.b16 %v910
          %v1007 = vunpack.c.h.b16 %v910
          %v1008 = vunpack.c.l.b16 %v911
          %v1009 = vunpack.c.h.b16 %v911
          %v1010 = vunpack.c.l.b16 %v912
          %v1011 = vunpack.c.h.b16 %v912
          %v1012 = vunpack.c.l.b16 %v913
          %v1013 = vunpack.c.h.b16 %v913
          %v1014 = vunpack.c.l.b16 %v914
          %v1015 = vunpack.c.h.b16 %v914
          %v1016 = vunpack.c.l.b16 %v915
          %v1017 = vunpack.c.h.b16 %v915
          %v1018 = vunpack.c.l.b16 %v916
          %v1019 = vunpack.c.h.b16 %v916
          %v1020 = vunpack.c.l.b16 %v917
          %v1021 = vunpack.c.h.b16 %v917
          %v1022 = vunpack.c.l.b16 %v918
          %v1023 = vunpack.c.h.b16 %v918
          %v1024 = vunpack.c.l.b16 %v919
          %v1025 = vunpack.c.h.b16 %v919
          %v1026 = vunpack.c.l.b16 %v920
          %v1027 = vunpack.c.h.b16 %v920
          %v1028 = vunpack.c.l.b16 %v921
          %v1029 = vunpack.c.h.b16 %v921
          %v1030 = vpack.c.b16 %v968, %v966
          %v1031 = vpack.c.b16 %v969, %v967
          %v1032 = vpack.c.b16 %v972, %v970
          %v1033 = vpack.c.b16 %v973, %v971
          %v1034 = vpack.c.b16 %v976, %v974
          %v1035 = vpack.c.b16 %v977, %v975
          %v1036 = vpack.c.b16 %v980, %v978
          %v1037 = vpack.c.b16 %v981, %v979
          %v1038 = vpack.c.b16 %v984, %v982
          %v1039 = vpack.c.b16 %v985, %v983
          %v1040 = vpack.c.b16 %v988, %v986
          %v1041 = vpack.c.b16 %v989, %v987
          %v1042 = vpack.c.b16 %v992, %v990
          %v1043 = vpack.c.b16 %v993, %v991
          %v1044 = vpack.c.b16 %v996, %v994
          %v1045 = vpack.c.b16 %v997, %v995
          %v1046 = vpack.c.b16 %v1000, %v998
          %v1047 = vpack.c.b16 %v1001, %v999
          %v1048 = vpack.c.b16 %v1004, %v1002
          %v1049 = vpack.c.b16 %v1005, %v1003
          %v1050 = vpack.c.b16 %v1008, %v1006
          %v1051 = vpack.c.b16 %v1009, %v1007
          %v1052 = vpack.c.b16 %v1012, %v1010
          %v1053 = vpack.c.b16 %v1013, %v1011
          %v1054 = vpack.c.b16 %v1016, %v1014
          %v1055 = vpack.c.b16 %v1017, %v1015
          %v1056 = vpack.c.b16 %v1020, %v1018
          %v1057 = vpack.c.b16 %v1021, %v1019
          %v1058 = vpack.c.b16 %v1024, %v1022
          %v1059 = vpack.c.b16 %v1025, %v1023
          %v1060 = vpack.c.b16 %v1028, %v1026
          %v1061 = vpack.c.b16 %v1029, %v1027
          %1094 = vmatprep.subr.bf16.mxu0 %v1031
          %1095 = vmatpush1.bf16.msra.mxu0 %v1030
          %1096 = vmatprep.subr.bf16.mxu0 %v1033
          %1097 = vmatpush1.bf16.msra.mxu0 %v1032
          %1098 = vmatprep.subr.bf16.mxu0 %v1035
          %1099 = vmatpush1.bf16.msra.mxu0 %v1034
          %1100 = vmatprep.subr.bf16.mxu0 %v1037
          %1101 = vmatpush1.bf16.msra.mxu0 %v1036
          %1102 = vmatprep.subr.bf16.mxu0 %v1039
          %1103 = vmatpush1.bf16.msra.mxu0 %v1038
          %1104 = vmatprep.subr.bf16.mxu0 %v1041
          %1105 = vmatpush1.bf16.msra.mxu0 %v1040
          %1106 = vmatprep.subr.bf16.mxu0 %v1043
          %1107 = vmatpush1.bf16.msra.mxu0 %v1042
          %1108 = vmatprep.subr.bf16.mxu0 %v1045
          %1109 = vmatpush1.bf16.msra.mxu0 %v1044
          %1110 = vmatprep.subr.bf16.mxu0 %v1047
          %1111 = vmatpush1.bf16.msra.mxu0 %v1046
          %1112 = vmatprep.subr.bf16.mxu0 %v1049
          %1113 = vmatpush1.bf16.msra.mxu0 %v1048
          %1114 = vmatprep.subr.bf16.mxu0 %v1051
          %1115 = vmatpush1.bf16.msra.mxu0 %v1050
          %1116 = vmatprep.subr.bf16.mxu0 %v1053
          %1117 = vmatpush1.bf16.msra.mxu0 %v1052
          %1118 = vmatprep.subr.bf16.mxu0 %v1055
          %1119 = vmatpush1.bf16.msra.mxu0 %v1054
          %1120 = vmatprep.subr.bf16.mxu0 %v1057
          %1121 = vmatpush1.bf16.msra.mxu0 %v1056
          %1122 = vmatprep.subr.bf16.mxu0 %v1059
          %1123 = vmatpush1.bf16.msra.mxu0 %v1058
          %1124 = vmatprep.subr.bf16.mxu0 %v1061
          %1125 = vmatpush1.bf16.msra.mxu0 %v1060
          %1126 = vmatprep.mubr.bf16.mxu0 %v889
          %1127 = vmatmul.mubr.bf16.gmra.mrb[0].mxu0 %v888
          %v1128 = vpop.f32.mrb[0].mxu0
          %v1129 = vadd.f32 %v927, %v1128
          %v1130 = vpop.f32.mrb[0].mxu0
          %v1131 = vadd.f32 %v931, %v1130
          %v1132 = vpop.f32.mrb[0].mxu0
          %v1133 = vadd.f32 %v927, %v1132
          %v1134 = vpop.f32.mrb[0].mxu0
          %v1135 = vadd.f32 %v931, %v1134
          %1136 = vdwg.mxu0
          %v1137 = vpack.c.bf16 %v1133, %v1129
          %v1138 = vpack.c.bf16 %v1135, %v1131
          %v1139 = vld [vmem:[#allocation14] sm:$0xff]
          %v1140 = vld [vmem:[#allocation14 + $0x8] sm:$0xff]
          %v1141 = vld [vmem:[#allocation14 + $0x10] sm:$0xff]
          %v1142 = vld [vmem:[#allocation14 + $0x18] sm:$0xff]
          %v1143 = vld [vmem:[#allocation14 + $0x20] sm:$0xff]
          %v1144 = vld [vmem:[#allocation14 + $0x28] sm:$0xff]
          %v1145 = vld [vmem:[#allocation14 + $0x30] sm:$0xff]
          %v1146 = vld [vmem:[#allocation14 + $0x38] sm:$0xff]
          %v1147 = vld [vmem:[#allocation14 + $0x40] sm:$0xff]
          %v1148 = vld [vmem:[#allocation14 + $0x48] sm:$0xff]
          %v1149 = vld [vmem:[#allocation14 + $0x50] sm:$0xff]
          %v1150 = vld [vmem:[#allocation14 + $0x58] sm:$0xff]
          %v1151 = vld [vmem:[#allocation14 + $0x60] sm:$0xff]
          %v1152 = vld [vmem:[#allocation14 + $0x68] sm:$0xff]
          %v1153 = vld [vmem:[#allocation14 + $0x70] sm:$0xff]
          %v1154 = vld [vmem:[#allocation14 + $0x78] sm:$0xff]
          %v1155 = vld [vmem:[#allocation14 + $0x80] sm:$0xff]
          %v1156 = vld [vmem:[#allocation14 + $0x88] sm:$0xff]
          %v1157 = vld [vmem:[#allocation14 + $0x90] sm:$0xff]
          %v1158 = vld [vmem:[#allocation14 + $0x98] sm:$0xff]
          %v1159 = vld [vmem:[#allocation14 + $0xa0] sm:$0xff]
          %v1160 = vld [vmem:[#allocation14 + $0xa8] sm:$0xff]
          %v1161 = vld [vmem:[#allocation14 + $0xb0] sm:$0xff]
          %v1162 = vld [vmem:[#allocation14 + $0xb8] sm:$0xff]
          %v1163 = vld [vmem:[#allocation14 + $0xc0] sm:$0xff]
          %v1164 = vld [vmem:[#allocation14 + $0xc8] sm:$0xff]
          %v1165 = vld [vmem:[#allocation14 + $0xd0] sm:$0xff]
          %v1166 = vld [vmem:[#allocation14 + $0xd8] sm:$0xff]
          %v1167 = vld [vmem:[#allocation14 + $0xe0] sm:$0xff]
          %v1168 = vld [vmem:[#allocation14 + $0xe8] sm:$0xff]
          %v1169 = vld [vmem:[#allocation14 + $0xf0] sm:$0xff]
          %v1170 = vld [vmem:[#allocation14 + $0xf8] sm:$0xff]
          %v1171 = vld [vmem:[%s9] sm:$0x3]
          %v1173 = vlaneseq
          %v1174 = vshrl.u32 %v1173, 7
          %v1175 = vsub.s32 0, %v1174
          %v1176 = vrot.slane %v1171, %v1175
          %v1177 = vlaneseq
          %v1178 = vshrl.u32 %v1177, 7
          %v1179 = vsub.s32 1, %v1178
          %v1180 = vrot.slane %v1171, %v1179
          %v1215 = vunpack.c.l.b16 %v1139
          %v1216 = vunpack.c.h.b16 %v1139
          %v1217 = vunpack.c.l.b16 %v1140
          %v1218 = vunpack.c.h.b16 %v1140
          %v1219 = vunpack.c.l.b16 %v1141
          %v1220 = vunpack.c.h.b16 %v1141
          %v1221 = vunpack.c.l.b16 %v1142
          %v1222 = vunpack.c.h.b16 %v1142
          %v1223 = vunpack.c.l.b16 %v1143
          %v1224 = vunpack.c.h.b16 %v1143
          %v1225 = vunpack.c.l.b16 %v1144
          %v1226 = vunpack.c.h.b16 %v1144
          %v1227 = vunpack.c.l.b16 %v1145
          %v1228 = vunpack.c.h.b16 %v1145
          %v1229 = vunpack.c.l.b16 %v1146
          %v1230 = vunpack.c.h.b16 %v1146
          %v1231 = vunpack.c.l.b16 %v1147
          %v1232 = vunpack.c.h.b16 %v1147
          %v1233 = vunpack.c.l.b16 %v1148
          %v1234 = vunpack.c.h.b16 %v1148
          %v1235 = vunpack.c.l.b16 %v1149
          %v1236 = vunpack.c.h.b16 %v1149
          %v1237 = vunpack.c.l.b16 %v1150
          %v1238 = vunpack.c.h.b16 %v1150
          %v1239 = vunpack.c.l.b16 %v1151
          %v1240 = vunpack.c.h.b16 %v1151
          %v1241 = vunpack.c.l.b16 %v1152
          %v1242 = vunpack.c.h.b16 %v1152
          %v1243 = vunpack.c.l.b16 %v1153
          %v1244 = vunpack.c.h.b16 %v1153
          %v1245 = vunpack.c.l.b16 %v1154
          %v1246 = vunpack.c.h.b16 %v1154
          %v1247 = vunpack.c.l.b16 %v1155
          %v1248 = vunpack.c.h.b16 %v1155
          %v1249 = vunpack.c.l.b16 %v1156
          %v1250 = vunpack.c.h.b16 %v1156
          %v1251 = vunpack.c.l.b16 %v1157
          %v1252 = vunpack.c.h.b16 %v1157
          %v1253 = vunpack.c.l.b16 %v1158
          %v1254 = vunpack.c.h.b16 %v1158
          %v1255 = vunpack.c.l.b16 %v1159
          %v1256 = vunpack.c.h.b16 %v1159
          %v1257 = vunpack.c.l.b16 %v1160
          %v1258 = vunpack.c.h.b16 %v1160
          %v1259 = vunpack.c.l.b16 %v1161
          %v1260 = vunpack.c.h.b16 %v1161
          %v1261 = vunpack.c.l.b16 %v1162
          %v1262 = vunpack.c.h.b16 %v1162
          %v1263 = vunpack.c.l.b16 %v1163
          %v1264 = vunpack.c.h.b16 %v1163
          %v1265 = vunpack.c.l.b16 %v1164
          %v1266 = vunpack.c.h.b16 %v1164
          %v1267 = vunpack.c.l.b16 %v1165
          %v1268 = vunpack.c.h.b16 %v1165
          %v1269 = vunpack.c.l.b16 %v1166
          %v1270 = vunpack.c.h.b16 %v1166
          %v1271 = vunpack.c.l.b16 %v1167
          %v1272 = vunpack.c.h.b16 %v1167
          %v1273 = vunpack.c.l.b16 %v1168
          %v1274 = vunpack.c.h.b16 %v1168
          %v1275 = vunpack.c.l.b16 %v1169
          %v1276 = vunpack.c.h.b16 %v1169
          %v1277 = vunpack.c.l.b16 %v1170
          %v1278 = vunpack.c.h.b16 %v1170
          %v1279 = vpack.c.b16 %v1217, %v1215
          %v1280 = vpack.c.b16 %v1218, %v1216
          %v1281 = vpack.c.b16 %v1221, %v1219
          %v1282 = vpack.c.b16 %v1222, %v1220
          %v1283 = vpack.c.b16 %v1225, %v1223
          %v1284 = vpack.c.b16 %v1226, %v1224
          %v1285 = vpack.c.b16 %v1229, %v1227
          %v1286 = vpack.c.b16 %v1230, %v1228
          %v1287 = vpack.c.b16 %v1233, %v1231
          %v1288 = vpack.c.b16 %v1234, %v1232
          %v1289 = vpack.c.b16 %v1237, %v1235
          %v1290 = vpack.c.b16 %v1238, %v1236
          %v1291 = vpack.c.b16 %v1241, %v1239
          %v1292 = vpack.c.b16 %v1242, %v1240
          %v1293 = vpack.c.b16 %v1245, %v1243
          %v1294 = vpack.c.b16 %v1246, %v1244
          %v1295 = vpack.c.b16 %v1249, %v1247
          %v1296 = vpack.c.b16 %v1250, %v1248
          %v1297 = vpack.c.b16 %v1253, %v1251
          %v1298 = vpack.c.b16 %v1254, %v1252
          %v1299 = vpack.c.b16 %v1257, %v1255
          %v1300 = vpack.c.b16 %v1258, %v1256
          %v1301 = vpack.c.b16 %v1261, %v1259
          %v1302 = vpack.c.b16 %v1262, %v1260
          %v1303 = vpack.c.b16 %v1265, %v1263
          %v1304 = vpack.c.b16 %v1266, %v1264
          %v1305 = vpack.c.b16 %v1269, %v1267
          %v1306 = vpack.c.b16 %v1270, %v1268
          %v1307 = vpack.c.b16 %v1273, %v1271
          %v1308 = vpack.c.b16 %v1274, %v1272
          %v1309 = vpack.c.b16 %v1277, %v1275
          %v1310 = vpack.c.b16 %v1278, %v1276
          %1343 = vmatprep.subr.bf16.mxu0 %v1280
          %1344 = vmatpush1.bf16.msra.mxu0 %v1279
          %1345 = vmatprep.subr.bf16.mxu0 %v1282
          %1346 = vmatpush1.bf16.msra.mxu0 %v1281
          %1347 = vmatprep.subr.bf16.mxu0 %v1284
          %1348 = vmatpush1.bf16.msra.mxu0 %v1283
          %1349 = vmatprep.subr.bf16.mxu0 %v1286
          %1350 = vmatpush1.bf16.msra.mxu0 %v1285
          %1351 = vmatprep.subr.bf16.mxu0 %v1288
          %1352 = vmatpush1.bf16.msra.mxu0 %v1287
          %1353 = vmatprep.subr.bf16.mxu0 %v1290
          %1354 = vmatpush1.bf16.msra.mxu0 %v1289
          %1355 = vmatprep.subr.bf16.mxu0 %v1292
          %1356 = vmatpush1.bf16.msra.mxu0 %v1291
          %1357 = vmatprep.subr.bf16.mxu0 %v1294
          %1358 = vmatpush1.bf16.msra.mxu0 %v1293
          %1359 = vmatprep.subr.bf16.mxu0 %v1296
          %1360 = vmatpush1.bf16.msra.mxu0 %v1295
          %1361 = vmatprep.subr.bf16.mxu0 %v1298
          %1362 = vmatpush1.bf16.msra.mxu0 %v1297
          %1363 = vmatprep.subr.bf16.mxu0 %v1300
          %1364 = vmatpush1.bf16.msra.mxu0 %v1299
          %1365 = vmatprep.subr.bf16.mxu0 %v1302
          %1366 = vmatpush1.bf16.msra.mxu0 %v1301
          %1367 = vmatprep.subr.bf16.mxu0 %v1304
          %1368 = vmatpush1.bf16.msra.mxu0 %v1303
          %1369 = vmatprep.subr.bf16.mxu0 %v1306
          %1370 = vmatpush1.bf16.msra.mxu0 %v1305
          %1371 = vmatprep.subr.bf16.mxu0 %v1308
          %1372 = vmatpush1.bf16.msra.mxu0 %v1307
          %1373 = vmatprep.subr.bf16.mxu0 %v1310
          %1374 = vmatpush1.bf16.msra.mxu0 %v1309
          %1375 = vmatprep.mubr.bf16.mxu0 %v1138
          %1376 = vmatmul.mubr.bf16.gmra.mrb[0].mxu0 %v1137
          %v1377 = vpop.f32.mrb[0].mxu0
          %v1378 = vadd.f32 %v1176, %v1377
          %v1379 = vpop.f32.mrb[0].mxu0
          %v1380 = vadd.f32 %v1180, %v1379
          %v1381 = vpop.f32.mrb[0].mxu0
          %v1382 = vadd.f32 %v1176, %v1381
          %v1383 = vpop.f32.mrb[0].mxu0
          %v1384 = vadd.f32 %v1180, %v1383
          %1385 = vdwg.mxu0
          %v1386 = vld [vmem:[#allocation16] sm:$0xff]
          %v1387 = vld [vmem:[#allocation16 + $0x8] sm:$0xff]
          %v1388 = vld [vmem:[#allocation16 + $0x10] sm:$0xff]
          %v1389 = vld [vmem:[#allocation16 + $0x18] sm:$0xff]
          %v1390 = vld [vmem:[#allocation16 + $0x20] sm:$0xff]
          %v1391 = vld [vmem:[#allocation16 + $0x28] sm:$0xff]
          %v1392 = vld [vmem:[#allocation16 + $0x30] sm:$0xff]
          %v1393 = vld [vmem:[#allocation16 + $0x38] sm:$0xff]
          %v1394 = vld [vmem:[#allocation16 + $0x40] sm:$0xff]
          %v1395 = vld [vmem:[#allocation16 + $0x48] sm:$0xff]
          %v1396 = vld [vmem:[#allocation16 + $0x50] sm:$0xff]
          %v1397 = vld [vmem:[#allocation16 + $0x58] sm:$0xff]
          %v1398 = vld [vmem:[#allocation16 + $0x60] sm:$0xff]
          %v1399 = vld [vmem:[#allocation16 + $0x68] sm:$0xff]
          %v1400 = vld [vmem:[#allocation16 + $0x70] sm:$0xff]
          %v1401 = vld [vmem:[#allocation16 + $0x78] sm:$0xff]
          %v1402 = vld [vmem:[#allocation16 + $0x80] sm:$0xff]
          %v1403 = vld [vmem:[#allocation16 + $0x88] sm:$0xff]
          %v1404 = vld [vmem:[#allocation16 + $0x90] sm:$0xff]
          %v1405 = vld [vmem:[#allocation16 + $0x98] sm:$0xff]
          %v1406 = vld [vmem:[#allocation16 + $0xa0] sm:$0xff]
          %v1407 = vld [vmem:[#allocation16 + $0xa8] sm:$0xff]
          %v1408 = vld [vmem:[#allocation16 + $0xb0] sm:$0xff]
          %v1409 = vld [vmem:[#allocation16 + $0xb8] sm:$0xff]
          %v1410 = vld [vmem:[#allocation16 + $0xc0] sm:$0xff]
          %v1411 = vld [vmem:[#allocation16 + $0xc8] sm:$0xff]
          %v1412 = vld [vmem:[#allocation16 + $0xd0] sm:$0xff]
          %v1413 = vld [vmem:[#allocation16 + $0xd8] sm:$0xff]
          %v1414 = vld [vmem:[#allocation16 + $0xe0] sm:$0xff]
          %v1415 = vld [vmem:[#allocation16 + $0xe8] sm:$0xff]
          %v1416 = vld [vmem:[#allocation16 + $0xf0] sm:$0xff]
          %v1417 = vld [vmem:[#allocation16 + $0xf8] sm:$0xff]
          %v1418 = vld [vmem:[%s11] sm:$0x3]
          %v1420 = vlaneseq
          %v1421 = vshrl.u32 %v1420, 7
          %v1422 = vsub.s32 0, %v1421
          %v1423 = vrot.slane %v1418, %v1422
          %v1424 = vlaneseq
          %v1425 = vshrl.u32 %v1424, 7
          %v1426 = vsub.s32 1, %v1425
          %v1427 = vrot.slane %v1418, %v1426
          %v1462 = vunpack.c.l.b16 %v1386
          %v1463 = vunpack.c.h.b16 %v1386
          %v1464 = vunpack.c.l.b16 %v1387
          %v1465 = vunpack.c.h.b16 %v1387
          %v1466 = vunpack.c.l.b16 %v1388
          %v1467 = vunpack.c.h.b16 %v1388
          %v1468 = vunpack.c.l.b16 %v1389
          %v1469 = vunpack.c.h.b16 %v1389
          %v1470 = vunpack.c.l.b16 %v1390
          %v1471 = vunpack.c.h.b16 %v1390
          %v1472 = vunpack.c.l.b16 %v1391
          %v1473 = vunpack.c.h.b16 %v1391
          %v1474 = vunpack.c.l.b16 %v1392
          %v1475 = vunpack.c.h.b16 %v1392
          %v1476 = vunpack.c.l.b16 %v1393
          %v1477 = vunpack.c.h.b16 %v1393
          %v1478 = vunpack.c.l.b16 %v1394
          %v1479 = vunpack.c.h.b16 %v1394
          %v1480 = vunpack.c.l.b16 %v1395
          %v1481 = vunpack.c.h.b16 %v1395
          %v1482 = vunpack.c.l.b16 %v1396
          %v1483 = vunpack.c.h.b16 %v1396
          %v1484 = vunpack.c.l.b16 %v1397
          %v1485 = vunpack.c.h.b16 %v1397
          %v1486 = vunpack.c.l.b16 %v1398
          %v1487 = vunpack.c.h.b16 %v1398
          %v1488 = vunpack.c.l.b16 %v1399
          %v1489 = vunpack.c.h.b16 %v1399
          %v1490 = vunpack.c.l.b16 %v1400
          %v1491 = vunpack.c.h.b16 %v1400
          %v1492 = vunpack.c.l.b16 %v1401
          %v1493 = vunpack.c.h.b16 %v1401
          %v1494 = vunpack.c.l.b16 %v1402
          %v1495 = vunpack.c.h.b16 %v1402
          %v1496 = vunpack.c.l.b16 %v1403
          %v1497 = vunpack.c.h.b16 %v1403
          %v1498 = vunpack.c.l.b16 %v1404
          %v1499 = vunpack.c.h.b16 %v1404
          %v1500 = vunpack.c.l.b16 %v1405
          %v1501 = vunpack.c.h.b16 %v1405
          %v1502 = vunpack.c.l.b16 %v1406
          %v1503 = vunpack.c.h.b16 %v1406
          %v1504 = vunpack.c.l.b16 %v1407
          %v1505 = vunpack.c.h.b16 %v1407
          %v1506 = vunpack.c.l.b16 %v1408
          %v1507 = vunpack.c.h.b16 %v1408
          %v1508 = vunpack.c.l.b16 %v1409
          %v1509 = vunpack.c.h.b16 %v1409
          %v1510 = vunpack.c.l.b16 %v1410
          %v1511 = vunpack.c.h.b16 %v1410
          %v1512 = vunpack.c.l.b16 %v1411
          %v1513 = vunpack.c.h.b16 %v1411
          %v1514 = vunpack.c.l.b16 %v1412
          %v1515 = vunpack.c.h.b16 %v1412
          %v1516 = vunpack.c.l.b16 %v1413
          %v1517 = vunpack.c.h.b16 %v1413
          %v1518 = vunpack.c.l.b16 %v1414
          %v1519 = vunpack.c.h.b16 %v1414
          %v1520 = vunpack.c.l.b16 %v1415
          %v1521 = vunpack.c.h.b16 %v1415
          %v1522 = vunpack.c.l.b16 %v1416
          %v1523 = vunpack.c.h.b16 %v1416
          %v1524 = vunpack.c.l.b16 %v1417
          %v1525 = vunpack.c.h.b16 %v1417
          %v1526 = vpack.c.b16 %v1464, %v1462
          %v1527 = vpack.c.b16 %v1465, %v1463
          %v1528 = vpack.c.b16 %v1468, %v1466
          %v1529 = vpack.c.b16 %v1469, %v1467
          %v1530 = vpack.c.b16 %v1472, %v1470
          %v1531 = vpack.c.b16 %v1473, %v1471
          %v1532 = vpack.c.b16 %v1476, %v1474
          %v1533 = vpack.c.b16 %v1477, %v1475
          %v1534 = vpack.c.b16 %v1480, %v1478
          %v1535 = vpack.c.b16 %v1481, %v1479
          %v1536 = vpack.c.b16 %v1484, %v1482
          %v1537 = vpack.c.b16 %v1485, %v1483
          %v1538 = vpack.c.b16 %v1488, %v1486
          %v1539 = vpack.c.b16 %v1489, %v1487
          %v1540 = vpack.c.b16 %v1492, %v1490
          %v1541 = vpack.c.b16 %v1493, %v1491
          %v1542 = vpack.c.b16 %v1496, %v1494
          %v1543 = vpack.c.b16 %v1497, %v1495
          %v1544 = vpack.c.b16 %v1500, %v1498
          %v1545 = vpack.c.b16 %v1501, %v1499
          %v1546 = vpack.c.b16 %v1504, %v1502
          %v1547 = vpack.c.b16 %v1505, %v1503
          %v1548 = vpack.c.b16 %v1508, %v1506
          %v1549 = vpack.c.b16 %v1509, %v1507
          %v1550 = vpack.c.b16 %v1512, %v1510
          %v1551 = vpack.c.b16 %v1513, %v1511
          %v1552 = vpack.c.b16 %v1516, %v1514
          %v1553 = vpack.c.b16 %v1517, %v1515
          %v1554 = vpack.c.b16 %v1520, %v1518
          %v1555 = vpack.c.b16 %v1521, %v1519
          %v1556 = vpack.c.b16 %v1524, %v1522
          %v1557 = vpack.c.b16 %v1525, %v1523
          %1590 = vmatprep.subr.bf16.mxu0 %v1527
          %1591 = vmatpush1.bf16.msra.mxu0 %v1526
          %1592 = vmatprep.subr.bf16.mxu0 %v1529
          %1593 = vmatpush1.bf16.msra.mxu0 %v1528
          %1594 = vmatprep.subr.bf16.mxu0 %v1531
          %1595 = vmatpush1.bf16.msra.mxu0 %v1530
          %1596 = vmatprep.subr.bf16.mxu0 %v1533
          %1597 = vmatpush1.bf16.msra.mxu0 %v1532
          %1598 = vmatprep.subr.bf16.mxu0 %v1535
          %1599 = vmatpush1.bf16.msra.mxu0 %v1534
          %1600 = vmatprep.subr.bf16.mxu0 %v1537
          %1601 = vmatpush1.bf16.msra.mxu0 %v1536
          %1602 = vmatprep.subr.bf16.mxu0 %v1539
          %1603 = vmatpush1.bf16.msra.mxu0 %v1538
          %1604 = vmatprep.subr.bf16.mxu0 %v1541
          %1605 = vmatpush1.bf16.msra.mxu0 %v1540
          %1606 = vmatprep.subr.bf16.mxu0 %v1543
          %1607 = vmatpush1.bf16.msra.mxu0 %v1542
          %1608 = vmatprep.subr.bf16.mxu0 %v1545
          %1609 = vmatpush1.bf16.msra.mxu0 %v1544
          %1610 = vmatprep.subr.bf16.mxu0 %v1547
          %1611 = vmatpush1.bf16.msra.mxu0 %v1546
          %1612 = vmatprep.subr.bf16.mxu0 %v1549
          %1613 = vmatpush1.bf16.msra.mxu0 %v1548
          %1614 = vmatprep.subr.bf16.mxu0 %v1551
          %1615 = vmatpush1.bf16.msra.mxu0 %v1550
          %1616 = vmatprep.subr.bf16.mxu0 %v1553
          %1617 = vmatpush1.bf16.msra.mxu0 %v1552
          %1618 = vmatprep.subr.bf16.mxu0 %v1555
          %1619 = vmatpush1.bf16.msra.mxu0 %v1554
          %1620 = vmatprep.subr.bf16.mxu0 %v1557
          %1621 = vmatpush1.bf16.msra.mxu0 %v1556
          %1622 = vmatprep.mubr.bf16.mxu0 %v1138
          %1623 = vmatmul.mubr.bf16.gmra.mrb[0].mxu0 %v1137
          %v1624 = vpop.f32.mrb[0].mxu0
          %v1625 = vadd.f32 %v1423, %v1624
          %v1626 = vpop.f32.mrb[0].mxu0
          %v1627 = vadd.f32 %v1427, %v1626
          %v1628 = vpop.f32.mrb[0].mxu0
          %v1629 = vadd.f32 %v1423, %v1628
          %v1630 = vpop.f32.mrb[0].mxu0
          %v1631 = vadd.f32 %v1427, %v1630
          %1632 = vdwg.mxu0
          %v1633 = vpack.c.bf16 %v1382, %v1378
          %v1634 = vpack.c.bf16 %v1384, %v1380
          %1635 = vst [vmem:[#allocation2] sm:$0xff] %v1633
          %1636 = vst [vmem:[#allocation2 + $0x8] sm:$0xff] %v1634
          %v1637 = vpack.c.bf16 %v1629, %v1625
          %v1638 = vpack.c.bf16 %v1631, %v1627
          %1639 = vst [vmem:[#allocation3] sm:$0xff] %v1637
          %1640 = vst [vmem:[#allocation3 + $0x8] sm:$0xff] %v1638
        $region152: #{tpu_custom_call.1} parent=107 // pred_fallthru
          _
        %v1641 = vld [vmem:[%s770] sm:$0xff]
        %v1642 = vld [vmem:[%s770 + $0x8] sm:$0xff]
        %v1643 = vld [vmem:[%s770 + $0x10] sm:$0xff]
        %v1644 = vld [vmem:[%s770 + $0x18] sm:$0xff]
        %v1645 = vlaneseq
        %v1646 = vand.u32 %v1645, 127
        %v1647 = vadd.s32 %v1646, 128
        %vm1648 = vcmp.lt.s32.totalorder %v1646, 200
        %vm1649 = vcmp.lt.s32.totalorder %v1647, 200
        %v1650 = vsel %vm1648, 1, 0
        %v1651 = vsel %vm1649, 1, 0
        %v1652 = vcvt.s32.f32 %v1650
        %v1653 = vcvt.s32.f32 %v1651
        %v1654 = vpack.c.bf16 %v1643, %v1641
        %v1655 = vpack.c.bf16 %v1644, %v1642
        %v1656 = vld [vmem:[#allocation10] sm:$0xff]
        %v1657 = vld [vmem:[#allocation10 + $0x8] sm:$0xff]
        %v1658 = vld [vmem:[#allocation10 + $0x10] sm:$0xff]
        %v1659 = vld [vmem:[#allocation10 + $0x18] sm:$0xff]
        %v1660 = vld [vmem:[#allocation10 + $0x20] sm:$0xff]
        %v1661 = vld [vmem:[#allocation10 + $0x28] sm:$0xff]
        %v1662 = vld [vmem:[#allocation10 + $0x30] sm:$0xff]
        %v1663 = vld [vmem:[#allocation10 + $0x38] sm:$0xff]
        %v1664 = vld [vmem:[#allocation10 + $0x40] sm:$0xff]
        %v1665 = vld [vmem:[#allocation10 + $0x48] sm:$0xff]
        %v1666 = vld [vmem:[#allocation10 + $0x50] sm:$0xff]
        %v1667 = vld [vmem:[#allocation10 + $0x58] sm:$0xff]
        %v1668 = vld [vmem:[#allocation10 + $0x60] sm:$0xff]
        %v1669 = vld [vmem:[#allocation10 + $0x68] sm:$0xff]
        %v1670 = vld [vmem:[#allocation10 + $0x70] sm:$0xff]
        %v1671 = vld [vmem:[#allocation10 + $0x78] sm:$0xff]
        %v1672 = vld [vmem:[#allocation10 + $0x80] sm:$0xff]
        %v1673 = vld [vmem:[#allocation10 + $0x88] sm:$0xff]
        %v1674 = vld [vmem:[#allocation10 + $0x90] sm:$0xff]
        %v1675 = vld [vmem:[#allocation10 + $0x98] sm:$0xff]
        %v1676 = vld [vmem:[#allocation10 + $0xa0] sm:$0xff]
        %v1677 = vld [vmem:[#allocation10 + $0xa8] sm:$0xff]
        %v1678 = vld [vmem:[#allocation10 + $0xb0] sm:$0xff]
        %v1679 = vld [vmem:[#allocation10 + $0xb8] sm:$0xff]
        %v1680 = vld [vmem:[#allocation10 + $0xc0] sm:$0xff]
        %v1681 = vld [vmem:[#allocation10 + $0xc8] sm:$0xff]
        %v1682 = vld [vmem:[#allocation10 + $0xd0] sm:$0xff]
        %v1683 = vld [vmem:[#allocation10 + $0xd8] sm:$0xff]
        %v1684 = vld [vmem:[#allocation10 + $0xe0] sm:$0xff]
        %v1685 = vld [vmem:[#allocation10 + $0xe8] sm:$0xff]
        %v1686 = vld [vmem:[#allocation10 + $0xf0] sm:$0xff]
        %v1687 = vld [vmem:[#allocation10 + $0xf8] sm:$0xff]
        %v1688 = vld [vmem:[%s3] sm:$0x3]
        %v1690 = vlaneseq
        %v1691 = vshrl.u32 %v1690, 7
        %v1692 = vsub.s32 0, %v1691
        %v1693 = vrot.slane %v1688, %v1692
        %v1694 = vlaneseq
        %v1695 = vshrl.u32 %v1694, 7
        %v1696 = vsub.s32 1, %v1695
        %v1697 = vrot.slane %v1688, %v1696
        %v1732 = vunpack.c.l.b16 %v1656
        %v1733 = vunpack.c.h.b16 %v1656
        %v1734 = vunpack.c.l.b16 %v1657
        %v1735 = vunpack.c.h.b16 %v1657
        %v1736 = vunpack.c.l.b16 %v1658
        %v1737 = vunpack.c.h.b16 %v1658
        %v1738 = vunpack.c.l.b16 %v1659
        %v1739 = vunpack.c.h.b16 %v1659
        %v1740 = vunpack.c.l.b16 %v1660
        %v1741 = vunpack.c.h.b16 %v1660
        %v1742 = vunpack.c.l.b16 %v1661
        %v1743 = vunpack.c.h.b16 %v1661
        %v1744 = vunpack.c.l.b16 %v1662
        %v1745 = vunpack.c.h.b16 %v1662
        %v1746 = vunpack.c.l.b16 %v1663
        %v1747 = vunpack.c.h.b16 %v1663
        %v1748 = vunpack.c.l.b16 %v1664
        %v1749 = vunpack.c.h.b16 %v1664
        %v1750 = vunpack.c.l.b16 %v1665
        %v1751 = vunpack.c.h.b16 %v1665
        %v1752 = vunpack.c.l.b16 %v1666
        %v1753 = vunpack.c.h.b16 %v1666
        %v1754 = vunpack.c.l.b16 %v1667
        %v1755 = vunpack.c.h.b16 %v1667
        %v1756 = vunpack.c.l.b16 %v1668
        %v1757 = vunpack.c.h.b16 %v1668
        %v1758 = vunpack.c.l.b16 %v1669
        %v1759 = vunpack.c.h.b16 %v1669
        %v1760 = vunpack.c.l.b16 %v1670
        %v1761 = vunpack.c.h.b16 %v1670
        %v1762 = vunpack.c.l.b16 %v1671
        %v1763 = vunpack.c.h.b16 %v1671
        %v1764 = vunpack.c.l.b16 %v1672
        %v1765 = vunpack.c.h.b16 %v1672
        %v1766 = vunpack.c.l.b16 %v1673
        %v1767 = vunpack.c.h.b16 %v1673
        %v1768 = vunpack.c.l.b16 %v1674
        %v1769 = vunpack.c.h.b16 %v1674
        %v1770 = vunpack.c.l.b16 %v1675
        %v1771 = vunpack.c.h.b16 %v1675
        %v1772 = vunpack.c.l.b16 %v1676
        %v1773 = vunpack.c.h.b16 %v1676
        %v1774 = vunpack.c.l.b16 %v1677
        %v1775 = vunpack.c.h.b16 %v1677
        %v1776 = vunpack.c.l.b16 %v1678
        %v1777 = vunpack.c.h.b16 %v1678
        %v1778 = vunpack.c.l.b16 %v1679
        %v1779 = vunpack.c.h.b16 %v1679
        %v1780 = vunpack.c.l.b16 %v1680
        %v1781 = vunpack.c.h.b16 %v1680
        %v1782 = vunpack.c.l.b16 %v1681
        %v1783 = vunpack.c.h.b16 %v1681
        %v1784 = vunpack.c.l.b16 %v1682
        %v1785 = vunpack.c.h.b16 %v1682
        %v1786 = vunpack.c.l.b16 %v1683
        %v1787 = vunpack.c.h.b16 %v1683
        %v1788 = vunpack.c.l.b16 %v1684
        %v1789 = vunpack.c.h.b16 %v1684
        %v1790 = vunpack.c.l.b16 %v1685
        %v1791 = vunpack.c.h.b16 %v1685
        %v1792 = vunpack.c.l.b16 %v1686
        %v1793 = vunpack.c.h.b16 %v1686
        %v1794 = vunpack.c.l.b16 %v1687
        %v1795 = vunpack.c.h.b16 %v1687
        %v1796 = vpack.c.b16 %v1734, %v1732
        %v1797 = vpack.c.b16 %v1735, %v1733
        %v1798 = vpack.c.b16 %v1738, %v1736
        %v1799 = vpack.c.b16 %v1739, %v1737
        %v1800 = vpack.c.b16 %v1742, %v1740
        %v1801 = vpack.c.b16 %v1743, %v1741
        %v1802 = vpack.c.b16 %v1746, %v1744
        %v1803 = vpack.c.b16 %v1747, %v1745
        %v1804 = vpack.c.b16 %v1750, %v1748
        %v1805 = vpack.c.b16 %v1751, %v1749
        %v1806 = vpack.c.b16 %v1754, %v1752
        %v1807 = vpack.c.b16 %v1755, %v1753
        %v1808 = vpack.c.b16 %v1758, %v1756
        %v1809 = vpack.c.b16 %v1759, %v1757
        %v1810 = vpack.c.b16 %v1762, %v1760
        %v1811 = vpack.c.b16 %v1763, %v1761
        %v1812 = vpack.c.b16 %v1766, %v1764
        %v1813 = vpack.c.b16 %v1767, %v1765
        %v1814 = vpack.c.b16 %v1770, %v1768
        %v1815 = vpack.c.b16 %v1771, %v1769
        %v1816 = vpack.c.b16 %v1774, %v1772
        %v1817 = vpack.c.b16 %v1775, %v1773
        %v1818 = vpack.c.b16 %v1778, %v1776
        %v1819 = vpack.c.b16 %v1779, %v1777
        %v1820 = vpack.c.b16 %v1782, %v1780
        %v1821 = vpack.c.b16 %v1783, %v1781
        %v1822 = vpack.c.b16 %v1786, %v1784
        %v1823 = vpack.c.b16 %v1787, %v1785
        %v1824 = vpack.c.b16 %v1790, %v1788
        %v1825 = vpack.c.b16 %v1791, %v1789
        %v1826 = vpack.c.b16 %v1794, %v1792
        %v1827 = vpack.c.b16 %v1795, %v1793
        %1860 = vmatprep.subr.bf16.mxu0 %v1797
        %1861 = vmatpush1.bf16.msra.mxu0 %v1796
        %1862 = vmatprep.subr.bf16.mxu0 %v1799
        %1863 = vmatpush1.bf16.msra.mxu0 %v1798
        %1864 = vmatprep.subr.bf16.mxu0 %v1801
        %1865 = vmatpush1.bf16.msra.mxu0 %v1800
        %1866 = vmatprep.subr.bf16.mxu0 %v1803
        %1867 = vmatpush1.bf16.msra.mxu0 %v1802
        %1868 = vmatprep.subr.bf16.mxu0 %v1805
        %1869 = vmatpush1.bf16.msra.mxu0 %v1804
        %1870 = vmatprep.subr.bf16.mxu0 %v1807
        %1871 = vmatpush1.bf16.msra.mxu0 %v1806
        %1872 = vmatprep.subr.bf16.mxu0 %v1809
        %1873 = vmatpush1.bf16.msra.mxu0 %v1808
        %1874 = vmatprep.subr.bf16.mxu0 %v1811
        %1875 = vmatpush1.bf16.msra.mxu0 %v1810
        %1876 = vmatprep.subr.bf16.mxu0 %v1813
        %1877 = vmatpush1.bf16.msra.mxu0 %v1812
        %1878 = vmatprep.subr.bf16.mxu0 %v1815
        %1879 = vmatpush1.bf16.msra.mxu0 %v1814
        %1880 = vmatprep.subr.bf16.mxu0 %v1817
        %1881 = vmatpush1.bf16.msra.mxu0 %v1816
        %1882 = vmatprep.subr.bf16.mxu0 %v1819
        %1883 = vmatpush1.bf16.msra.mxu0 %v1818
        %1884 = vmatprep.subr.bf16.mxu0 %v1821
        %1885 = vmatpush1.bf16.msra.mxu0 %v1820
        %1886 = vmatprep.subr.bf16.mxu0 %v1823
        %1887 = vmatpush1.bf16.msra.mxu0 %v1822
        %1888 = vmatprep.subr.bf16.mxu0 %v1825
        %1889 = vmatpush1.bf16.msra.mxu0 %v1824
        %1890 = vmatprep.subr.bf16.mxu0 %v1827
        %1891 = vmatpush1.bf16.msra.mxu0 %v1826
        %1892 = vmatprep.mubr.bf16.mxu0 %v1655
        %1893 = vmatmul.mubr.bf16.gmra.mrb[0].mxu0 %v1654
        %v1894 = vpop.f32.mrb[0].mxu0
        %v1895 = vadd.f32 %v1693, %v1894
        %v1896 = vpop.f32.mrb[0].mxu0
        %v1897 = vadd.f32 %v1697, %v1896
        %v1898 = vpop.f32.mrb[0].mxu0
        %v1899 = vadd.f32 %v1693, %v1898
        %v1900 = vpop.f32.mrb[0].mxu0
        %v1901 = vadd.f32 %v1697, %v1900
        %1902 = vdwg.mxu0
        %v1903 = vpack.c.bf16 %v1899, %v1895
        %v1904 = vpack.c.bf16 %v1901, %v1897
        %v1905 = vld [vmem:[#allocation13] sm:$0xff]
        %v1906 = vld [vmem:[#allocation13 + $0x8] sm:$0xff]
        %v1907 = vld [vmem:[#allocation13 + $0x10] sm:$0xff]
        %v1908 = vld [vmem:[#allocation13 + $0x18] sm:$0xff]
        %v1909 = vld [vmem:[#allocation13 + $0x20] sm:$0xff]
        %v1910 = vld [vmem:[#allocation13 + $0x28] sm:$0xff]
        %v1911 = vld [vmem:[#allocation13 + $0x30] sm:$0xff]
        %v1912 = vld [vmem:[#allocation13 + $0x38] sm:$0xff]
        %v1913 = vld [vmem:[#allocation13 + $0x40] sm:$0xff]
        %v1914 = vld [vmem:[#allocation13 + $0x48] sm:$0xff]
        %v1915 = vld [vmem:[#allocation13 + $0x50] sm:$0xff]
        %v1916 = vld [vmem:[#allocation13 + $0x58] sm:$0xff]
        %v1917 = vld [vmem:[#allocation13 + $0x60] sm:$0xff]
        %v1918 = vld [vmem:[#allocation13 + $0x68] sm:$0xff]
        %v1919 = vld [vmem:[#allocation13 + $0x70] sm:$0xff]
        %v1920 = vld [vmem:[#allocation13 + $0x78] sm:$0xff]
        %v1921 = vld [vmem:[#allocation13 + $0x80] sm:$0xff]
        %v1922 = vld [vmem:[#allocation13 + $0x88] sm:$0xff]
        %v1923 = vld [vmem:[#allocation13 + $0x90] sm:$0xff]
        %v1924 = vld [vmem:[#allocation13 + $0x98] sm:$0xff]
        %v1925 = vld [vmem:[#allocation13 + $0xa0] sm:$0xff]
        %v1926 = vld [vmem:[#allocation13 + $0xa8] sm:$0xff]
        %v1927 = vld [vmem:[#allocation13 + $0xb0] sm:$0xff]
        %v1928 = vld [vmem:[#allocation13 + $0xb8] sm:$0xff]
        %v1929 = vld [vmem:[#allocation13 + $0xc0] sm:$0xff]
        %v1930 = vld [vmem:[#allocation13 + $0xc8] sm:$0xff]
        %v1931 = vld [vmem:[#allocation13 + $0xd0] sm:$0xff]
        %v1932 = vld [vmem:[#allocation13 + $0xd8] sm:$0xff]
        %v1933 = vld [vmem:[#allocation13 + $0xe0] sm:$0xff]
        %v1934 = vld [vmem:[#allocation13 + $0xe8] sm:$0xff]
        %v1935 = vld [vmem:[#allocation13 + $0xf0] sm:$0xff]
        %v1936 = vld [vmem:[#allocation13 + $0xf8] sm:$0xff]
        %v1937 = vld [vmem:[%s7] sm:$0x3]
        %v1939 = vlaneseq
        %v1940 = vshrl.u32 %v1939, 7
        %v1941 = vsub.s32 0, %v1940
        %v1942 = vrot.slane %v1937, %v1941
        %v1943 = vlaneseq
        %v1944 = vshrl.u32 %v1943, 7
        %v1945 = vsub.s32 1, %v1944
        %v1946 = vrot.slane %v1937, %v1945
        %v1981 = vunpack.c.l.b16 %v1905
        %v1982 = vunpack.c.h.b16 %v1905
        %v1983 = vunpack.c.l.b16 %v1906
        %v1984 = vunpack.c.h.b16 %v1906
        %v1985 = vunpack.c.l.b16 %v1907
        %v1986 = vunpack.c.h.b16 %v1907
        %v1987 = vunpack.c.l.b16 %v1908
        %v1988 = vunpack.c.h.b16 %v1908
        %v1989 = vunpack.c.l.b16 %v1909
        %v1990 = vunpack.c.h.b16 %v1909
        %v1991 = vunpack.c.l.b16 %v1910
        %v1992 = vunpack.c.h.b16 %v1910
        %v1993 = vunpack.c.l.b16 %v1911
        %v1994 = vunpack.c.h.b16 %v1911
        %v1995 = vunpack.c.l.b16 %v1912
        %v1996 = vunpack.c.h.b16 %v1912
        %v1997 = vunpack.c.l.b16 %v1913
        %v1998 = vunpack.c.h.b16 %v1913
        %v1999 = vunpack.c.l.b16 %v1914
        %v2000 = vunpack.c.h.b16 %v1914
        %v2001 = vunpack.c.l.b16 %v1915
        %v2002 = vunpack.c.h.b16 %v1915
        %v2003 = vunpack.c.l.b16 %v1916
        %v2004 = vunpack.c.h.b16 %v1916
        %v2005 = vunpack.c.l.b16 %v1917
        %v2006 = vunpack.c.h.b16 %v1917
        %v2007 = vunpack.c.l.b16 %v1918
        %v2008 = vunpack.c.h.b16 %v1918
        %v2009 = vunpack.c.l.b16 %v1919
        %v2010 = vunpack.c.h.b16 %v1919
        %v2011 = vunpack.c.l.b16 %v1920
        %v2012 = vunpack.c.h.b16 %v1920
        %v2013 = vunpack.c.l.b16 %v1921
        %v2014 = vunpack.c.h.b16 %v1921
        %v2015 = vunpack.c.l.b16 %v1922
        %v2016 = vunpack.c.h.b16 %v1922
        %v2017 = vunpack.c.l.b16 %v1923
        %v2018 = vunpack.c.h.b16 %v1923
        %v2019 = vunpack.c.l.b16 %v1924
        %v2020 = vunpack.c.h.b16 %v1924
        %v2021 = vunpack.c.l.b16 %v1925
        %v2022 = vunpack.c.h.b16 %v1925
        %v2023 = vunpack.c.l.b16 %v1926
        %v2024 = vunpack.c.h.b16 %v1926
        %v2025 = vunpack.c.l.b16 %v1927
        %v2026 = vunpack.c.h.b16 %v1927
        %v2027 = vunpack.c.l.b16 %v1928
        %v2028 = vunpack.c.h.b16 %v1928
        %v2029 = vunpack.c.l.b16 %v1929
        %v2030 = vunpack.c.h.b16 %v1929
        %v2031 = vunpack.c.l.b16 %v1930
        %v2032 = vunpack.c.h.b16 %v1930
        %v2033 = vunpack.c.l.b16 %v1931
        %v2034 = vunpack.c.h.b16 %v1931
        %v2035 = vunpack.c.l.b16 %v1932
        %v2036 = vunpack.c.h.b16 %v1932
        %v2037 = vunpack.c.l.b16 %v1933
        %v2038 = vunpack.c.h.b16 %v1933
        %v2039 = vunpack.c.l.b16 %v1934
        %v2040 = vunpack.c.h.b16 %v1934
        %v2041 = vunpack.c.l.b16 %v1935
        %v2042 = vunpack.c.h.b16 %v1935
        %v2043 = vunpack.c.l.b16 %v1936
        %v2044 = vunpack.c.h.b16 %v1936
        %v2045 = vpack.c.b16 %v1983, %v1981
        %v2046 = vpack.c.b16 %v1984, %v1982
        %v2047 = vpack.c.b16 %v1987, %v1985
        %v2048 = vpack.c.b16 %v1988, %v1986
        %v2049 = vpack.c.b16 %v1991, %v1989
        %v2050 = vpack.c.b16 %v1992, %v1990
        %v2051 = vpack.c.b16 %v1995, %v1993
        %v2052 = vpack.c.b16 %v1996, %v1994
        %v2053 = vpack.c.b16 %v1999, %v1997
        %v2054 = vpack.c.b16 %v2000, %v1998
        %v2055 = vpack.c.b16 %v2003, %v2001
        %v2056 = vpack.c.b16 %v2004, %v2002
        %v2057 = vpack.c.b16 %v2007, %v2005
        %v2058 = vpack.c.b16 %v2008, %v2006
        %v2059 = vpack.c.b16 %v2011, %v2009
        %v2060 = vpack.c.b16 %v2012, %v2010
        %v2061 = vpack.c.b16 %v2015, %v2013
        %v2062 = vpack.c.b16 %v2016, %v2014
        %v2063 = vpack.c.b16 %v2019, %v2017
        %v2064 = vpack.c.b16 %v2020, %v2018
        %v2065 = vpack.c.b16 %v2023, %v2021
        %v2066 = vpack.c.b16 %v2024, %v2022
        %v2067 = vpack.c.b16 %v2027, %v2025
        %v2068 = vpack.c.b16 %v2028, %v2026
        %v2069 = vpack.c.b16 %v2031, %v2029
        %v2070 = vpack.c.b16 %v2032, %v2030
        %v2071 = vpack.c.b16 %v2035, %v2033
        %v2072 = vpack.c.b16 %v2036, %v2034
        %v2073 = vpack.c.b16 %v2039, %v2037
        %v2074 = vpack.c.b16 %v2040, %v2038
        %v2075 = vpack.c.b16 %v2043, %v2041
        %v2076 = vpack.c.b16 %v2044, %v2042
        %2109 = vmatprep.subr.bf16.mxu0 %v2046
        %2110 = vmatpush1.bf16.msra.mxu0 %v2045
        %2111 = vmatprep.subr.bf16.mxu0 %v2048
        %2112 = vmatpush1.bf16.msra.mxu0 %v2047
        %2113 = vmatprep.subr.bf16.mxu0 %v2050
        %2114 = vmatpush1.bf16.msra.mxu0 %v2049
        %2115 = vmatprep.subr.bf16.mxu0 %v2052
        %2116 = vmatpush1.bf16.msra.mxu0 %v2051
        %2117 = vmatprep.subr.bf16.mxu0 %v2054
        %2118 = vmatpush1.bf16.msra.mxu0 %v2053
        %2119 = vmatprep.subr.bf16.mxu0 %v2056
        %2120 = vmatpush1.bf16.msra.mxu0 %v2055
        %2121 = vmatprep.subr.bf16.mxu0 %v2058
        %2122 = vmatpush1.bf16.msra.mxu0 %v2057
        %2123 = vmatprep.subr.bf16.mxu0 %v2060
        %2124 = vmatpush1.bf16.msra.mxu0 %v2059
        %2125 = vmatprep.subr.bf16.mxu0 %v2062
        %2126 = vmatpush1.bf16.msra.mxu0 %v2061
        %2127 = vmatprep.subr.bf16.mxu0 %v2064
        %2128 = vmatpush1.bf16.msra.mxu0 %v2063
        %2129 = vmatprep.subr.bf16.mxu0 %v2066
        %2130 = vmatpush1.bf16.msra.mxu0 %v2065
        %2131 = vmatprep.subr.bf16.mxu0 %v2068
        %2132 = vmatpush1.bf16.msra.mxu0 %v2067
        %2133 = vmatprep.subr.bf16.mxu0 %v2070
        %2134 = vmatpush1.bf16.msra.mxu0 %v2069
        %2135 = vmatprep.subr.bf16.mxu0 %v2072
        %2136 = vmatpush1.bf16.msra.mxu0 %v2071
        %2137 = vmatprep.subr.bf16.mxu0 %v2074
        %2138 = vmatpush1.bf16.msra.mxu0 %v2073
        %2139 = vmatprep.subr.bf16.mxu0 %v2076
        %2140 = vmatpush1.bf16.msra.mxu0 %v2075
        %2141 = vmatprep.mubr.bf16.mxu0 %v1904
        %2142 = vmatmul.mubr.bf16.gmra.mrb[0].mxu0 %v1903
        %v2143 = vpop.f32.mrb[0].mxu0
        %v2144 = vadd.f32 %v1942, %v2143
        %v2145 = vpop.f32.mrb[0].mxu0
        %v2146 = vadd.f32 %v1946, %v2145
        %v2147 = vpop.f32.mrb[0].mxu0
        %v2148 = vadd.f32 %v1942, %v2147
        %v2149 = vpop.f32.mrb[0].mxu0
        %v2150 = vadd.f32 %v1946, %v2149
        %2151 = vdwg.mxu0
        %v2152 = vmul.f32 %v2144, 0.088388346
        %v2153 = vmul.f32 %v2146, 0.088388346
        %v2154 = vmul.f32 %v2148, 0.088388346
        %v2155 = vmul.f32 %v2150, 0.088388346
        %v2156 = vpack.c.bf16 %v2154, %v2152
        %v2157 = vpack.c.bf16 %v2155, %v2153
        %v2158 = vld [vmem:[#allocation2] sm:$0xff]
        %v2159 = vld [vmem:[#allocation2 + $0x8] sm:$0xff]
        %v2160 = vld [vmem:[#allocation3] sm:$0xff]
        %v2161 = vld [vmem:[#allocation3 + $0x8] sm:$0xff]
        %2162 = vmatprep.subr.bf16.mxu0 0
        %2163 = vmatpush1.bf16.xpose.msra.mxu0 %v2158
        %2164 = vmatprep.subr.bf16.mxu0 0
        %2165 = vmatpush1.bf16.xpose.msra.mxu0 0
        %2166 = vmatprep.subr.bf16.mxu0 0
        %2167 = vmatpush1.bf16.xpose.msra.mxu0 0
        %2168 = vmatprep.subr.bf16.mxu0 0
        %2169 = vmatpush1.bf16.xpose.msra.mxu0 0
        %2170 = vmatprep.subr.bf16.mxu0 0
        %2171 = vmatpush1.bf16.xpose.msra.mxu0 0
        %2172 = vmatprep.subr.bf16.mxu0 0
        %2173 = vmatpush1.bf16.xpose.msra.mxu0 0
        %2174 = vmatprep.subr.bf16.mxu0 0
        %2175 = vmatpush1.bf16.xpose.msra.mxu0 0
        %2176 = vmatprep.subr.bf16.mxu0 0
        %2177 = vmatpush1.bf16.xpose.msra.mxu0 0
        %2178 = vmatprep.subr.bf16.mxu0 0
        %2179 = vmatpush1.bf16.xpose.msra.mxu0 0
        %2180 = vmatprep.subr.bf16.mxu0 0
        %2181 = vmatpush1.bf16.xpose.msra.mxu0 0
        %2182 = vmatprep.subr.bf16.mxu0 0
        %2183 = vmatpush1.bf16.xpose.msra.mxu0 0
        %2184 = vmatprep.subr.bf16.mxu0 0
        %2185 = vmatpush1.bf16.xpose.msra.mxu0 0
        %2186 = vmatprep.subr.bf16.mxu0 0
        %2187 = vmatpush1.bf16.xpose.msra.mxu0 0
        %2188 = vmatprep.subr.bf16.mxu0 0
        %2189 = vmatpush1.bf16.xpose.msra.mxu0 0
        %2190 = vmatprep.subr.bf16.mxu0 0
        %2191 = vmatpush1.bf16.xpose.msra.mxu0 0
        %2192 = vmatprep.subr.bf16.mxu0 0
        %2193 = vmatpush1.bf16.xpose.msra.mxu0 0
        %2194 = vmatprep.mubr.bf16.mxu0 0
        %2195 = vmatmul.mubr.bf16.gmra.mrb[0].mxu0 %v2156
        %v2196 = vpop.f32.mrb[0].mxu0
        %v2197 = vadd.f32 0.0, %v2196
        %v2198 = vpop.f32.mrb[0].mxu0
        %v2199 = vpop.f32.mrb[0].mxu0
        %v2200 = vadd.f32 0.0, %v2199
        %v2201 = vpop.f32.mrb[0].mxu0
        %2202 = vdwg.mxu0
        %vm2203 = vcmask 130048
        %v2204 = vsel %vm2203, %v2197, -inf
        %2205 = vmax.xlane.f32.xlu0 %v2204
        %v2206 = vpop.xlane.xlu0 %2205
        %v2207 = vsel %vm2203, %v2200, -inf
        %2208 = vmax.xlane.f32.xlu0 %v2207
        %v2209 = vpop.xlane.xlu0 %2208
        %v2210 = vsub.f32 %v2197, %v2206
        %v2211 = vsub.f32 %v2200, %v2209
        %v2212 = vmul.f32 %v2210, 1.442695
        %v2213 = vpow.pop %v2212
        %v2214 = vmul.f32 %v2211, 1.442695
        %v2215 = vpow.pop %v2214
        %v2216 = vsel %vm2203, %v2213, 0.0
        %2217 = vadd.xlane.f32.xlu0 %v2216
        %v2218 = vpop.xlane.xlu0 %2217
        %v2219 = vsel %vm2203, %v2215, 0.0
        %2220 = vadd.xlane.f32.xlu0 %v2219
        %v2221 = vpop.xlane.xlu0 %2220
        %v2222 = vrcp.pop %v2218
        %v2223 = vmul.f32 %v2213, %v2222
        %v2224 = vrcp.pop %v2221
        %v2225 = vmul.f32 %v2215, %v2224
        %v2226 = vpack.c.bf16 %v2225, %v2223
        %v2228 = vsel %vm2203, %v2226, 0
        %2230 = vmatprep.subr.bf16.mxu0 0
        %2231 = vmatpush1.bf16.msra.mxu0 %v2160
        %2232 = vmatprep.subr.bf16.mxu0 0
        %2233 = vmatpush1.bf16.msra.mxu0 0
        %2234 = vmatprep.subr.bf16.mxu0 0
        %2235 = vmatpush1.bf16.msra.mxu0 0
        %2236 = vmatprep.subr.bf16.mxu0 0
        %2237 = vmatpush1.bf16.msra.mxu0 0
        %2238 = vmatprep.subr.bf16.mxu0 0
        %2239 = vmatpush1.bf16.msra.mxu0 0
        %2240 = vmatprep.subr.bf16.mxu0 0
        %2241 = vmatpush1.bf16.msra.mxu0 0
        %2242 = vmatprep.subr.bf16.mxu0 0
        %2243 = vmatpush1.bf16.msra.mxu0 0
        %2244 = vmatprep.subr.bf16.mxu0 0
        %2245 = vmatpush1.bf16.msra.mxu0 0
        %2246 = vmatprep.subr.bf16.mxu0 0
        %2247 = vmatpush1.bf16.msra.mxu0 0
        %2248 = vmatprep.subr.bf16.mxu0 0
        %2249 = vmatpush1.bf16.msra.mxu0 0
        %2250 = vmatprep.subr.bf16.mxu0 0
        %2251 = vmatpush1.bf16.msra.mxu0 0
        %2252 = vmatprep.subr.bf16.mxu0 0
        %2253 = vmatpush1.bf16.msra.mxu0 0
        %2254 = vmatprep.subr.bf16.mxu0 0
        %2255 = vmatpush1.bf16.msra.mxu0 0
        %2256 = vmatprep.subr.bf16.mxu0 0
        %2257 = vmatpush1.bf16.msra.mxu0 0
        %2258 = vmatprep.subr.bf16.mxu0 0
        %2259 = vmatpush1.bf16.msra.mxu0 0
        %2260 = vmatprep.subr.bf16.mxu0 0
        %2261 = vmatpush1.bf16.msra.mxu0 0
        %2262 = vmatprep.mubr.bf16.mxu0 0
        %2263 = vmatmul.mubr.bf16.gmra.mrb[0].mxu0 %v2228
        %v2264 = vpop.f32.mrb[0].mxu0
        %v2265 = vadd.f32 0.0, %v2264
        %v2266 = vpop.f32.mrb[0].mxu0
        %v2267 = vpop.f32.mrb[0].mxu0
        %v2268 = vadd.f32 0.0, %v2267
        %v2269 = vpop.f32.mrb[0].mxu0
        %2270 = vdwg.mxu0
        %v2271 = vpack.c.bf16 %v2268, %v2265
        %2272 = vst [vmem:[#allocation4] sm:$0xff] %v2271
        %2273 = vmatprep.subr.bf16.mxu0 0
        %2274 = vmatpush1.bf16.xpose.msra.mxu0 %v2159
        %2275 = vmatprep.subr.bf16.mxu0 0
        %2276 = vmatpush1.bf16.xpose.msra.mxu0 0
        %2277 = vmatprep.subr.bf16.mxu0 0
        %2278 = vmatpush1.bf16.xpose.msra.mxu0 0
        %2279 = vmatprep.subr.bf16.mxu0 0
        %2280 = vmatpush1.bf16.xpose.msra.mxu0 0
        %2281 = vmatprep.subr.bf16.mxu0 0
        %2282 = vmatpush1.bf16.xpose.msra.mxu0 0
        %2283 = vmatprep.subr.bf16.mxu0 0
        %2284 = vmatpush1.bf16.xpose.msra.mxu0 0
        %2285 = vmatprep.subr.bf16.mxu0 0
        %2286 = vmatpush1.bf16.xpose.msra.mxu0 0
        %2287 = vmatprep.subr.bf16.mxu0 0
        %2288 = vmatpush1.bf16.xpose.msra.mxu0 0
        %2289 = vmatprep.subr.bf16.mxu0 0
        %2290 = vmatpush1.bf16.xpose.msra.mxu0 0
        %2291 = vmatprep.subr.bf16.mxu0 0
        %2292 = vmatpush1.bf16.xpose.msra.mxu0 0
        %2293 = vmatprep.subr.bf16.mxu0 0
        %2294 = vmatpush1.bf16.xpose.msra.mxu0 0
        %2295 = vmatprep.subr.bf16.mxu0 0
        %2296 = vmatpush1.bf16.xpose.msra.mxu0 0
        %2297 = vmatprep.subr.bf16.mxu0 0
        %2298 = vmatpush1.bf16.xpose.msra.mxu0 0
        %2299 = vmatprep.subr.bf16.mxu0 0
        %2300 = vmatpush1.bf16.xpose.msra.mxu0 0
        %2301 = vmatprep.subr.bf16.mxu0 0
        %2302 = vmatpush1.bf16.xpose.msra.mxu0 0
        %2303 = vmatprep.subr.bf16.mxu0 0
        %2304 = vmatpush1.bf16.xpose.msra.mxu0 0
        %2305 = vmatprep.mubr.bf16.mxu0 0
        %2306 = vmatmul.mubr.bf16.gmra.mrb[0].mxu0 %v2157
        %v2307 = vpop.f32.mrb[0].mxu0
        %v2308 = vadd.f32 0.0, %v2307
        %v2309 = vpop.f32.mrb[0].mxu0
        %v2310 = vpop.f32.mrb[0].mxu0
        %v2311 = vadd.f32 0.0, %v2310
        %v2312 = vpop.f32.mrb[0].mxu0
        %2313 = vdwg.mxu0
        %v2314 = vsel %vm2203, %v2308, -inf
        %2315 = vmax.xlane.f32.xlu0 %v2314
        %v2316 = vpop.xlane.xlu0 %2315
        %v2317 = vsel %vm2203, %v2311, -inf
        %2318 = vmax.xlane.f32.xlu0 %v2317
        %v2319 = vpop.xlane.xlu0 %2318
        %v2320 = vsub.f32 %v2308, %v2316
        %v2321 = vsub.f32 %v2311, %v2319
        %v2322 = vmul.f32 %v2320, 1.442695
        %v2323 = vpow.pop %v2322
        %v2324 = vmul.f32 %v2321, 1.442695
        %v2325 = vpow.pop %v2324
        %v2326 = vsel %vm2203, %v2323, 0.0
        %2327 = vadd.xlane.f32.xlu0 %v2326
        %v2328 = vpop.xlane.xlu0 %2327
        %v2329 = vsel %vm2203, %v2325, 0.0
        %2330 = vadd.xlane.f32.xlu0 %v2329
        %v2331 = vpop.xlane.xlu0 %2330
        %v2332 = vrcp.pop %v2328
        %v2333 = vmul.f32 %v2323, %v2332
        %v2334 = vrcp.pop %v2331
        %v2335 = vmul.f32 %v2325, %v2334
        %v2336 = vpack.c.bf16 %v2335, %v2333
        %v2338 = vsel %vm2203, %v2336, 0
        %2340 = vmatprep.subr.bf16.mxu0 0
        %2341 = vmatpush1.bf16.msra.mxu0 %v2161
        %2342 = vmatprep.subr.bf16.mxu0 0
        %2343 = vmatpush1.bf16.msra.mxu0 0
        %2344 = vmatprep.subr.bf16.mxu0 0
        %2345 = vmatpush1.bf16.msra.mxu0 0
        %2346 = vmatprep.subr.bf16.mxu0 0
        %2347 = vmatpush1.bf16.msra.mxu0 0
        %2348 = vmatprep.subr.bf16.mxu0 0
        %2349 = vmatpush1.bf16.msra.mxu0 0
        %2350 = vmatprep.subr.bf16.mxu0 0
        %2351 = vmatpush1.bf16.msra.mxu0 0
        %2352 = vmatprep.subr.bf16.mxu0 0
        %2353 = vmatpush1.bf16.msra.mxu0 0
        %2354 = vmatprep.subr.bf16.mxu0 0
        %2355 = vmatpush1.bf16.msra.mxu0 0
        %2356 = vmatprep.subr.bf16.mxu0 0
        %2357 = vmatpush1.bf16.msra.mxu0 0
        %2358 = vmatprep.subr.bf16.mxu0 0
        %2359 = vmatpush1.bf16.msra.mxu0 0
        %2360 = vmatprep.subr.bf16.mxu0 0
        %2361 = vmatpush1.bf16.msra.mxu0 0
        %2362 = vmatprep.subr.bf16.mxu0 0
        %2363 = vmatpush1.bf16.msra.mxu0 0
        %2364 = vmatprep.subr.bf16.mxu0 0
        %2365 = vmatpush1.bf16.msra.mxu0 0
        %2366 = vmatprep.subr.bf16.mxu0 0
        %2367 = vmatpush1.bf16.msra.mxu0 0
        %2368 = vmatprep.subr.bf16.mxu0 0
        %2369 = vmatpush1.bf16.msra.mxu0 0
        %2370 = vmatprep.subr.bf16.mxu0 0
        %2371 = vmatpush1.bf16.msra.mxu0 0
        %2372 = vmatprep.mubr.bf16.mxu0 0
        %2373 = vmatmul.mubr.bf16.gmra.mrb[0].mxu0 %v2338
        %v2374 = vpop.f32.mrb[0].mxu0
        %v2375 = vadd.f32 0.0, %v2374
        %v2376 = vpop.f32.mrb[0].mxu0
        %v2377 = vpop.f32.mrb[0].mxu0
        %v2378 = vadd.f32 0.0, %v2377
        %v2379 = vpop.f32.mrb[0].mxu0
        %2380 = vdwg.mxu0
        %v2381 = vpack.c.bf16 %v2378, %v2375
        %2382 = vst [vmem:[#allocation4 + $0x8] sm:$0xff] %v2381
        %v2383 = vld [vmem:[#allocation4] sm:$0xff]
        %v2384 = vld [vmem:[#allocation4 + $0x8] sm:$0xff]
        %v2385 = vld [vmem:[#allocation17] sm:$0xff]
        %v2386 = vld [vmem:[#allocation17 + $0x8] sm:$0xff]
        %v2387 = vld [vmem:[#allocation17 + $0x10] sm:$0xff]
        %v2388 = vld [vmem:[#allocation17 + $0x18] sm:$0xff]
        %v2389 = vld [vmem:[#allocation17 + $0x20] sm:$0xff]
        %v2390 = vld [vmem:[#allocation17 + $0x28] sm:$0xff]
        %v2391 = vld [vmem:[#allocation17 + $0x30] sm:$0xff]
        %v2392 = vld [vmem:[#allocation17 + $0x38] sm:$0xff]
        %v2393 = vld [vmem:[#allocation17 + $0x40] sm:$0xff]
        %v2394 = vld [vmem:[#allocation17 + $0x48] sm:$0xff]
        %v2395 = vld [vmem:[#allocation17 + $0x50] sm:$0xff]
        %v2396 = vld [vmem:[#allocation17 + $0x58] sm:$0xff]
        %v2397 = vld [vmem:[#allocation17 + $0x60] sm:$0xff]
        %v2398 = vld [vmem:[#allocation17 + $0x68] sm:$0xff]
        %v2399 = vld [vmem:[#allocation17 + $0x70] sm:$0xff]
        %v2400 = vld [vmem:[#allocation17 + $0x78] sm:$0xff]
        %v2401 = vld [vmem:[#allocation17 + $0x80] sm:$0xff]
        %v2402 = vld [vmem:[#allocation17 + $0x88] sm:$0xff]
        %v2403 = vld [vmem:[#allocation17 + $0x90] sm:$0xff]
        %v2404 = vld [vmem:[#allocation17 + $0x98] sm:$0xff]
        %v2405 = vld [vmem:[#allocation17 + $0xa0] sm:$0xff]
        %v2406 = vld [vmem:[#allocation17 + $0xa8] sm:$0xff]
        %v2407 = vld [vmem:[#allocation17 + $0xb0] sm:$0xff]
        %v2408 = vld [vmem:[#allocation17 + $0xb8] sm:$0xff]
        %v2409 = vld [vmem:[#allocation17 + $0xc0] sm:$0xff]
        %v2410 = vld [vmem:[#allocation17 + $0xc8] sm:$0xff]
        %v2411 = vld [vmem:[#allocation17 + $0xd0] sm:$0xff]
        %v2412 = vld [vmem:[#allocation17 + $0xd8] sm:$0xff]
        %v2413 = vld [vmem:[#allocation17 + $0xe0] sm:$0xff]
        %v2414 = vld [vmem:[#allocation17 + $0xe8] sm:$0xff]
        %v2415 = vld [vmem:[#allocation17 + $0xf0] sm:$0xff]
        %v2416 = vld [vmem:[#allocation17 + $0xf8] sm:$0xff]
        %v2417 = vld [vmem:[%s13] sm:$0x3]
        %v2419 = vlaneseq
        %v2420 = vshrl.u32 %v2419, 7
        %v2421 = vsub.s32 0, %v2420
        %v2422 = vrot.slane %v2417, %v2421
        %v2423 = vlaneseq
        %v2424 = vshrl.u32 %v2423, 7
        %v2425 = vsub.s32 1, %v2424
        %v2426 = vrot.slane %v2417, %v2425
        %v2461 = vunpack.c.l.b16 %v2385
        %v2462 = vunpack.c.h.b16 %v2385
        %v2463 = vunpack.c.l.b16 %v2386
        %v2464 = vunpack.c.h.b16 %v2386
        %v2465 = vunpack.c.l.b16 %v2387
        %v2466 = vunpack.c.h.b16 %v2387
        %v2467 = vunpack.c.l.b16 %v2388
        %v2468 = vunpack.c.h.b16 %v2388
        %v2469 = vunpack.c.l.b16 %v2389
        %v2470 = vunpack.c.h.b16 %v2389
        %v2471 = vunpack.c.l.b16 %v2390
        %v2472 = vunpack.c.h.b16 %v2390
        %v2473 = vunpack.c.l.b16 %v2391
        %v2474 = vunpack.c.h.b16 %v2391
        %v2475 = vunpack.c.l.b16 %v2392
        %v2476 = vunpack.c.h.b16 %v2392
        %v2477 = vunpack.c.l.b16 %v2393
        %v2478 = vunpack.c.h.b16 %v2393
        %v2479 = vunpack.c.l.b16 %v2394
        %v2480 = vunpack.c.h.b16 %v2394
        %v2481 = vunpack.c.l.b16 %v2395
        %v2482 = vunpack.c.h.b16 %v2395
        %v2483 = vunpack.c.l.b16 %v2396
        %v2484 = vunpack.c.h.b16 %v2396
        %v2485 = vunpack.c.l.b16 %v2397
        %v2486 = vunpack.c.h.b16 %v2397
        %v2487 = vunpack.c.l.b16 %v2398
        %v2488 = vunpack.c.h.b16 %v2398
        %v2489 = vunpack.c.l.b16 %v2399
        %v2490 = vunpack.c.h.b16 %v2399
        %v2491 = vunpack.c.l.b16 %v2400
        %v2492 = vunpack.c.h.b16 %v2400
        %v2493 = vunpack.c.l.b16 %v2401
        %v2494 = vunpack.c.h.b16 %v2401
        %v2495 = vunpack.c.l.b16 %v2402
        %v2496 = vunpack.c.h.b16 %v2402
        %v2497 = vunpack.c.l.b16 %v2403
        %v2498 = vunpack.c.h.b16 %v2403
        %v2499 = vunpack.c.l.b16 %v2404
        %v2500 = vunpack.c.h.b16 %v2404
        %v2501 = vunpack.c.l.b16 %v2405
        %v2502 = vunpack.c.h.b16 %v2405
        %v2503 = vunpack.c.l.b16 %v2406
        %v2504 = vunpack.c.h.b16 %v2406
        %v2505 = vunpack.c.l.b16 %v2407
        %v2506 = vunpack.c.h.b16 %v2407
        %v2507 = vunpack.c.l.b16 %v2408
        %v2508 = vunpack.c.h.b16 %v2408
        %v2509 = vunpack.c.l.b16 %v2409
        %v2510 = vunpack.c.h.b16 %v2409
        %v2511 = vunpack.c.l.b16 %v2410
        %v2512 = vunpack.c.h.b16 %v2410
        %v2513 = vunpack.c.l.b16 %v2411
        %v2514 = vunpack.c.h.b16 %v2411
        %v2515 = vunpack.c.l.b16 %v2412
        %v2516 = vunpack.c.h.b16 %v2412
        %v2517 = vunpack.c.l.b16 %v2413
        %v2518 = vunpack.c.h.b16 %v2413
        %v2519 = vunpack.c.l.b16 %v2414
        %v2520 = vunpack.c.h.b16 %v2414
        %v2521 = vunpack.c.l.b16 %v2415
        %v2522 = vunpack.c.h.b16 %v2415
        %v2523 = vunpack.c.l.b16 %v2416
        %v2524 = vunpack.c.h.b16 %v2416
        %v2525 = vpack.c.b16 %v2463, %v2461
        %v2526 = vpack.c.b16 %v2464, %v2462
        %v2527 = vpack.c.b16 %v2467, %v2465
        %v2528 = vpack.c.b16 %v2468, %v2466
        %v2529 = vpack.c.b16 %v2471, %v2469
        %v2530 = vpack.c.b16 %v2472, %v2470
        %v2531 = vpack.c.b16 %v2475, %v2473
        %v2532 = vpack.c.b16 %v2476, %v2474
        %v2533 = vpack.c.b16 %v2479, %v2477
        %v2534 = vpack.c.b16 %v2480, %v2478
        %v2535 = vpack.c.b16 %v2483, %v2481
        %v2536 = vpack.c.b16 %v2484, %v2482
        %v2537 = vpack.c.b16 %v2487, %v2485
        %v2538 = vpack.c.b16 %v2488, %v2486
        %v2539 = vpack.c.b16 %v2491, %v2489
        %v2540 = vpack.c.b16 %v2492, %v2490
        %v2541 = vpack.c.b16 %v2495, %v2493
        %v2542 = vpack.c.b16 %v2496, %v2494
        %v2543 = vpack.c.b16 %v2499, %v2497
        %v2544 = vpack.c.b16 %v2500, %v2498
        %v2545 = vpack.c.b16 %v2503, %v2501
        %v2546 = vpack.c.b16 %v2504, %v2502
        %v2547 = vpack.c.b16 %v2507, %v2505
        %v2548 = vpack.c.b16 %v2508, %v2506
        %v2549 = vpack.c.b16 %v2511, %v2509
        %v2550 = vpack.c.b16 %v2512, %v2510
        %v2551 = vpack.c.b16 %v2515, %v2513
        %v2552 = vpack.c.b16 %v2516, %v2514
        %v2553 = vpack.c.b16 %v2519, %v2517
        %v2554 = vpack.c.b16 %v2520, %v2518
        %v2555 = vpack.c.b16 %v2523, %v2521
        %v2556 = vpack.c.b16 %v2524, %v2522
        %2589 = vmatprep.subr.bf16.mxu0 %v2526
        %2590 = vmatpush1.bf16.msra.mxu0 %v2525
        %2591 = vmatprep.subr.bf16.mxu0 %v2528
        %2592 = vmatpush1.bf16.msra.mxu0 %v2527
        %2593 = vmatprep.subr.bf16.mxu0 %v2530
        %2594 = vmatpush1.bf16.msra.mxu0 %v2529
        %2595 = vmatprep.subr.bf16.mxu0 %v2532
        %2596 = vmatpush1.bf16.msra.mxu0 %v2531
        %2597 = vmatprep.subr.bf16.mxu0 %v2534
        %2598 = vmatpush1.bf16.msra.mxu0 %v2533
        %2599 = vmatprep.subr.bf16.mxu0 %v2536
        %2600 = vmatpush1.bf16.msra.mxu0 %v2535
        %2601 = vmatprep.subr.bf16.mxu0 %v2538
        %2602 = vmatpush1.bf16.msra.mxu0 %v2537
        %2603 = vmatprep.subr.bf16.mxu0 %v2540
        %2604 = vmatpush1.bf16.msra.mxu0 %v2539
        %2605 = vmatprep.subr.bf16.mxu0 %v2542
        %2606 = vmatpush1.bf16.msra.mxu0 %v2541
        %2607 = vmatprep.subr.bf16.mxu0 %v2544
        %2608 = vmatpush1.bf16.msra.mxu0 %v2543
        %2609 = vmatprep.subr.bf16.mxu0 %v2546
        %2610 = vmatpush1.bf16.msra.mxu0 %v2545
        %2611 = vmatprep.subr.bf16.mxu0 %v2548
        %2612 = vmatpush1.bf16.msra.mxu0 %v2547
        %2613 = vmatprep.subr.bf16.mxu0 %v2550
        %2614 = vmatpush1.bf16.msra.mxu0 %v2549
        %2615 = vmatprep.subr.bf16.mxu0 %v2552
        %2616 = vmatpush1.bf16.msra.mxu0 %v2551
        %2617 = vmatprep.subr.bf16.mxu0 %v2554
        %2618 = vmatpush1.bf16.msra.mxu0 %v2553
        %2619 = vmatprep.subr.bf16.mxu0 %v2556
        %2620 = vmatpush1.bf16.msra.mxu0 %v2555
        %2621 = vmatprep.mubr.bf16.mxu0 %v2384
        %2622 = vmatmul.mubr.bf16.gmra.mrb[0].mxu0 %v2383
        %v2623 = vpop.f32.mrb[0].mxu0
        %v2624 = vadd.f32 %v2422, %v2623
        %v2625 = vpop.f32.mrb[0].mxu0
        %v2626 = vadd.f32 %v2426, %v2625
        %v2627 = vpop.f32.mrb[0].mxu0
        %v2628 = vadd.f32 %v2422, %v2627
        %v2629 = vpop.f32.mrb[0].mxu0
        %v2630 = vadd.f32 %v2426, %v2629
        %2631 = vdwg.mxu0
        %v2632 = vadd.f32 %v1641, %v2624
        %v2633 = vadd.f32 %v1642, %v2626
        %v2634 = vadd.f32 %v1643, %v2628
        %v2635 = vadd.f32 %v1644, %v2630
        %v2636 = vld [vmem:[%s14] sm:$0x3]
        %v2637 = vld [vmem:[%s15] sm:$0x3]
        %v2638 = vadd.f32 %v2632, %v2633
        %2639 = vadd.xlane.f32.xlu0 %v2638
        %v2640 = vpop.xlane.xlu0 %2639
        %v2641 = vadd.f32 %v2634, %v2635
        %2642 = vadd.xlane.f32.xlu0 %v2641
        %v2643 = vpop.xlane.xlu0 %2642
        %v2644 = vmul.f32 %v2640, 0.005
        %v2645 = vmul.f32 %v2643, 0.005
        %v2646 = vsub.f32 %v2632, %v2644
        %v2647 = vsub.f32 %v2633, %v2644
        %v2648 = vsub.f32 %v2634, %v2645
        %v2649 = vsub.f32 %v2635, %v2645
        %v2650 = vmul.f32 %v2646, %v1652
        %v2651 = vmul.f32 %v2647, %v1653
        %v2652 = vmul.f32 %v2648, %v1652
        %v2653 = vmul.f32 %v2649, %v1653
        %v2654 = vmul.f32 %v2650, %v2650
        %v2655 = vmul.f32 %v2651, %v2651
        %v2656 = vmul.f32 %v2652, %v2652
        %v2657 = vmul.f32 %v2653, %v2653
        %v2658 = vadd.f32 %v2654, %v2655
        %2659 = vadd.xlane.f32.xlu0 %v2658
        %v2660 = vpop.xlane.xlu0 %2659
        %v2661 = vadd.f32 %v2656, %v2657
        %2662 = vadd.xlane.f32.xlu0 %v2661
        %v2663 = vpop.xlane.xlu0 %2662
        %v2664 = vmul.f32 %v2660, 0.005
        %v2665 = vmul.f32 %v2663, 0.005
        %v2666 = vadd.f32 %v2664, 1e-05
        %v2667 = vadd.f32 %v2665, 1e-05
        %v2668 = vrsqrt.pop %v2666
        %v2669 = vrsqrt.pop %v2667
        %v2670 = vmul.f32 %v2646, %v2668
        %v2671 = vmul.f32 %v2647, %v2668
        %v2672 = vmul.f32 %v2648, %v2669
        %v2673 = vmul.f32 %v2649, %v2669
        %v2675 = vlaneseq
        %v2676 = vshrl.u32 %v2675, 7
        %v2677 = vsub.s32 0, %v2676
        %v2678 = vrot.slane %v2636, %v2677
        %v2679 = vlaneseq
        %v2680 = vshrl.u32 %v2679, 7
        %v2681 = vsub.s32 1, %v2680
        %v2682 = vrot.slane %v2636, %v2681
        %v2685 = vmul.f32 %v2670, %v2678
        %v2686 = vmul.f32 %v2671, %v2682
        %v2687 = vmul.f32 %v2672, %v2678
        %v2688 = vmul.f32 %v2673, %v2682
        %v2690 = vlaneseq
        %v2691 = vshrl.u32 %v2690, 7
        %v2692 = vsub.s32 0, %v2691
        %v2693 = vrot.slane %v2637, %v2692
        %v2694 = vlaneseq
        %v2695 = vshrl.u32 %v2694, 7
        %v2696 = vsub.s32 1, %v2695
        %v2697 = vrot.slane %v2637, %v2696
        %v2700 = vadd.f32 %v2685, %v2693
        %v2701 = vadd.f32 %v2686, %v2697
        %v2702 = vadd.f32 %v2687, %v2693
        %v2703 = vadd.f32 %v2688, %v2697
        %v2704 = vpack.c.bf16 %v2702, %v2700
        %v2705 = vpack.c.bf16 %v2703, %v2701
        %v2706 = vld [vmem:[#allocation19] sm:$0xff]
        %v2707 = vld [vmem:[#allocation19 + $0x8] sm:$0xff]
        %v2708 = vld [vmem:[#allocation19 + $0x10] sm:$0xff]
        %v2709 = vld [vmem:[#allocation19 + $0x18] sm:$0xff]
        %v2710 = vld [vmem:[#allocation19 + $0x20] sm:$0xff]
        %v2711 = vld [vmem:[#allocation19 + $0x28] sm:$0xff]
        %v2712 = vld [vmem:[#allocation19 + $0x30] sm:$0xff]
        %v2713 = vld [vmem:[#allocation19 + $0x38] sm:$0xff]
        %v2714 = vld [vmem:[#allocation19 + $0x40] sm:$0xff]
        %v2715 = vld [vmem:[#allocation19 + $0x48] sm:$0xff]
        %v2716 = vld [vmem:[#allocation19 + $0x50] sm:$0xff]
        %v2717 = vld [vmem:[#allocation19 + $0x58] sm:$0xff]
        %v2718 = vld [vmem:[#allocation19 + $0x60] sm:$0xff]
        %v2719 = vld [vmem:[#allocation19 + $0x68] sm:$0xff]
        %v2720 = vld [vmem:[#allocation19 + $0x70] sm:$0xff]
        %v2721 = vld [vmem:[#allocation19 + $0x78] sm:$0xff]
        %v2722 = vld [vmem:[#allocation19 + $0x80] sm:$0xff]
        %v2723 = vld [vmem:[#allocation19 + $0x88] sm:$0xff]
        %v2724 = vld [vmem:[#allocation19 + $0x90] sm:$0xff]
        %v2725 = vld [vmem:[#allocation19 + $0x98] sm:$0xff]
        %v2726 = vld [vmem:[#allocation19 + $0xa0] sm:$0xff]
        %v2727 = vld [vmem:[#allocation19 + $0xa8] sm:$0xff]
        %v2728 = vld [vmem:[#allocation19 + $0xb0] sm:$0xff]
        %v2729 = vld [vmem:[#allocation19 + $0xb8] sm:$0xff]
        %v2730 = vld [vmem:[#allocation19 + $0xc0] sm:$0xff]
        %v2731 = vld [vmem:[#allocation19 + $0xc8] sm:$0xff]
        %v2732 = vld [vmem:[#allocation19 + $0xd0] sm:$0xff]
        %v2733 = vld [vmem:[#allocation19 + $0xd8] sm:$0xff]
        %v2734 = vld [vmem:[#allocation19 + $0xe0] sm:$0xff]
        %v2735 = vld [vmem:[#allocation19 + $0xe8] sm:$0xff]
        %v2736 = vld [vmem:[#allocation19 + $0xf0] sm:$0xff]
        %v2737 = vld [vmem:[#allocation19 + $0xf8] sm:$0xff]
        %v2738 = vld [vmem:[#allocation19 + $0x100] sm:$0xff]
        %v2739 = vld [vmem:[#allocation19 + $0x108] sm:$0xff]
        %v2740 = vld [vmem:[#allocation19 + $0x110] sm:$0xff]
        %v2741 = vld [vmem:[#allocation19 + $0x118] sm:$0xff]
        %v2742 = vld [vmem:[#allocation19 + $0x120] sm:$0xff]
        %v2743 = vld [vmem:[#allocation19 + $0x128] sm:$0xff]
        %v2744 = vld [vmem:[#allocation19 + $0x130] sm:$0xff]
        %v2745 = vld [vmem:[#allocation19 + $0x138] sm:$0xff]
        %v2746 = vld [vmem:[#allocation19 + $0x140] sm:$0xff]
        %v2747 = vld [vmem:[#allocation19 + $0x148] sm:$0xff]
        %v2748 = vld [vmem:[#allocation19 + $0x150] sm:$0xff]
        %v2749 = vld [vmem:[#allocation19 + $0x158] sm:$0xff]
        %v2750 = vld [vmem:[#allocation19 + $0x160] sm:$0xff]
        %v2751 = vld [vmem:[#allocation19 + $0x168] sm:$0xff]
        %v2752 = vld [vmem:[#allocation19 + $0x170] sm:$0xff]
        %v2753 = vld [vmem:[#allocation19 + $0x178] sm:$0xff]
        %v2754 = vld [vmem:[#allocation19 + $0x180] sm:$0xff]
        %v2755 = vld [vmem:[#allocation19 + $0x188] sm:$0xff]
        %v2756 = vld [vmem:[#allocation19 + $0x190] sm:$0xff]
        %v2757 = vld [vmem:[#allocation19 + $0x198] sm:$0xff]
        %v2758 = vld [vmem:[#allocation19 + $0x1a0] sm:$0xff]
        %v2759 = vld [vmem:[#allocation19 + $0x1a8] sm:$0xff]
        %v2760 = vld [vmem:[#allocation19 + $0x1b0] sm:$0xff]
        %v2761 = vld [vmem:[#allocation19 + $0x1b8] sm:$0xff]
        %v2762 = vld [vmem:[#allocation19 + $0x1c0] sm:$0xff]
        %v2763 = vld [vmem:[#allocation19 + $0x1c8] sm:$0xff]
        %v2764 = vld [vmem:[#allocation19 + $0x1d0] sm:$0xff]
        %v2765 = vld [vmem:[#allocation19 + $0x1d8] sm:$0xff]
        %v2766 = vld [vmem:[#allocation19 + $0x1e0] sm:$0xff]
        %v2767 = vld [vmem:[#allocation19 + $0x1e8] sm:$0xff]
        %v2768 = vld [vmem:[#allocation19 + $0x1f0] sm:$0xff]
        %v2769 = vld [vmem:[#allocation19 + $0x1f8] sm:$0xff]
        %v2770 = vld [vmem:[#allocation19 + $0x200] sm:$0xff]
        %v2771 = vld [vmem:[#allocation19 + $0x208] sm:$0xff]
        %v2772 = vld [vmem:[#allocation19 + $0x210] sm:$0xff]
        %v2773 = vld [vmem:[#allocation19 + $0x218] sm:$0xff]
        %v2774 = vld [vmem:[#allocation19 + $0x220] sm:$0xff]
        %v2775 = vld [vmem:[#allocation19 + $0x228] sm:$0xff]
        %v2776 = vld [vmem:[#allocation19 + $0x230] sm:$0xff]
        %v2777 = vld [vmem:[#allocation19 + $0x238] sm:$0xff]
        %v2778 = vld [vmem:[#allocation19 + $0x240] sm:$0xff]
        %v2779 = vld [vmem:[#allocation19 + $0x248] sm:$0xff]
        %v2780 = vld [vmem:[#allocation19 + $0x250] sm:$0xff]
        %v2781 = vld [vmem:[#allocation19 + $0x258] sm:$0xff]
        %v2782 = vld [vmem:[#allocation19 + $0x260] sm:$0xff]
        %v2783 = vld [vmem:[#allocation19 + $0x268] sm:$0xff]
        %v2784 = vld [vmem:[#allocation19 + $0x270] sm:$0xff]
        %v2785 = vld [vmem:[#allocation19 + $0x278] sm:$0xff]
        %v2786 = vld [vmem:[#allocation19 + $0x280] sm:$0xff]
        %v2787 = vld [vmem:[#allocation19 + $0x288] sm:$0xff]
        %v2788 = vld [vmem:[#allocation19 + $0x290] sm:$0xff]
        %v2789 = vld [vmem:[#allocation19 + $0x298] sm:$0xff]
        %v2790 = vld [vmem:[#allocation19 + $0x2a0] sm:$0xff]
        %v2791 = vld [vmem:[#allocation19 + $0x2a8] sm:$0xff]
        %v2792 = vld [vmem:[#allocation19 + $0x2b0] sm:$0xff]
        %v2793 = vld [vmem:[#allocation19 + $0x2b8] sm:$0xff]
        %v2794 = vld [vmem:[#allocation19 + $0x2c0] sm:$0xff]
        %v2795 = vld [vmem:[#allocation19 + $0x2c8] sm:$0xff]
        %v2796 = vld [vmem:[#allocation19 + $0x2d0] sm:$0xff]
        %v2797 = vld [vmem:[#allocation19 + $0x2d8] sm:$0xff]
        %v2798 = vld [vmem:[#allocation19 + $0x2e0] sm:$0xff]
        %v2799 = vld [vmem:[#allocation19 + $0x2e8] sm:$0xff]
        %v2800 = vld [vmem:[#allocation19 + $0x2f0] sm:$0xff]
        %v2801 = vld [vmem:[#allocation19 + $0x2f8] sm:$0xff]
        %v2802 = vld [vmem:[#allocation19 + $0x300] sm:$0xff]
        %v2803 = vld [vmem:[#allocation19 + $0x308] sm:$0xff]
        %v2804 = vld [vmem:[#allocation19 + $0x310] sm:$0xff]
        %v2805 = vld [vmem:[#allocation19 + $0x318] sm:$0xff]
        %v2806 = vld [vmem:[#allocation19 + $0x320] sm:$0xff]
        %v2807 = vld [vmem:[#allocation19 + $0x328] sm:$0xff]
        %v2808 = vld [vmem:[#allocation19 + $0x330] sm:$0xff]
        %v2809 = vld [vmem:[#allocation19 + $0x338] sm:$0xff]
        %v2810 = vld [vmem:[#allocation19 + $0x340] sm:$0xff]
        %v2811 = vld [vmem:[#allocation19 + $0x348] sm:$0xff]
        %v2812 = vld [vmem:[#allocation19 + $0x350] sm:$0xff]
        %v2813 = vld [vmem:[#allocation19 + $0x358] sm:$0xff]
        %v2814 = vld [vmem:[#allocation19 + $0x360] sm:$0xff]
        %v2815 = vld [vmem:[#allocation19 + $0x368] sm:$0xff]
        %v2816 = vld [vmem:[#allocation19 + $0x370] sm:$0xff]
        %v2817 = vld [vmem:[#allocation19 + $0x378] sm:$0xff]
        %v2818 = vld [vmem:[#allocation19 + $0x380] sm:$0xff]
        %v2819 = vld [vmem:[#allocation19 + $0x388] sm:$0xff]
        %v2820 = vld [vmem:[#allocation19 + $0x390] sm:$0xff]
        %v2821 = vld [vmem:[#allocation19 + $0x398] sm:$0xff]
        %v2822 = vld [vmem:[#allocation19 + $0x3a0] sm:$0xff]
        %v2823 = vld [vmem:[#allocation19 + $0x3a8] sm:$0xff]
        %v2824 = vld [vmem:[#allocation19 + $0x3b0] sm:$0xff]
        %v2825 = vld [vmem:[#allocation19 + $0x3b8] sm:$0xff]
        %v2826 = vld [vmem:[#allocation19 + $0x3c0] sm:$0xff]
        %v2827 = vld [vmem:[#allocation19 + $0x3c8] sm:$0xff]
        %v2828 = vld [vmem:[#allocation19 + $0x3d0] sm:$0xff]
        %v2829 = vld [vmem:[#allocation19 + $0x3d8] sm:$0xff]
        %v2830 = vld [vmem:[#allocation19 + $0x3e0] sm:$0xff]
        %v2831 = vld [vmem:[#allocation19 + $0x3e8] sm:$0xff]
        %v2832 = vld [vmem:[#allocation19 + $0x3f0] sm:$0xff]
        %v2833 = vld [vmem:[#allocation19 + $0x3f8] sm:$0xff]
        %v2834 = vld [vmem:[%s17] sm:$0xff]
        %v2836 = vlaneseq
        %v2837 = vshrl.u32 %v2836, 7
        %v2838 = vsub.s32 0, %v2837
        %v2839 = vrot.slane %v2834, %v2838
        %v2840 = vlaneseq
        %v2841 = vshrl.u32 %v2840, 7
        %v2842 = vsub.s32 1, %v2841
        %v2843 = vrot.slane %v2834, %v2842
        %v2844 = vlaneseq
        %v2845 = vshrl.u32 %v2844, 7
        %v2846 = vsub.s32 2, %v2845
        %v2847 = vrot.slane %v2834, %v2846
        %v2848 = vlaneseq
        %v2849 = vshrl.u32 %v2848, 7
        %v2850 = vsub.s32 3, %v2849
        %v2851 = vrot.slane %v2834, %v2850
        %v2852 = vlaneseq
        %v2853 = vshrl.u32 %v2852, 7
        %v2854 = vsub.s32 4, %v2853
        %v2855 = vrot.slane %v2834, %v2854
        %v2856 = vlaneseq
        %v2857 = vshrl.u32 %v2856, 7
        %v2858 = vsub.s32 5, %v2857
        %v2859 = vrot.slane %v2834, %v2858
        %v2860 = vlaneseq
        %v2861 = vshrl.u32 %v2860, 7
        %v2862 = vsub.s32 6, %v2861
        %v2863 = vrot.slane %v2834, %v2862
        %v2864 = vlaneseq
        %v2865 = vshrl.u32 %v2864, 7
        %v2866 = vsub.s32 7, %v2865
        %v2867 = vrot.slane %v2834, %v2866
        %v3004 = vunpack.c.l.b16 %v2706
        %v3005 = vunpack.c.h.b16 %v2706
        %v3006 = vunpack.c.l.b16 %v2707
        %v3007 = vunpack.c.h.b16 %v2707
        %v3008 = vunpack.c.l.b16 %v2708
        %v3009 = vunpack.c.h.b16 %v2708
        %v3010 = vunpack.c.l.b16 %v2709
        %v3011 = vunpack.c.h.b16 %v2709
        %v3012 = vunpack.c.l.b16 %v2710
        %v3013 = vunpack.c.h.b16 %v2710
        %v3014 = vunpack.c.l.b16 %v2711
        %v3015 = vunpack.c.h.b16 %v2711
        %v3016 = vunpack.c.l.b16 %v2712
        %v3017 = vunpack.c.h.b16 %v2712
        %v3018 = vunpack.c.l.b16 %v2713
        %v3019 = vunpack.c.h.b16 %v2713
        %v3020 = vunpack.c.l.b16 %v2714
        %v3021 = vunpack.c.h.b16 %v2714
        %v3022 = vunpack.c.l.b16 %v2715
        %v3023 = vunpack.c.h.b16 %v2715
        %v3024 = vunpack.c.l.b16 %v2716
        %v3025 = vunpack.c.h.b16 %v2716
        %v3026 = vunpack.c.l.b16 %v2717
        %v3027 = vunpack.c.h.b16 %v2717
        %v3028 = vunpack.c.l.b16 %v2718
        %v3029 = vunpack.c.h.b16 %v2718
        %v3030 = vunpack.c.l.b16 %v2719
        %v3031 = vunpack.c.h.b16 %v2719
        %v3032 = vunpack.c.l.b16 %v2720
        %v3033 = vunpack.c.h.b16 %v2720
        %v3034 = vunpack.c.l.b16 %v2721
        %v3035 = vunpack.c.h.b16 %v2721
        %v3036 = vunpack.c.l.b16 %v2722
        %v3037 = vunpack.c.h.b16 %v2722
        %v3038 = vunpack.c.l.b16 %v2723
        %v3039 = vunpack.c.h.b16 %v2723
        %v3040 = vunpack.c.l.b16 %v2724
        %v3041 = vunpack.c.h.b16 %v2724
        %v3042 = vunpack.c.l.b16 %v2725
        %v3043 = vunpack.c.h.b16 %v2725
        %v3044 = vunpack.c.l.b16 %v2726
        %v3045 = vunpack.c.h.b16 %v2726
        %v3046 = vunpack.c.l.b16 %v2727
        %v3047 = vunpack.c.h.b16 %v2727
        %v3048 = vunpack.c.l.b16 %v2728
        %v3049 = vunpack.c.h.b16 %v2728
        %v3050 = vunpack.c.l.b16 %v2729
        %v3051 = vunpack.c.h.b16 %v2729
        %v3052 = vunpack.c.l.b16 %v2730
        %v3053 = vunpack.c.h.b16 %v2730
        %v3054 = vunpack.c.l.b16 %v2731
        %v3055 = vunpack.c.h.b16 %v2731
        %v3056 = vunpack.c.l.b16 %v2732
        %v3057 = vunpack.c.h.b16 %v2732
        %v3058 = vunpack.c.l.b16 %v2733
        %v3059 = vunpack.c.h.b16 %v2733
        %v3060 = vunpack.c.l.b16 %v2734
        %v3061 = vunpack.c.h.b16 %v2734
        %v3062 = vunpack.c.l.b16 %v2735
        %v3063 = vunpack.c.h.b16 %v2735
        %v3064 = vunpack.c.l.b16 %v2736
        %v3065 = vunpack.c.h.b16 %v2736
        %v3066 = vunpack.c.l.b16 %v2737
        %v3067 = vunpack.c.h.b16 %v2737
        %v3068 = vunpack.c.l.b16 %v2738
        %v3069 = vunpack.c.h.b16 %v2738
        %v3070 = vunpack.c.l.b16 %v2739
        %v3071 = vunpack.c.h.b16 %v2739
        %v3072 = vunpack.c.l.b16 %v2740
        %v3073 = vunpack.c.h.b16 %v2740
        %v3074 = vunpack.c.l.b16 %v2741
        %v3075 = vunpack.c.h.b16 %v2741
        %v3076 = vunpack.c.l.b16 %v2742
        %v3077 = vunpack.c.h.b16 %v2742
        %v3078 = vunpack.c.l.b16 %v2743
        %v3079 = vunpack.c.h.b16 %v2743
        %v3080 = vunpack.c.l.b16 %v2744
        %v3081 = vunpack.c.h.b16 %v2744
        %v3082 = vunpack.c.l.b16 %v2745
        %v3083 = vunpack.c.h.b16 %v2745
        %v3084 = vunpack.c.l.b16 %v2746
        %v3085 = vunpack.c.h.b16 %v2746
        %v3086 = vunpack.c.l.b16 %v2747
        %v3087 = vunpack.c.h.b16 %v2747
        %v3088 = vunpack.c.l.b16 %v2748
        %v3089 = vunpack.c.h.b16 %v2748
        %v3090 = vunpack.c.l.b16 %v2749
        %v3091 = vunpack.c.h.b16 %v2749
        %v3092 = vunpack.c.l.b16 %v2750
        %v3093 = vunpack.c.h.b16 %v2750
        %v3094 = vunpack.c.l.b16 %v2751
        %v3095 = vunpack.c.h.b16 %v2751
        %v3096 = vunpack.c.l.b16 %v2752
        %v3097 = vunpack.c.h.b16 %v2752
        %v3098 = vunpack.c.l.b16 %v2753
        %v3099 = vunpack.c.h.b16 %v2753
        %v3100 = vunpack.c.l.b16 %v2754
        %v3101 = vunpack.c.h.b16 %v2754
        %v3102 = vunpack.c.l.b16 %v2755
        %v3103 = vunpack.c.h.b16 %v2755
        %v3104 = vunpack.c.l.b16 %v2756
        %v3105 = vunpack.c.h.b16 %v2756
        %v3106 = vunpack.c.l.b16 %v2757
        %v3107 = vunpack.c.h.b16 %v2757
        %v3108 = vunpack.c.l.b16 %v2758
        %v3109 = vunpack.c.h.b16 %v2758
        %v3110 = vunpack.c.l.b16 %v2759
        %v3111 = vunpack.c.h.b16 %v2759
        %v3112 = vunpack.c.l.b16 %v2760
        %v3113 = vunpack.c.h.b16 %v2760
        %v3114 = vunpack.c.l.b16 %v2761
        %v3115 = vunpack.c.h.b16 %v2761
        %v3116 = vunpack.c.l.b16 %v2762
        %v3117 = vunpack.c.h.b16 %v2762
        %v3118 = vunpack.c.l.b16 %v2763
        %v3119 = vunpack.c.h.b16 %v2763
        %v3120 = vunpack.c.l.b16 %v2764
        %v3121 = vunpack.c.h.b16 %v2764
        %v3122 = vunpack.c.l.b16 %v2765
        %v3123 = vunpack.c.h.b16 %v2765
        %v3124 = vunpack.c.l.b16 %v2766
        %v3125 = vunpack.c.h.b16 %v2766
        %v3126 = vunpack.c.l.b16 %v2767
        %v3127 = vunpack.c.h.b16 %v2767
        %v3128 = vunpack.c.l.b16 %v2768
        %v3129 = vunpack.c.h.b16 %v2768
        %v3130 = vunpack.c.l.b16 %v2769
        %v3131 = vunpack.c.h.b16 %v2769
        %v3132 = vunpack.c.l.b16 %v2770
        %v3133 = vunpack.c.h.b16 %v2770
        %v3134 = vunpack.c.l.b16 %v2771
        %v3135 = vunpack.c.h.b16 %v2771
        %v3136 = vunpack.c.l.b16 %v2772
        %v3137 = vunpack.c.h.b16 %v2772
        %v3138 = vunpack.c.l.b16 %v2773
        %v3139 = vunpack.c.h.b16 %v2773
        %v3140 = vunpack.c.l.b16 %v2774
        %v3141 = vunpack.c.h.b16 %v2774
        %v3142 = vunpack.c.l.b16 %v2775
        %v3143 = vunpack.c.h.b16 %v2775
        %v3144 = vunpack.c.l.b16 %v2776
        %v3145 = vunpack.c.h.b16 %v2776
        %v3146 = vunpack.c.l.b16 %v2777
        %v3147 = vunpack.c.h.b16 %v2777
        %v3148 = vunpack.c.l.b16 %v2778
        %v3149 = vunpack.c.h.b16 %v2778
        %v3150 = vunpack.c.l.b16 %v2779
        %v3151 = vunpack.c.h.b16 %v2779
        %v3152 = vunpack.c.l.b16 %v2780
        %v3153 = vunpack.c.h.b16 %v2780
        %v3154 = vunpack.c.l.b16 %v2781
        %v3155 = vunpack.c.h.b16 %v2781
        %v3156 = vunpack.c.l.b16 %v2782
        %v3157 = vunpack.c.h.b16 %v2782
        %v3158 = vunpack.c.l.b16 %v2783
        %v3159 = vunpack.c.h.b16 %v2783
        %v3160 = vunpack.c.l.b16 %v2784
        %v3161 = vunpack.c.h.b16 %v2784
        %v3162 = vunpack.c.l.b16 %v2785
        %v3163 = vunpack.c.h.b16 %v2785
        %v3164 = vunpack.c.l.b16 %v2786
        %v3165 = vunpack.c.h.b16 %v2786
        %v3166 = vunpack.c.l.b16 %v2787
        %v3167 = vunpack.c.h.b16 %v2787
        %v3168 = vunpack.c.l.b16 %v2788
        %v3169 = vunpack.c.h.b16 %v2788
        %v3170 = vunpack.c.l.b16 %v2789
        %v3171 = vunpack.c.h.b16 %v2789
        %v3172 = vunpack.c.l.b16 %v2790
        %v3173 = vunpack.c.h.b16 %v2790
        %v3174 = vunpack.c.l.b16 %v2791
        %v3175 = vunpack.c.h.b16 %v2791
        %v3176 = vunpack.c.l.b16 %v2792
        %v3177 = vunpack.c.h.b16 %v2792
        %v3178 = vunpack.c.l.b16 %v2793
        %v3179 = vunpack.c.h.b16 %v2793
        %v3180 = vunpack.c.l.b16 %v2794
        %v3181 = vunpack.c.h.b16 %v2794
        %v3182 = vunpack.c.l.b16 %v2795
        %v3183 = vunpack.c.h.b16 %v2795
        %v3184 = vunpack.c.l.b16 %v2796
        %v3185 = vunpack.c.h.b16 %v2796
        %v3186 = vunpack.c.l.b16 %v2797
        %v3187 = vunpack.c.h.b16 %v2797
        %v3188 = vunpack.c.l.b16 %v2798
        %v3189 = vunpack.c.h.b16 %v2798
        %v3190 = vunpack.c.l.b16 %v2799
        %v3191 = vunpack.c.h.b16 %v2799
        %v3192 = vunpack.c.l.b16 %v2800
        %v3193 = vunpack.c.h.b16 %v2800
        %v3194 = vunpack.c.l.b16 %v2801
        %v3195 = vunpack.c.h.b16 %v2801
        %v3196 = vunpack.c.l.b16 %v2802
        %v3197 = vunpack.c.h.b16 %v2802
        %v3198 = vunpack.c.l.b16 %v2803
        %v3199 = vunpack.c.h.b16 %v2803
        %v3200 = vunpack.c.l.b16 %v2804
        %v3201 = vunpack.c.h.b16 %v2804
        %v3202 = vunpack.c.l.b16 %v2805
        %v3203 = vunpack.c.h.b16 %v2805
        %v3204 = vunpack.c.l.b16 %v2806
        %v3205 = vunpack.c.h.b16 %v2806
        %v3206 = vunpack.c.l.b16 %v2807
        %v3207 = vunpack.c.h.b16 %v2807
        %v3208 = vunpack.c.l.b16 %v2808
        %v3209 = vunpack.c.h.b16 %v2808
        %v3210 = vunpack.c.l.b16 %v2809
        %v3211 = vunpack.c.h.b16 %v2809
        %v3212 = vunpack.c.l.b16 %v2810
        %v3213 = vunpack.c.h.b16 %v2810
        %v3214 = vunpack.c.l.b16 %v2811
        %v3215 = vunpack.c.h.b16 %v2811
        %v3216 = vunpack.c.l.b16 %v2812
        %v3217 = vunpack.c.h.b16 %v2812
        %v3218 = vunpack.c.l.b16 %v2813
        %v3219 = vunpack.c.h.b16 %v2813
        %v3220 = vunpack.c.l.b16 %v2814
        %v3221 = vunpack.c.h.b16 %v2814
        %v3222 = vunpack.c.l.b16 %v2815
        %v3223 = vunpack.c.h.b16 %v2815
        %v3224 = vunpack.c.l.b16 %v2816
        %v3225 = vunpack.c.h.b16 %v2816
        %v3226 = vunpack.c.l.b16 %v2817
        %v3227 = vunpack.c.h.b16 %v2817
        %v3228 = vunpack.c.l.b16 %v2818
        %v3229 = vunpack.c.h.b16 %v2818
        %v3230 = vunpack.c.l.b16 %v2819
        %v3231 = vunpack.c.h.b16 %v2819
        %v3232 = vunpack.c.l.b16 %v2820
        %v3233 = vunpack.c.h.b16 %v2820
        %v3234 = vunpack.c.l.b16 %v2821
        %v3235 = vunpack.c.h.b16 %v2821
        %v3236 = vunpack.c.l.b16 %v2822
        %v3237 = vunpack.c.h.b16 %v2822
        %v3238 = vunpack.c.l.b16 %v2823
        %v3239 = vunpack.c.h.b16 %v2823
        %v3240 = vunpack.c.l.b16 %v2824
        %v3241 = vunpack.c.h.b16 %v2824
        %v3242 = vunpack.c.l.b16 %v2825
        %v3243 = vunpack.c.h.b16 %v2825
        %v3244 = vunpack.c.l.b16 %v2826
        %v3245 = vunpack.c.h.b16 %v2826
        %v3246 = vunpack.c.l.b16 %v2827
        %v3247 = vunpack.c.h.b16 %v2827
        %v3248 = vunpack.c.l.b16 %v2828
        %v3249 = vunpack.c.h.b16 %v2828
        %v3250 = vunpack.c.l.b16 %v2829
        %v3251 = vunpack.c.h.b16 %v2829
        %v3252 = vunpack.c.l.b16 %v2830
        %v3253 = vunpack.c.h.b16 %v2830
        %v3254 = vunpack.c.l.b16 %v2831
        %v3255 = vunpack.c.h.b16 %v2831
        %v3256 = vunpack.c.l.b16 %v2832
        %v3257 = vunpack.c.h.b16 %v2832
        %v3258 = vunpack.c.l.b16 %v2833
        %v3259 = vunpack.c.h.b16 %v2833
        %v3260 = vpack.c.b16 %v3012, %v3004
        %v3261 = vpack.c.b16 %v3013, %v3005
        %v3262 = vpack.c.b16 %v3014, %v3006
        %v3263 = vpack.c.b16 %v3015, %v3007
        %v3264 = vpack.c.b16 %v3016, %v3008
        %v3265 = vpack.c.b16 %v3017, %v3009
        %v3266 = vpack.c.b16 %v3018, %v3010
        %v3267 = vpack.c.b16 %v3019, %v3011
        %v3268 = vpack.c.b16 %v3028, %v3020
        %v3269 = vpack.c.b16 %v3029, %v3021
        %v3270 = vpack.c.b16 %v3030, %v3022
        %v3271 = vpack.c.b16 %v3031, %v3023
        %v3272 = vpack.c.b16 %v3032, %v3024
        %v3273 = vpack.c.b16 %v3033, %v3025
        %v3274 = vpack.c.b16 %v3034, %v3026
        %v3275 = vpack.c.b16 %v3035, %v3027
        %v3276 = vpack.c.b16 %v3044, %v3036
        %v3277 = vpack.c.b16 %v3045, %v3037
        %v3278 = vpack.c.b16 %v3046, %v3038
        %v3279 = vpack.c.b16 %v3047, %v3039
        %v3280 = vpack.c.b16 %v3048, %v3040
        %v3281 = vpack.c.b16 %v3049, %v3041
        %v3282 = vpack.c.b16 %v3050, %v3042
        %v3283 = vpack.c.b16 %v3051, %v3043
        %v3284 = vpack.c.b16 %v3060, %v3052
        %v3285 = vpack.c.b16 %v3061, %v3053
        %v3286 = vpack.c.b16 %v3062, %v3054
        %v3287 = vpack.c.b16 %v3063, %v3055
        %v3288 = vpack.c.b16 %v3064, %v3056
        %v3289 = vpack.c.b16 %v3065, %v3057
        %v3290 = vpack.c.b16 %v3066, %v3058
        %v3291 = vpack.c.b16 %v3067, %v3059
        %v3292 = vpack.c.b16 %v3076, %v3068
        %v3293 = vpack.c.b16 %v3077, %v3069
        %v3294 = vpack.c.b16 %v3078, %v3070
        %v3295 = vpack.c.b16 %v3079, %v3071
        %v3296 = vpack.c.b16 %v3080, %v3072
        %v3297 = vpack.c.b16 %v3081, %v3073
        %v3298 = vpack.c.b16 %v3082, %v3074
        %v3299 = vpack.c.b16 %v3083, %v3075
        %v3300 = vpack.c.b16 %v3092, %v3084
        %v3301 = vpack.c.b16 %v3093, %v3085
        %v3302 = vpack.c.b16 %v3094, %v3086
        %v3303 = vpack.c.b16 %v3095, %v3087
        %v3304 = vpack.c.b16 %v3096, %v3088
        %v3305 = vpack.c.b16 %v3097, %v3089
        %v3306 = vpack.c.b16 %v3098, %v3090
        %v3307 = vpack.c.b16 %v3099, %v3091
        %v3308 = vpack.c.b16 %v3108, %v3100
        %v3309 = vpack.c.b16 %v3109, %v3101
        %v3310 = vpack.c.b16 %v3110, %v3102
        %v3311 = vpack.c.b16 %v3111, %v3103
        %v3312 = vpack.c.b16 %v3112, %v3104
        %v3313 = vpack.c.b16 %v3113, %v3105
        %v3314 = vpack.c.b16 %v3114, %v3106
        %v3315 = vpack.c.b16 %v3115, %v3107
        %v3316 = vpack.c.b16 %v3124, %v3116
        %v3317 = vpack.c.b16 %v3125, %v3117
        %v3318 = vpack.c.b16 %v3126, %v3118
        %v3319 = vpack.c.b16 %v3127, %v3119
        %v3320 = vpack.c.b16 %v3128, %v3120
        %v3321 = vpack.c.b16 %v3129, %v3121
        %v3322 = vpack.c.b16 %v3130, %v3122
        %v3323 = vpack.c.b16 %v3131, %v3123
        %v3324 = vpack.c.b16 %v3140, %v3132
        %v3325 = vpack.c.b16 %v3141, %v3133
        %v3326 = vpack.c.b16 %v3142, %v3134
        %v3327 = vpack.c.b16 %v3143, %v3135
        %v3328 = vpack.c.b16 %v3144, %v3136
        %v3329 = vpack.c.b16 %v3145, %v3137
        %v3330 = vpack.c.b16 %v3146, %v3138
        %v3331 = vpack.c.b16 %v3147, %v3139
        %v3332 = vpack.c.b16 %v3156, %v3148
        %v3333 = vpack.c.b16 %v3157, %v3149
        %v3334 = vpack.c.b16 %v3158, %v3150
        %v3335 = vpack.c.b16 %v3159, %v3151
        %v3336 = vpack.c.b16 %v3160, %v3152
        %v3337 = vpack.c.b16 %v3161, %v3153
        %v3338 = vpack.c.b16 %v3162, %v3154
        %v3339 = vpack.c.b16 %v3163, %v3155
        %v3340 = vpack.c.b16 %v3172, %v3164
        %v3341 = vpack.c.b16 %v3173, %v3165
        %v3342 = vpack.c.b16 %v3174, %v3166
        %v3343 = vpack.c.b16 %v3175, %v3167
        %v3344 = vpack.c.b16 %v3176, %v3168
        %v3345 = vpack.c.b16 %v3177, %v3169
        %v3346 = vpack.c.b16 %v3178, %v3170
        %v3347 = vpack.c.b16 %v3179, %v3171
        %v3348 = vpack.c.b16 %v3188, %v3180
        %v3349 = vpack.c.b16 %v3189, %v3181
        %v3350 = vpack.c.b16 %v3190, %v3182
        %v3351 = vpack.c.b16 %v3191, %v3183
        %v3352 = vpack.c.b16 %v3192, %v3184
        %v3353 = vpack.c.b16 %v3193, %v3185
        %v3354 = vpack.c.b16 %v3194, %v3186
        %v3355 = vpack.c.b16 %v3195, %v3187
        %v3356 = vpack.c.b16 %v3204, %v3196
        %v3357 = vpack.c.b16 %v3205, %v3197
        %v3358 = vpack.c.b16 %v3206, %v3198
        %v3359 = vpack.c.b16 %v3207, %v3199
        %v3360 = vpack.c.b16 %v3208, %v3200
        %v3361 = vpack.c.b16 %v3209, %v3201
        %v3362 = vpack.c.b16 %v3210, %v3202
        %v3363 = vpack.c.b16 %v3211, %v3203
        %v3364 = vpack.c.b16 %v3220, %v3212
        %v3365 = vpack.c.b16 %v3221, %v3213
        %v3366 = vpack.c.b16 %v3222, %v3214
        %v3367 = vpack.c.b16 %v3223, %v3215
        %v3368 = vpack.c.b16 %v3224, %v3216
        %v3369 = vpack.c.b16 %v3225, %v3217
        %v3370 = vpack.c.b16 %v3226, %v3218
        %v3371 = vpack.c.b16 %v3227, %v3219
        %v3372 = vpack.c.b16 %v3236, %v3228
        %v3373 = vpack.c.b16 %v3237, %v3229
        %v3374 = vpack.c.b16 %v3238, %v3230
        %v3375 = vpack.c.b16 %v3239, %v3231
        %v3376 = vpack.c.b16 %v3240, %v3232
        %v3377 = vpack.c.b16 %v3241, %v3233
        %v3378 = vpack.c.b16 %v3242, %v3234
        %v3379 = vpack.c.b16 %v3243, %v3235
        %v3380 = vpack.c.b16 %v3252, %v3244
        %v3381 = vpack.c.b16 %v3253, %v3245
        %v3382 = vpack.c.b16 %v3254, %v3246
        %v3383 = vpack.c.b16 %v3255, %v3247
        %v3384 = vpack.c.b16 %v3256, %v3248
        %v3385 = vpack.c.b16 %v3257, %v3249
        %v3386 = vpack.c.b16 %v3258, %v3250
        %v3387 = vpack.c.b16 %v3259, %v3251
        %3516 = vmatprep.subr.bf16.mxu0 %v3261
        %3517 = vmatpush1.bf16.msra.mxu0 %v3260
        %3518 = vmatprep.subr.bf16.mxu0 %v3269
        %3519 = vmatpush1.bf16.msra.mxu0 %v3268
        %3520 = vmatprep.subr.bf16.mxu0 %v3277
        %3521 = vmatpush1.bf16.msra.mxu0 %v3276
        %3522 = vmatprep.subr.bf16.mxu0 %v3285
        %3523 = vmatpush1.bf16.msra.mxu0 %v3284
        %3524 = vmatprep.subr.bf16.mxu0 %v3293
        %3525 = vmatpush1.bf16.msra.mxu0 %v3292
        %3526 = vmatprep.subr.bf16.mxu0 %v3301
        %3527 = vmatpush1.bf16.msra.mxu0 %v3300
        %3528 = vmatprep.subr.bf16.mxu0 %v3309
        %3529 = vmatpush1.bf16.msra.mxu0 %v3308
        %3530 = vmatprep.subr.bf16.mxu0 %v3317
        %3531 = vmatpush1.bf16.msra.mxu0 %v3316
        %3532 = vmatprep.subr.bf16.mxu0 %v3325
        %3533 = vmatpush1.bf16.msra.mxu0 %v3324
        %3534 = vmatprep.subr.bf16.mxu0 %v3333
        %3535 = vmatpush1.bf16.msra.mxu0 %v3332
        %3536 = vmatprep.subr.bf16.mxu0 %v3341
        %3537 = vmatpush1.bf16.msra.mxu0 %v3340
        %3538 = vmatprep.subr.bf16.mxu0 %v3349
        %3539 = vmatpush1.bf16.msra.mxu0 %v3348
        %3540 = vmatprep.subr.bf16.mxu0 %v3357
        %3541 = vmatpush1.bf16.msra.mxu0 %v3356
        %3542 = vmatprep.subr.bf16.mxu0 %v3365
        %3543 = vmatpush1.bf16.msra.mxu0 %v3364
        %3544 = vmatprep.subr.bf16.mxu0 %v3373
        %3545 = vmatpush1.bf16.msra.mxu0 %v3372
        %3546 = vmatprep.subr.bf16.mxu0 %v3381
        %3547 = vmatpush1.bf16.msra.mxu0 %v3380
        %3548 = vmatprep.mubr.bf16.mxu0 %v2705
        %3549 = vmatmul.mubr.bf16.gmra.mrb[0].mxu0 %v2704
        %v3550 = vpop.f32.mrb[0].mxu0
        %v3551 = vadd.f32 %v2839, %v3550
        %v3552 = vpop.f32.mrb[0].mxu0
        %v3553 = vadd.f32 %v2843, %v3552
        %v3554 = vpop.f32.mrb[0].mxu0
        %v3555 = vadd.f32 %v2839, %v3554
        %v3556 = vpop.f32.mrb[0].mxu0
        %v3557 = vadd.f32 %v2843, %v3556
        %3558 = vdwg.mxu0
        %3559 = vmatprep.subr.bf16.mxu0 %v3263
        %3560 = vmatpush1.bf16.msra.mxu0 %v3262
        %3561 = vmatprep.subr.bf16.mxu0 %v3271
        %3562 = vmatpush1.bf16.msra.mxu0 %v3270
        %3563 = vmatprep.subr.bf16.mxu0 %v3279
        %3564 = vmatpush1.bf16.msra.mxu0 %v3278
        %3565 = vmatprep.subr.bf16.mxu0 %v3287
        %3566 = vmatpush1.bf16.msra.mxu0 %v3286
        %3567 = vmatprep.subr.bf16.mxu0 %v3295
        %3568 = vmatpush1.bf16.msra.mxu0 %v3294
        %3569 = vmatprep.subr.bf16.mxu0 %v3303
        %3570 = vmatpush1.bf16.msra.mxu0 %v3302
        %3571 = vmatprep.subr.bf16.mxu0 %v3311
        %3572 = vmatpush1.bf16.msra.mxu0 %v3310
        %3573 = vmatprep.subr.bf16.mxu0 %v3319
        %3574 = vmatpush1.bf16.msra.mxu0 %v3318
        %3575 = vmatprep.subr.bf16.mxu0 %v3327
        %3576 = vmatpush1.bf16.msra.mxu0 %v3326
        %3577 = vmatprep.subr.bf16.mxu0 %v3335
        %3578 = vmatpush1.bf16.msra.mxu0 %v3334
        %3579 = vmatprep.subr.bf16.mxu0 %v3343
        %3580 = vmatpush1.bf16.msra.mxu0 %v3342
        %3581 = vmatprep.subr.bf16.mxu0 %v3351
        %3582 = vmatpush1.bf16.msra.mxu0 %v3350
        %3583 = vmatprep.subr.bf16.mxu0 %v3359
        %3584 = vmatpush1.bf16.msra.mxu0 %v3358
        %3585 = vmatprep.subr.bf16.mxu0 %v3367
        %3586 = vmatpush1.bf16.msra.mxu0 %v3366
        %3587 = vmatprep.subr.bf16.mxu0 %v3375
        %3588 = vmatpush1.bf16.msra.mxu0 %v3374
        %3589 = vmatprep.subr.bf16.mxu0 %v3383
        %3590 = vmatpush1.bf16.msra.mxu0 %v3382
        %3591 = vmatprep.mubr.bf16.mxu0 %v2705
        %3592 = vmatmul.mubr.bf16.gmra.mrb[0].mxu0 %v2704
        %v3593 = vpop.f32.mrb[0].mxu0
        %v3594 = vadd.f32 %v2847, %v3593
        %v3595 = vpop.f32.mrb[0].mxu0
        %v3596 = vadd.f32 %v2851, %v3595
        %v3597 = vpop.f32.mrb[0].mxu0
        %v3598 = vadd.f32 %v2847, %v3597
        %v3599 = vpop.f32.mrb[0].mxu0
        %v3600 = vadd.f32 %v2851, %v3599
        %3601 = vdwg.mxu0
        %3602 = vmatprep.subr.bf16.mxu0 %v3265
        %3603 = vmatpush1.bf16.msra.mxu0 %v3264
        %3604 = vmatprep.subr.bf16.mxu0 %v3273
        %3605 = vmatpush1.bf16.msra.mxu0 %v3272
        %3606 = vmatprep.subr.bf16.mxu0 %v3281
        %3607 = vmatpush1.bf16.msra.mxu0 %v3280
        %3608 = vmatprep.subr.bf16.mxu0 %v3289
        %3609 = vmatpush1.bf16.msra.mxu0 %v3288
        %3610 = vmatprep.subr.bf16.mxu0 %v3297
        %3611 = vmatpush1.bf16.msra.mxu0 %v3296
        %3612 = vmatprep.subr.bf16.mxu0 %v3305
        %3613 = vmatpush1.bf16.msra.mxu0 %v3304
        %3614 = vmatprep.subr.bf16.mxu0 %v3313
        %3615 = vmatpush1.bf16.msra.mxu0 %v3312
        %3616 = vmatprep.subr.bf16.mxu0 %v3321
        %3617 = vmatpush1.bf16.msra.mxu0 %v3320
        %3618 = vmatprep.subr.bf16.mxu0 %v3329
        %3619 = vmatpush1.bf16.msra.mxu0 %v3328
        %3620 = vmatprep.subr.bf16.mxu0 %v3337
        %3621 = vmatpush1.bf16.msra.mxu0 %v3336
        %3622 = vmatprep.subr.bf16.mxu0 %v3345
        %3623 = vmatpush1.bf16.msra.mxu0 %v3344
        %3624 = vmatprep.subr.bf16.mxu0 %v3353
        %3625 = vmatpush1.bf16.msra.mxu0 %v3352
        %3626 = vmatprep.subr.bf16.mxu0 %v3361
        %3627 = vmatpush1.bf16.msra.mxu0 %v3360
        %3628 = vmatprep.subr.bf16.mxu0 %v3369
        %3629 = vmatpush1.bf16.msra.mxu0 %v3368
        %3630 = vmatprep.subr.bf16.mxu0 %v3377
        %3631 = vmatpush1.bf16.msra.mxu0 %v3376
        %3632 = vmatprep.subr.bf16.mxu0 %v3385
        %3633 = vmatpush1.bf16.msra.mxu0 %v3384
        %3634 = vmatprep.mubr.bf16.mxu0 %v2705
        %3635 = vmatmul.mubr.bf16.gmra.mrb[0].mxu0 %v2704
        %v3636 = vpop.f32.mrb[0].mxu0
        %v3637 = vadd.f32 %v2855, %v3636
        %v3638 = vpop.f32.mrb[0].mxu0
        %v3639 = vadd.f32 %v2859, %v3638
        %v3640 = vpop.f32.mrb[0].mxu0
        %v3641 = vadd.f32 %v2855, %v3640
        %v3642 = vpop.f32.mrb[0].mxu0
        %v3643 = vadd.f32 %v2859, %v3642
        %3644 = vdwg.mxu0
        %3645 = vmatprep.subr.bf16.mxu0 %v3267
        %3646 = vmatpush1.bf16.msra.mxu0 %v3266
        %3647 = vmatprep.subr.bf16.mxu0 %v3275
        %3648 = vmatpush1.bf16.msra.mxu0 %v3274
        %3649 = vmatprep.subr.bf16.mxu0 %v3283
        %3650 = vmatpush1.bf16.msra.mxu0 %v3282
        %3651 = vmatprep.subr.bf16.mxu0 %v3291
        %3652 = vmatpush1.bf16.msra.mxu0 %v3290
        %3653 = vmatprep.subr.bf16.mxu0 %v3299
        %3654 = vmatpush1.bf16.msra.mxu0 %v3298
        %3655 = vmatprep.subr.bf16.mxu0 %v3307
        %3656 = vmatpush1.bf16.msra.mxu0 %v3306
        %3657 = vmatprep.subr.bf16.mxu0 %v3315
        %3658 = vmatpush1.bf16.msra.mxu0 %v3314
        %3659 = vmatprep.subr.bf16.mxu0 %v3323
        %3660 = vmatpush1.bf16.msra.mxu0 %v3322
        %3661 = vmatprep.subr.bf16.mxu0 %v3331
        %3662 = vmatpush1.bf16.msra.mxu0 %v3330
        %3663 = vmatprep.subr.bf16.mxu0 %v3339
        %3664 = vmatpush1.bf16.msra.mxu0 %v3338
        %3665 = vmatprep.subr.bf16.mxu0 %v3347
        %3666 = vmatpush1.bf16.msra.mxu0 %v3346
        %3667 = vmatprep.subr.bf16.mxu0 %v3355
        %3668 = vmatpush1.bf16.msra.mxu0 %v3354
        %3669 = vmatprep.subr.bf16.mxu0 %v3363
        %3670 = vmatpush1.bf16.msra.mxu0 %v3362
        %3671 = vmatprep.subr.bf16.mxu0 %v3371
        %3672 = vmatpush1.bf16.msra.mxu0 %v3370
        %3673 = vmatprep.subr.bf16.mxu0 %v3379
        %3674 = vmatpush1.bf16.msra.mxu0 %v3378
        %3675 = vmatprep.subr.bf16.mxu0 %v3387
        %3676 = vmatpush1.bf16.msra.mxu0 %v3386
        %3677 = vmatprep.mubr.bf16.mxu0 %v2705
        %3678 = vmatmul.mubr.bf16.gmra.mrb[0].mxu0 %v2704
        %v3679 = vpop.f32.mrb[0].mxu0
        %v3680 = vadd.f32 %v2863, %v3679
        %v3681 = vpop.f32.mrb[0].mxu0
        %v3682 = vadd.f32 %v2867, %v3681
        %v3683 = vpop.f32.mrb[0].mxu0
        %v3684 = vadd.f32 %v2863, %v3683
        %v3685 = vpop.f32.mrb[0].mxu0
        %v3686 = vadd.f32 %v2867, %v3685
        %3687 = vdwg.mxu0
        %v3688 = vmul.f32 %v3551, 0.5
        %v3689 = vmul.f32 %v3553, 0.5
        %v3690 = vmul.f32 %v3594, 0.5
        %v3691 = vmul.f32 %v3596, 0.5
        %v3692 = vmul.f32 %v3637, 0.5
        %v3693 = vmul.f32 %v3639, 0.5
        %v3694 = vmul.f32 %v3680, 0.5
        %v3695 = vmul.f32 %v3682, 0.5
        %v3696 = vmul.f32 %v3555, 0.5
        %v3697 = vmul.f32 %v3557, 0.5
        %v3698 = vmul.f32 %v3598, 0.5
        %v3699 = vmul.f32 %v3600, 0.5
        %v3700 = vmul.f32 %v3641, 0.5
        %v3701 = vmul.f32 %v3643, 0.5
        %v3702 = vmul.f32 %v3684, 0.5
        %v3703 = vmul.f32 %v3686, 0.5
        %v3704 = vmul.f32 %v3551, 0.70710677
        %v3705 = vmul.f32 %v3553, 0.70710677
        %v3706 = vmul.f32 %v3594, 0.70710677
        %v3707 = vmul.f32 %v3596, 0.70710677
        %v3708 = vmul.f32 %v3637, 0.70710677
        %v3709 = vmul.f32 %v3639, 0.70710677
        %v3710 = vmul.f32 %v3680, 0.70710677
        %v3711 = vmul.f32 %v3682, 0.70710677
        %v3712 = vmul.f32 %v3555, 0.70710677
        %v3713 = vmul.f32 %v3557, 0.70710677
        %v3714 = vmul.f32 %v3598, 0.70710677
        %v3715 = vmul.f32 %v3600, 0.70710677
        %v3716 = vmul.f32 %v3641, 0.70710677
        %v3717 = vmul.f32 %v3643, 0.70710677
        %v3718 = vmul.f32 %v3684, 0.70710677
        %v3719 = vmul.f32 %v3686, 0.70710677
        %v3720 = verf.f32.pop %v3704
        %v3721 = verf.f32.pop %v3705
        %v3722 = verf.f32.pop %v3706
        %v3723 = verf.f32.pop %v3707
        %v3724 = verf.f32.pop %v3708
        %v3725 = verf.f32.pop %v3709
        %v3726 = verf.f32.pop %v3710
        %v3727 = verf.f32.pop %v3711
        %v3728 = verf.f32.pop %v3712
        %v3729 = verf.f32.pop %v3713
        %v3730 = verf.f32.pop %v3714
        %v3731 = verf.f32.pop %v3715
        %v3732 = verf.f32.pop %v3716
        %v3733 = verf.f32.pop %v3717
        %v3734 = verf.f32.pop %v3718
        %v3735 = verf.f32.pop %v3719
        %v3736 = vadd.f32 %v3720, 1.0
        %v3737 = vadd.f32 %v3721, 1.0
        %v3738 = vadd.f32 %v3722, 1.0
        %v3739 = vadd.f32 %v3723, 1.0
        %v3740 = vadd.f32 %v3724, 1.0
        %v3741 = vadd.f32 %v3725, 1.0
        %v3742 = vadd.f32 %v3726, 1.0
        %v3743 = vadd.f32 %v3727, 1.0
        %v3744 = vadd.f32 %v3728, 1.0
        %v3745 = vadd.f32 %v3729, 1.0
        %v3746 = vadd.f32 %v3730, 1.0
        %v3747 = vadd.f32 %v3731, 1.0
        %v3748 = vadd.f32 %v3732, 1.0
        %v3749 = vadd.f32 %v3733, 1.0
        %v3750 = vadd.f32 %v3734, 1.0
        %v3751 = vadd.f32 %v3735, 1.0
        %v3752 = vmul.f32 %v3688, %v3736
        %v3753 = vmul.f32 %v3689, %v3737
        %v3754 = vmul.f32 %v3690, %v3738
        %v3755 = vmul.f32 %v3691, %v3739
        %v3756 = vmul.f32 %v3692, %v3740
        %v3757 = vmul.f32 %v3693, %v3741
        %v3758 = vmul.f32 %v3694, %v3742
        %v3759 = vmul.f32 %v3695, %v3743
        %v3760 = vmul.f32 %v3696, %v3744
        %v3761 = vmul.f32 %v3697, %v3745
        %v3762 = vmul.f32 %v3698, %v3746
        %v3763 = vmul.f32 %v3699, %v3747
        %v3764 = vmul.f32 %v3700, %v3748
        %v3765 = vmul.f32 %v3701, %v3749
        %v3766 = vmul.f32 %v3702, %v3750
        %v3767 = vmul.f32 %v3703, %v3751
        %v3768 = vpack.c.bf16 %v3760, %v3752
        %v3769 = vpack.c.bf16 %v3761, %v3753
        %v3770 = vpack.c.bf16 %v3762, %v3754
        %v3771 = vpack.c.bf16 %v3763, %v3755
        %v3772 = vpack.c.bf16 %v3764, %v3756
        %v3773 = vpack.c.bf16 %v3765, %v3757
        %v3774 = vpack.c.bf16 %v3766, %v3758
        %v3775 = vpack.c.bf16 %v3767, %v3759
        %v3776 = vld [vmem:[#allocation20] sm:$0xff]
        %v3777 = vld [vmem:[#allocation20 + $0x8] sm:$0xff]
        %v3778 = vld [vmem:[#allocation20 + $0x10] sm:$0xff]
        %v3779 = vld [vmem:[#allocation20 + $0x18] sm:$0xff]
        %v3780 = vld [vmem:[#allocation20 + $0x20] sm:$0xff]
        %v3781 = vld [vmem:[#allocation20 + $0x28] sm:$0xff]
        %v3782 = vld [vmem:[#allocation20 + $0x30] sm:$0xff]
        %v3783 = vld [vmem:[#allocation20 + $0x38] sm:$0xff]
        %v3784 = vld [vmem:[#allocation20 + $0x40] sm:$0xff]
        %v3785 = vld [vmem:[#allocation20 + $0x48] sm:$0xff]
        %v3786 = vld [vmem:[#allocation20 + $0x50] sm:$0xff]
        %v3787 = vld [vmem:[#allocation20 + $0x58] sm:$0xff]
        %v3788 = vld [vmem:[#allocation20 + $0x60] sm:$0xff]
        %v3789 = vld [vmem:[#allocation20 + $0x68] sm:$0xff]
        %v3790 = vld [vmem:[#allocation20 + $0x70] sm:$0xff]
        %v3791 = vld [vmem:[#allocation20 + $0x78] sm:$0xff]
        %v3792 = vld [vmem:[#allocation20 + $0x80] sm:$0xff]
        %v3793 = vld [vmem:[#allocation20 + $0x88] sm:$0xff]
        %v3794 = vld [vmem:[#allocation20 + $0x90] sm:$0xff]
        %v3795 = vld [vmem:[#allocation20 + $0x98] sm:$0xff]
        %v3796 = vld [vmem:[#allocation20 + $0xa0] sm:$0xff]
        %v3797 = vld [vmem:[#allocation20 + $0xa8] sm:$0xff]
        %v3798 = vld [vmem:[#allocation20 + $0xb0] sm:$0xff]
        %v3799 = vld [vmem:[#allocation20 + $0xb8] sm:$0xff]
        %v3800 = vld [vmem:[#allocation20 + $0xc0] sm:$0xff]
        %v3801 = vld [vmem:[#allocation20 + $0xc8] sm:$0xff]
        %v3802 = vld [vmem:[#allocation20 + $0xd0] sm:$0xff]
        %v3803 = vld [vmem:[#allocation20 + $0xd8] sm:$0xff]
        %v3804 = vld [vmem:[#allocation20 + $0xe0] sm:$0xff]
        %v3805 = vld [vmem:[#allocation20 + $0xe8] sm:$0xff]
        %v3806 = vld [vmem:[#allocation20 + $0xf0] sm:$0xff]
        %v3807 = vld [vmem:[#allocation20 + $0xf8] sm:$0xff]
        %v3808 = vld [vmem:[#allocation20 + $0x100] sm:$0xff]
        %v3809 = vld [vmem:[#allocation20 + $0x108] sm:$0xff]
        %v3810 = vld [vmem:[#allocation20 + $0x110] sm:$0xff]
        %v3811 = vld [vmem:[#allocation20 + $0x118] sm:$0xff]
        %v3812 = vld [vmem:[#allocation20 + $0x120] sm:$0xff]
        %v3813 = vld [vmem:[#allocation20 + $0x128] sm:$0xff]
        %v3814 = vld [vmem:[#allocation20 + $0x130] sm:$0xff]
        %v3815 = vld [vmem:[#allocation20 + $0x138] sm:$0xff]
        %v3816 = vld [vmem:[#allocation20 + $0x140] sm:$0xff]
        %v3817 = vld [vmem:[#allocation20 + $0x148] sm:$0xff]
        %v3818 = vld [vmem:[#allocation20 + $0x150] sm:$0xff]
        %v3819 = vld [vmem:[#allocation20 + $0x158] sm:$0xff]
        %v3820 = vld [vmem:[#allocation20 + $0x160] sm:$0xff]
        %v3821 = vld [vmem:[#allocation20 + $0x168] sm:$0xff]
        %v3822 = vld [vmem:[#allocation20 + $0x170] sm:$0xff]
        %v3823 = vld [vmem:[#allocation20 + $0x178] sm:$0xff]
        %v3824 = vld [vmem:[#allocation20 + $0x180] sm:$0xff]
        %v3825 = vld [vmem:[#allocation20 + $0x188] sm:$0xff]
        %v3826 = vld [vmem:[#allocation20 + $0x190] sm:$0xff]
        %v3827 = vld [vmem:[#allocation20 + $0x198] sm:$0xff]
        %v3828 = vld [vmem:[#allocation20 + $0x1a0] sm:$0xff]
        %v3829 = vld [vmem:[#allocation20 + $0x1a8] sm:$0xff]
        %v3830 = vld [vmem:[#allocation20 + $0x1b0] sm:$0xff]
        %v3831 = vld [vmem:[#allocation20 + $0x1b8] sm:$0xff]
        %v3832 = vld [vmem:[#allocation20 + $0x1c0] sm:$0xff]
        %v3833 = vld [vmem:[#allocation20 + $0x1c8] sm:$0xff]
        %v3834 = vld [vmem:[#allocation20 + $0x1d0] sm:$0xff]
        %v3835 = vld [vmem:[#allocation20 + $0x1d8] sm:$0xff]
        %v3836 = vld [vmem:[#allocation20 + $0x1e0] sm:$0xff]
        %v3837 = vld [vmem:[#allocation20 + $0x1e8] sm:$0xff]
        %v3838 = vld [vmem:[#allocation20 + $0x1f0] sm:$0xff]
        %v3839 = vld [vmem:[#allocation20 + $0x1f8] sm:$0xff]
        %v3840 = vld [vmem:[#allocation20 + $0x200] sm:$0xff]
        %v3841 = vld [vmem:[#allocation20 + $0x208] sm:$0xff]
        %v3842 = vld [vmem:[#allocation20 + $0x210] sm:$0xff]
        %v3843 = vld [vmem:[#allocation20 + $0x218] sm:$0xff]
        %v3844 = vld [vmem:[#allocation20 + $0x220] sm:$0xff]
        %v3845 = vld [vmem:[#allocation20 + $0x228] sm:$0xff]
        %v3846 = vld [vmem:[#allocation20 + $0x230] sm:$0xff]
        %v3847 = vld [vmem:[#allocation20 + $0x238] sm:$0xff]
        %v3848 = vld [vmem:[#allocation20 + $0x240] sm:$0xff]
        %v3849 = vld [vmem:[#allocation20 + $0x248] sm:$0xff]
        %v3850 = vld [vmem:[#allocation20 + $0x250] sm:$0xff]
        %v3851 = vld [vmem:[#allocation20 + $0x258] sm:$0xff]
        %v3852 = vld [vmem:[#allocation20 + $0x260] sm:$0xff]
        %v3853 = vld [vmem:[#allocation20 + $0x268] sm:$0xff]
        %v3854 = vld [vmem:[#allocation20 + $0x270] sm:$0xff]
        %v3855 = vld [vmem:[#allocation20 + $0x278] sm:$0xff]
        %v3856 = vld [vmem:[#allocation20 + $0x280] sm:$0xff]
        %v3857 = vld [vmem:[#allocation20 + $0x288] sm:$0xff]
        %v3858 = vld [vmem:[#allocation20 + $0x290] sm:$0xff]
        %v3859 = vld [vmem:[#allocation20 + $0x298] sm:$0xff]
        %v3860 = vld [vmem:[#allocation20 + $0x2a0] sm:$0xff]
        %v3861 = vld [vmem:[#allocation20 + $0x2a8] sm:$0xff]
        %v3862 = vld [vmem:[#allocation20 + $0x2b0] sm:$0xff]
        %v3863 = vld [vmem:[#allocation20 + $0x2b8] sm:$0xff]
        %v3864 = vld [vmem:[#allocation20 + $0x2c0] sm:$0xff]
        %v3865 = vld [vmem:[#allocation20 + $0x2c8] sm:$0xff]
        %v3866 = vld [vmem:[#allocation20 + $0x2d0] sm:$0xff]
        %v3867 = vld [vmem:[#allocation20 + $0x2d8] sm:$0xff]
        %v3868 = vld [vmem:[#allocation20 + $0x2e0] sm:$0xff]
        %v3869 = vld [vmem:[#allocation20 + $0x2e8] sm:$0xff]
        %v3870 = vld [vmem:[#allocation20 + $0x2f0] sm:$0xff]
        %v3871 = vld [vmem:[#allocation20 + $0x2f8] sm:$0xff]
        %v3872 = vld [vmem:[#allocation20 + $0x300] sm:$0xff]
        %v3873 = vld [vmem:[#allocation20 + $0x308] sm:$0xff]
        %v3874 = vld [vmem:[#allocation20 + $0x310] sm:$0xff]
        %v3875 = vld [vmem:[#allocation20 + $0x318] sm:$0xff]
        %v3876 = vld [vmem:[#allocation20 + $0x320] sm:$0xff]
        %v3877 = vld [vmem:[#allocation20 + $0x328] sm:$0xff]
        %v3878 = vld [vmem:[#allocation20 + $0x330] sm:$0xff]
        %v3879 = vld [vmem:[#allocation20 + $0x338] sm:$0xff]
        %v3880 = vld [vmem:[#allocation20 + $0x340] sm:$0xff]
        %v3881 = vld [vmem:[#allocation20 + $0x348] sm:$0xff]
        %v3882 = vld [vmem:[#allocation20 + $0x350] sm:$0xff]
        %v3883 = vld [vmem:[#allocation20 + $0x358] sm:$0xff]
        %v3884 = vld [vmem:[#allocation20 + $0x360] sm:$0xff]
        %v3885 = vld [vmem:[#allocation20 + $0x368] sm:$0xff]
        %v3886 = vld [vmem:[#allocation20 + $0x370] sm:$0xff]
        %v3887 = vld [vmem:[#allocation20 + $0x378] sm:$0xff]
        %v3888 = vld [vmem:[#allocation20 + $0x380] sm:$0xff]
        %v3889 = vld [vmem:[#allocation20 + $0x388] sm:$0xff]
        %v3890 = vld [vmem:[#allocation20 + $0x390] sm:$0xff]
        %v3891 = vld [vmem:[#allocation20 + $0x398] sm:$0xff]
        %v3892 = vld [vmem:[#allocation20 + $0x3a0] sm:$0xff]
        %v3893 = vld [vmem:[#allocation20 + $0x3a8] sm:$0xff]
        %v3894 = vld [vmem:[#allocation20 + $0x3b0] sm:$0xff]
        %v3895 = vld [vmem:[#allocation20 + $0x3b8] sm:$0xff]
        %v3896 = vld [vmem:[#allocation20 + $0x3c0] sm:$0xff]
        %v3897 = vld [vmem:[#allocation20 + $0x3c8] sm:$0xff]
        %v3898 = vld [vmem:[#allocation20 + $0x3d0] sm:$0xff]
        %v3899 = vld [vmem:[#allocation20 + $0x3d8] sm:$0xff]
        %v3900 = vld [vmem:[#allocation20 + $0x3e0] sm:$0xff]
        %v3901 = vld [vmem:[#allocation20 + $0x3e8] sm:$0xff]
        %v3902 = vld [vmem:[#allocation20 + $0x3f0] sm:$0xff]
        %v3903 = vld [vmem:[#allocation20 + $0x3f8] sm:$0xff]
        %v4032 = vunpack.c.l.b16 %v3776
        %v4033 = vunpack.c.h.b16 %v3776
        %v4034 = vunpack.c.l.b16 %v3777
        %v4035 = vunpack.c.h.b16 %v3777
        %v4036 = vunpack.c.l.b16 %v3778
        %v4037 = vunpack.c.h.b16 %v3778
        %v4038 = vunpack.c.l.b16 %v3779
        %v4039 = vunpack.c.h.b16 %v3779
        %v4040 = vunpack.c.l.b16 %v3780
        %v4041 = vunpack.c.h.b16 %v3780
        %v4042 = vunpack.c.l.b16 %v3781
        %v4043 = vunpack.c.h.b16 %v3781
        %v4044 = vunpack.c.l.b16 %v3782
        %v4045 = vunpack.c.h.b16 %v3782
        %v4046 = vunpack.c.l.b16 %v3783
        %v4047 = vunpack.c.h.b16 %v3783
        %v4048 = vunpack.c.l.b16 %v3784
        %v4049 = vunpack.c.h.b16 %v3784
        %v4050 = vunpack.c.l.b16 %v3785
        %v4051 = vunpack.c.h.b16 %v3785
        %v4052 = vunpack.c.l.b16 %v3786
        %v4053 = vunpack.c.h.b16 %v3786
        %v4054 = vunpack.c.l.b16 %v3787
        %v4055 = vunpack.c.h.b16 %v3787
        %v4056 = vunpack.c.l.b16 %v3788
        %v4057 = vunpack.c.h.b16 %v3788
        %v4058 = vunpack.c.l.b16 %v3789
        %v4059 = vunpack.c.h.b16 %v3789
        %v4060 = vunpack.c.l.b16 %v3790
        %v4061 = vunpack.c.h.b16 %v3790
        %v4062 = vunpack.c.l.b16 %v3791
        %v4063 = vunpack.c.h.b16 %v3791
        %v4064 = vunpack.c.l.b16 %v3792
        %v4065 = vunpack.c.h.b16 %v3792
        %v4066 = vunpack.c.l.b16 %v3793
        %v4067 = vunpack.c.h.b16 %v3793
        %v4068 = vunpack.c.l.b16 %v3794
        %v4069 = vunpack.c.h.b16 %v3794
        %v4070 = vunpack.c.l.b16 %v3795
        %v4071 = vunpack.c.h.b16 %v3795
        %v4072 = vunpack.c.l.b16 %v3796
        %v4073 = vunpack.c.h.b16 %v3796
        %v4074 = vunpack.c.l.b16 %v3797
        %v4075 = vunpack.c.h.b16 %v3797
        %v4076 = vunpack.c.l.b16 %v3798
        %v4077 = vunpack.c.h.b16 %v3798
        %v4078 = vunpack.c.l.b16 %v3799
        %v4079 = vunpack.c.h.b16 %v3799
        %v4080 = vunpack.c.l.b16 %v3800
        %v4081 = vunpack.c.h.b16 %v3800
        %v4082 = vunpack.c.l.b16 %v3801
        %v4083 = vunpack.c.h.b16 %v3801
        %v4084 = vunpack.c.l.b16 %v3802
        %v4085 = vunpack.c.h.b16 %v3802
        %v4086 = vunpack.c.l.b16 %v3803
        %v4087 = vunpack.c.h.b16 %v3803
        %v4088 = vunpack.c.l.b16 %v3804
        %v4089 = vunpack.c.h.b16 %v3804
        %v4090 = vunpack.c.l.b16 %v3805
        %v4091 = vunpack.c.h.b16 %v3805
        %v4092 = vunpack.c.l.b16 %v3806
        %v4093 = vunpack.c.h.b16 %v3806
        %v4094 = vunpack.c.l.b16 %v3807
        %v4095 = vunpack.c.h.b16 %v3807
        %v4096 = vunpack.c.l.b16 %v3808
        %v4097 = vunpack.c.h.b16 %v3808
        %v4098 = vunpack.c.l.b16 %v3809
        %v4099 = vunpack.c.h.b16 %v3809
        %v4100 = vunpack.c.l.b16 %v3810
        %v4101 = vunpack.c.h.b16 %v3810
        %v4102 = vunpack.c.l.b16 %v3811
        %v4103 = vunpack.c.h.b16 %v3811
        %v4104 = vunpack.c.l.b16 %v3812
        %v4105 = vunpack.c.h.b16 %v3812
        %v4106 = vunpack.c.l.b16 %v3813
        %v4107 = vunpack.c.h.b16 %v3813
        %v4108 = vunpack.c.l.b16 %v3814
        %v4109 = vunpack.c.h.b16 %v3814
        %v4110 = vunpack.c.l.b16 %v3815
        %v4111 = vunpack.c.h.b16 %v3815
        %v4112 = vunpack.c.l.b16 %v3816
        %v4113 = vunpack.c.h.b16 %v3816
        %v4114 = vunpack.c.l.b16 %v3817
        %v4115 = vunpack.c.h.b16 %v3817
        %v4116 = vunpack.c.l.b16 %v3818
        %v4117 = vunpack.c.h.b16 %v3818
        %v4118 = vunpack.c.l.b16 %v3819
        %v4119 = vunpack.c.h.b16 %v3819
        %v4120 = vunpack.c.l.b16 %v3820
        %v4121 = vunpack.c.h.b16 %v3820
        %v4122 = vunpack.c.l.b16 %v3821
        %v4123 = vunpack.c.h.b16 %v3821
        %v4124 = vunpack.c.l.b16 %v3822
        %v4125 = vunpack.c.h.b16 %v3822
        %v4126 = vunpack.c.l.b16 %v3823
        %v4127 = vunpack.c.h.b16 %v3823
        %v4128 = vunpack.c.l.b16 %v3824
        %v4129 = vunpack.c.h.b16 %v3824
        %v4130 = vunpack.c.l.b16 %v3825
        %v4131 = vunpack.c.h.b16 %v3825
        %v4132 = vunpack.c.l.b16 %v3826
        %v4133 = vunpack.c.h.b16 %v3826
        %v4134 = vunpack.c.l.b16 %v3827
        %v4135 = vunpack.c.h.b16 %v3827
        %v4136 = vunpack.c.l.b16 %v3828
        %v4137 = vunpack.c.h.b16 %v3828
        %v4138 = vunpack.c.l.b16 %v3829
        %v4139 = vunpack.c.h.b16 %v3829
        %v4140 = vunpack.c.l.b16 %v3830
        %v4141 = vunpack.c.h.b16 %v3830
        %v4142 = vunpack.c.l.b16 %v3831
        %v4143 = vunpack.c.h.b16 %v3831
        %v4144 = vunpack.c.l.b16 %v3832
        %v4145 = vunpack.c.h.b16 %v3832
        %v4146 = vunpack.c.l.b16 %v3833
        %v4147 = vunpack.c.h.b16 %v3833
        %v4148 = vunpack.c.l.b16 %v3834
        %v4149 = vunpack.c.h.b16 %v3834
        %v4150 = vunpack.c.l.b16 %v3835
        %v4151 = vunpack.c.h.b16 %v3835
        %v4152 = vunpack.c.l.b16 %v3836
        %v4153 = vunpack.c.h.b16 %v3836
        %v4154 = vunpack.c.l.b16 %v3837
        %v4155 = vunpack.c.h.b16 %v3837
        %v4156 = vunpack.c.l.b16 %v3838
        %v4157 = vunpack.c.h.b16 %v3838
        %v4158 = vunpack.c.l.b16 %v3839
        %v4159 = vunpack.c.h.b16 %v3839
        %v4160 = vunpack.c.l.b16 %v3840
        %v4161 = vunpack.c.h.b16 %v3840
        %v4162 = vunpack.c.l.b16 %v3841
        %v4163 = vunpack.c.h.b16 %v3841
        %v4164 = vunpack.c.l.b16 %v3842
        %v4165 = vunpack.c.h.b16 %v3842
        %v4166 = vunpack.c.l.b16 %v3843
        %v4167 = vunpack.c.h.b16 %v3843
        %v4168 = vunpack.c.l.b16 %v3844
        %v4169 = vunpack.c.h.b16 %v3844
        %v4170 = vunpack.c.l.b16 %v3845
        %v4171 = vunpack.c.h.b16 %v3845
        %v4172 = vunpack.c.l.b16 %v3846
        %v4173 = vunpack.c.h.b16 %v3846
        %v4174 = vunpack.c.l.b16 %v3847
        %v4175 = vunpack.c.h.b16 %v3847
        %v4176 = vunpack.c.l.b16 %v3848
        %v4177 = vunpack.c.h.b16 %v3848
        %v4178 = vunpack.c.l.b16 %v3849
        %v4179 = vunpack.c.h.b16 %v3849
        %v4180 = vunpack.c.l.b16 %v3850
        %v4181 = vunpack.c.h.b16 %v3850
        %v4182 = vunpack.c.l.b16 %v3851
        %v4183 = vunpack.c.h.b16 %v3851
        %v4184 = vunpack.c.l.b16 %v3852
        %v4185 = vunpack.c.h.b16 %v3852
        %v4186 = vunpack.c.l.b16 %v3853
        %v4187 = vunpack.c.h.b16 %v3853
        %v4188 = vunpack.c.l.b16 %v3854
        %v4189 = vunpack.c.h.b16 %v3854
        %v4190 = vunpack.c.l.b16 %v3855
        %v4191 = vunpack.c.h.b16 %v3855
        %v4192 = vunpack.c.l.b16 %v3856
        %v4193 = vunpack.c.h.b16 %v3856
        %v4194 = vunpack.c.l.b16 %v3857
        %v4195 = vunpack.c.h.b16 %v3857
        %v4196 = vunpack.c.l.b16 %v3858
        %v4197 = vunpack.c.h.b16 %v3858
        %v4198 = vunpack.c.l.b16 %v3859
        %v4199 = vunpack.c.h.b16 %v3859
        %v4200 = vunpack.c.l.b16 %v3860
        %v4201 = vunpack.c.h.b16 %v3860
        %v4202 = vunpack.c.l.b16 %v3861
        %v4203 = vunpack.c.h.b16 %v3861
        %v4204 = vunpack.c.l.b16 %v3862
        %v4205 = vunpack.c.h.b16 %v3862
        %v4206 = vunpack.c.l.b16 %v3863
        %v4207 = vunpack.c.h.b16 %v3863
        %v4208 = vunpack.c.l.b16 %v3864
        %v4209 = vunpack.c.h.b16 %v3864
        %v4210 = vunpack.c.l.b16 %v3865
        %v4211 = vunpack.c.h.b16 %v3865
        %v4212 = vunpack.c.l.b16 %v3866
        %v4213 = vunpack.c.h.b16 %v3866
        %v4214 = vunpack.c.l.b16 %v3867
        %v4215 = vunpack.c.h.b16 %v3867
        %v4216 = vunpack.c.l.b16 %v3868
        %v4217 = vunpack.c.h.b16 %v3868
        %v4218 = vunpack.c.l.b16 %v3869
        %v4219 = vunpack.c.h.b16 %v3869
        %v4220 = vunpack.c.l.b16 %v3870
        %v4221 = vunpack.c.h.b16 %v3870
        %v4222 = vunpack.c.l.b16 %v3871
        %v4223 = vunpack.c.h.b16 %v3871
        %v4224 = vunpack.c.l.b16 %v3872
        %v4225 = vunpack.c.h.b16 %v3872
        %v4226 = vunpack.c.l.b16 %v3873
        %v4227 = vunpack.c.h.b16 %v3873
        %v4228 = vunpack.c.l.b16 %v3874
        %v4229 = vunpack.c.h.b16 %v3874
        %v4230 = vunpack.c.l.b16 %v3875
        %v4231 = vunpack.c.h.b16 %v3875
        %v4232 = vunpack.c.l.b16 %v3876
        %v4233 = vunpack.c.h.b16 %v3876
        %v4234 = vunpack.c.l.b16 %v3877
        %v4235 = vunpack.c.h.b16 %v3877
        %v4236 = vunpack.c.l.b16 %v3878
        %v4237 = vunpack.c.h.b16 %v3878
        %v4238 = vunpack.c.l.b16 %v3879
        %v4239 = vunpack.c.h.b16 %v3879
        %v4240 = vunpack.c.l.b16 %v3880
        %v4241 = vunpack.c.h.b16 %v3880
        %v4242 = vunpack.c.l.b16 %v3881
        %v4243 = vunpack.c.h.b16 %v3881
        %v4244 = vunpack.c.l.b16 %v3882
        %v4245 = vunpack.c.h.b16 %v3882
        %v4246 = vunpack.c.l.b16 %v3883
        %v4247 = vunpack.c.h.b16 %v3883
        %v4248 = vunpack.c.l.b16 %v3884
        %v4249 = vunpack.c.h.b16 %v3884
        %v4250 = vunpack.c.l.b16 %v3885
        %v4251 = vunpack.c.h.b16 %v3885
        %v4252 = vunpack.c.l.b16 %v3886
        %v4253 = vunpack.c.h.b16 %v3886
        %v4254 = vunpack.c.l.b16 %v3887
        %v4255 = vunpack.c.h.b16 %v3887
        %v4256 = vunpack.c.l.b16 %v3888
        %v4257 = vunpack.c.h.b16 %v3888
        %v4258 = vunpack.c.l.b16 %v3889
        %v4259 = vunpack.c.h.b16 %v3889
        %v4260 = vunpack.c.l.b16 %v3890
        %v4261 = vunpack.c.h.b16 %v3890
        %v4262 = vunpack.c.l.b16 %v3891
        %v4263 = vunpack.c.h.b16 %v3891
        %v4264 = vunpack.c.l.b16 %v3892
        %v4265 = vunpack.c.h.b16 %v3892
        %v4266 = vunpack.c.l.b16 %v3893
        %v4267 = vunpack.c.h.b16 %v3893
        %v4268 = vunpack.c.l.b16 %v3894
        %v4269 = vunpack.c.h.b16 %v3894
        %v4270 = vunpack.c.l.b16 %v3895
        %v4271 = vunpack.c.h.b16 %v3895
        %v4272 = vunpack.c.l.b16 %v3896
        %v4273 = vunpack.c.h.b16 %v3896
        %v4274 = vunpack.c.l.b16 %v3897
        %v4275 = vunpack.c.h.b16 %v3897
        %v4276 = vunpack.c.l.b16 %v3898
        %v4277 = vunpack.c.h.b16 %v3898
        %v4278 = vunpack.c.l.b16 %v3899
        %v4279 = vunpack.c.h.b16 %v3899
        %v4280 = vunpack.c.l.b16 %v3900
        %v4281 = vunpack.c.h.b16 %v3900
        %v4282 = vunpack.c.l.b16 %v3901
        %v4283 = vunpack.c.h.b16 %v3901
        %v4284 = vunpack.c.l.b16 %v3902
        %v4285 = vunpack.c.h.b16 %v3902
        %v4286 = vunpack.c.l.b16 %v3903
        %v4287 = vunpack.c.h.b16 %v3903
        %v4288 = vpack.c.b16 %v4034, %v4032
        %v4289 = vpack.c.b16 %v4035, %v4033
        %v4290 = vpack.c.b16 %v4038, %v4036
        %v4291 = vpack.c.b16 %v4039, %v4037
        %v4292 = vpack.c.b16 %v4042, %v4040
        %v4293 = vpack.c.b16 %v4043, %v4041
        %v4294 = vpack.c.b16 %v4046, %v4044
        %v4295 = vpack.c.b16 %v4047, %v4045
        %v4296 = vpack.c.b16 %v4050, %v4048
        %v4297 = vpack.c.b16 %v4051, %v4049
        %v4298 = vpack.c.b16 %v4054, %v4052
        %v4299 = vpack.c.b16 %v4055, %v4053
        %v4300 = vpack.c.b16 %v4058, %v4056
        %v4301 = vpack.c.b16 %v4059, %v4057
        %v4302 = vpack.c.b16 %v4062, %v4060
        %v4303 = vpack.c.b16 %v4063, %v4061
        %v4304 = vpack.c.b16 %v4066, %v4064
        %v4305 = vpack.c.b16 %v4067, %v4065
        %v4306 = vpack.c.b16 %v4070, %v4068
        %v4307 = vpack.c.b16 %v4071, %v4069
        %v4308 = vpack.c.b16 %v4074, %v4072
        %v4309 = vpack.c.b16 %v4075, %v4073
        %v4310 = vpack.c.b16 %v4078, %v4076
        %v4311 = vpack.c.b16 %v4079, %v4077
        %v4312 = vpack.c.b16 %v4082, %v4080
        %v4313 = vpack.c.b16 %v4083, %v4081
        %v4314 = vpack.c.b16 %v4086, %v4084
        %v4315 = vpack.c.b16 %v4087, %v4085
        %v4316 = vpack.c.b16 %v4090, %v4088
        %v4317 = vpack.c.b16 %v4091, %v4089
        %v4318 = vpack.c.b16 %v4094, %v4092
        %v4319 = vpack.c.b16 %v4095, %v4093
        %v4320 = vpack.c.b16 %v4098, %v4096
        %v4321 = vpack.c.b16 %v4099, %v4097
        %v4322 = vpack.c.b16 %v4102, %v4100
        %v4323 = vpack.c.b16 %v4103, %v4101
        %v4324 = vpack.c.b16 %v4106, %v4104
        %v4325 = vpack.c.b16 %v4107, %v4105
        %v4326 = vpack.c.b16 %v4110, %v4108
        %v4327 = vpack.c.b16 %v4111, %v4109
        %v4328 = vpack.c.b16 %v4114, %v4112
        %v4329 = vpack.c.b16 %v4115, %v4113
        %v4330 = vpack.c.b16 %v4118, %v4116
        %v4331 = vpack.c.b16 %v4119, %v4117
        %v4332 = vpack.c.b16 %v4122, %v4120
        %v4333 = vpack.c.b16 %v4123, %v4121
        %v4334 = vpack.c.b16 %v4126, %v4124
        %v4335 = vpack.c.b16 %v4127, %v4125
        %v4336 = vpack.c.b16 %v4130, %v4128
        %v4337 = vpack.c.b16 %v4131, %v4129
        %v4338 = vpack.c.b16 %v4134, %v4132
        %v4339 = vpack.c.b16 %v4135, %v4133
        %v4340 = vpack.c.b16 %v4138, %v4136
        %v4341 = vpack.c.b16 %v4139, %v4137
        %v4342 = vpack.c.b16 %v4142, %v4140
        %v4343 = vpack.c.b16 %v4143, %v4141
        %v4344 = vpack.c.b16 %v4146, %v4144
        %v4345 = vpack.c.b16 %v4147, %v4145
        %v4346 = vpack.c.b16 %v4150, %v4148
        %v4347 = vpack.c.b16 %v4151, %v4149
        %v4348 = vpack.c.b16 %v4154, %v4152
        %v4349 = vpack.c.b16 %v4155, %v4153
        %v4350 = vpack.c.b16 %v4158, %v4156
        %v4351 = vpack.c.b16 %v4159, %v4157
        %v4352 = vpack.c.b16 %v4162, %v4160
        %v4353 = vpack.c.b16 %v4163, %v4161
        %v4354 = vpack.c.b16 %v4166, %v4164
        %v4355 = vpack.c.b16 %v4167, %v4165
        %v4356 = vpack.c.b16 %v4170, %v4168
        %v4357 = vpack.c.b16 %v4171, %v4169
        %v4358 = vpack.c.b16 %v4174, %v4172
        %v4359 = vpack.c.b16 %v4175, %v4173
        %v4360 = vpack.c.b16 %v4178, %v4176
        %v4361 = vpack.c.b16 %v4179, %v4177
        %v4362 = vpack.c.b16 %v4182, %v4180
        %v4363 = vpack.c.b16 %v4183, %v4181
        %v4364 = vpack.c.b16 %v4186, %v4184
        %v4365 = vpack.c.b16 %v4187, %v4185
        %v4366 = vpack.c.b16 %v4190, %v4188
        %v4367 = vpack.c.b16 %v4191, %v4189
        %v4368 = vpack.c.b16 %v4194, %v4192
        %v4369 = vpack.c.b16 %v4195, %v4193
        %v4370 = vpack.c.b16 %v4198, %v4196
        %v4371 = vpack.c.b16 %v4199, %v4197
        %v4372 = vpack.c.b16 %v4202, %v4200
        %v4373 = vpack.c.b16 %v4203, %v4201
        %v4374 = vpack.c.b16 %v4206, %v4204
        %v4375 = vpack.c.b16 %v4207, %v4205
        %v4376 = vpack.c.b16 %v4210, %v4208
        %v4377 = vpack.c.b16 %v4211, %v4209
        %v4378 = vpack.c.b16 %v4214, %v4212
        %v4379 = vpack.c.b16 %v4215, %v4213
        %v4380 = vpack.c.b16 %v4218, %v4216
        %v4381 = vpack.c.b16 %v4219, %v4217
        %v4382 = vpack.c.b16 %v4222, %v4220
        %v4383 = vpack.c.b16 %v4223, %v4221
        %v4384 = vpack.c.b16 %v4226, %v4224
        %v4385 = vpack.c.b16 %v4227, %v4225
        %v4386 = vpack.c.b16 %v4230, %v4228
        %v4387 = vpack.c.b16 %v4231, %v4229
        %v4388 = vpack.c.b16 %v4234, %v4232
        %v4389 = vpack.c.b16 %v4235, %v4233
        %v4390 = vpack.c.b16 %v4238, %v4236
        %v4391 = vpack.c.b16 %v4239, %v4237
        %v4392 = vpack.c.b16 %v4242, %v4240
        %v4393 = vpack.c.b16 %v4243, %v4241
        %v4394 = vpack.c.b16 %v4246, %v4244
        %v4395 = vpack.c.b16 %v4247, %v4245
        %v4396 = vpack.c.b16 %v4250, %v4248
        %v4397 = vpack.c.b16 %v4251, %v4249
        %v4398 = vpack.c.b16 %v4254, %v4252
        %v4399 = vpack.c.b16 %v4255, %v4253
        %v4400 = vpack.c.b16 %v4258, %v4256
        %v4401 = vpack.c.b16 %v4259, %v4257
        %v4402 = vpack.c.b16 %v4262, %v4260
        %v4403 = vpack.c.b16 %v4263, %v4261
        %v4404 = vpack.c.b16 %v4266, %v4264
        %v4405 = vpack.c.b16 %v4267, %v4265
        %v4406 = vpack.c.b16 %v4270, %v4268
        %v4407 = vpack.c.b16 %v4271, %v4269
        %v4408 = vpack.c.b16 %v4274, %v4272
        %v4409 = vpack.c.b16 %v4275, %v4273
        %v4410 = vpack.c.b16 %v4278, %v4276
        %v4411 = vpack.c.b16 %v4279, %v4277
        %v4412 = vpack.c.b16 %v4282, %v4280
        %v4413 = vpack.c.b16 %v4283, %v4281
        %v4414 = vpack.c.b16 %v4286, %v4284
        %v4415 = vpack.c.b16 %v4287, %v4285
        %4544 = vmatprep.subr.bf16.mxu0 %v4289
        %4545 = vmatpush1.bf16.msra.mxu0 %v4288
        %4546 = vmatprep.subr.bf16.mxu0 %v4291
        %4547 = vmatpush1.bf16.msra.mxu0 %v4290
        %4548 = vmatprep.subr.bf16.mxu0 %v4293
        %4549 = vmatpush1.bf16.msra.mxu0 %v4292
        %4550 = vmatprep.subr.bf16.mxu0 %v4295
        %4551 = vmatpush1.bf16.msra.mxu0 %v4294
        %4552 = vmatprep.subr.bf16.mxu0 %v4297
        %4553 = vmatpush1.bf16.msra.mxu0 %v4296
        %4554 = vmatprep.subr.bf16.mxu0 %v4299
        %4555 = vmatpush1.bf16.msra.mxu0 %v4298
        %4556 = vmatprep.subr.bf16.mxu0 %v4301
        %4557 = vmatpush1.bf16.msra.mxu0 %v4300
        %4558 = vmatprep.subr.bf16.mxu0 %v4303
        %4559 = vmatpush1.bf16.msra.mxu0 %v4302
        %4560 = vmatprep.subr.bf16.mxu0 %v4305
        %4561 = vmatpush1.bf16.msra.mxu0 %v4304
        %4562 = vmatprep.subr.bf16.mxu0 %v4307
        %4563 = vmatpush1.bf16.msra.mxu0 %v4306
        %4564 = vmatprep.subr.bf16.mxu0 %v4309
        %4565 = vmatpush1.bf16.msra.mxu0 %v4308
        %4566 = vmatprep.subr.bf16.mxu0 %v4311
        %4567 = vmatpush1.bf16.msra.mxu0 %v4310
        %4568 = vmatprep.subr.bf16.mxu0 %v4313
        %4569 = vmatpush1.bf16.msra.mxu0 %v4312
        %4570 = vmatprep.subr.bf16.mxu0 %v4315
        %4571 = vmatpush1.bf16.msra.mxu0 %v4314
        %4572 = vmatprep.subr.bf16.mxu0 %v4317
        %4573 = vmatpush1.bf16.msra.mxu0 %v4316
        %4574 = vmatprep.subr.bf16.mxu0 %v4319
        %4575 = vmatpush1.bf16.msra.mxu0 %v4318
        %4576 = vmatprep.mubr.bf16.mxu0 %v3769
        %4577 = vmatmul.mubr.bf16.gmra.mrb[0].mxu0 %v3768
        %v4578 = vpop.f32.mrb[0].mxu0
        %v4579 = vadd.f32 0.0, %v4578
        %v4580 = vpop.f32.mrb[0].mxu0
        %v4581 = vadd.f32 0.0, %v4580
        %v4582 = vpop.f32.mrb[0].mxu0
        %v4583 = vadd.f32 0.0, %v4582
        %v4584 = vpop.f32.mrb[0].mxu0
        %v4585 = vadd.f32 0.0, %v4584
        %4586 = vdwg.mxu0
        %4587 = vmatprep.subr.bf16.mxu0 %v4321
        %4588 = vmatpush1.bf16.msra.mxu0 %v4320
        %4589 = vmatprep.subr.bf16.mxu0 %v4323
        %4590 = vmatpush1.bf16.msra.mxu0 %v4322
        %4591 = vmatprep.subr.bf16.mxu0 %v4325
        %4592 = vmatpush1.bf16.msra.mxu0 %v4324
        %4593 = vmatprep.subr.bf16.mxu0 %v4327
        %4594 = vmatpush1.bf16.msra.mxu0 %v4326
        %4595 = vmatprep.subr.bf16.mxu0 %v4329
        %4596 = vmatpush1.bf16.msra.mxu0 %v4328
        %4597 = vmatprep.subr.bf16.mxu0 %v4331
        %4598 = vmatpush1.bf16.msra.mxu0 %v4330
        %4599 = vmatprep.subr.bf16.mxu0 %v4333
        %4600 = vmatpush1.bf16.msra.mxu0 %v4332
        %4601 = vmatprep.subr.bf16.mxu0 %v4335
        %4602 = vmatpush1.bf16.msra.mxu0 %v4334
        %4603 = vmatprep.subr.bf16.mxu0 %v4337
        %4604 = vmatpush1.bf16.msra.mxu0 %v4336
        %4605 = vmatprep.subr.bf16.mxu0 %v4339
        %4606 = vmatpush1.bf16.msra.mxu0 %v4338
        %4607 = vmatprep.subr.bf16.mxu0 %v4341
        %4608 = vmatpush1.bf16.msra.mxu0 %v4340
        %4609 = vmatprep.subr.bf16.mxu0 %v4343
        %4610 = vmatpush1.bf16.msra.mxu0 %v4342
        %4611 = vmatprep.subr.bf16.mxu0 %v4345
        %4612 = vmatpush1.bf16.msra.mxu0 %v4344
        %4613 = vmatprep.subr.bf16.mxu0 %v4347
        %4614 = vmatpush1.bf16.msra.mxu0 %v4346
        %4615 = vmatprep.subr.bf16.mxu0 %v4349
        %4616 = vmatpush1.bf16.msra.mxu0 %v4348
        %4617 = vmatprep.subr.bf16.mxu0 %v4351
        %4618 = vmatpush1.bf16.msra.mxu0 %v4350
        %4619 = vmatprep.mubr.bf16.mxu0 %v3771
        %4620 = vmatmul.mubr.bf16.gmra.mrb[0].mxu0 %v3770
        %v4621 = vpop.f32.mrb[0].mxu0
        %v4622 = vadd.f32 %v4579, %v4621
        %v4623 = vpop.f32.mrb[0].mxu0
        %v4624 = vadd.f32 %v4581, %v4623
        %v4625 = vpop.f32.mrb[0].mxu0
        %v4626 = vadd.f32 %v4583, %v4625
        %v4627 = vpop.f32.mrb[0].mxu0
        %v4628 = vadd.f32 %v4585, %v4627
        %4629 = vdwg.mxu0
        %4630 = vmatprep.subr.bf16.mxu0 %v4353
        %4631 = vmatpush1.bf16.msra.mxu0 %v4352
        %4632 = vmatprep.subr.bf16.mxu0 %v4355
        %4633 = vmatpush1.bf16.msra.mxu0 %v4354
        %4634 = vmatprep.subr.bf16.mxu0 %v4357
        %4635 = vmatpush1.bf16.msra.mxu0 %v4356
        %4636 = vmatprep.subr.bf16.mxu0 %v4359
        %4637 = vmatpush1.bf16.msra.mxu0 %v4358
        %4638 = vmatprep.subr.bf16.mxu0 %v4361
        %4639 = vmatpush1.bf16.msra.mxu0 %v4360
        %4640 = vmatprep.subr.bf16.mxu0 %v4363
        %4641 = vmatpush1.bf16.msra.mxu0 %v4362
        %4642 = vmatprep.subr.bf16.mxu0 %v4365
        %4643 = vmatpush1.bf16.msra.mxu0 %v4364
        %4644 = vmatprep.subr.bf16.mxu0 %v4367
        %4645 = vmatpush1.bf16.msra.mxu0 %v4366
        %4646 = vmatprep.subr.bf16.mxu0 %v4369
        %4647 = vmatpush1.bf16.msra.mxu0 %v4368
        %4648 = vmatprep.subr.bf16.mxu0 %v4371
        %4649 = vmatpush1.bf16.msra.mxu0 %v4370
        %4650 = vmatprep.subr.bf16.mxu0 %v4373
        %4651 = vmatpush1.bf16.msra.mxu0 %v4372
        %4652 = vmatprep.subr.bf16.mxu0 %v4375
        %4653 = vmatpush1.bf16.msra.mxu0 %v4374
        %4654 = vmatprep.subr.bf16.mxu0 %v4377
        %4655 = vmatpush1.bf16.msra.mxu0 %v4376
        %4656 = vmatprep.subr.bf16.mxu0 %v4379
        %4657 = vmatpush1.bf16.msra.mxu0 %v4378
        %4658 = vmatprep.subr.bf16.mxu0 %v4381
        %4659 = vmatpush1.bf16.msra.mxu0 %v4380
        %4660 = vmatprep.subr.bf16.mxu0 %v4383
        %4661 = vmatpush1.bf16.msra.mxu0 %v4382
        %4662 = vmatprep.mubr.bf16.mxu0 %v3773
        %4663 = vmatmul.mubr.bf16.gmra.mrb[0].mxu0 %v3772
        %v4664 = vpop.f32.mrb[0].mxu0
        %v4665 = vadd.f32 %v4622, %v4664
        %v4666 = vpop.f32.mrb[0].mxu0
        %v4667 = vadd.f32 %v4624, %v4666
        %v4668 = vpop.f32.mrb[0].mxu0
        %v4669 = vadd.f32 %v4626, %v4668
        %v4670 = vpop.f32.mrb[0].mxu0
        %v4671 = vadd.f32 %v4628, %v4670
        %4672 = vdwg.mxu0
        %4673 = vmatprep.subr.bf16.mxu0 %v4385
        %4674 = vmatpush1.bf16.msra.mxu0 %v4384
        %4675 = vmatprep.subr.bf16.mxu0 %v4387
        %4676 = vmatpush1.bf16.msra.mxu0 %v4386
        %4677 = vmatprep.subr.bf16.mxu0 %v4389
        %4678 = vmatpush1.bf16.msra.mxu0 %v4388
        %4679 = vmatprep.subr.bf16.mxu0 %v4391
        %4680 = vmatpush1.bf16.msra.mxu0 %v4390
        %4681 = vmatprep.subr.bf16.mxu0 %v4393
        %4682 = vmatpush1.bf16.msra.mxu0 %v4392
        %4683 = vmatprep.subr.bf16.mxu0 %v4395
        %4684 = vmatpush1.bf16.msra.mxu0 %v4394
        %4685 = vmatprep.subr.bf16.mxu0 %v4397
        %4686 = vmatpush1.bf16.msra.mxu0 %v4396
        %4687 = vmatprep.subr.bf16.mxu0 %v4399
        %4688 = vmatpush1.bf16.msra.mxu0 %v4398
        %4689 = vmatprep.subr.bf16.mxu0 %v4401
        %4690 = vmatpush1.bf16.msra.mxu0 %v4400
        %4691 = vmatprep.subr.bf16.mxu0 %v4403
        %4692 = vmatpush1.bf16.msra.mxu0 %v4402
        %4693 = vmatprep.subr.bf16.mxu0 %v4405
        %4694 = vmatpush1.bf16.msra.mxu0 %v4404
        %4695 = vmatprep.subr.bf16.mxu0 %v4407
        %4696 = vmatpush1.bf16.msra.mxu0 %v4406
        %4697 = vmatprep.subr.bf16.mxu0 %v4409
        %4698 = vmatpush1.bf16.msra.mxu0 %v4408
        %4699 = vmatprep.subr.bf16.mxu0 %v4411
        %4700 = vmatpush1.bf16.msra.mxu0 %v4410
        %4701 = vmatprep.subr.bf16.mxu0 %v4413
        %4702 = vmatpush1.bf16.msra.mxu0 %v4412
        %4703 = vmatprep.subr.bf16.mxu0 %v4415
        %4704 = vmatpush1.bf16.msra.mxu0 %v4414
        %4705 = vmatprep.mubr.bf16.mxu0 %v3775
        %4706 = vmatmul.mubr.bf16.gmra.mrb[0].mxu0 %v3774
        %v4707 = vpop.f32.mrb[0].mxu0
        %v4708 = vadd.f32 %v4665, %v4707
        %v4709 = vpop.f32.mrb[0].mxu0
        %v4710 = vadd.f32 %v4667, %v4709
        %v4711 = vpop.f32.mrb[0].mxu0
        %v4712 = vadd.f32 %v4669, %v4711
        %v4713 = vpop.f32.mrb[0].mxu0
        %v4714 = vadd.f32 %v4671, %v4713
        %4715 = vdwg.mxu0
        %v4716 = vadd.f32 %v2700, %v4708
        %v4717 = vadd.f32 %v2701, %v4710
        %v4718 = vadd.f32 %v2702, %v4712
        %v4719 = vadd.f32 %v2703, %v4714
        %v4720 = vld [vmem:[%s19] sm:$0x3]
        %v4722 = vlaneseq
        %v4723 = vshrl.u32 %v4722, 7
        %v4724 = vsub.s32 0, %v4723
        %v4725 = vrot.slane %v4720, %v4724
        %v4726 = vlaneseq
        %v4727 = vshrl.u32 %v4726, 7
        %v4728 = vsub.s32 1, %v4727
        %v4729 = vrot.slane %v4720, %v4728
        %v4732 = vadd.f32 %v4716, %v4725
        %v4733 = vadd.f32 %v4717, %v4729
        %v4734 = vadd.f32 %v4718, %v4725
        %v4735 = vadd.f32 %v4719, %v4729
        %v4736 = vld [vmem:[%s20] sm:$0x3]
        %v4737 = vld [vmem:[%s21] sm:$0x3]
        %v4738 = vadd.f32 %v4732, %v4733
        %4739 = vadd.xlane.f32.xlu0 %v4738
        %v4740 = vpop.xlane.xlu0 %4739
        %v4741 = vadd.f32 %v4734, %v4735
        %4742 = vadd.xlane.f32.xlu0 %v4741
        %v4743 = vpop.xlane.xlu0 %4742
        %v4744 = vmul.f32 %v4740, 0.005
        %v4745 = vmul.f32 %v4743, 0.005
        %v4746 = vsub.f32 %v4732, %v4744
        %v4747 = vsub.f32 %v4733, %v4744
        %v4748 = vsub.f32 %v4734, %v4745
        %v4749 = vsub.f32 %v4735, %v4745
        %v4750 = vmul.f32 %v4746, %v1652
        %v4751 = vmul.f32 %v4747, %v1653
        %v4752 = vmul.f32 %v4748, %v1652
        %v4753 = vmul.f32 %v4749, %v1653
        %v4754 = vmul.f32 %v4750, %v4750
        %v4755 = vmul.f32 %v4751, %v4751
        %v4756 = vmul.f32 %v4752, %v4752
        %v4757 = vmul.f32 %v4753, %v4753
        %v4758 = vadd.f32 %v4754, %v4755
        %4759 = vadd.xlane.f32.xlu0 %v4758
        %v4760 = vpop.xlane.xlu0 %4759
        %v4761 = vadd.f32 %v4756, %v4757
        %4762 = vadd.xlane.f32.xlu0 %v4761
        %v4763 = vpop.xlane.xlu0 %4762
        %v4764 = vmul.f32 %v4760, 0.005
        %v4765 = vmul.f32 %v4763, 0.005
        %v4766 = vadd.f32 %v4764, 1e-05
        %v4767 = vadd.f32 %v4765, 1e-05
        %v4768 = vrsqrt.pop %v4766
        %v4769 = vrsqrt.pop %v4767
        %v4770 = vmul.f32 %v4746, %v4768
        %v4771 = vmul.f32 %v4747, %v4768
        %v4772 = vmul.f32 %v4748, %v4769
        %v4773 = vmul.f32 %v4749, %v4769
        %v4775 = vlaneseq
        %v4776 = vshrl.u32 %v4775, 7
        %v4777 = vsub.s32 0, %v4776
        %v4778 = vrot.slane %v4736, %v4777
        %v4779 = vlaneseq
        %v4780 = vshrl.u32 %v4779, 7
        %v4781 = vsub.s32 1, %v4780
        %v4782 = vrot.slane %v4736, %v4781
        %v4785 = vmul.f32 %v4770, %v4778
        %v4786 = vmul.f32 %v4771, %v4782
        %v4787 = vmul.f32 %v4772, %v4778
        %v4788 = vmul.f32 %v4773, %v4782
        %v4790 = vlaneseq
        %v4791 = vshrl.u32 %v4790, 7
        %v4792 = vsub.s32 0, %v4791
        %v4793 = vrot.slane %v4737, %v4792
        %v4794 = vlaneseq
        %v4795 = vshrl.u32 %v4794, 7
        %v4796 = vsub.s32 1, %v4795
        %v4797 = vrot.slane %v4737, %v4796
        %v4800 = vadd.f32 %v4785, %v4793
        %v4801 = vadd.f32 %v4786, %v4797
        %v4802 = vadd.f32 %v4787, %v4793
        %v4803 = vadd.f32 %v4788, %v4797
        %4804 = vst [vmem:[%s876] sm:$0xff] %v4800
        %4805 = vst [vmem:[%s876 + $0x8] sm:$0xff] %v4801
        %4806 = vst [vmem:[%s876 + $0x10] sm:$0xff] %v4802
        %4807 = vst [vmem:[%s876 + $0x18] sm:$0xff] %v4803
        %s4808 = sand.u32 %s542, 1
        %s4809 = scalar_lea.sflag [#allocation7], %s4808
        %s4810 = sand.u32 %s542, 1
        %s4811 = smul.addr %s4810, 32
        %s4812 = scalar_lea.vmem [#allocation22], %s4811
        // Predicated region
        $region153: #{tpu_custom_call.1} parent=107 // pred_check
          %p4813 = pneg %p552
        $region154: #{tpu_custom_call.1} parent=107 // pred_check_branch
          %4815 = sbr.rel (%p4813) target = $region156
        $region155: #{tpu_custom_call.1} parent=107 // pred_region
          %s4816 = smul.u32 2, %s51
          %s4818 = ssub.s32 512, 512
          %4819 = vsyncadd %s4809, %s4818
          %s4820 = smul.addr %s4816, 2
          %s4821 = smul.addr %s50, 4
          %s4822 = sadd.s32 %s4820, %s4821
          %s4823 = smul.addr %s4822, 128
          %s4824 = scalar_lea.hbm %s22, %s4823
          %s4825 = sshll.u32 %s4812, 4
          %s4826 = int_to_ptr.vmem [resolvable:$true] %s4825
          %4831 = dma.vmem_to_hbm [thread:$0]  %s4826, 512, %s4824, %s4809, 256, 256, 16
        $region156: #{tpu_custom_call.1} parent=107 // pred_fallthru
          _
      $region108: #{tpu_custom_call.1} parent=5 // pred_fallthru
        _
      %p4832 = scmp.le.s32.totalorder 2, %s41
      // Predicated region
      $region157: #{tpu_custom_call.1} parent=5 // pred_check
        %p4833 = pneg %p4832
      $region158: #{tpu_custom_call.1} parent=5 // pred_check_branch
        %4835 = sbr.rel (%p4833) target = $region160
      $region159: #{tpu_custom_call.1} parent=5 // pred_region
        %s4836 = ssub.s32 %s41, 2
        // Predicated region
        $region161: #{tpu_custom_call.1} parent=159 // pred_check
          %p4837 = pneg %p558
        $region162: #{tpu_custom_call.1} parent=159 // pred_check_branch
          %4839 = sbr.rel (%p4837) target = $region164
        $region163: #{tpu_custom_call.1} parent=159 // pred_region
          %s4840 = sand.u32 %s543, 1
          %s4841 = scalar_lea.sflag [#allocation7], %s4840
          %s4842 = sand.u32 %s543, 1
          %s4843 = smul.addr %s4842, 32
          %s4844 = scalar_lea.vmem [#allocation22], %s4843
          %4845 = dma.done %s4841, 512
        $region164: #{tpu_custom_call.1} parent=159 // pred_fallthru
          _
      $region160: #{tpu_custom_call.1} parent=5 // pred_fallthru
        _
    $region6: #{tpu_custom_call.1} parent=1 // loop_footer
      %s45 = sadd.s32 1, %s41
    $region7: #{tpu_custom_call.1} parent=1 // loop_footer_branch
      %40 = sbr.rel target = $region3
    $region8: #{tpu_custom_call.1} parent=1 // loop_exit
      _
    %4846 = vsyncpa [#allocation6], 1
    %s4847 = scalar_lea.sflag [#allocation6], 1
    %4848 = vsyncpa %s4847, 1
    %4849 = vsyncpa [#allocation9], 1
    %s4850 = scalar_lea.sflag [#allocation9], 1
    %4851 = vsyncpa %s4850, 1
    %4852 = vsyncpa [#allocation12], 1
    %4853 = vsyncpa [#allocation15], 1
    %4854 = vsyncpa [#allocation18], 1
    %4855 = vsyncpa [#allocation21], 1
    %4856 = vsyncpa [#allocation7], 1
    %s4857 = scalar_lea.sflag [#allocation7], 1
    %4858 = vsyncpa %s4857, 1

</llo_original>
